<compile_context>
chip_gen: v7x
topology: tpu7x:2x2x1
jax: 0.10.0
libtpu: 0.0.40
codegen_flags: <defaults>
</compile_context>

<pallas_src>
import functools

import jax
import jax.numpy as jnp
import numpy as np
from jax import lax
from jax.experimental import pallas as pl
from jax.experimental.pallas import tpu as pltpu

_SQRT_2 = 1.4142135623730951
_LANE = 128


def _round_up(v, m):
    return ((v + m - 1) // m) * m


def _erf(x):
    # Abramowitz & Stegun 7.1.26, |error| < 1.5e-7; exp and the approx reciprocal both run
    # on the (otherwise idle) EUP slot.
    p = 0.3275911
    a1, a2, a3, a4, a5 = 0.254829592, -0.284496736, 1.421413741, -1.453152027, 1.061405429
    ax = jnp.abs(x)
    t = pl.reciprocal(1.0 + p * ax, approx=True)
    poly = ((((a5 * t + a4) * t + a3) * t + a2) * t + a1) * t
    y = 1.0 - poly * jnp.exp(-ax * ax)
    return jnp.where(x >= 0, y, -y)


def _gelu_exact(x):
    return 0.5 * x * (1.0 + _erf(x / _SQRT_2))


def _block_kernel(xpad_hbm, wdw_ref, bdw_ref, w1_ref, b1_ref, w2_ref, b2_ref,
                  gamma_ref, out_ref, win_ref, sem_ref, conv_ref, *,
                  TH, Wt, Wp, CP, RC):
    # xpad_hbm : (N, Hp+6, Wp, CP) f32, resident in HBM (manual DMA)
    # win_ref  : (2, TH+6, Wp, CP) f32 VMEM, double-buffered halo window
    # conv_ref : (TH*Wt, CP) bf16 VMEM, depthwise-conv output (MLP lhs)
    # out_ref  : (TH, Wt, CP) f32
    n = pl.program_id(0)
    t = pl.program_id(1)
    n_t = pl.num_programs(1)
    slot = lax.rem(t, 2)

    # ---- per-row-tile halo window DMA, double-buffered along the t axis ----
    def start_window(n_idx, t_idx, s):
        pltpu.make_async_copy(
            xpad_hbm.at[n_idx, pl.ds(t_idx * TH, TH + 6)],
            win_ref.at[s],
            sem_ref.at[s],
        ).start()

    def wait_window(s):
        pltpu.make_async_copy(
            xpad_hbm.at[0, pl.ds(0, TH + 6)],
            win_ref.at[s],
            sem_ref.at[s],
        ).wait()

    @pl.when(t == 0)                      # prime the pipeline once per image
    def _():
        start_window(n, t, slot)

    wait_window(slot)

    @pl.when(t + 1 < n_t)                 # prefetch the next row tile of this image
    def _():
        start_window(n, t + 1, 1 - slot)

    # ---- re-parameterized depthwise 7x7 conv: register-resident RC-row chunks ----
    wtab = wdw_ref[...]                   # (49, CP), hoisted once
    bias = bdw_ref[...].reshape(1, 1, CP) # fused BN bias

    for r0 in range(0, TH, RC):           # static unroll over output-row chunks
        rc = min(RC, TH - r0)
        acc = jnp.broadcast_to(bias, (rc, Wt, CP))        # init with bias (saves a pass)
        for kw in range(7):
            # one sublane (W) shift per kw, sliced directly off the window ref
            xw = win_ref[slot, pl.ds(r0, rc + 6), pl.ds(5 + kw, Wt), :]
            for kh in range(7):           # kh offsets only slice the leading row dim (free)
                acc = acc + xw[kh:kh + rc] * wtab[kh * 7 + kw]
        conv_ref[pl.ds(r0 * Wt, rc * Wt), :] = (
            acc.reshape(rc * Wt, CP).astype(jnp.bfloat16))   # layout-preserving (Wt % 8 == 0)

    # ---- pointwise MLP: Linear -> GELU -> Linear (bf16 MXU operands, f32 accumulation) ----
    y = conv_ref[...]                                        # (TH*Wt, CP) bf16
    h = jnp.dot(y, w1_ref[...], preferred_element_type=jnp.float32) + b1_ref[...]
    h = _gelu_exact(h)
    z = jnp.dot(h.astype(jnp.bfloat16), w2_ref[...],
                preferred_element_type=jnp.float32)
    z = (z + b2_ref[...]) * gamma_ref[...]                   # bias + layer scale

    # Residual read from the same window: rows [3, 3+TH), cols start at the 8-aligned offset.
    res = win_ref[slot, pl.ds(3, TH), pl.ds(8, Wt), :]
    out_ref[...] = res + z.reshape(TH, Wt, CP)


def convnext_block(x_nchw, params, *, row_tile=None):
    N, C, H, W = x_nchw.shape
    CP = _round_up(C, _LANE)              # lane-dense channel dim
    H4 = 4 * C
    H4P = _round_up(H4, _LANE)            # lane-dense hidden dim
    Wt = _round_up(W, 8)                  # tile width -> layout-preserving reshapes
    Wp = _round_up(Wt + 11, 8)            # 8-col aligned left halo + >=3-col right halo

    # Row tile: n_t = ceil(H / target), TH = ceil(H / n_t)  ->  Hp == H (no wasted rows)
    # unless H < target.  Target ~2048 pixels per MLP matmul, capped so the f32 hidden
    # tensor stays small.
    if row_tile is None:
        target = max(1, 2048 // Wt)
        target = min(target, max(1, (8 * 1024 * 1024) // (Wt * H4P * 4)))
    else:
        target = row_tile
    target = max(1, min(H, target))
    n_t = -(-H // target)
    TH = -(-H // n_t)
    Hp = n_t * TH
    # TODO(synk): for 14x14 / 7x7 stages also fold the batch axis into the matmul M dim so
    # M >= 1024 per grid step.

    # Conv accumulation chunk: keep the per-chunk accumulator within ~64 KiB of vregs.
    RC = max(1, min(8, (64 * 1024) // (Wt * CP * 4)))

    # NCHW -> NHWC; single fused pad: 3-row top halo, (3 + Hp-H)-row bottom halo, 8-col left
    # halo (keeps the residual window sublane-aligned), right col halo, channel pad to CP.
    # TODO(synk): handle the spatial halo with in-kernel edge masking to avoid this padded
    # HBM materialization entirely on low-bandwidth chips.
    x = jnp.transpose(x_nchw, (0, 2, 3, 1)).astype(jnp.float32)
    xpad = jnp.pad(x, ((0, 0), (3, 3 + Hp - H), (8, Wp - 8 - W), (0, CP - C)))

    # Kernel-side parameter layouts: (49, CP) tap table, bf16 MXU weights.  Zero padding
    # keeps padded channels exactly zero through conv, MLP and residual.
    wdw = jnp.pad(params["w_dw"].reshape(49, C), ((0, 0), (0, CP - C)))
    bdw = jnp.pad(params["b_dw"], ((0, 0), (0, CP - C)))
    w1 = jnp.pad(params["w1"], ((0, CP - C), (0, H4P - H4))).astype(jnp.bfloat16)
    b1 = jnp.pad(params["b1"], ((0, 0), (0, H4P - H4)))
    w2 = jnp.pad(params["w2"], ((0, H4P - H4), (0, CP - C))).astype(jnp.bfloat16)
    b2 = jnp.pad(params["b2"], ((0, 0), (0, CP - C)))
    gamma = jnp.pad(params["gamma"], ((0, 0), (0, CP - C)))

    # VMEM budget: halo windows + conv scratch + weights + output blocks + MLP intermediates,
    # with headroom, capped at 3/4 of physical VMEM (generation-aware when queryable).
    win_bytes = 2 * (TH + 6) * Wp * CP * 4
    conv_bytes = TH * Wt * CP * 2
    weight_bytes = 2 * 2 * (CP * H4P * 2) + 4 * (49 * CP + 4 * CP + 2 * H4P)
    out_bytes = 2 * TH * Wt * CP * 4
    inter_bytes = TH * Wt * (6 * H4P + 8 * CP) + (RC + 6) * Wt * CP * 16
    needed = int(1.5 * (win_bytes + conv_bytes + weight_bytes + out_bytes + inter_bytes))
    phys = 128 * 1024 * 1024
    try:
        phys = int(pltpu.get_tpu_info().vmem_capacity_bytes)
    except Exception:
        pass
    vmem_limit = int(min(max(needed, 32 * 1024 * 1024), (phys * 3) // 4))

    cost = pl.CostEstimate(
        flops=int(N * Hp * Wt * (2 * 49 * CP + 4 * CP * H4P)),
        transcendentals=int(2 * N * Hp * Wt * H4P),
        bytes_accessed=int(4 * (xpad.size + N * Hp * Wt * CP) + 2 * (w1.size + w2.size)
                           + 4 * (wdw.size + bdw.size + b1.size + b2.size + gamma.size)),
    )

    kern = functools.partial(_block_kernel, TH=TH, Wt=Wt, Wp=Wp, CP=CP, RC=RC)
    out = pl.pallas_call(
        kern,
        out_shape=jax.ShapeDtypeStruct((N, Hp, Wt, CP), jnp.float32),
        grid_spec=pltpu.PrefetchScalarGridSpec(
            num_scalar_prefetch=0,
            grid=(N, n_t),
            in_specs=[
                pl.BlockSpec(memory_space=pl.ANY),                 # padded input stays in HBM
                pl.BlockSpec((49, CP), lambda n, t: (0, 0)),
                pl.BlockSpec((1, CP), lambda n, t: (0, 0)),
                pl.BlockSpec((CP, H4P), lambda n, t: (0, 0)),
                pl.BlockSpec((1, H4P), lambda n, t: (0, 0)),
                pl.BlockSpec((H4P, CP), lambda n, t: (0, 0)),
                pl.BlockSpec((1, CP), lambda n, t: (0, 0)),
                pl.BlockSpec((1, CP), lambda n, t: (0, 0)),
            ],
            out_specs=pl.BlockSpec((None, TH, Wt, CP), lambda n, t: (n, t, 0, 0)),
            scratch_shapes=[
                pltpu.VMEM((2, TH + 6, Wp, CP), jnp.float32),      # double-buffered halo window
                pltpu.SemaphoreType.DMA((2,)),
                pltpu.VMEM((TH * Wt, CP), jnp.bfloat16),           # conv output (MLP lhs)
            ],
        ),
        compiler_params=pltpu.CompilerParams(
            dimension_semantics=("parallel", "arbitrary"),
            vmem_limit_bytes=vmem_limit),
        cost_estimate=cost,
    )(xpad, wdw, bdw, w1, b1, w2, b2, gamma)

    out = out[:, :H, :W, :C]
    return jnp.transpose(out, (0, 3, 1, 2))                  # NHWC -> NCHW


def make_params(key, dim, layer_scale_init_value=1e-6):
    """Deterministic synthetic parameters matching the module's shapes."""
    ks = jax.random.split(key, 10)
    eps = 1e-5

    def conv_bn_fused(kconv, kbn, ksize):
        # Conv2d(dim, dim, ksize, groups=dim, bias=False) weight: (dim, 1, k, k)
        w = 0.1 * jax.random.normal(kconv, (dim, 1, ksize, ksize), jnp.float32)
        kg, kb, km, kv = jax.random.split(kbn, 4)
        bn_g = 1.0 + 0.1 * jax.random.normal(kg, (dim,), jnp.float32)
        bn_b = 0.1 * jax.random.normal(kb, (dim,), jnp.float32)
        bn_m = 0.1 * jax.random.normal(km, (dim,), jnp.float32)
        bn_v = jax.random.uniform(kv, (dim,), jnp.float32, minval=0.5, maxval=1.5)
        std = jnp.sqrt(bn_v + eps)
        w_f = w * (bn_g / std)[:, None, None, None]
        b_f = bn_b - bn_m * bn_g / std
        return w_f, b_f

    # forward() (non-reparam path) sums small_conv3 (7x7) + small_conv1 (5x5) + small_conv2 (3x3)
    w7, b7 = conv_bn_fused(ks[0], ks[1], 7)
    w5, b5 = conv_bn_fused(ks[2], ks[3], 5)
    w3, b3 = conv_bn_fused(ks[4], ks[5], 3)
    w_eq = (w7
            + jnp.pad(w5, ((0, 0), (0, 0), (1, 1), (1, 1)))
            + jnp.pad(w3, ((0, 0), (0, 0), (2, 2), (2, 2))))
    b_eq = b7 + b5 + b3
    w_dw = jnp.transpose(w_eq[:, 0], (1, 2, 0))          # (7, 7, dim)

    # nn.Linear(dim, 4*dim) / nn.Linear(4*dim, dim): y = x @ W.T + b
    lim1 = 1.0 / np.sqrt(dim)
    W1 = jax.random.uniform(ks[6], (4 * dim, dim), jnp.float32, minval=-lim1, maxval=lim1)
    b1 = jax.random.uniform(ks[7], (4 * dim,), jnp.float32, minval=-lim1, maxval=lim1)
    lim2 = 1.0 / np.sqrt(4 * dim)
    W2 = jax.random.uniform(ks[8], (dim, 4 * dim), jnp.float32, minval=-lim2, maxval=lim2)
    b2 = jax.random.uniform(ks[9], (dim,), jnp.float32, minval=-lim2, maxval=lim2)

    gamma_ls = layer_scale_init_value * jnp.ones((dim,), jnp.float32)

    return dict(
        w_dw=w_dw,
        b_dw=b_eq.reshape(1, dim),
        w1=jnp.transpose(W1),            # (dim, 4*dim)
        b1=b1.reshape(1, 4 * dim),
        w2=jnp.transpose(W2),            # (4*dim, dim)
        b2=b2.reshape(1, dim),
        gamma=gamma_ls.reshape(1, dim),
    )


def reference(x_nchw, params):
    """Pure-JAX reference of Block.forward (for a sanity check)."""
    x = jnp.transpose(x_nchw, (0, 2, 3, 1)).astype(jnp.float32)
    C = x.shape[-1]
    w = params["w_dw"][:, :, None, :]                    # HWIO, I = 1 (depthwise)
    y = lax.conv_general_dilated(
        x, w, window_strides=(1, 1), padding=[(3, 3), (3, 3)],
        dimension_numbers=("NHWC", "HWIO", "NHWC"), feature_group_count=C)
    y = y + params["b_dw"][0]
    h = jax.nn.gelu(y @ params["w1"] + params["b1"][0], approximate=False)
    z = h @ params["w2"] + params["b2"][0]
    z = z * params["gamma"][0]
    return jnp.transpose(x + z, (0, 3, 1, 2))


if __name__ == "__main__":
    key = jax.random.PRNGKey(0)
    kx, kp = jax.random.split(key)

    N, dim, H, W = 2, 8, 16, 16
    x = jax.random.normal(kx, (N, dim, H, W), jnp.float32)

    # (1) Block default layer scale (gamma = 1e-6): the full output is dominated by the
    #     exact-f32 residual path, so a tight full-output check is meaningful here.
    params = make_params(kp, dim, layer_scale_init_value=1e-6)
    out = convnext_block(x, params)
    jax.block_until_ready(out)
    ref = reference(x, params)
    np.testing.assert_allclose(np.asarray(out), np.asarray(ref), atol=1e-5, rtol=1e-5)

    # (2) gamma = 1.0 (the value the ConvNeXt wrapper actually passes to its blocks): the
    #     branch is O(0.1), giving a meaningful check of conv + MLP.  Tolerances account for
    #     the bf16 MXU operands (f32 accumulation) used in the kernel.
    params1 = make_params(kp, dim, layer_scale_init_value=1.0)
    out1 = convnext_block(x, params1)
    jax.block_until_ready(out1)
    ref1 = reference(x, params1)
    np.testing.assert_allclose(np.asarray(out1 - x), np.asarray(ref1 - x),
                               atol=5e-2, rtol=5e-2)
    np.testing.assert_allclose(np.asarray(out1), np.asarray(ref1), atol=5e-2, rtol=5e-2)

    print("KERNEL_OK")
</pallas_src>

<mosaic_0001>
module attributes {stable_mosaic.version = 11 : i64} {
  func.func @_block_kernel(%arg0: i32, %arg1: i32, %arg2: memref<2x22x32x128xf32, #tpu.memory_space<any>>, %arg3: memref<49x128xf32, #tpu.memory_space<vmem>>, %arg4: memref<1x128xf32, #tpu.memory_space<vmem>>, %arg5: memref<128x128xbf16, #tpu.memory_space<vmem>>, %arg6: memref<1x128xf32, #tpu.memory_space<vmem>>, %arg7: memref<128x128xbf16, #tpu.memory_space<vmem>>, %arg8: memref<1x128xf32, #tpu.memory_space<vmem>>, %arg9: memref<1x128xf32, #tpu.memory_space<vmem>>, %arg10: memref<1x16x16x128xf32, #tpu.memory_space<vmem>>, %arg11: memref<2x22x32x128xf32, #tpu.memory_space<vmem>>, %arg12: memref<2x!tpu.dma_semaphore, #tpu.memory_space<semaphore_mem>>, %arg13: memref<256x128xbf16, #tpu.memory_space<vmem>>) attributes {dimension_semantics = [#tpu.dimension_semantics<parallel>, #tpu.dimension_semantics<arbitrary>], iteration_bounds = array<i64: 2, 1>, scalar_prefetch = 0 : i64, scratch_operands = 3 : i64, tpu.core_type = #tpu.core_type<tc>, window_params = [{}, {pipeline_mode = #tpu.pipeline_mode<synchronous>, transform_indices = @transform_1, window_bounds = array<i64: 49, 128>}, {pipeline_mode = #tpu.pipeline_mode<synchronous>, transform_indices = @transform_2, window_bounds = array<i64: 1, 128>}, {pipeline_mode = #tpu.pipeline_mode<synchronous>, transform_indices = @transform_3, window_bounds = array<i64: 128, 128>}, {pipeline_mode = #tpu.pipeline_mode<synchronous>, transform_indices = @transform_4, window_bounds = array<i64: 1, 128>}, {pipeline_mode = #tpu.pipeline_mode<synchronous>, transform_indices = @transform_5, window_bounds = array<i64: 128, 128>}, {pipeline_mode = #tpu.pipeline_mode<synchronous>, transform_indices = @transform_6, window_bounds = array<i64: 1, 128>}, {pipeline_mode = #tpu.pipeline_mode<synchronous>, transform_indices = @transform_7, window_bounds = array<i64: 1, 128>}, {transform_indices = @transform_8, window_bounds = array<i64: 1, 16, 16, 128>}]} {
    %c2_i32 = arith.constant 2 : i32
    %0 = arith.remsi %arg1, %c2_i32 : i32
    %c0_i32 = arith.constant 0 : i32
    %1 = arith.cmpi eq, %arg1, %c0_i32 : i32
    %2 = arith.extui %1 : i1 to i32
    %c0_i32_0 = arith.constant 0 : i32
    %3 = arith.cmpi ne, %2, %c0_i32_0 : i32
    scf.if %3 {
      %c16_i32 = arith.constant 16 : i32
      %817 = arith.muli %arg1, %c16_i32 : i32
      %c0_i32_84 = arith.constant 0 : i32
      %c0_i32_85 = arith.constant 0 : i32
      %818 = tpu.memref_slice %arg2[%arg0, %817, %c0_i32_84, %c0_i32_85] : memref<2x22x32x128xf32, #tpu.memory_space<any>> -> memref<1x22x32x128xf32, #tpu.memory_space<any>>
      %819 = tpu.memref_squeeze %818 : memref<1x22x32x128xf32, #tpu.memory_space<any>> -> memref<22x32x128xf32, #tpu.memory_space<any>>
      %c0_i32_86 = arith.constant 0 : i32
      %c0_i32_87 = arith.constant 0 : i32
      %c0_i32_88 = arith.constant 0 : i32
      %820 = tpu.memref_slice %arg11[%0, %c0_i32_86, %c0_i32_87, %c0_i32_88] : memref<2x22x32x128xf32, #tpu.memory_space<vmem>> -> memref<1x22x32x128xf32, #tpu.memory_space<vmem>>
      %821 = tpu.memref_squeeze %820 : memref<1x22x32x128xf32, #tpu.memory_space<vmem>> -> memref<22x32x128xf32, #tpu.memory_space<vmem>>
      %822 = tpu.memref_slice %arg12[%0] : memref<2x!tpu.dma_semaphore, #tpu.memory_space<semaphore_mem>> -> memref<1x!tpu.dma_semaphore, #tpu.memory_space<semaphore_mem>>
      %823 = tpu.memref_squeeze %822 : memref<1x!tpu.dma_semaphore, #tpu.memory_space<semaphore_mem>> -> memref<!tpu.dma_semaphore, #tpu.memory_space<semaphore_mem>>
      tpu.enqueue_dma source(%819 : memref<22x32x128xf32, #tpu.memory_space<any>>) target(%821 : memref<22x32x128xf32, #tpu.memory_space<vmem>>) target_semaphore(%823 : memref<!tpu.dma_semaphore, #tpu.memory_space<semaphore_mem>>)
    } else {
    }
    %c0_i32_1 = arith.constant 0 : i32
    %c0_i32_2 = arith.constant 0 : i32
    %c0_i32_3 = arith.constant 0 : i32
    %c0_i32_4 = arith.constant 0 : i32
    %4 = tpu.memref_slice %arg2[%c0_i32_1, %c0_i32_2, %c0_i32_3, %c0_i32_4] : memref<2x22x32x128xf32, #tpu.memory_space<any>> -> memref<1x22x32x128xf32, #tpu.memory_space<any>>
    %5 = tpu.memref_squeeze %4 : memref<1x22x32x128xf32, #tpu.memory_space<any>> -> memref<22x32x128xf32, #tpu.memory_space<any>>
    %c0_i32_5 = arith.constant 0 : i32
    %c0_i32_6 = arith.constant 0 : i32
    %c0_i32_7 = arith.constant 0 : i32
    %6 = tpu.memref_slice %arg11[%0, %c0_i32_5, %c0_i32_6, %c0_i32_7] : memref<2x22x32x128xf32, #tpu.memory_space<vmem>> -> memref<1x22x32x128xf32, #tpu.memory_space<vmem>>
    %7 = tpu.memref_squeeze %6 : memref<1x22x32x128xf32, #tpu.memory_space<vmem>> -> memref<22x32x128xf32, #tpu.memory_space<vmem>>
    %8 = tpu.memref_slice %arg12[%0] : memref<2x!tpu.dma_semaphore, #tpu.memory_space<semaphore_mem>> -> memref<1x!tpu.dma_semaphore, #tpu.memory_space<semaphore_mem>>
    %9 = tpu.memref_squeeze %8 : memref<1x!tpu.dma_semaphore, #tpu.memory_space<semaphore_mem>> -> memref<!tpu.dma_semaphore, #tpu.memory_space<semaphore_mem>>
    tpu.wait_dma2 semaphore(%9 : memref<!tpu.dma_semaphore, #tpu.memory_space<semaphore_mem>>) src(%5 : memref<22x32x128xf32, #tpu.memory_space<any>>) dst(%7 : memref<22x32x128xf32, #tpu.memory_space<vmem>>)
    %c1_i32 = arith.constant 1 : i32
    %10 = arith.addi %arg1, %c1_i32 : i32
    %c1_i32_8 = arith.constant 1 : i32
    %11 = arith.cmpi slt, %10, %c1_i32_8 : i32
    %12 = arith.extui %11 : i1 to i32
    %c0_i32_9 = arith.constant 0 : i32
    %13 = arith.cmpi ne, %12, %c0_i32_9 : i32
    scf.if %13 {
      %c1_i32_84 = arith.constant 1 : i32
      %817 = arith.addi %arg1, %c1_i32_84 : i32
      %c1_i32_85 = arith.constant 1 : i32
      %818 = arith.subi %c1_i32_85, %0 : i32
      %c16_i32 = arith.constant 16 : i32
      %819 = arith.muli %817, %c16_i32 : i32
      %c0_i32_86 = arith.constant 0 : i32
      %c0_i32_87 = arith.constant 0 : i32
      %820 = tpu.memref_slice %arg2[%arg0, %819, %c0_i32_86, %c0_i32_87] : memref<2x22x32x128xf32, #tpu.memory_space<any>> -> memref<1x22x32x128xf32, #tpu.memory_space<any>>
      %821 = tpu.memref_squeeze %820 : memref<1x22x32x128xf32, #tpu.memory_space<any>> -> memref<22x32x128xf32, #tpu.memory_space<any>>
      %c0_i32_88 = arith.constant 0 : i32
      %c0_i32_89 = arith.constant 0 : i32
      %c0_i32_90 = arith.constant 0 : i32
      %822 = tpu.memref_slice %arg11[%818, %c0_i32_88, %c0_i32_89, %c0_i32_90] : memref<2x22x32x128xf32, #tpu.memory_space<vmem>> -> memref<1x22x32x128xf32, #tpu.memory_space<vmem>>
      %823 = tpu.memref_squeeze %822 : memref<1x22x32x128xf32, #tpu.memory_space<vmem>> -> memref<22x32x128xf32, #tpu.memory_space<vmem>>
      %824 = tpu.memref_slice %arg12[%818] : memref<2x!tpu.dma_semaphore, #tpu.memory_space<semaphore_mem>> -> memref<1x!tpu.dma_semaphore, #tpu.memory_space<semaphore_mem>>
      %825 = tpu.memref_squeeze %824 : memref<1x!tpu.dma_semaphore, #tpu.memory_space<semaphore_mem>> -> memref<!tpu.dma_semaphore, #tpu.memory_space<semaphore_mem>>
      tpu.enqueue_dma source(%821 : memref<22x32x128xf32, #tpu.memory_space<any>>) target(%823 : memref<22x32x128xf32, #tpu.memory_space<vmem>>) target_semaphore(%825 : memref<!tpu.dma_semaphore, #tpu.memory_space<semaphore_mem>>)
    } else {
    }
    %c0 = arith.constant 0 : index
    %c0_10 = arith.constant 0 : index
    %14 = vector.load %arg3[%c0, %c0_10] : memref<49x128xf32, #tpu.memory_space<vmem>>, vector<49x128xf32>
    %c0_11 = arith.constant 0 : index
    %c0_12 = arith.constant 0 : index
    %15 = vector.load %arg4[%c0_11, %c0_12] : memref<1x128xf32, #tpu.memory_space<vmem>>, vector<1x128xf32>
    %16 = vector.shape_cast %15 : vector<1x128xf32> to vector<1x1x128xf32>
    %17 = vector.shape_cast %16 : vector<1x1x128xf32> to vector<1x1x128xf32>
    %18 = vector.broadcast %17 : vector<1x1x128xf32> to vector<8x16x128xf32>
    %19 = arith.index_cast %0 : i32 to index
    %c0_13 = arith.constant 0 : index
    %c5 = arith.constant 5 : index
    %c0_14 = arith.constant 0 : index
    %20 = vector.load %arg11[%19, %c0_13, %c5, %c0_14] : memref<2x22x32x128xf32, #tpu.memory_space<vmem>>, vector<1x14x16x128xf32>
    %21 = vector.shape_cast %20 : vector<1x14x16x128xf32> to vector<14x16x128xf32>
    %22 = vector.extract_strided_slice %21 {offsets = [0, 0, 0], sizes = [8, 16, 128], strides = [1, 1, 1]} : vector<14x16x128xf32> to vector<8x16x128xf32>
    %23 = vector.extract_strided_slice %14 {offsets = [0, 0], sizes = [1, 128], strides = [1, 1]} : vector<49x128xf32> to vector<1x128xf32>
    %24 = vector.shape_cast %23 : vector<1x128xf32> to vector<128xf32>
    %25 = vector.shape_cast %24 : vector<128xf32> to vector<1x1x128xf32>
    %26 = vector.broadcast %25 : vector<1x1x128xf32> to vector<8x16x128xf32>
    %27 = arith.mulf %22, %26 : vector<8x16x128xf32>
    %28 = arith.addf %18, %27 : vector<8x16x128xf32>
    %29 = vector.extract_strided_slice %21 {offsets = [1, 0, 0], sizes = [8, 16, 128], strides = [1, 1, 1]} : vector<14x16x128xf32> to vector<8x16x128xf32>
    %30 = vector.extract_strided_slice %14 {offsets = [7, 0], sizes = [1, 128], strides = [1, 1]} : vector<49x128xf32> to vector<1x128xf32>
    %31 = vector.shape_cast %30 : vector<1x128xf32> to vector<128xf32>
    %32 = vector.shape_cast %31 : vector<128xf32> to vector<1x1x128xf32>
    %33 = vector.broadcast %32 : vector<1x1x128xf32> to vector<8x16x128xf32>
    %34 = arith.mulf %29, %33 : vector<8x16x128xf32>
    %35 = arith.addf %28, %34 : vector<8x16x128xf32>
    %36 = vector.extract_strided_slice %21 {offsets = [2, 0, 0], sizes = [8, 16, 128], strides = [1, 1, 1]} : vector<14x16x128xf32> to vector<8x16x128xf32>
    %37 = vector.extract_strided_slice %14 {offsets = [14, 0], sizes = [1, 128], strides = [1, 1]} : vector<49x128xf32> to vector<1x128xf32>
    %38 = vector.shape_cast %37 : vector<1x128xf32> to vector<128xf32>
    %39 = vector.shape_cast %38 : vector<128xf32> to vector<1x1x128xf32>
    %40 = vector.broadcast %39 : vector<1x1x128xf32> to vector<8x16x128xf32>
    %41 = arith.mulf %36, %40 : vector<8x16x128xf32>
    %42 = arith.addf %35, %41 : vector<8x16x128xf32>
    %43 = vector.extract_strided_slice %21 {offsets = [3, 0, 0], sizes = [8, 16, 128], strides = [1, 1, 1]} : vector<14x16x128xf32> to vector<8x16x128xf32>
    %44 = vector.extract_strided_slice %14 {offsets = [21, 0], sizes = [1, 128], strides = [1, 1]} : vector<49x128xf32> to vector<1x128xf32>
    %45 = vector.shape_cast %44 : vector<1x128xf32> to vector<128xf32>
    %46 = vector.shape_cast %45 : vector<128xf32> to vector<1x1x128xf32>
    %47 = vector.broadcast %46 : vector<1x1x128xf32> to vector<8x16x128xf32>
    %48 = arith.mulf %43, %47 : vector<8x16x128xf32>
    %49 = arith.addf %42, %48 : vector<8x16x128xf32>
    %50 = vector.extract_strided_slice %21 {offsets = [4, 0, 0], sizes = [8, 16, 128], strides = [1, 1, 1]} : vector<14x16x128xf32> to vector<8x16x128xf32>
    %51 = vector.extract_strided_slice %14 {offsets = [28, 0], sizes = [1, 128], strides = [1, 1]} : vector<49x128xf32> to vector<1x128xf32>
    %52 = vector.shape_cast %51 : vector<1x128xf32> to vector<128xf32>
    %53 = vector.shape_cast %52 : vector<128xf32> to vector<1x1x128xf32>
    %54 = vector.broadcast %53 : vector<1x1x128xf32> to vector<8x16x128xf32>
    %55 = arith.mulf %50, %54 : vector<8x16x128xf32>
    %56 = arith.addf %49, %55 : vector<8x16x128xf32>
    %57 = vector.extract_strided_slice %21 {offsets = [5, 0, 0], sizes = [8, 16, 128], strides = [1, 1, 1]} : vector<14x16x128xf32> to vector<8x16x128xf32>
    %58 = vector.extract_strided_slice %14 {offsets = [35, 0], sizes = [1, 128], strides = [1, 1]} : vector<49x128xf32> to vector<1x128xf32>
    %59 = vector.shape_cast %58 : vector<1x128xf32> to vector<128xf32>
    %60 = vector.shape_cast %59 : vector<128xf32> to vector<1x1x128xf32>
    %61 = vector.broadcast %60 : vector<1x1x128xf32> to vector<8x16x128xf32>
    %62 = arith.mulf %57, %61 : vector<8x16x128xf32>
    %63 = arith.addf %56, %62 : vector<8x16x128xf32>
    %64 = vector.extract_strided_slice %21 {offsets = [6, 0, 0], sizes = [8, 16, 128], strides = [1, 1, 1]} : vector<14x16x128xf32> to vector<8x16x128xf32>
    %65 = vector.extract_strided_slice %14 {offsets = [42, 0], sizes = [1, 128], strides = [1, 1]} : vector<49x128xf32> to vector<1x128xf32>
    %66 = vector.shape_cast %65 : vector<1x128xf32> to vector<128xf32>
    %67 = vector.shape_cast %66 : vector<128xf32> to vector<1x1x128xf32>
    %68 = vector.broadcast %67 : vector<1x1x128xf32> to vector<8x16x128xf32>
    %69 = arith.mulf %64, %68 : vector<8x16x128xf32>
    %70 = arith.addf %63, %69 : vector<8x16x128xf32>
    %71 = arith.index_cast %0 : i32 to index
    %c0_15 = arith.constant 0 : index
    %c6 = arith.constant 6 : index
    %c0_16 = arith.constant 0 : index
    %72 = vector.load %arg11[%71, %c0_15, %c6, %c0_16] : memref<2x22x32x128xf32, #tpu.memory_space<vmem>>, vector<1x14x16x128xf32>
    %73 = vector.shape_cast %72 : vector<1x14x16x128xf32> to vector<14x16x128xf32>
    %74 = vector.extract_strided_slice %73 {offsets = [0, 0, 0], sizes = [8, 16, 128], strides = [1, 1, 1]} : vector<14x16x128xf32> to vector<8x16x128xf32>
    %75 = vector.extract_strided_slice %14 {offsets = [1, 0], sizes = [1, 128], strides = [1, 1]} : vector<49x128xf32> to vector<1x128xf32>
    %76 = vector.shape_cast %75 : vector<1x128xf32> to vector<128xf32>
    %77 = vector.shape_cast %76 : vector<128xf32> to vector<1x1x128xf32>
    %78 = vector.broadcast %77 : vector<1x1x128xf32> to vector<8x16x128xf32>
    %79 = arith.mulf %74, %78 : vector<8x16x128xf32>
    %80 = arith.addf %70, %79 : vector<8x16x128xf32>
    %81 = vector.extract_strided_slice %73 {offsets = [1, 0, 0], sizes = [8, 16, 128], strides = [1, 1, 1]} : vector<14x16x128xf32> to vector<8x16x128xf32>
    %82 = vector.extract_strided_slice %14 {offsets = [8, 0], sizes = [1, 128], strides = [1, 1]} : vector<49x128xf32> to vector<1x128xf32>
    %83 = vector.shape_cast %82 : vector<1x128xf32> to vector<128xf32>
    %84 = vector.shape_cast %83 : vector<128xf32> to vector<1x1x128xf32>
    %85 = vector.broadcast %84 : vector<1x1x128xf32> to vector<8x16x128xf32>
    %86 = arith.mulf %81, %85 : vector<8x16x128xf32>
    %87 = arith.addf %80, %86 : vector<8x16x128xf32>
    %88 = vector.extract_strided_slice %73 {offsets = [2, 0, 0], sizes = [8, 16, 128], strides = [1, 1, 1]} : vector<14x16x128xf32> to vector<8x16x128xf32>
    %89 = vector.extract_strided_slice %14 {offsets = [15, 0], sizes = [1, 128], strides = [1, 1]} : vector<49x128xf32> to vector<1x128xf32>
    %90 = vector.shape_cast %89 : vector<1x128xf32> to vector<128xf32>
    %91 = vector.shape_cast %90 : vector<128xf32> to vector<1x1x128xf32>
    %92 = vector.broadcast %91 : vector<1x1x128xf32> to vector<8x16x128xf32>
    %93 = arith.mulf %88, %92 : vector<8x16x128xf32>
    %94 = arith.addf %87, %93 : vector<8x16x128xf32>
    %95 = vector.extract_strided_slice %73 {offsets = [3, 0, 0], sizes = [8, 16, 128], strides = [1, 1, 1]} : vector<14x16x128xf32> to vector<8x16x128xf32>
    %96 = vector.extract_strided_slice %14 {offsets = [22, 0], sizes = [1, 128], strides = [1, 1]} : vector<49x128xf32> to vector<1x128xf32>
    %97 = vector.shape_cast %96 : vector<1x128xf32> to vector<128xf32>
    %98 = vector.shape_cast %97 : vector<128xf32> to vector<1x1x128xf32>
    %99 = vector.broadcast %98 : vector<1x1x128xf32> to vector<8x16x128xf32>
    %100 = arith.mulf %95, %99 : vector<8x16x128xf32>
    %101 = arith.addf %94, %100 : vector<8x16x128xf32>
    %102 = vector.extract_strided_slice %73 {offsets = [4, 0, 0], sizes = [8, 16, 128], strides = [1, 1, 1]} : vector<14x16x128xf32> to vector<8x16x128xf32>
    %103 = vector.extract_strided_slice %14 {offsets = [29, 0], sizes = [1, 128], strides = [1, 1]} : vector<49x128xf32> to vector<1x128xf32>
    %104 = vector.shape_cast %103 : vector<1x128xf32> to vector<128xf32>
    %105 = vector.shape_cast %104 : vector<128xf32> to vector<1x1x128xf32>
    %106 = vector.broadcast %105 : vector<1x1x128xf32> to vector<8x16x128xf32>
    %107 = arith.mulf %102, %106 : vector<8x16x128xf32>
    %108 = arith.addf %101, %107 : vector<8x16x128xf32>
    %109 = vector.extract_strided_slice %73 {offsets = [5, 0, 0], sizes = [8, 16, 128], strides = [1, 1, 1]} : vector<14x16x128xf32> to vector<8x16x128xf32>
    %110 = vector.extract_strided_slice %14 {offsets = [36, 0], sizes = [1, 128], strides = [1, 1]} : vector<49x128xf32> to vector<1x128xf32>
    %111 = vector.shape_cast %110 : vector<1x128xf32> to vector<128xf32>
    %112 = vector.shape_cast %111 : vector<128xf32> to vector<1x1x128xf32>
    %113 = vector.broadcast %112 : vector<1x1x128xf32> to vector<8x16x128xf32>
    %114 = arith.mulf %109, %113 : vector<8x16x128xf32>
    %115 = arith.addf %108, %114 : vector<8x16x128xf32>
    %116 = vector.extract_strided_slice %73 {offsets = [6, 0, 0], sizes = [8, 16, 128], strides = [1, 1, 1]} : vector<14x16x128xf32> to vector<8x16x128xf32>
    %117 = vector.extract_strided_slice %14 {offsets = [43, 0], sizes = [1, 128], strides = [1, 1]} : vector<49x128xf32> to vector<1x128xf32>
    %118 = vector.shape_cast %117 : vector<1x128xf32> to vector<128xf32>
    %119 = vector.shape_cast %118 : vector<128xf32> to vector<1x1x128xf32>
    %120 = vector.broadcast %119 : vector<1x1x128xf32> to vector<8x16x128xf32>
    %121 = arith.mulf %116, %120 : vector<8x16x128xf32>
    %122 = arith.addf %115, %121 : vector<8x16x128xf32>
    %123 = arith.index_cast %0 : i32 to index
    %c0_17 = arith.constant 0 : index
    %c7 = arith.constant 7 : index
    %c0_18 = arith.constant 0 : index
    %124 = vector.load %arg11[%123, %c0_17, %c7, %c0_18] : memref<2x22x32x128xf32, #tpu.memory_space<vmem>>, vector<1x14x16x128xf32>
    %125 = vector.shape_cast %124 : vector<1x14x16x128xf32> to vector<14x16x128xf32>
    %126 = vector.extract_strided_slice %125 {offsets = [0, 0, 0], sizes = [8, 16, 128], strides = [1, 1, 1]} : vector<14x16x128xf32> to vector<8x16x128xf32>
    %127 = vector.extract_strided_slice %14 {offsets = [2, 0], sizes = [1, 128], strides = [1, 1]} : vector<49x128xf32> to vector<1x128xf32>
    %128 = vector.shape_cast %127 : vector<1x128xf32> to vector<128xf32>
    %129 = vector.shape_cast %128 : vector<128xf32> to vector<1x1x128xf32>
    %130 = vector.broadcast %129 : vector<1x1x128xf32> to vector<8x16x128xf32>
    %131 = arith.mulf %126, %130 : vector<8x16x128xf32>
    %132 = arith.addf %122, %131 : vector<8x16x128xf32>
    %133 = vector.extract_strided_slice %125 {offsets = [1, 0, 0], sizes = [8, 16, 128], strides = [1, 1, 1]} : vector<14x16x128xf32> to vector<8x16x128xf32>
    %134 = vector.extract_strided_slice %14 {offsets = [9, 0], sizes = [1, 128], strides = [1, 1]} : vector<49x128xf32> to vector<1x128xf32>
    %135 = vector.shape_cast %134 : vector<1x128xf32> to vector<128xf32>
    %136 = vector.shape_cast %135 : vector<128xf32> to vector<1x1x128xf32>
    %137 = vector.broadcast %136 : vector<1x1x128xf32> to vector<8x16x128xf32>
    %138 = arith.mulf %133, %137 : vector<8x16x128xf32>
    %139 = arith.addf %132, %138 : vector<8x16x128xf32>
    %140 = vector.extract_strided_slice %125 {offsets = [2, 0, 0], sizes = [8, 16, 128], strides = [1, 1, 1]} : vector<14x16x128xf32> to vector<8x16x128xf32>
    %141 = vector.extract_strided_slice %14 {offsets = [16, 0], sizes = [1, 128], strides = [1, 1]} : vector<49x128xf32> to vector<1x128xf32>
    %142 = vector.shape_cast %141 : vector<1x128xf32> to vector<128xf32>
    %143 = vector.shape_cast %142 : vector<128xf32> to vector<1x1x128xf32>
    %144 = vector.broadcast %143 : vector<1x1x128xf32> to vector<8x16x128xf32>
    %145 = arith.mulf %140, %144 : vector<8x16x128xf32>
    %146 = arith.addf %139, %145 : vector<8x16x128xf32>
    %147 = vector.extract_strided_slice %125 {offsets = [3, 0, 0], sizes = [8, 16, 128], strides = [1, 1, 1]} : vector<14x16x128xf32> to vector<8x16x128xf32>
    %148 = vector.extract_strided_slice %14 {offsets = [23, 0], sizes = [1, 128], strides = [1, 1]} : vector<49x128xf32> to vector<1x128xf32>
    %149 = vector.shape_cast %148 : vector<1x128xf32> to vector<128xf32>
    %150 = vector.shape_cast %149 : vector<128xf32> to vector<1x1x128xf32>
    %151 = vector.broadcast %150 : vector<1x1x128xf32> to vector<8x16x128xf32>
    %152 = arith.mulf %147, %151 : vector<8x16x128xf32>
    %153 = arith.addf %146, %152 : vector<8x16x128xf32>
    %154 = vector.extract_strided_slice %125 {offsets = [4, 0, 0], sizes = [8, 16, 128], strides = [1, 1, 1]} : vector<14x16x128xf32> to vector<8x16x128xf32>
    %155 = vector.extract_strided_slice %14 {offsets = [30, 0], sizes = [1, 128], strides = [1, 1]} : vector<49x128xf32> to vector<1x128xf32>
    %156 = vector.shape_cast %155 : vector<1x128xf32> to vector<128xf32>
    %157 = vector.shape_cast %156 : vector<128xf32> to vector<1x1x128xf32>
    %158 = vector.broadcast %157 : vector<1x1x128xf32> to vector<8x16x128xf32>
    %159 = arith.mulf %154, %158 : vector<8x16x128xf32>
    %160 = arith.addf %153, %159 : vector<8x16x128xf32>
    %161 = vector.extract_strided_slice %125 {offsets = [5, 0, 0], sizes = [8, 16, 128], strides = [1, 1, 1]} : vector<14x16x128xf32> to vector<8x16x128xf32>
    %162 = vector.extract_strided_slice %14 {offsets = [37, 0], sizes = [1, 128], strides = [1, 1]} : vector<49x128xf32> to vector<1x128xf32>
    %163 = vector.shape_cast %162 : vector<1x128xf32> to vector<128xf32>
    %164 = vector.shape_cast %163 : vector<128xf32> to vector<1x1x128xf32>
    %165 = vector.broadcast %164 : vector<1x1x128xf32> to vector<8x16x128xf32>
    %166 = arith.mulf %161, %165 : vector<8x16x128xf32>
    %167 = arith.addf %160, %166 : vector<8x16x128xf32>
    %168 = vector.extract_strided_slice %125 {offsets = [6, 0, 0], sizes = [8, 16, 128], strides = [1, 1, 1]} : vector<14x16x128xf32> to vector<8x16x128xf32>
    %169 = vector.extract_strided_slice %14 {offsets = [44, 0], sizes = [1, 128], strides = [1, 1]} : vector<49x128xf32> to vector<1x128xf32>
    %170 = vector.shape_cast %169 : vector<1x128xf32> to vector<128xf32>
    %171 = vector.shape_cast %170 : vector<128xf32> to vector<1x1x128xf32>
    %172 = vector.broadcast %171 : vector<1x1x128xf32> to vector<8x16x128xf32>
    %173 = arith.mulf %168, %172 : vector<8x16x128xf32>
    %174 = arith.addf %167, %173 : vector<8x16x128xf32>
    %175 = arith.index_cast %0 : i32 to index
    %c0_19 = arith.constant 0 : index
    %c8 = arith.constant 8 : index
    %c0_20 = arith.constant 0 : index
    %176 = vector.load %arg11[%175, %c0_19, %c8, %c0_20] : memref<2x22x32x128xf32, #tpu.memory_space<vmem>>, vector<1x14x16x128xf32>
    %177 = vector.shape_cast %176 : vector<1x14x16x128xf32> to vector<14x16x128xf32>
    %178 = vector.extract_strided_slice %177 {offsets = [0, 0, 0], sizes = [8, 16, 128], strides = [1, 1, 1]} : vector<14x16x128xf32> to vector<8x16x128xf32>
    %179 = vector.extract_strided_slice %14 {offsets = [3, 0], sizes = [1, 128], strides = [1, 1]} : vector<49x128xf32> to vector<1x128xf32>
    %180 = vector.shape_cast %179 : vector<1x128xf32> to vector<128xf32>
    %181 = vector.shape_cast %180 : vector<128xf32> to vector<1x1x128xf32>
    %182 = vector.broadcast %181 : vector<1x1x128xf32> to vector<8x16x128xf32>
    %183 = arith.mulf %178, %182 : vector<8x16x128xf32>
    %184 = arith.addf %174, %183 : vector<8x16x128xf32>
    %185 = vector.extract_strided_slice %177 {offsets = [1, 0, 0], sizes = [8, 16, 128], strides = [1, 1, 1]} : vector<14x16x128xf32> to vector<8x16x128xf32>
    %186 = vector.extract_strided_slice %14 {offsets = [10, 0], sizes = [1, 128], strides = [1, 1]} : vector<49x128xf32> to vector<1x128xf32>
    %187 = vector.shape_cast %186 : vector<1x128xf32> to vector<128xf32>
    %188 = vector.shape_cast %187 : vector<128xf32> to vector<1x1x128xf32>
    %189 = vector.broadcast %188 : vector<1x1x128xf32> to vector<8x16x128xf32>
    %190 = arith.mulf %185, %189 : vector<8x16x128xf32>
    %191 = arith.addf %184, %190 : vector<8x16x128xf32>
    %192 = vector.extract_strided_slice %177 {offsets = [2, 0, 0], sizes = [8, 16, 128], strides = [1, 1, 1]} : vector<14x16x128xf32> to vector<8x16x128xf32>
    %193 = vector.extract_strided_slice %14 {offsets = [17, 0], sizes = [1, 128], strides = [1, 1]} : vector<49x128xf32> to vector<1x128xf32>
    %194 = vector.shape_cast %193 : vector<1x128xf32> to vector<128xf32>
    %195 = vector.shape_cast %194 : vector<128xf32> to vector<1x1x128xf32>
    %196 = vector.broadcast %195 : vector<1x1x128xf32> to vector<8x16x128xf32>
    %197 = arith.mulf %192, %196 : vector<8x16x128xf32>
    %198 = arith.addf %191, %197 : vector<8x16x128xf32>
    %199 = vector.extract_strided_slice %177 {offsets = [3, 0, 0], sizes = [8, 16, 128], strides = [1, 1, 1]} : vector<14x16x128xf32> to vector<8x16x128xf32>
    %200 = vector.extract_strided_slice %14 {offsets = [24, 0], sizes = [1, 128], strides = [1, 1]} : vector<49x128xf32> to vector<1x128xf32>
    %201 = vector.shape_cast %200 : vector<1x128xf32> to vector<128xf32>
    %202 = vector.shape_cast %201 : vector<128xf32> to vector<1x1x128xf32>
    %203 = vector.broadcast %202 : vector<1x1x128xf32> to vector<8x16x128xf32>
    %204 = arith.mulf %199, %203 : vector<8x16x128xf32>
    %205 = arith.addf %198, %204 : vector<8x16x128xf32>
    %206 = vector.extract_strided_slice %177 {offsets = [4, 0, 0], sizes = [8, 16, 128], strides = [1, 1, 1]} : vector<14x16x128xf32> to vector<8x16x128xf32>
    %207 = vector.extract_strided_slice %14 {offsets = [31, 0], sizes = [1, 128], strides = [1, 1]} : vector<49x128xf32> to vector<1x128xf32>
    %208 = vector.shape_cast %207 : vector<1x128xf32> to vector<128xf32>
    %209 = vector.shape_cast %208 : vector<128xf32> to vector<1x1x128xf32>
    %210 = vector.broadcast %209 : vector<1x1x128xf32> to vector<8x16x128xf32>
    %211 = arith.mulf %206, %210 : vector<8x16x128xf32>
    %212 = arith.addf %205, %211 : vector<8x16x128xf32>
    %213 = vector.extract_strided_slice %177 {offsets = [5, 0, 0], sizes = [8, 16, 128], strides = [1, 1, 1]} : vector<14x16x128xf32> to vector<8x16x128xf32>
    %214 = vector.extract_strided_slice %14 {offsets = [38, 0], sizes = [1, 128], strides = [1, 1]} : vector<49x128xf32> to vector<1x128xf32>
    %215 = vector.shape_cast %214 : vector<1x128xf32> to vector<128xf32>
    %216 = vector.shape_cast %215 : vector<128xf32> to vector<1x1x128xf32>
    %217 = vector.broadcast %216 : vector<1x1x128xf32> to vector<8x16x128xf32>
    %218 = arith.mulf %213, %217 : vector<8x16x128xf32>
    %219 = arith.addf %212, %218 : vector<8x16x128xf32>
    %220 = vector.extract_strided_slice %177 {offsets = [6, 0, 0], sizes = [8, 16, 128], strides = [1, 1, 1]} : vector<14x16x128xf32> to vector<8x16x128xf32>
    %221 = vector.extract_strided_slice %14 {offsets = [45, 0], sizes = [1, 128], strides = [1, 1]} : vector<49x128xf32> to vector<1x128xf32>
    %222 = vector.shape_cast %221 : vector<1x128xf32> to vector<128xf32>
    %223 = vector.shape_cast %222 : vector<128xf32> to vector<1x1x128xf32>
    %224 = vector.broadcast %223 : vector<1x1x128xf32> to vector<8x16x128xf32>
    %225 = arith.mulf %220, %224 : vector<8x16x128xf32>
    %226 = arith.addf %219, %225 : vector<8x16x128xf32>
    %227 = arith.index_cast %0 : i32 to index
    %c0_21 = arith.constant 0 : index
    %c9 = arith.constant 9 : index
    %c0_22 = arith.constant 0 : index
    %228 = vector.load %arg11[%227, %c0_21, %c9, %c0_22] : memref<2x22x32x128xf32, #tpu.memory_space<vmem>>, vector<1x14x16x128xf32>
    %229 = vector.shape_cast %228 : vector<1x14x16x128xf32> to vector<14x16x128xf32>
    %230 = vector.extract_strided_slice %229 {offsets = [0, 0, 0], sizes = [8, 16, 128], strides = [1, 1, 1]} : vector<14x16x128xf32> to vector<8x16x128xf32>
    %231 = vector.extract_strided_slice %14 {offsets = [4, 0], sizes = [1, 128], strides = [1, 1]} : vector<49x128xf32> to vector<1x128xf32>
    %232 = vector.shape_cast %231 : vector<1x128xf32> to vector<128xf32>
    %233 = vector.shape_cast %232 : vector<128xf32> to vector<1x1x128xf32>
    %234 = vector.broadcast %233 : vector<1x1x128xf32> to vector<8x16x128xf32>
    %235 = arith.mulf %230, %234 : vector<8x16x128xf32>
    %236 = arith.addf %226, %235 : vector<8x16x128xf32>
    %237 = vector.extract_strided_slice %229 {offsets = [1, 0, 0], sizes = [8, 16, 128], strides = [1, 1, 1]} : vector<14x16x128xf32> to vector<8x16x128xf32>
    %238 = vector.extract_strided_slice %14 {offsets = [11, 0], sizes = [1, 128], strides = [1, 1]} : vector<49x128xf32> to vector<1x128xf32>
    %239 = vector.shape_cast %238 : vector<1x128xf32> to vector<128xf32>
    %240 = vector.shape_cast %239 : vector<128xf32> to vector<1x1x128xf32>
    %241 = vector.broadcast %240 : vector<1x1x128xf32> to vector<8x16x128xf32>
    %242 = arith.mulf %237, %241 : vector<8x16x128xf32>
    %243 = arith.addf %236, %242 : vector<8x16x128xf32>
    %244 = vector.extract_strided_slice %229 {offsets = [2, 0, 0], sizes = [8, 16, 128], strides = [1, 1, 1]} : vector<14x16x128xf32> to vector<8x16x128xf32>
    %245 = vector.extract_strided_slice %14 {offsets = [18, 0], sizes = [1, 128], strides = [1, 1]} : vector<49x128xf32> to vector<1x128xf32>
    %246 = vector.shape_cast %245 : vector<1x128xf32> to vector<128xf32>
    %247 = vector.shape_cast %246 : vector<128xf32> to vector<1x1x128xf32>
    %248 = vector.broadcast %247 : vector<1x1x128xf32> to vector<8x16x128xf32>
    %249 = arith.mulf %244, %248 : vector<8x16x128xf32>
    %250 = arith.addf %243, %249 : vector<8x16x128xf32>
    %251 = vector.extract_strided_slice %229 {offsets = [3, 0, 0], sizes = [8, 16, 128], strides = [1, 1, 1]} : vector<14x16x128xf32> to vector<8x16x128xf32>
    %252 = vector.extract_strided_slice %14 {offsets = [25, 0], sizes = [1, 128], strides = [1, 1]} : vector<49x128xf32> to vector<1x128xf32>
    %253 = vector.shape_cast %252 : vector<1x128xf32> to vector<128xf32>
    %254 = vector.shape_cast %253 : vector<128xf32> to vector<1x1x128xf32>
    %255 = vector.broadcast %254 : vector<1x1x128xf32> to vector<8x16x128xf32>
    %256 = arith.mulf %251, %255 : vector<8x16x128xf32>
    %257 = arith.addf %250, %256 : vector<8x16x128xf32>
    %258 = vector.extract_strided_slice %229 {offsets = [4, 0, 0], sizes = [8, 16, 128], strides = [1, 1, 1]} : vector<14x16x128xf32> to vector<8x16x128xf32>
    %259 = vector.extract_strided_slice %14 {offsets = [32, 0], sizes = [1, 128], strides = [1, 1]} : vector<49x128xf32> to vector<1x128xf32>
    %260 = vector.shape_cast %259 : vector<1x128xf32> to vector<128xf32>
    %261 = vector.shape_cast %260 : vector<128xf32> to vector<1x1x128xf32>
    %262 = vector.broadcast %261 : vector<1x1x128xf32> to vector<8x16x128xf32>
    %263 = arith.mulf %258, %262 : vector<8x16x128xf32>
    %264 = arith.addf %257, %263 : vector<8x16x128xf32>
    %265 = vector.extract_strided_slice %229 {offsets = [5, 0, 0], sizes = [8, 16, 128], strides = [1, 1, 1]} : vector<14x16x128xf32> to vector<8x16x128xf32>
    %266 = vector.extract_strided_slice %14 {offsets = [39, 0], sizes = [1, 128], strides = [1, 1]} : vector<49x128xf32> to vector<1x128xf32>
    %267 = vector.shape_cast %266 : vector<1x128xf32> to vector<128xf32>
    %268 = vector.shape_cast %267 : vector<128xf32> to vector<1x1x128xf32>
    %269 = vector.broadcast %268 : vector<1x1x128xf32> to vector<8x16x128xf32>
    %270 = arith.mulf %265, %269 : vector<8x16x128xf32>
    %271 = arith.addf %264, %270 : vector<8x16x128xf32>
    %272 = vector.extract_strided_slice %229 {offsets = [6, 0, 0], sizes = [8, 16, 128], strides = [1, 1, 1]} : vector<14x16x128xf32> to vector<8x16x128xf32>
    %273 = vector.extract_strided_slice %14 {offsets = [46, 0], sizes = [1, 128], strides = [1, 1]} : vector<49x128xf32> to vector<1x128xf32>
    %274 = vector.shape_cast %273 : vector<1x128xf32> to vector<128xf32>
    %275 = vector.shape_cast %274 : vector<128xf32> to vector<1x1x128xf32>
    %276 = vector.broadcast %275 : vector<1x1x128xf32> to vector<8x16x128xf32>
    %277 = arith.mulf %272, %276 : vector<8x16x128xf32>
    %278 = arith.addf %271, %277 : vector<8x16x128xf32>
    %279 = arith.index_cast %0 : i32 to index
    %c0_23 = arith.constant 0 : index
    %c10 = arith.constant 10 : index
    %c0_24 = arith.constant 0 : index
    %280 = vector.load %arg11[%279, %c0_23, %c10, %c0_24] : memref<2x22x32x128xf32, #tpu.memory_space<vmem>>, vector<1x14x16x128xf32>
    %281 = vector.shape_cast %280 : vector<1x14x16x128xf32> to vector<14x16x128xf32>
    %282 = vector.extract_strided_slice %281 {offsets = [0, 0, 0], sizes = [8, 16, 128], strides = [1, 1, 1]} : vector<14x16x128xf32> to vector<8x16x128xf32>
    %283 = vector.extract_strided_slice %14 {offsets = [5, 0], sizes = [1, 128], strides = [1, 1]} : vector<49x128xf32> to vector<1x128xf32>
    %284 = vector.shape_cast %283 : vector<1x128xf32> to vector<128xf32>
    %285 = vector.shape_cast %284 : vector<128xf32> to vector<1x1x128xf32>
    %286 = vector.broadcast %285 : vector<1x1x128xf32> to vector<8x16x128xf32>
    %287 = arith.mulf %282, %286 : vector<8x16x128xf32>
    %288 = arith.addf %278, %287 : vector<8x16x128xf32>
    %289 = vector.extract_strided_slice %281 {offsets = [1, 0, 0], sizes = [8, 16, 128], strides = [1, 1, 1]} : vector<14x16x128xf32> to vector<8x16x128xf32>
    %290 = vector.extract_strided_slice %14 {offsets = [12, 0], sizes = [1, 128], strides = [1, 1]} : vector<49x128xf32> to vector<1x128xf32>
    %291 = vector.shape_cast %290 : vector<1x128xf32> to vector<128xf32>
    %292 = vector.shape_cast %291 : vector<128xf32> to vector<1x1x128xf32>
    %293 = vector.broadcast %292 : vector<1x1x128xf32> to vector<8x16x128xf32>
    %294 = arith.mulf %289, %293 : vector<8x16x128xf32>
    %295 = arith.addf %288, %294 : vector<8x16x128xf32>
    %296 = vector.extract_strided_slice %281 {offsets = [2, 0, 0], sizes = [8, 16, 128], strides = [1, 1, 1]} : vector<14x16x128xf32> to vector<8x16x128xf32>
    %297 = vector.extract_strided_slice %14 {offsets = [19, 0], sizes = [1, 128], strides = [1, 1]} : vector<49x128xf32> to vector<1x128xf32>
    %298 = vector.shape_cast %297 : vector<1x128xf32> to vector<128xf32>
    %299 = vector.shape_cast %298 : vector<128xf32> to vector<1x1x128xf32>
    %300 = vector.broadcast %299 : vector<1x1x128xf32> to vector<8x16x128xf32>
    %301 = arith.mulf %296, %300 : vector<8x16x128xf32>
    %302 = arith.addf %295, %301 : vector<8x16x128xf32>
    %303 = vector.extract_strided_slice %281 {offsets = [3, 0, 0], sizes = [8, 16, 128], strides = [1, 1, 1]} : vector<14x16x128xf32> to vector<8x16x128xf32>
    %304 = vector.extract_strided_slice %14 {offsets = [26, 0], sizes = [1, 128], strides = [1, 1]} : vector<49x128xf32> to vector<1x128xf32>
    %305 = vector.shape_cast %304 : vector<1x128xf32> to vector<128xf32>
    %306 = vector.shape_cast %305 : vector<128xf32> to vector<1x1x128xf32>
    %307 = vector.broadcast %306 : vector<1x1x128xf32> to vector<8x16x128xf32>
    %308 = arith.mulf %303, %307 : vector<8x16x128xf32>
    %309 = arith.addf %302, %308 : vector<8x16x128xf32>
    %310 = vector.extract_strided_slice %281 {offsets = [4, 0, 0], sizes = [8, 16, 128], strides = [1, 1, 1]} : vector<14x16x128xf32> to vector<8x16x128xf32>
    %311 = vector.extract_strided_slice %14 {offsets = [33, 0], sizes = [1, 128], strides = [1, 1]} : vector<49x128xf32> to vector<1x128xf32>
    %312 = vector.shape_cast %311 : vector<1x128xf32> to vector<128xf32>
    %313 = vector.shape_cast %312 : vector<128xf32> to vector<1x1x128xf32>
    %314 = vector.broadcast %313 : vector<1x1x128xf32> to vector<8x16x128xf32>
    %315 = arith.mulf %310, %314 : vector<8x16x128xf32>
    %316 = arith.addf %309, %315 : vector<8x16x128xf32>
    %317 = vector.extract_strided_slice %281 {offsets = [5, 0, 0], sizes = [8, 16, 128], strides = [1, 1, 1]} : vector<14x16x128xf32> to vector<8x16x128xf32>
    %318 = vector.extract_strided_slice %14 {offsets = [40, 0], sizes = [1, 128], strides = [1, 1]} : vector<49x128xf32> to vector<1x128xf32>
    %319 = vector.shape_cast %318 : vector<1x128xf32> to vector<128xf32>
    %320 = vector.shape_cast %319 : vector<128xf32> to vector<1x1x128xf32>
    %321 = vector.broadcast %320 : vector<1x1x128xf32> to vector<8x16x128xf32>
    %322 = arith.mulf %317, %321 : vector<8x16x128xf32>
    %323 = arith.addf %316, %322 : vector<8x16x128xf32>
    %324 = vector.extract_strided_slice %281 {offsets = [6, 0, 0], sizes = [8, 16, 128], strides = [1, 1, 1]} : vector<14x16x128xf32> to vector<8x16x128xf32>
    %325 = vector.extract_strided_slice %14 {offsets = [47, 0], sizes = [1, 128], strides = [1, 1]} : vector<49x128xf32> to vector<1x128xf32>
    %326 = vector.shape_cast %325 : vector<1x128xf32> to vector<128xf32>
    %327 = vector.shape_cast %326 : vector<128xf32> to vector<1x1x128xf32>
    %328 = vector.broadcast %327 : vector<1x1x128xf32> to vector<8x16x128xf32>
    %329 = arith.mulf %324, %328 : vector<8x16x128xf32>
    %330 = arith.addf %323, %329 : vector<8x16x128xf32>
    %331 = arith.index_cast %0 : i32 to index
    %c0_25 = arith.constant 0 : index
    %c11 = arith.constant 11 : index
    %c0_26 = arith.constant 0 : index
    %332 = vector.load %arg11[%331, %c0_25, %c11, %c0_26] : memref<2x22x32x128xf32, #tpu.memory_space<vmem>>, vector<1x14x16x128xf32>
    %333 = vector.shape_cast %332 : vector<1x14x16x128xf32> to vector<14x16x128xf32>
    %334 = vector.extract_strided_slice %333 {offsets = [0, 0, 0], sizes = [8, 16, 128], strides = [1, 1, 1]} : vector<14x16x128xf32> to vector<8x16x128xf32>
    %335 = vector.extract_strided_slice %14 {offsets = [6, 0], sizes = [1, 128], strides = [1, 1]} : vector<49x128xf32> to vector<1x128xf32>
    %336 = vector.shape_cast %335 : vector<1x128xf32> to vector<128xf32>
    %337 = vector.shape_cast %336 : vector<128xf32> to vector<1x1x128xf32>
    %338 = vector.broadcast %337 : vector<1x1x128xf32> to vector<8x16x128xf32>
    %339 = arith.mulf %334, %338 : vector<8x16x128xf32>
    %340 = arith.addf %330, %339 : vector<8x16x128xf32>
    %341 = vector.extract_strided_slice %333 {offsets = [1, 0, 0], sizes = [8, 16, 128], strides = [1, 1, 1]} : vector<14x16x128xf32> to vector<8x16x128xf32>
    %342 = vector.extract_strided_slice %14 {offsets = [13, 0], sizes = [1, 128], strides = [1, 1]} : vector<49x128xf32> to vector<1x128xf32>
    %343 = vector.shape_cast %342 : vector<1x128xf32> to vector<128xf32>
    %344 = vector.shape_cast %343 : vector<128xf32> to vector<1x1x128xf32>
    %345 = vector.broadcast %344 : vector<1x1x128xf32> to vector<8x16x128xf32>
    %346 = arith.mulf %341, %345 : vector<8x16x128xf32>
    %347 = arith.addf %340, %346 : vector<8x16x128xf32>
    %348 = vector.extract_strided_slice %333 {offsets = [2, 0, 0], sizes = [8, 16, 128], strides = [1, 1, 1]} : vector<14x16x128xf32> to vector<8x16x128xf32>
    %349 = vector.extract_strided_slice %14 {offsets = [20, 0], sizes = [1, 128], strides = [1, 1]} : vector<49x128xf32> to vector<1x128xf32>
    %350 = vector.shape_cast %349 : vector<1x128xf32> to vector<128xf32>
    %351 = vector.shape_cast %350 : vector<128xf32> to vector<1x1x128xf32>
    %352 = vector.broadcast %351 : vector<1x1x128xf32> to vector<8x16x128xf32>
    %353 = arith.mulf %348, %352 : vector<8x16x128xf32>
    %354 = arith.addf %347, %353 : vector<8x16x128xf32>
    %355 = vector.extract_strided_slice %333 {offsets = [3, 0, 0], sizes = [8, 16, 128], strides = [1, 1, 1]} : vector<14x16x128xf32> to vector<8x16x128xf32>
    %356 = vector.extract_strided_slice %14 {offsets = [27, 0], sizes = [1, 128], strides = [1, 1]} : vector<49x128xf32> to vector<1x128xf32>
    %357 = vector.shape_cast %356 : vector<1x128xf32> to vector<128xf32>
    %358 = vector.shape_cast %357 : vector<128xf32> to vector<1x1x128xf32>
    %359 = vector.broadcast %358 : vector<1x1x128xf32> to vector<8x16x128xf32>
    %360 = arith.mulf %355, %359 : vector<8x16x128xf32>
    %361 = arith.addf %354, %360 : vector<8x16x128xf32>
    %362 = vector.extract_strided_slice %333 {offsets = [4, 0, 0], sizes = [8, 16, 128], strides = [1, 1, 1]} : vector<14x16x128xf32> to vector<8x16x128xf32>
    %363 = vector.extract_strided_slice %14 {offsets = [34, 0], sizes = [1, 128], strides = [1, 1]} : vector<49x128xf32> to vector<1x128xf32>
    %364 = vector.shape_cast %363 : vector<1x128xf32> to vector<128xf32>
    %365 = vector.shape_cast %364 : vector<128xf32> to vector<1x1x128xf32>
    %366 = vector.broadcast %365 : vector<1x1x128xf32> to vector<8x16x128xf32>
    %367 = arith.mulf %362, %366 : vector<8x16x128xf32>
    %368 = arith.addf %361, %367 : vector<8x16x128xf32>
    %369 = vector.extract_strided_slice %333 {offsets = [5, 0, 0], sizes = [8, 16, 128], strides = [1, 1, 1]} : vector<14x16x128xf32> to vector<8x16x128xf32>
    %370 = vector.extract_strided_slice %14 {offsets = [41, 0], sizes = [1, 128], strides = [1, 1]} : vector<49x128xf32> to vector<1x128xf32>
    %371 = vector.shape_cast %370 : vector<1x128xf32> to vector<128xf32>
    %372 = vector.shape_cast %371 : vector<128xf32> to vector<1x1x128xf32>
    %373 = vector.broadcast %372 : vector<1x1x128xf32> to vector<8x16x128xf32>
    %374 = arith.mulf %369, %373 : vector<8x16x128xf32>
    %375 = arith.addf %368, %374 : vector<8x16x128xf32>
    %376 = vector.extract_strided_slice %333 {offsets = [6, 0, 0], sizes = [8, 16, 128], strides = [1, 1, 1]} : vector<14x16x128xf32> to vector<8x16x128xf32>
    %377 = vector.extract_strided_slice %14 {offsets = [48, 0], sizes = [1, 128], strides = [1, 1]} : vector<49x128xf32> to vector<1x128xf32>
    %378 = vector.shape_cast %377 : vector<1x128xf32> to vector<128xf32>
    %379 = vector.shape_cast %378 : vector<128xf32> to vector<1x1x128xf32>
    %380 = vector.broadcast %379 : vector<1x1x128xf32> to vector<8x16x128xf32>
    %381 = arith.mulf %376, %380 : vector<8x16x128xf32>
    %382 = arith.addf %375, %381 : vector<8x16x128xf32>
    %383 = vector.shape_cast %382 : vector<8x16x128xf32> to vector<128x128xf32>
    %384 = arith.truncf %383 : vector<128x128xf32> to vector<128x128xbf16>
    %c0_27 = arith.constant 0 : index
    %c0_28 = arith.constant 0 : index
    %385 = vector.load %arg13[%c0_27, %c0_28] : memref<256x128xbf16, #tpu.memory_space<vmem>>, vector<128x128xbf16>
    tpu.vector_store %arg13[%c0_27, %c0_28], %384 {strides = array<i32>} : memref<256x128xbf16, #tpu.memory_space<vmem>>, vector<128x128xbf16>,
    %386 = vector.shape_cast %16 : vector<1x1x128xf32> to vector<1x1x128xf32>
    %387 = vector.broadcast %386 : vector<1x1x128xf32> to vector<8x16x128xf32>
    %388 = arith.index_cast %0 : i32 to index
    %c8_29 = arith.constant 8 : index
    %c5_30 = arith.constant 5 : index
    %c0_31 = arith.constant 0 : index
    %389 = vector.load %arg11[%388, %c8_29, %c5_30, %c0_31] : memref<2x22x32x128xf32, #tpu.memory_space<vmem>>, vector<1x14x16x128xf32>
    %390 = vector.shape_cast %389 : vector<1x14x16x128xf32> to vector<14x16x128xf32>
    %391 = vector.extract_strided_slice %390 {offsets = [0, 0, 0], sizes = [8, 16, 128], strides = [1, 1, 1]} : vector<14x16x128xf32> to vector<8x16x128xf32>
    %392 = vector.extract_strided_slice %14 {offsets = [0, 0], sizes = [1, 128], strides = [1, 1]} : vector<49x128xf32> to vector<1x128xf32>
    %393 = vector.shape_cast %392 : vector<1x128xf32> to vector<128xf32>
    %394 = vector.shape_cast %393 : vector<128xf32> to vector<1x1x128xf32>
    %395 = vector.broadcast %394 : vector<1x1x128xf32> to vector<8x16x128xf32>
    %396 = arith.mulf %391, %395 : vector<8x16x128xf32>
    %397 = arith.addf %387, %396 : vector<8x16x128xf32>
    %398 = vector.extract_strided_slice %390 {offsets = [1, 0, 0], sizes = [8, 16, 128], strides = [1, 1, 1]} : vector<14x16x128xf32> to vector<8x16x128xf32>
    %399 = vector.extract_strided_slice %14 {offsets = [7, 0], sizes = [1, 128], strides = [1, 1]} : vector<49x128xf32> to vector<1x128xf32>
    %400 = vector.shape_cast %399 : vector<1x128xf32> to vector<128xf32>
    %401 = vector.shape_cast %400 : vector<128xf32> to vector<1x1x128xf32>
    %402 = vector.broadcast %401 : vector<1x1x128xf32> to vector<8x16x128xf32>
    %403 = arith.mulf %398, %402 : vector<8x16x128xf32>
    %404 = arith.addf %397, %403 : vector<8x16x128xf32>
    %405 = vector.extract_strided_slice %390 {offsets = [2, 0, 0], sizes = [8, 16, 128], strides = [1, 1, 1]} : vector<14x16x128xf32> to vector<8x16x128xf32>
    %406 = vector.extract_strided_slice %14 {offsets = [14, 0], sizes = [1, 128], strides = [1, 1]} : vector<49x128xf32> to vector<1x128xf32>
    %407 = vector.shape_cast %406 : vector<1x128xf32> to vector<128xf32>
    %408 = vector.shape_cast %407 : vector<128xf32> to vector<1x1x128xf32>
    %409 = vector.broadcast %408 : vector<1x1x128xf32> to vector<8x16x128xf32>
    %410 = arith.mulf %405, %409 : vector<8x16x128xf32>
    %411 = arith.addf %404, %410 : vector<8x16x128xf32>
    %412 = vector.extract_strided_slice %390 {offsets = [3, 0, 0], sizes = [8, 16, 128], strides = [1, 1, 1]} : vector<14x16x128xf32> to vector<8x16x128xf32>
    %413 = vector.extract_strided_slice %14 {offsets = [21, 0], sizes = [1, 128], strides = [1, 1]} : vector<49x128xf32> to vector<1x128xf32>
    %414 = vector.shape_cast %413 : vector<1x128xf32> to vector<128xf32>
    %415 = vector.shape_cast %414 : vector<128xf32> to vector<1x1x128xf32>
    %416 = vector.broadcast %415 : vector<1x1x128xf32> to vector<8x16x128xf32>
    %417 = arith.mulf %412, %416 : vector<8x16x128xf32>
    %418 = arith.addf %411, %417 : vector<8x16x128xf32>
    %419 = vector.extract_strided_slice %390 {offsets = [4, 0, 0], sizes = [8, 16, 128], strides = [1, 1, 1]} : vector<14x16x128xf32> to vector<8x16x128xf32>
    %420 = vector.extract_strided_slice %14 {offsets = [28, 0], sizes = [1, 128], strides = [1, 1]} : vector<49x128xf32> to vector<1x128xf32>
    %421 = vector.shape_cast %420 : vector<1x128xf32> to vector<128xf32>
    %422 = vector.shape_cast %421 : vector<128xf32> to vector<1x1x128xf32>
    %423 = vector.broadcast %422 : vector<1x1x128xf32> to vector<8x16x128xf32>
    %424 = arith.mulf %419, %423 : vector<8x16x128xf32>
    %425 = arith.addf %418, %424 : vector<8x16x128xf32>
    %426 = vector.extract_strided_slice %390 {offsets = [5, 0, 0], sizes = [8, 16, 128], strides = [1, 1, 1]} : vector<14x16x128xf32> to vector<8x16x128xf32>
    %427 = vector.extract_strided_slice %14 {offsets = [35, 0], sizes = [1, 128], strides = [1, 1]} : vector<49x128xf32> to vector<1x128xf32>
    %428 = vector.shape_cast %427 : vector<1x128xf32> to vector<128xf32>
    %429 = vector.shape_cast %428 : vector<128xf32> to vector<1x1x128xf32>
    %430 = vector.broadcast %429 : vector<1x1x128xf32> to vector<8x16x128xf32>
    %431 = arith.mulf %426, %430 : vector<8x16x128xf32>
    %432 = arith.addf %425, %431 : vector<8x16x128xf32>
    %433 = vector.extract_strided_slice %390 {offsets = [6, 0, 0], sizes = [8, 16, 128], strides = [1, 1, 1]} : vector<14x16x128xf32> to vector<8x16x128xf32>
    %434 = vector.extract_strided_slice %14 {offsets = [42, 0], sizes = [1, 128], strides = [1, 1]} : vector<49x128xf32> to vector<1x128xf32>
    %435 = vector.shape_cast %434 : vector<1x128xf32> to vector<128xf32>
    %436 = vector.shape_cast %435 : vector<128xf32> to vector<1x1x128xf32>
    %437 = vector.broadcast %436 : vector<1x1x128xf32> to vector<8x16x128xf32>
    %438 = arith.mulf %433, %437 : vector<8x16x128xf32>
    %439 = arith.addf %432, %438 : vector<8x16x128xf32>
    %440 = arith.index_cast %0 : i32 to index
    %c8_32 = arith.constant 8 : index
    %c6_33 = arith.constant 6 : index
    %c0_34 = arith.constant 0 : index
    %441 = vector.load %arg11[%440, %c8_32, %c6_33, %c0_34] : memref<2x22x32x128xf32, #tpu.memory_space<vmem>>, vector<1x14x16x128xf32>
    %442 = vector.shape_cast %441 : vector<1x14x16x128xf32> to vector<14x16x128xf32>
    %443 = vector.extract_strided_slice %442 {offsets = [0, 0, 0], sizes = [8, 16, 128], strides = [1, 1, 1]} : vector<14x16x128xf32> to vector<8x16x128xf32>
    %444 = vector.extract_strided_slice %14 {offsets = [1, 0], sizes = [1, 128], strides = [1, 1]} : vector<49x128xf32> to vector<1x128xf32>
    %445 = vector.shape_cast %444 : vector<1x128xf32> to vector<128xf32>
    %446 = vector.shape_cast %445 : vector<128xf32> to vector<1x1x128xf32>
    %447 = vector.broadcast %446 : vector<1x1x128xf32> to vector<8x16x128xf32>
    %448 = arith.mulf %443, %447 : vector<8x16x128xf32>
    %449 = arith.addf %439, %448 : vector<8x16x128xf32>
    %450 = vector.extract_strided_slice %442 {offsets = [1, 0, 0], sizes = [8, 16, 128], strides = [1, 1, 1]} : vector<14x16x128xf32> to vector<8x16x128xf32>
    %451 = vector.extract_strided_slice %14 {offsets = [8, 0], sizes = [1, 128], strides = [1, 1]} : vector<49x128xf32> to vector<1x128xf32>
    %452 = vector.shape_cast %451 : vector<1x128xf32> to vector<128xf32>
    %453 = vector.shape_cast %452 : vector<128xf32> to vector<1x1x128xf32>
    %454 = vector.broadcast %453 : vector<1x1x128xf32> to vector<8x16x128xf32>
    %455 = arith.mulf %450, %454 : vector<8x16x128xf32>
    %456 = arith.addf %449, %455 : vector<8x16x128xf32>
    %457 = vector.extract_strided_slice %442 {offsets = [2, 0, 0], sizes = [8, 16, 128], strides = [1, 1, 1]} : vector<14x16x128xf32> to vector<8x16x128xf32>
    %458 = vector.extract_strided_slice %14 {offsets = [15, 0], sizes = [1, 128], strides = [1, 1]} : vector<49x128xf32> to vector<1x128xf32>
    %459 = vector.shape_cast %458 : vector<1x128xf32> to vector<128xf32>
    %460 = vector.shape_cast %459 : vector<128xf32> to vector<1x1x128xf32>
    %461 = vector.broadcast %460 : vector<1x1x128xf32> to vector<8x16x128xf32>
    %462 = arith.mulf %457, %461 : vector<8x16x128xf32>
    %463 = arith.addf %456, %462 : vector<8x16x128xf32>
    %464 = vector.extract_strided_slice %442 {offsets = [3, 0, 0], sizes = [8, 16, 128], strides = [1, 1, 1]} : vector<14x16x128xf32> to vector<8x16x128xf32>
    %465 = vector.extract_strided_slice %14 {offsets = [22, 0], sizes = [1, 128], strides = [1, 1]} : vector<49x128xf32> to vector<1x128xf32>
    %466 = vector.shape_cast %465 : vector<1x128xf32> to vector<128xf32>
    %467 = vector.shape_cast %466 : vector<128xf32> to vector<1x1x128xf32>
    %468 = vector.broadcast %467 : vector<1x1x128xf32> to vector<8x16x128xf32>
    %469 = arith.mulf %464, %468 : vector<8x16x128xf32>
    %470 = arith.addf %463, %469 : vector<8x16x128xf32>
    %471 = vector.extract_strided_slice %442 {offsets = [4, 0, 0], sizes = [8, 16, 128], strides = [1, 1, 1]} : vector<14x16x128xf32> to vector<8x16x128xf32>
    %472 = vector.extract_strided_slice %14 {offsets = [29, 0], sizes = [1, 128], strides = [1, 1]} : vector<49x128xf32> to vector<1x128xf32>
    %473 = vector.shape_cast %472 : vector<1x128xf32> to vector<128xf32>
    %474 = vector.shape_cast %473 : vector<128xf32> to vector<1x1x128xf32>
    %475 = vector.broadcast %474 : vector<1x1x128xf32> to vector<8x16x128xf32>
    %476 = arith.mulf %471, %475 : vector<8x16x128xf32>
    %477 = arith.addf %470, %476 : vector<8x16x128xf32>
    %478 = vector.extract_strided_slice %442 {offsets = [5, 0, 0], sizes = [8, 16, 128], strides = [1, 1, 1]} : vector<14x16x128xf32> to vector<8x16x128xf32>
    %479 = vector.extract_strided_slice %14 {offsets = [36, 0], sizes = [1, 128], strides = [1, 1]} : vector<49x128xf32> to vector<1x128xf32>
    %480 = vector.shape_cast %479 : vector<1x128xf32> to vector<128xf32>
    %481 = vector.shape_cast %480 : vector<128xf32> to vector<1x1x128xf32>
    %482 = vector.broadcast %481 : vector<1x1x128xf32> to vector<8x16x128xf32>
    %483 = arith.mulf %478, %482 : vector<8x16x128xf32>
    %484 = arith.addf %477, %483 : vector<8x16x128xf32>
    %485 = vector.extract_strided_slice %442 {offsets = [6, 0, 0], sizes = [8, 16, 128], strides = [1, 1, 1]} : vector<14x16x128xf32> to vector<8x16x128xf32>
    %486 = vector.extract_strided_slice %14 {offsets = [43, 0], sizes = [1, 128], strides = [1, 1]} : vector<49x128xf32> to vector<1x128xf32>
    %487 = vector.shape_cast %486 : vector<1x128xf32> to vector<128xf32>
    %488 = vector.shape_cast %487 : vector<128xf32> to vector<1x1x128xf32>
    %489 = vector.broadcast %488 : vector<1x1x128xf32> to vector<8x16x128xf32>
    %490 = arith.mulf %485, %489 : vector<8x16x128xf32>
    %491 = arith.addf %484, %490 : vector<8x16x128xf32>
    %492 = arith.index_cast %0 : i32 to index
    %c8_35 = arith.constant 8 : index
    %c7_36 = arith.constant 7 : index
    %c0_37 = arith.constant 0 : index
    %493 = vector.load %arg11[%492, %c8_35, %c7_36, %c0_37] : memref<2x22x32x128xf32, #tpu.memory_space<vmem>>, vector<1x14x16x128xf32>
    %494 = vector.shape_cast %493 : vector<1x14x16x128xf32> to vector<14x16x128xf32>
    %495 = vector.extract_strided_slice %494 {offsets = [0, 0, 0], sizes = [8, 16, 128], strides = [1, 1, 1]} : vector<14x16x128xf32> to vector<8x16x128xf32>
    %496 = vector.extract_strided_slice %14 {offsets = [2, 0], sizes = [1, 128], strides = [1, 1]} : vector<49x128xf32> to vector<1x128xf32>
    %497 = vector.shape_cast %496 : vector<1x128xf32> to vector<128xf32>
    %498 = vector.shape_cast %497 : vector<128xf32> to vector<1x1x128xf32>
    %499 = vector.broadcast %498 : vector<1x1x128xf32> to vector<8x16x128xf32>
    %500 = arith.mulf %495, %499 : vector<8x16x128xf32>
    %501 = arith.addf %491, %500 : vector<8x16x128xf32>
    %502 = vector.extract_strided_slice %494 {offsets = [1, 0, 0], sizes = [8, 16, 128], strides = [1, 1, 1]} : vector<14x16x128xf32> to vector<8x16x128xf32>
    %503 = vector.extract_strided_slice %14 {offsets = [9, 0], sizes = [1, 128], strides = [1, 1]} : vector<49x128xf32> to vector<1x128xf32>
    %504 = vector.shape_cast %503 : vector<1x128xf32> to vector<128xf32>
    %505 = vector.shape_cast %504 : vector<128xf32> to vector<1x1x128xf32>
    %506 = vector.broadcast %505 : vector<1x1x128xf32> to vector<8x16x128xf32>
    %507 = arith.mulf %502, %506 : vector<8x16x128xf32>
    %508 = arith.addf %501, %507 : vector<8x16x128xf32>
    %509 = vector.extract_strided_slice %494 {offsets = [2, 0, 0], sizes = [8, 16, 128], strides = [1, 1, 1]} : vector<14x16x128xf32> to vector<8x16x128xf32>
    %510 = vector.extract_strided_slice %14 {offsets = [16, 0], sizes = [1, 128], strides = [1, 1]} : vector<49x128xf32> to vector<1x128xf32>
    %511 = vector.shape_cast %510 : vector<1x128xf32> to vector<128xf32>
    %512 = vector.shape_cast %511 : vector<128xf32> to vector<1x1x128xf32>
    %513 = vector.broadcast %512 : vector<1x1x128xf32> to vector<8x16x128xf32>
    %514 = arith.mulf %509, %513 : vector<8x16x128xf32>
    %515 = arith.addf %508, %514 : vector<8x16x128xf32>
    %516 = vector.extract_strided_slice %494 {offsets = [3, 0, 0], sizes = [8, 16, 128], strides = [1, 1, 1]} : vector<14x16x128xf32> to vector<8x16x128xf32>
    %517 = vector.extract_strided_slice %14 {offsets = [23, 0], sizes = [1, 128], strides = [1, 1]} : vector<49x128xf32> to vector<1x128xf32>
    %518 = vector.shape_cast %517 : vector<1x128xf32> to vector<128xf32>
    %519 = vector.shape_cast %518 : vector<128xf32> to vector<1x1x128xf32>
    %520 = vector.broadcast %519 : vector<1x1x128xf32> to vector<8x16x128xf32>
    %521 = arith.mulf %516, %520 : vector<8x16x128xf32>
    %522 = arith.addf %515, %521 : vector<8x16x128xf32>
    %523 = vector.extract_strided_slice %494 {offsets = [4, 0, 0], sizes = [8, 16, 128], strides = [1, 1, 1]} : vector<14x16x128xf32> to vector<8x16x128xf32>
    %524 = vector.extract_strided_slice %14 {offsets = [30, 0], sizes = [1, 128], strides = [1, 1]} : vector<49x128xf32> to vector<1x128xf32>
    %525 = vector.shape_cast %524 : vector<1x128xf32> to vector<128xf32>
    %526 = vector.shape_cast %525 : vector<128xf32> to vector<1x1x128xf32>
    %527 = vector.broadcast %526 : vector<1x1x128xf32> to vector<8x16x128xf32>
    %528 = arith.mulf %523, %527 : vector<8x16x128xf32>
    %529 = arith.addf %522, %528 : vector<8x16x128xf32>
    %530 = vector.extract_strided_slice %494 {offsets = [5, 0, 0], sizes = [8, 16, 128], strides = [1, 1, 1]} : vector<14x16x128xf32> to vector<8x16x128xf32>
    %531 = vector.extract_strided_slice %14 {offsets = [37, 0], sizes = [1, 128], strides = [1, 1]} : vector<49x128xf32> to vector<1x128xf32>
    %532 = vector.shape_cast %531 : vector<1x128xf32> to vector<128xf32>
    %533 = vector.shape_cast %532 : vector<128xf32> to vector<1x1x128xf32>
    %534 = vector.broadcast %533 : vector<1x1x128xf32> to vector<8x16x128xf32>
    %535 = arith.mulf %530, %534 : vector<8x16x128xf32>
    %536 = arith.addf %529, %535 : vector<8x16x128xf32>
    %537 = vector.extract_strided_slice %494 {offsets = [6, 0, 0], sizes = [8, 16, 128], strides = [1, 1, 1]} : vector<14x16x128xf32> to vector<8x16x128xf32>
    %538 = vector.extract_strided_slice %14 {offsets = [44, 0], sizes = [1, 128], strides = [1, 1]} : vector<49x128xf32> to vector<1x128xf32>
    %539 = vector.shape_cast %538 : vector<1x128xf32> to vector<128xf32>
    %540 = vector.shape_cast %539 : vector<128xf32> to vector<1x1x128xf32>
    %541 = vector.broadcast %540 : vector<1x1x128xf32> to vector<8x16x128xf32>
    %542 = arith.mulf %537, %541 : vector<8x16x128xf32>
    %543 = arith.addf %536, %542 : vector<8x16x128xf32>
    %544 = arith.index_cast %0 : i32 to index
    %c8_38 = arith.constant 8 : index
    %c8_39 = arith.constant 8 : index
    %c0_40 = arith.constant 0 : index
    %545 = vector.load %arg11[%544, %c8_38, %c8_39, %c0_40] : memref<2x22x32x128xf32, #tpu.memory_space<vmem>>, vector<1x14x16x128xf32>
    %546 = vector.shape_cast %545 : vector<1x14x16x128xf32> to vector<14x16x128xf32>
    %547 = vector.extract_strided_slice %546 {offsets = [0, 0, 0], sizes = [8, 16, 128], strides = [1, 1, 1]} : vector<14x16x128xf32> to vector<8x16x128xf32>
    %548 = vector.extract_strided_slice %14 {offsets = [3, 0], sizes = [1, 128], strides = [1, 1]} : vector<49x128xf32> to vector<1x128xf32>
    %549 = vector.shape_cast %548 : vector<1x128xf32> to vector<128xf32>
    %550 = vector.shape_cast %549 : vector<128xf32> to vector<1x1x128xf32>
    %551 = vector.broadcast %550 : vector<1x1x128xf32> to vector<8x16x128xf32>
    %552 = arith.mulf %547, %551 : vector<8x16x128xf32>
    %553 = arith.addf %543, %552 : vector<8x16x128xf32>
    %554 = vector.extract_strided_slice %546 {offsets = [1, 0, 0], sizes = [8, 16, 128], strides = [1, 1, 1]} : vector<14x16x128xf32> to vector<8x16x128xf32>
    %555 = vector.extract_strided_slice %14 {offsets = [10, 0], sizes = [1, 128], strides = [1, 1]} : vector<49x128xf32> to vector<1x128xf32>
    %556 = vector.shape_cast %555 : vector<1x128xf32> to vector<128xf32>
    %557 = vector.shape_cast %556 : vector<128xf32> to vector<1x1x128xf32>
    %558 = vector.broadcast %557 : vector<1x1x128xf32> to vector<8x16x128xf32>
    %559 = arith.mulf %554, %558 : vector<8x16x128xf32>
    %560 = arith.addf %553, %559 : vector<8x16x128xf32>
    %561 = vector.extract_strided_slice %546 {offsets = [2, 0, 0], sizes = [8, 16, 128], strides = [1, 1, 1]} : vector<14x16x128xf32> to vector<8x16x128xf32>
    %562 = vector.extract_strided_slice %14 {offsets = [17, 0], sizes = [1, 128], strides = [1, 1]} : vector<49x128xf32> to vector<1x128xf32>
    %563 = vector.shape_cast %562 : vector<1x128xf32> to vector<128xf32>
    %564 = vector.shape_cast %563 : vector<128xf32> to vector<1x1x128xf32>
    %565 = vector.broadcast %564 : vector<1x1x128xf32> to vector<8x16x128xf32>
    %566 = arith.mulf %561, %565 : vector<8x16x128xf32>
    %567 = arith.addf %560, %566 : vector<8x16x128xf32>
    %568 = vector.extract_strided_slice %546 {offsets = [3, 0, 0], sizes = [8, 16, 128], strides = [1, 1, 1]} : vector<14x16x128xf32> to vector<8x16x128xf32>
    %569 = vector.extract_strided_slice %14 {offsets = [24, 0], sizes = [1, 128], strides = [1, 1]} : vector<49x128xf32> to vector<1x128xf32>
    %570 = vector.shape_cast %569 : vector<1x128xf32> to vector<128xf32>
    %571 = vector.shape_cast %570 : vector<128xf32> to vector<1x1x128xf32>
    %572 = vector.broadcast %571 : vector<1x1x128xf32> to vector<8x16x128xf32>
    %573 = arith.mulf %568, %572 : vector<8x16x128xf32>
    %574 = arith.addf %567, %573 : vector<8x16x128xf32>
    %575 = vector.extract_strided_slice %546 {offsets = [4, 0, 0], sizes = [8, 16, 128], strides = [1, 1, 1]} : vector<14x16x128xf32> to vector<8x16x128xf32>
    %576 = vector.extract_strided_slice %14 {offsets = [31, 0], sizes = [1, 128], strides = [1, 1]} : vector<49x128xf32> to vector<1x128xf32>
    %577 = vector.shape_cast %576 : vector<1x128xf32> to vector<128xf32>
    %578 = vector.shape_cast %577 : vector<128xf32> to vector<1x1x128xf32>
    %579 = vector.broadcast %578 : vector<1x1x128xf32> to vector<8x16x128xf32>
    %580 = arith.mulf %575, %579 : vector<8x16x128xf32>
    %581 = arith.addf %574, %580 : vector<8x16x128xf32>
    %582 = vector.extract_strided_slice %546 {offsets = [5, 0, 0], sizes = [8, 16, 128], strides = [1, 1, 1]} : vector<14x16x128xf32> to vector<8x16x128xf32>
    %583 = vector.extract_strided_slice %14 {offsets = [38, 0], sizes = [1, 128], strides = [1, 1]} : vector<49x128xf32> to vector<1x128xf32>
    %584 = vector.shape_cast %583 : vector<1x128xf32> to vector<128xf32>
    %585 = vector.shape_cast %584 : vector<128xf32> to vector<1x1x128xf32>
    %586 = vector.broadcast %585 : vector<1x1x128xf32> to vector<8x16x128xf32>
    %587 = arith.mulf %582, %586 : vector<8x16x128xf32>
    %588 = arith.addf %581, %587 : vector<8x16x128xf32>
    %589 = vector.extract_strided_slice %546 {offsets = [6, 0, 0], sizes = [8, 16, 128], strides = [1, 1, 1]} : vector<14x16x128xf32> to vector<8x16x128xf32>
    %590 = vector.extract_strided_slice %14 {offsets = [45, 0], sizes = [1, 128], strides = [1, 1]} : vector<49x128xf32> to vector<1x128xf32>
    %591 = vector.shape_cast %590 : vector<1x128xf32> to vector<128xf32>
    %592 = vector.shape_cast %591 : vector<128xf32> to vector<1x1x128xf32>
    %593 = vector.broadcast %592 : vector<1x1x128xf32> to vector<8x16x128xf32>
    %594 = arith.mulf %589, %593 : vector<8x16x128xf32>
    %595 = arith.addf %588, %594 : vector<8x16x128xf32>
    %596 = arith.index_cast %0 : i32 to index
    %c8_41 = arith.constant 8 : index
    %c9_42 = arith.constant 9 : index
    %c0_43 = arith.constant 0 : index
    %597 = vector.load %arg11[%596, %c8_41, %c9_42, %c0_43] : memref<2x22x32x128xf32, #tpu.memory_space<vmem>>, vector<1x14x16x128xf32>
    %598 = vector.shape_cast %597 : vector<1x14x16x128xf32> to vector<14x16x128xf32>
    %599 = vector.extract_strided_slice %598 {offsets = [0, 0, 0], sizes = [8, 16, 128], strides = [1, 1, 1]} : vector<14x16x128xf32> to vector<8x16x128xf32>
    %600 = vector.extract_strided_slice %14 {offsets = [4, 0], sizes = [1, 128], strides = [1, 1]} : vector<49x128xf32> to vector<1x128xf32>
    %601 = vector.shape_cast %600 : vector<1x128xf32> to vector<128xf32>
    %602 = vector.shape_cast %601 : vector<128xf32> to vector<1x1x128xf32>
    %603 = vector.broadcast %602 : vector<1x1x128xf32> to vector<8x16x128xf32>
    %604 = arith.mulf %599, %603 : vector<8x16x128xf32>
    %605 = arith.addf %595, %604 : vector<8x16x128xf32>
    %606 = vector.extract_strided_slice %598 {offsets = [1, 0, 0], sizes = [8, 16, 128], strides = [1, 1, 1]} : vector<14x16x128xf32> to vector<8x16x128xf32>
    %607 = vector.extract_strided_slice %14 {offsets = [11, 0], sizes = [1, 128], strides = [1, 1]} : vector<49x128xf32> to vector<1x128xf32>
    %608 = vector.shape_cast %607 : vector<1x128xf32> to vector<128xf32>
    %609 = vector.shape_cast %608 : vector<128xf32> to vector<1x1x128xf32>
    %610 = vector.broadcast %609 : vector<1x1x128xf32> to vector<8x16x128xf32>
    %611 = arith.mulf %606, %610 : vector<8x16x128xf32>
    %612 = arith.addf %605, %611 : vector<8x16x128xf32>
    %613 = vector.extract_strided_slice %598 {offsets = [2, 0, 0], sizes = [8, 16, 128], strides = [1, 1, 1]} : vector<14x16x128xf32> to vector<8x16x128xf32>
    %614 = vector.extract_strided_slice %14 {offsets = [18, 0], sizes = [1, 128], strides = [1, 1]} : vector<49x128xf32> to vector<1x128xf32>
    %615 = vector.shape_cast %614 : vector<1x128xf32> to vector<128xf32>
    %616 = vector.shape_cast %615 : vector<128xf32> to vector<1x1x128xf32>
    %617 = vector.broadcast %616 : vector<1x1x128xf32> to vector<8x16x128xf32>
    %618 = arith.mulf %613, %617 : vector<8x16x128xf32>
    %619 = arith.addf %612, %618 : vector<8x16x128xf32>
    %620 = vector.extract_strided_slice %598 {offsets = [3, 0, 0], sizes = [8, 16, 128], strides = [1, 1, 1]} : vector<14x16x128xf32> to vector<8x16x128xf32>
    %621 = vector.extract_strided_slice %14 {offsets = [25, 0], sizes = [1, 128], strides = [1, 1]} : vector<49x128xf32> to vector<1x128xf32>
    %622 = vector.shape_cast %621 : vector<1x128xf32> to vector<128xf32>
    %623 = vector.shape_cast %622 : vector<128xf32> to vector<1x1x128xf32>
    %624 = vector.broadcast %623 : vector<1x1x128xf32> to vector<8x16x128xf32>
    %625 = arith.mulf %620, %624 : vector<8x16x128xf32>
    %626 = arith.addf %619, %625 : vector<8x16x128xf32>
    %627 = vector.extract_strided_slice %598 {offsets = [4, 0, 0], sizes = [8, 16, 128], strides = [1, 1, 1]} : vector<14x16x128xf32> to vector<8x16x128xf32>
    %628 = vector.extract_strided_slice %14 {offsets = [32, 0], sizes = [1, 128], strides = [1, 1]} : vector<49x128xf32> to vector<1x128xf32>
    %629 = vector.shape_cast %628 : vector<1x128xf32> to vector<128xf32>
    %630 = vector.shape_cast %629 : vector<128xf32> to vector<1x1x128xf32>
    %631 = vector.broadcast %630 : vector<1x1x128xf32> to vector<8x16x128xf32>
    %632 = arith.mulf %627, %631 : vector<8x16x128xf32>
    %633 = arith.addf %626, %632 : vector<8x16x128xf32>
    %634 = vector.extract_strided_slice %598 {offsets = [5, 0, 0], sizes = [8, 16, 128], strides = [1, 1, 1]} : vector<14x16x128xf32> to vector<8x16x128xf32>
    %635 = vector.extract_strided_slice %14 {offsets = [39, 0], sizes = [1, 128], strides = [1, 1]} : vector<49x128xf32> to vector<1x128xf32>
    %636 = vector.shape_cast %635 : vector<1x128xf32> to vector<128xf32>
    %637 = vector.shape_cast %636 : vector<128xf32> to vector<1x1x128xf32>
    %638 = vector.broadcast %637 : vector<1x1x128xf32> to vector<8x16x128xf32>
    %639 = arith.mulf %634, %638 : vector<8x16x128xf32>
    %640 = arith.addf %633, %639 : vector<8x16x128xf32>
    %641 = vector.extract_strided_slice %598 {offsets = [6, 0, 0], sizes = [8, 16, 128], strides = [1, 1, 1]} : vector<14x16x128xf32> to vector<8x16x128xf32>
    %642 = vector.extract_strided_slice %14 {offsets = [46, 0], sizes = [1, 128], strides = [1, 1]} : vector<49x128xf32> to vector<1x128xf32>
    %643 = vector.shape_cast %642 : vector<1x128xf32> to vector<128xf32>
    %644 = vector.shape_cast %643 : vector<128xf32> to vector<1x1x128xf32>
    %645 = vector.broadcast %644 : vector<1x1x128xf32> to vector<8x16x128xf32>
    %646 = arith.mulf %641, %645 : vector<8x16x128xf32>
    %647 = arith.addf %640, %646 : vector<8x16x128xf32>
    %648 = arith.index_cast %0 : i32 to index
    %c8_44 = arith.constant 8 : index
    %c10_45 = arith.constant 10 : index
    %c0_46 = arith.constant 0 : index
    %649 = vector.load %arg11[%648, %c8_44, %c10_45, %c0_46] : memref<2x22x32x128xf32, #tpu.memory_space<vmem>>, vector<1x14x16x128xf32>
    %650 = vector.shape_cast %649 : vector<1x14x16x128xf32> to vector<14x16x128xf32>
    %651 = vector.extract_strided_slice %650 {offsets = [0, 0, 0], sizes = [8, 16, 128], strides = [1, 1, 1]} : vector<14x16x128xf32> to vector<8x16x128xf32>
    %652 = vector.extract_strided_slice %14 {offsets = [5, 0], sizes = [1, 128], strides = [1, 1]} : vector<49x128xf32> to vector<1x128xf32>
    %653 = vector.shape_cast %652 : vector<1x128xf32> to vector<128xf32>
    %654 = vector.shape_cast %653 : vector<128xf32> to vector<1x1x128xf32>
    %655 = vector.broadcast %654 : vector<1x1x128xf32> to vector<8x16x128xf32>
    %656 = arith.mulf %651, %655 : vector<8x16x128xf32>
    %657 = arith.addf %647, %656 : vector<8x16x128xf32>
    %658 = vector.extract_strided_slice %650 {offsets = [1, 0, 0], sizes = [8, 16, 128], strides = [1, 1, 1]} : vector<14x16x128xf32> to vector<8x16x128xf32>
    %659 = vector.extract_strided_slice %14 {offsets = [12, 0], sizes = [1, 128], strides = [1, 1]} : vector<49x128xf32> to vector<1x128xf32>
    %660 = vector.shape_cast %659 : vector<1x128xf32> to vector<128xf32>
    %661 = vector.shape_cast %660 : vector<128xf32> to vector<1x1x128xf32>
    %662 = vector.broadcast %661 : vector<1x1x128xf32> to vector<8x16x128xf32>
    %663 = arith.mulf %658, %662 : vector<8x16x128xf32>
    %664 = arith.addf %657, %663 : vector<8x16x128xf32>
    %665 = vector.extract_strided_slice %650 {offsets = [2, 0, 0], sizes = [8, 16, 128], strides = [1, 1, 1]} : vector<14x16x128xf32> to vector<8x16x128xf32>
    %666 = vector.extract_strided_slice %14 {offsets = [19, 0], sizes = [1, 128], strides = [1, 1]} : vector<49x128xf32> to vector<1x128xf32>
    %667 = vector.shape_cast %666 : vector<1x128xf32> to vector<128xf32>
    %668 = vector.shape_cast %667 : vector<128xf32> to vector<1x1x128xf32>
    %669 = vector.broadcast %668 : vector<1x1x128xf32> to vector<8x16x128xf32>
    %670 = arith.mulf %665, %669 : vector<8x16x128xf32>
    %671 = arith.addf %664, %670 : vector<8x16x128xf32>
    %672 = vector.extract_strided_slice %650 {offsets = [3, 0, 0], sizes = [8, 16, 128], strides = [1, 1, 1]} : vector<14x16x128xf32> to vector<8x16x128xf32>
    %673 = vector.extract_strided_slice %14 {offsets = [26, 0], sizes = [1, 128], strides = [1, 1]} : vector<49x128xf32> to vector<1x128xf32>
    %674 = vector.shape_cast %673 : vector<1x128xf32> to vector<128xf32>
    %675 = vector.shape_cast %674 : vector<128xf32> to vector<1x1x128xf32>
    %676 = vector.broadcast %675 : vector<1x1x128xf32> to vector<8x16x128xf32>
    %677 = arith.mulf %672, %676 : vector<8x16x128xf32>
    %678 = arith.addf %671, %677 : vector<8x16x128xf32>
    %679 = vector.extract_strided_slice %650 {offsets = [4, 0, 0], sizes = [8, 16, 128], strides = [1, 1, 1]} : vector<14x16x128xf32> to vector<8x16x128xf32>
    %680 = vector.extract_strided_slice %14 {offsets = [33, 0], sizes = [1, 128], strides = [1, 1]} : vector<49x128xf32> to vector<1x128xf32>
    %681 = vector.shape_cast %680 : vector<1x128xf32> to vector<128xf32>
    %682 = vector.shape_cast %681 : vector<128xf32> to vector<1x1x128xf32>
    %683 = vector.broadcast %682 : vector<1x1x128xf32> to vector<8x16x128xf32>
    %684 = arith.mulf %679, %683 : vector<8x16x128xf32>
    %685 = arith.addf %678, %684 : vector<8x16x128xf32>
    %686 = vector.extract_strided_slice %650 {offsets = [5, 0, 0], sizes = [8, 16, 128], strides = [1, 1, 1]} : vector<14x16x128xf32> to vector<8x16x128xf32>
    %687 = vector.extract_strided_slice %14 {offsets = [40, 0], sizes = [1, 128], strides = [1, 1]} : vector<49x128xf32> to vector<1x128xf32>
    %688 = vector.shape_cast %687 : vector<1x128xf32> to vector<128xf32>
    %689 = vector.shape_cast %688 : vector<128xf32> to vector<1x1x128xf32>
    %690 = vector.broadcast %689 : vector<1x1x128xf32> to vector<8x16x128xf32>
    %691 = arith.mulf %686, %690 : vector<8x16x128xf32>
    %692 = arith.addf %685, %691 : vector<8x16x128xf32>
    %693 = vector.extract_strided_slice %650 {offsets = [6, 0, 0], sizes = [8, 16, 128], strides = [1, 1, 1]} : vector<14x16x128xf32> to vector<8x16x128xf32>
    %694 = vector.extract_strided_slice %14 {offsets = [47, 0], sizes = [1, 128], strides = [1, 1]} : vector<49x128xf32> to vector<1x128xf32>
    %695 = vector.shape_cast %694 : vector<1x128xf32> to vector<128xf32>
    %696 = vector.shape_cast %695 : vector<128xf32> to vector<1x1x128xf32>
    %697 = vector.broadcast %696 : vector<1x1x128xf32> to vector<8x16x128xf32>
    %698 = arith.mulf %693, %697 : vector<8x16x128xf32>
    %699 = arith.addf %692, %698 : vector<8x16x128xf32>
    %700 = arith.index_cast %0 : i32 to index
    %c8_47 = arith.constant 8 : index
    %c11_48 = arith.constant 11 : index
    %c0_49 = arith.constant 0 : index
    %701 = vector.load %arg11[%700, %c8_47, %c11_48, %c0_49] : memref<2x22x32x128xf32, #tpu.memory_space<vmem>>, vector<1x14x16x128xf32>
    %702 = vector.shape_cast %701 : vector<1x14x16x128xf32> to vector<14x16x128xf32>
    %703 = vector.extract_strided_slice %702 {offsets = [0, 0, 0], sizes = [8, 16, 128], strides = [1, 1, 1]} : vector<14x16x128xf32> to vector<8x16x128xf32>
    %704 = vector.extract_strided_slice %14 {offsets = [6, 0], sizes = [1, 128], strides = [1, 1]} : vector<49x128xf32> to vector<1x128xf32>
    %705 = vector.shape_cast %704 : vector<1x128xf32> to vector<128xf32>
    %706 = vector.shape_cast %705 : vector<128xf32> to vector<1x1x128xf32>
    %707 = vector.broadcast %706 : vector<1x1x128xf32> to vector<8x16x128xf32>
    %708 = arith.mulf %703, %707 : vector<8x16x128xf32>
    %709 = arith.addf %699, %708 : vector<8x16x128xf32>
    %710 = vector.extract_strided_slice %702 {offsets = [1, 0, 0], sizes = [8, 16, 128], strides = [1, 1, 1]} : vector<14x16x128xf32> to vector<8x16x128xf32>
    %711 = vector.extract_strided_slice %14 {offsets = [13, 0], sizes = [1, 128], strides = [1, 1]} : vector<49x128xf32> to vector<1x128xf32>
    %712 = vector.shape_cast %711 : vector<1x128xf32> to vector<128xf32>
    %713 = vector.shape_cast %712 : vector<128xf32> to vector<1x1x128xf32>
    %714 = vector.broadcast %713 : vector<1x1x128xf32> to vector<8x16x128xf32>
    %715 = arith.mulf %710, %714 : vector<8x16x128xf32>
    %716 = arith.addf %709, %715 : vector<8x16x128xf32>
    %717 = vector.extract_strided_slice %702 {offsets = [2, 0, 0], sizes = [8, 16, 128], strides = [1, 1, 1]} : vector<14x16x128xf32> to vector<8x16x128xf32>
    %718 = vector.extract_strided_slice %14 {offsets = [20, 0], sizes = [1, 128], strides = [1, 1]} : vector<49x128xf32> to vector<1x128xf32>
    %719 = vector.shape_cast %718 : vector<1x128xf32> to vector<128xf32>
    %720 = vector.shape_cast %719 : vector<128xf32> to vector<1x1x128xf32>
    %721 = vector.broadcast %720 : vector<1x1x128xf32> to vector<8x16x128xf32>
    %722 = arith.mulf %717, %721 : vector<8x16x128xf32>
    %723 = arith.addf %716, %722 : vector<8x16x128xf32>
    %724 = vector.extract_strided_slice %702 {offsets = [3, 0, 0], sizes = [8, 16, 128], strides = [1, 1, 1]} : vector<14x16x128xf32> to vector<8x16x128xf32>
    %725 = vector.extract_strided_slice %14 {offsets = [27, 0], sizes = [1, 128], strides = [1, 1]} : vector<49x128xf32> to vector<1x128xf32>
    %726 = vector.shape_cast %725 : vector<1x128xf32> to vector<128xf32>
    %727 = vector.shape_cast %726 : vector<128xf32> to vector<1x1x128xf32>
    %728 = vector.broadcast %727 : vector<1x1x128xf32> to vector<8x16x128xf32>
    %729 = arith.mulf %724, %728 : vector<8x16x128xf32>
    %730 = arith.addf %723, %729 : vector<8x16x128xf32>
    %731 = vector.extract_strided_slice %702 {offsets = [4, 0, 0], sizes = [8, 16, 128], strides = [1, 1, 1]} : vector<14x16x128xf32> to vector<8x16x128xf32>
    %732 = vector.extract_strided_slice %14 {offsets = [34, 0], sizes = [1, 128], strides = [1, 1]} : vector<49x128xf32> to vector<1x128xf32>
    %733 = vector.shape_cast %732 : vector<1x128xf32> to vector<128xf32>
    %734 = vector.shape_cast %733 : vector<128xf32> to vector<1x1x128xf32>
    %735 = vector.broadcast %734 : vector<1x1x128xf32> to vector<8x16x128xf32>
    %736 = arith.mulf %731, %735 : vector<8x16x128xf32>
    %737 = arith.addf %730, %736 : vector<8x16x128xf32>
    %738 = vector.extract_strided_slice %702 {offsets = [5, 0, 0], sizes = [8, 16, 128], strides = [1, 1, 1]} : vector<14x16x128xf32> to vector<8x16x128xf32>
    %739 = vector.extract_strided_slice %14 {offsets = [41, 0], sizes = [1, 128], strides = [1, 1]} : vector<49x128xf32> to vector<1x128xf32>
    %740 = vector.shape_cast %739 : vector<1x128xf32> to vector<128xf32>
    %741 = vector.shape_cast %740 : vector<128xf32> to vector<1x1x128xf32>
    %742 = vector.broadcast %741 : vector<1x1x128xf32> to vector<8x16x128xf32>
    %743 = arith.mulf %738, %742 : vector<8x16x128xf32>
    %744 = arith.addf %737, %743 : vector<8x16x128xf32>
    %745 = vector.extract_strided_slice %702 {offsets = [6, 0, 0], sizes = [8, 16, 128], strides = [1, 1, 1]} : vector<14x16x128xf32> to vector<8x16x128xf32>
    %746 = vector.extract_strided_slice %14 {offsets = [48, 0], sizes = [1, 128], strides = [1, 1]} : vector<49x128xf32> to vector<1x128xf32>
    %747 = vector.shape_cast %746 : vector<1x128xf32> to vector<128xf32>
    %748 = vector.shape_cast %747 : vector<128xf32> to vector<1x1x128xf32>
    %749 = vector.broadcast %748 : vector<1x1x128xf32> to vector<8x16x128xf32>
    %750 = arith.mulf %745, %749 : vector<8x16x128xf32>
    %751 = arith.addf %744, %750 : vector<8x16x128xf32>
    %752 = vector.shape_cast %751 : vector<8x16x128xf32> to vector<128x128xf32>
    %753 = arith.truncf %752 : vector<128x128xf32> to vector<128x128xbf16>
    %c128 = arith.constant 128 : index
    %c0_50 = arith.constant 0 : index
    %754 = vector.load %arg13[%c128, %c0_50] : memref<256x128xbf16, #tpu.memory_space<vmem>>, vector<128x128xbf16>
    tpu.vector_store %arg13[%c128, %c0_50], %753 {strides = array<i32>} : memref<256x128xbf16, #tpu.memory_space<vmem>>, vector<128x128xbf16>,
    %c0_51 = arith.constant 0 : index
    %c0_52 = arith.constant 0 : index
    %755 = vector.load %arg13[%c0_51, %c0_52] : memref<256x128xbf16, #tpu.memory_space<vmem>>, vector<256x128xbf16>
    %c0_53 = arith.constant 0 : index
    %c0_54 = arith.constant 0 : index
    %756 = vector.load %arg5[%c0_53, %c0_54] : memref<128x128xbf16, #tpu.memory_space<vmem>>, vector<128x128xbf16>
    %cst = arith.constant dense<0.000000e+00> : vector<256x128xf32>
    %757 = tpu.matmul %755, %756, %cst {dimension_numbers = #tpu.dot_dimension_numbers<[1], [0], [0], [1], [0, 0, 1, 1], [], []>} : vector<256x128xbf16>, vector<128x128xbf16>, vector<256x128xf32> -> vector<256x128xf32>
    %c0_55 = arith.constant 0 : index
    %c0_56 = arith.constant 0 : index
    %758 = vector.load %arg6[%c0_55, %c0_56] : memref<1x128xf32, #tpu.memory_space<vmem>>, vector<1x128xf32>
    %759 = vector.broadcast %758 : vector<1x128xf32> to vector<256x128xf32>
    %760 = arith.addf %757, %759 : vector<256x128xf32>
    %cst_57 = arith.constant 5.000000e-01 : f32
    %761 = vector.broadcast %cst_57 : f32 to vector<256x128xf32>
    %762 = arith.mulf %761, %760 : vector<256x128xf32>
    %cst_58 = arith.constant 1.41421354 : f32
    %763 = vector.broadcast %cst_58 : f32 to vector<256x128xf32>
    %764 = arith.divf %760, %763 : vector<256x128xf32>
    %765 = math.absf %764 : vector<256x128xf32>
    %cst_59 = arith.constant 0.327591091 : f32
    %766 = vector.broadcast %cst_59 : f32 to vector<256x128xf32>
    %767 = arith.mulf %766, %765 : vector<256x128xf32>
    %cst_60 = arith.constant 1.000000e+00 : f32
    %768 = vector.broadcast %cst_60 : f32 to vector<256x128xf32>
    %769 = arith.addf %768, %767 : vector<256x128xf32>
    %770 = tpu.reciprocal %769 {approx = true} : vector<256x128xf32> -> vector<256x128xf32>
    %cst_61 = arith.constant 1.06140542 : f32
    %771 = vector.broadcast %cst_61 : f32 to vector<256x128xf32>
    %772 = arith.mulf %771, %770 : vector<256x128xf32>
    %cst_62 = arith.constant -1.45315206 : f32
    %773 = vector.broadcast %cst_62 : f32 to vector<256x128xf32>
    %774 = arith.addf %772, %773 : vector<256x128xf32>
    %775 = arith.mulf %774, %770 : vector<256x128xf32>
    %cst_63 = arith.constant 1.42141378 : f32
    %776 = vector.broadcast %cst_63 : f32 to vector<256x128xf32>
    %777 = arith.addf %775, %776 : vector<256x128xf32>
    %778 = arith.mulf %777, %770 : vector<256x128xf32>
    %cst_64 = arith.constant -0.284496725 : f32
    %779 = vector.broadcast %cst_64 : f32 to vector<256x128xf32>
    %780 = arith.addf %778, %779 : vector<256x128xf32>
    %781 = arith.mulf %780, %770 : vector<256x128xf32>
    %cst_65 = arith.constant 0.254829586 : f32
    %782 = vector.broadcast %cst_65 : f32 to vector<256x128xf32>
    %783 = arith.addf %781, %782 : vector<256x128xf32>
    %784 = arith.mulf %783, %770 : vector<256x128xf32>
    %cst_66 = arith.constant 0.000000e+00 : f32
    %785 = vector.broadcast %cst_66 : f32 to vector<256x128xf32>
    %786 = arith.subf %785, %765 : vector<256x128xf32>
    %787 = arith.mulf %786, %765 : vector<256x128xf32>
    %788 = math.exp %787 : vector<256x128xf32>
    %789 = arith.mulf %784, %788 : vector<256x128xf32>
    %cst_67 = arith.constant 1.000000e+00 : f32
    %790 = vector.broadcast %cst_67 : f32 to vector<256x128xf32>
    %791 = arith.subf %790, %789 : vector<256x128xf32>
    %cst_68 = arith.constant 0.000000e+00 : f32
    %792 = vector.broadcast %cst_68 : f32 to vector<256x128xf32>
    %793 = arith.cmpf oge, %764, %792 : vector<256x128xf32>
    %cst_69 = arith.constant 0.000000e+00 : f32
    %794 = vector.broadcast %cst_69 : f32 to vector<256x128xf32>
    %795 = arith.subf %794, %791 : vector<256x128xf32>
    %796 = arith.select %793, %791, %795 : vector<256x128xi1>, vector<256x128xf32>
    %cst_70 = arith.constant 1.000000e+00 : f32
    %797 = vector.broadcast %cst_70 : f32 to vector<256x128xf32>
    %798 = arith.addf %797, %796 : vector<256x128xf32>
    %799 = arith.mulf %762, %798 : vector<256x128xf32>
    %800 = arith.truncf %799 : vector<256x128xf32> to vector<256x128xbf16>
    %c0_71 = arith.constant 0 : index
    %c0_72 = arith.constant 0 : index
    %801 = vector.load %arg7[%c0_71, %c0_72] : memref<128x128xbf16, #tpu.memory_space<vmem>>, vector<128x128xbf16>
    %cst_73 = arith.constant dense<0.000000e+00> : vector<256x128xf32>
    %802 = tpu.matmul %800, %801, %cst_73 {dimension_numbers = #tpu.dot_dimension_numbers<[1], [0], [0], [1], [0, 0, 1, 1], [], []>} : vector<256x128xbf16>, vector<128x128xbf16>, vector<256x128xf32> -> vector<256x128xf32>
    %c0_74 = arith.constant 0 : index
    %c0_75 = arith.constant 0 : index
    %803 = vector.load %arg8[%c0_74, %c0_75] : memref<1x128xf32, #tpu.memory_space<vmem>>, vector<1x128xf32>
    %804 = vector.broadcast %803 : vector<1x128xf32> to vector<256x128xf32>
    %805 = arith.addf %802, %804 : vector<256x128xf32>
    %c0_76 = arith.constant 0 : index
    %c0_77 = arith.constant 0 : index
    %806 = vector.load %arg9[%c0_76, %c0_77] : memref<1x128xf32, #tpu.memory_space<vmem>>, vector<1x128xf32>
    %807 = vector.broadcast %806 : vector<1x128xf32> to vector<256x128xf32>
    %808 = arith.mulf %805, %807 : vector<256x128xf32>
    %809 = arith.index_cast %0 : i32 to index
    %c3 = arith.constant 3 : index
    %c8_78 = arith.constant 8 : index
    %c0_79 = arith.constant 0 : index
    %810 = vector.load %arg11[%809, %c3, %c8_78, %c0_79] : memref<2x22x32x128xf32, #tpu.memory_space<vmem>>, vector<1x16x16x128xf32>
    %811 = vector.shape_cast %810 : vector<1x16x16x128xf32> to vector<16x16x128xf32>
    %812 = vector.shape_cast %808 : vector<256x128xf32> to vector<16x16x128xf32>
    %813 = arith.addf %811, %812 : vector<16x16x128xf32>
    %c0_80 = arith.constant 0 : index
    %c0_81 = arith.constant 0 : index
    %c0_82 = arith.constant 0 : index
    %c0_83 = arith.constant 0 : index
    %814 = vector.load %arg10[%c0_80, %c0_81, %c0_82, %c0_83] : memref<1x16x16x128xf32, #tpu.memory_space<vmem>>, vector<1x16x16x128xf32>
    %815 = vector.shape_cast %814 : vector<1x16x16x128xf32> to vector<16x16x128xf32>
    %816 = vector.shape_cast %813 : vector<16x16x128xf32> to vector<1x16x16x128xf32>
    tpu.vector_store %arg10[%c0_80, %c0_81, %c0_82, %c0_83], %816 {strides = array<i32>} : memref<1x16x16x128xf32, #tpu.memory_space<vmem>>, vector<1x16x16x128xf32>,
    return
  }
  func.func @transform_1(%arg0: i32, %arg1: i32) -> (i32, i32) {
    %c0_i32 = arith.constant 0 : i32
    %c0_i32_0 = arith.constant 0 : i32
    %c0_i32_1 = arith.constant 0 : i32
    return %c0_i32, %c0_i32_0 : i32, i32
  }
  func.func @transform_2(%arg0: i32, %arg1: i32) -> (i32, i32) {
    %c0_i32 = arith.constant 0 : i32
    %c0_i32_0 = arith.constant 0 : i32
    %c0_i32_1 = arith.constant 0 : i32
    return %c0_i32, %c0_i32_0 : i32, i32
  }
  func.func @transform_3(%arg0: i32, %arg1: i32) -> (i32, i32) {
    %c0_i32 = arith.constant 0 : i32
    %c0_i32_0 = arith.constant 0 : i32
    %c0_i32_1 = arith.constant 0 : i32
    return %c0_i32, %c0_i32_0 : i32, i32
  }
  func.func @transform_4(%arg0: i32, %arg1: i32) -> (i32, i32) {
    %c0_i32 = arith.constant 0 : i32
    %c0_i32_0 = arith.constant 0 : i32
    %c0_i32_1 = arith.constant 0 : i32
    return %c0_i32, %c0_i32_0 : i32, i32
  }
  func.func @transform_5(%arg0: i32, %arg1: i32) -> (i32, i32) {
    %c0_i32 = arith.constant 0 : i32
    %c0_i32_0 = arith.constant 0 : i32
    %c0_i32_1 = arith.constant 0 : i32
    return %c0_i32, %c0_i32_0 : i32, i32
  }
  func.func @transform_6(%arg0: i32, %arg1: i32) -> (i32, i32) {
    %c0_i32 = arith.constant 0 : i32
    %c0_i32_0 = arith.constant 0 : i32
    %c0_i32_1 = arith.constant 0 : i32
    return %c0_i32, %c0_i32_0 : i32, i32
  }
  func.func @transform_7(%arg0: i32, %arg1: i32) -> (i32, i32) {
    %c0_i32 = arith.constant 0 : i32
    %c0_i32_0 = arith.constant 0 : i32
    %c0_i32_1 = arith.constant 0 : i32
    return %c0_i32, %c0_i32_0 : i32, i32
  }
  func.func @transform_8(%arg0: i32, %arg1: i32) -> (i32, i32, i32, i32) {
    %c0_i32 = arith.constant 0 : i32
    %c0_i32_0 = arith.constant 0 : i32
    %c0_i32_1 = arith.constant 0 : i32
    return %arg0, %arg1, %c0_i32, %c0_i32_0 : i32, i32, i32, i32
  }
}

</mosaic_0001>

<llo_original>
// kernel: tpu_custom_call.1
$region0: #{tpu_custom_call.1}
  #allocation0 [shape = 'u32[]', space=smem, size = 0x4, offset = 0x4, fixed_abs, tag = 'smem constant byte address 0x4 - core index']
  #allocation1 [shape = 'u32[144,128]{1,0:T(1,128)}', space=vmem, size = 0x12000, scoped, tag = 'internal scratch']
  #allocation2 [shape = 'f32[2,22,32,128]{3,2,1,0:T(8,128)}', space=vmem, size = 0xb0000, scoped, tag = 'scratch operand']
  #allocation3 [shape = 's32[2]{0}', space=sflag, size = 0x8, scoped, tag = 'scratch operand']
  #allocation4 [shape = 'bf16[256,128]{1,0:T(16,128)(2,1)}', space=vmem, size = 0x10000, scoped, tag = 'scratch operand']
  #allocation12 [shape = 's32[]', space=sflag, size = 0x4, offset = 0, fixed_abs, tag = 'sflag constant byte address 0x0 - dummy sync flag']
  #allocation13 [shape = 's32[]', space=sflag, size = 0x4, offset = 0, fixed_abs, tag = 'sflag constant byte address 0x0 - dummy sync flag']
  #allocation14 [shape = 'u32[]', space=smem, size = 0x4, offset = 0x44, fixed_abs, tag = 'smem constant byte address 0x44 - assertion arg 0']
  #allocation15 [shape = 'u32[]', space=smem, size = 0x4, offset = 0x48, fixed_abs, tag = 'smem constant byte address 0x48 - assertion arg 1']
  #allocation16 [shape = 's32[]', space=sflag, size = 0x4, offset = 0, fixed_abs, tag = 'sflag constant byte address 0x0 - dummy sync flag']
  #allocation17 [shape = 's32[]', space=sflag, size = 0x4, offset = 0, fixed_abs, tag = 'sflag constant byte address 0x0 - dummy sync flag']
  %s0 = inlined_call_operand.hbm [shape: f32[2,22,32,128], index: 0, kind: input, shape index: {}]
  %s1 = inlined_call_operand.hbm [shape: f32[49,128], index: 1, kind: input, shape index: {}]
  %s2 = inlined_call_operand.vmem [shape: f32[1,128], index: 2, kind: input, shape index: {}]
  %s3 = inlined_call_operand.hbm [shape: bf16[128,128], index: 3, kind: input, shape index: {}]
  %s4 = inlined_call_operand.vmem [shape: f32[1,128], index: 4, kind: input, shape index: {}]
  %s5 = inlined_call_operand.hbm [shape: bf16[128,128], index: 5, kind: input, shape index: {}]
  %s6 = inlined_call_operand.vmem [shape: f32[1,128], index: 6, kind: input, shape index: {}]
  %s7 = inlined_call_operand.vmem [shape: f32[1,128], index: 7, kind: input, shape index: {}]
  %s8 = inlined_call_operand.hbm [shape: f32[2,16,16,128], index: 8, kind: output, shape index: {}]
  %s9 = sld [smem:[#allocation0]]
  $region89: #{tpu_custom_call.1} parent=0
    _
  %s11 = ssub.s32 1, %s9
  %s12 = scalar_select 0, %s11, %s9
  $region1: #{tpu_custom_call.1} parent=0
    #allocation5 [shape = 'u8[28672]{0}', space=vmem, size = 0x7000, scoped, tag = 'input window, operand 1, single buffered']
    #allocation6 [shape = 's32[2]{0}', space=sflag, size = 0x8, scoped, tag = 'scoped memory for tpu_custom_call.1']
    #allocation7 [shape = 's32[2]{0}', space=sflag, size = 0x8, scoped, tag = 'scoped memory for tpu_custom_call.1']
    #allocation8 [shape = 'u8[32768]{0}', space=vmem, size = 0x8000, scoped, tag = 'input window, operand 3, single buffered']
    #allocation9 [shape = 's32[1]{0}', space=sflag, size = 0x4, scoped, tag = 'scoped memory for tpu_custom_call.1']
    #allocation10 [shape = 'u8[32768]{0}', space=vmem, size = 0x8000, scoped, tag = 'input window, operand 5, single buffered']
    #allocation11 [shape = 'u8[262144]{0}', space=vmem, size = 0x40000, scoped, tag = 'output window, operand 0']
    %13 = vsyncpa [#allocation6], 0
    %14 = vsyncpa [#allocation9], 0
    %15 = vsyncpa [#allocation7], 0
    %s16 = scalar_lea.sflag [#allocation7], 1
    %17 = vsyncpa %s16, 0
    loop: start=0, step=1, limit=4
    $region2: #{tpu_custom_call.1} parent=1 // loop_pre_header
      _
    $region3: #{tpu_custom_call.1} parent=1 // loop_header
      %s19 = sphi 0, %s23
      %p20 = scmp.ge.s32.totalorder %s19, 4
      %s26 = sphi 0, %s38
      %s27 = sphi 0, %s34
      %s28 = sphi 0, %s26
      %s29 = sphi 0, %s27
      %s30 = sphi 0, %s28
      %s31 = sphi 0, %s29
      %s39 = sphi 0, %s39
      %s41 = sphi 0, %s39
      %s42 = sphi 0, %s41
      %s56 = sphi 0, %s42
      %s60 = sphi 0, %s60
      %s62 = sphi 0, %s60
      %s63 = sphi 0, %s62
      %s77 = sphi 0, %s63
      %s81 = sphi 0, %s81
      %s83 = sphi 0, %s81
      %s84 = sphi 0, %s83
      %s98 = sphi 0, %s84
      %s102 = sphi 0, %s102
      %s104 = sphi 0, %s102
      %s105 = sphi 0, %s104
      %s119 = sphi 0, %s105
      %s123 = sphi 0, %s123
      %s125 = sphi 0, %s123
      %s126 = sphi 0, %s125
      %s140 = sphi 0, %s126
      %s144 = sphi 0, %s144
      %s146 = sphi 0, %s144
      %s147 = sphi 0, %s146
      %s161 = sphi 0, %s147
      %s165 = sphi 0, %s165
      %s167 = sphi 0, %s165
      %s168 = sphi 0, %s167
      %s182 = sphi 0, %s168
      %s190 = sphi 0, %s192
      %s193 = sphi 0, %s190
      %s194 = sphi 0, %s193
      %s210 = sphi 0, %s194
    $region4: #{tpu_custom_call.1} parent=1 // loop_header_branch
      %22 = sbr.rel (%p20) target = $region8
    $region5: #{tpu_custom_call.1} parent=1 // loop_body
      %s24 = ssub.s32 %s19, 1
      %s25 = ssub.s32 %s19, 2
      %s32 = sadd.s32 1, %s27
      %p33 = scmp.ge.s32.totalorder %s32, 1
      %s34 = scalar_select %p33, 0, %s32
      %s35 = sadd.s32 1, %s26
      %s36 = scalar_select %p33, %s35, %s26
      %p37 = scmp.ge.s32.totalorder %s36, 2
      %s38 = scalar_select %p37, 0, %s36
      %s40 = sadd.s32 %s39, 1
      %p43 = scmp.eq.s32.totalorder %s19, 1
      %p44 = scmp.ne.s32.totalorder %s39, %s41
      %p45 = scmp.eq.s32.totalorder %s19, 0
      %p46 = por %p44, %p45
      %p47 = scmp.ne.s32.totalorder %s39, %s41
      %p48 = scmp.eq.s32.totalorder %s24, 1
      %p49 = por %p47, %p48
      %p50 = scmp.ne.s32.totalorder %s41, %s42
      %p51 = scmp.eq.s32.totalorder %s24, 0
      %p52 = por %p50, %p51
      %p53 = scmp.ne.s32.totalorder %s41, %s42
      %p54 = scmp.eq.s32.totalorder %s25, 1
      %p55 = por %p53, %p54
      %p57 = scmp.ne.s32.totalorder %s42, %s56
      %p58 = scmp.eq.s32.totalorder %s25, 0
      %p59 = por %p57, %p58
      %s61 = sadd.s32 %s60, 1
      %p64 = scmp.eq.s32.totalorder %s19, 1
      %p65 = scmp.ne.s32.totalorder %s60, %s62
      %p66 = scmp.eq.s32.totalorder %s19, 0
      %p67 = por %p65, %p66
      %p68 = scmp.ne.s32.totalorder %s60, %s62
      %p69 = scmp.eq.s32.totalorder %s24, 1
      %p70 = por %p68, %p69
      %p71 = scmp.ne.s32.totalorder %s62, %s63
      %p72 = scmp.eq.s32.totalorder %s24, 0
      %p73 = por %p71, %p72
      %p74 = scmp.ne.s32.totalorder %s62, %s63
      %p75 = scmp.eq.s32.totalorder %s25, 1
      %p76 = por %p74, %p75
      %p78 = scmp.ne.s32.totalorder %s63, %s77
      %p79 = scmp.eq.s32.totalorder %s25, 0
      %p80 = por %p78, %p79
      %s82 = sadd.s32 %s81, 1
      %p85 = scmp.eq.s32.totalorder %s19, 1
      %p86 = scmp.ne.s32.totalorder %s81, %s83
      %p87 = scmp.eq.s32.totalorder %s19, 0
      %p88 = por %p86, %p87
      %p89 = scmp.ne.s32.totalorder %s81, %s83
      %p90 = scmp.eq.s32.totalorder %s24, 1
      %p91 = por %p89, %p90
      %p92 = scmp.ne.s32.totalorder %s83, %s84
      %p93 = scmp.eq.s32.totalorder %s24, 0
      %p94 = por %p92, %p93
      %p95 = scmp.ne.s32.totalorder %s83, %s84
      %p96 = scmp.eq.s32.totalorder %s25, 1
      %p97 = por %p95, %p96
      %p99 = scmp.ne.s32.totalorder %s84, %s98
      %p100 = scmp.eq.s32.totalorder %s25, 0
      %p101 = por %p99, %p100
      %s103 = sadd.s32 %s102, 1
      %p106 = scmp.eq.s32.totalorder %s19, 1
      %p107 = scmp.ne.s32.totalorder %s102, %s104
      %p108 = scmp.eq.s32.totalorder %s19, 0
      %p109 = por %p107, %p108
      %p110 = scmp.ne.s32.totalorder %s102, %s104
      %p111 = scmp.eq.s32.totalorder %s24, 1
      %p112 = por %p110, %p111
      %p113 = scmp.ne.s32.totalorder %s104, %s105
      %p114 = scmp.eq.s32.totalorder %s24, 0
      %p115 = por %p113, %p114
      %p116 = scmp.ne.s32.totalorder %s104, %s105
      %p117 = scmp.eq.s32.totalorder %s25, 1
      %p118 = por %p116, %p117
      %p120 = scmp.ne.s32.totalorder %s105, %s119
      %p121 = scmp.eq.s32.totalorder %s25, 0
      %p122 = por %p120, %p121
      %s124 = sadd.s32 %s123, 1
      %p127 = scmp.eq.s32.totalorder %s19, 1
      %p128 = scmp.ne.s32.totalorder %s123, %s125
      %p129 = scmp.eq.s32.totalorder %s19, 0
      %p130 = por %p128, %p129
      %p131 = scmp.ne.s32.totalorder %s123, %s125
      %p132 = scmp.eq.s32.totalorder %s24, 1
      %p133 = por %p131, %p132
      %p134 = scmp.ne.s32.totalorder %s125, %s126
      %p135 = scmp.eq.s32.totalorder %s24, 0
      %p136 = por %p134, %p135
      %p137 = scmp.ne.s32.totalorder %s125, %s126
      %p138 = scmp.eq.s32.totalorder %s25, 1
      %p139 = por %p137, %p138
      %p141 = scmp.ne.s32.totalorder %s126, %s140
      %p142 = scmp.eq.s32.totalorder %s25, 0
      %p143 = por %p141, %p142
      %s145 = sadd.s32 %s144, 1
      %p148 = scmp.eq.s32.totalorder %s19, 1
      %p149 = scmp.ne.s32.totalorder %s144, %s146
      %p150 = scmp.eq.s32.totalorder %s19, 0
      %p151 = por %p149, %p150
      %p152 = scmp.ne.s32.totalorder %s144, %s146
      %p153 = scmp.eq.s32.totalorder %s24, 1
      %p154 = por %p152, %p153
      %p155 = scmp.ne.s32.totalorder %s146, %s147
      %p156 = scmp.eq.s32.totalorder %s24, 0
      %p157 = por %p155, %p156
      %p158 = scmp.ne.s32.totalorder %s146, %s147
      %p159 = scmp.eq.s32.totalorder %s25, 1
      %p160 = por %p158, %p159
      %p162 = scmp.ne.s32.totalorder %s147, %s161
      %p163 = scmp.eq.s32.totalorder %s25, 0
      %p164 = por %p162, %p163
      %s166 = sadd.s32 %s165, 1
      %p169 = scmp.eq.s32.totalorder %s19, 1
      %p170 = scmp.ne.s32.totalorder %s165, %s167
      %p171 = scmp.eq.s32.totalorder %s19, 0
      %p172 = por %p170, %p171
      %p173 = scmp.ne.s32.totalorder %s165, %s167
      %p174 = scmp.eq.s32.totalorder %s24, 1
      %p175 = por %p173, %p174
      %p176 = scmp.ne.s32.totalorder %s167, %s168
      %p177 = scmp.eq.s32.totalorder %s24, 0
      %p178 = por %p176, %p177
      %p179 = scmp.ne.s32.totalorder %s167, %s168
      %p180 = scmp.eq.s32.totalorder %s25, 1
      %p181 = por %p179, %p180
      %p183 = scmp.ne.s32.totalorder %s168, %s182
      %p184 = scmp.eq.s32.totalorder %s25, 0
      %p185 = por %p183, %p184
      %s186 = ssub.s32 %s26, %s38
      %s187 = ssub.s32 %s27, %s34
      %s188 = sor.u32 %s186, %s187
      %p189 = scmp.eq.s32.totalorder %s188, 0
      %s191 = sadd.s32 %s190, 1
      %s192 = scalar_select %p189, %s190, %s191
      %p195 = pneg %p189
      %p196 = scmp.eq.s32.totalorder %s19, 1
      %p197 = por %p195, %p196
      %p198 = scmp.ne.s32.totalorder %s190, %s193
      %p199 = scmp.eq.s32.totalorder %s19, 0
      %p200 = por %p198, %p199
      %p201 = scmp.ne.s32.totalorder %s190, %s193
      %p202 = scmp.eq.s32.totalorder %s24, 1
      %p203 = por %p201, %p202
      %p204 = scmp.ne.s32.totalorder %s193, %s194
      %p205 = scmp.eq.s32.totalorder %s24, 0
      %p206 = por %p204, %p205
      %p207 = scmp.ne.s32.totalorder %s193, %s194
      %p208 = scmp.eq.s32.totalorder %s25, 1
      %p209 = por %p207, %p208
      %p211 = scmp.ne.s32.totalorder %s194, %s210
      %p212 = scmp.eq.s32.totalorder %s25, 0
      %p213 = por %p211, %p212
      %p214 = scmp.le.s32.totalorder 1, %s19
      %p215 = scmp.lt.s32.totalorder %s19, 3
      %p216 = pnand %p214, %p215
      %p217 = pneg %p216
      // Predicated region
      $region9: #{tpu_custom_call.1} parent=5 // pred_check
        _
      $region10: #{tpu_custom_call.1} parent=5 // pred_check_branch
        %219 = sbr.rel (%p216) target = $region12
      $region11: #{tpu_custom_call.1} parent=5 // pred_region
        %s220 = ssub.s32 %s19, 1
        // Predicated region
        $region13: #{tpu_custom_call.1} parent=11 // pred_check
          %p221 = pneg %p52
        $region14: #{tpu_custom_call.1} parent=11 // pred_check_branch
          %223 = sbr.rel (%p221) target = $region16
        $region15: #{tpu_custom_call.1} parent=11 // pred_region
          %s225 = ssub.s32 896, 896
          %226 = vsyncadd [#allocation6], %s225
          %s227 = sshll.u32 [#allocation5], 4
          %s228 = int_to_ptr.vmem [resolvable:$true] %s227
          %233 = dma.hbm_to_vmem [thread:$0]  %s1, 896, %s228, [#allocation6], 128, 128, 8
        $region16: #{tpu_custom_call.1} parent=11 // pred_fallthru
          _
        // Predicated region
        $region17: #{tpu_custom_call.1} parent=11 // pred_check
          %p234 = pneg %p73
        $region18: #{tpu_custom_call.1} parent=11 // pred_check_branch
          %236 = sbr.rel (%p234) target = $region20
        $region19: #{tpu_custom_call.1} parent=11 // pred_region
          _
        $region20: #{tpu_custom_call.1} parent=11 // pred_fallthru
          _
        // Predicated region
        $region21: #{tpu_custom_call.1} parent=11 // pred_check
          %p237 = pneg %p94
        $region22: #{tpu_custom_call.1} parent=11 // pred_check_branch
          %239 = sbr.rel (%p237) target = $region24
        $region23: #{tpu_custom_call.1} parent=11 // pred_region
          %s241 = ssub.s32 1024, 1024
          %242 = vsyncadd [#allocation9], %s241
          %s243 = sshll.u32 [#allocation8], 4
          %s244 = int_to_ptr.vmem [resolvable:$true] %s243
          %249 = dma.hbm_to_vmem [thread:$0]  %s3, 1024, %s244, [#allocation9], 64, 64, 4
        $region24: #{tpu_custom_call.1} parent=11 // pred_fallthru
          _
        // Predicated region
        $region25: #{tpu_custom_call.1} parent=11 // pred_check
          %p250 = pneg %p115
        $region26: #{tpu_custom_call.1} parent=11 // pred_check_branch
          %252 = sbr.rel (%p250) target = $region28
        $region27: #{tpu_custom_call.1} parent=11 // pred_region
          _
        $region28: #{tpu_custom_call.1} parent=11 // pred_fallthru
          _
        // Predicated region
        $region29: #{tpu_custom_call.1} parent=11 // pred_check
          %p253 = pneg %p136
        $region30: #{tpu_custom_call.1} parent=11 // pred_check_branch
          %255 = sbr.rel (%p253) target = $region32
        $region31: #{tpu_custom_call.1} parent=11 // pred_region
          %s257 = ssub.s32 1024, 1024
          %258 = vsyncadd [#allocation9], %s257
          %s259 = sshll.u32 [#allocation10], 4
          %s260 = int_to_ptr.vmem [resolvable:$true] %s259
          %265 = dma.hbm_to_vmem [thread:$0]  %s5, 1024, %s260, [#allocation9], 64, 64, 4
        $region32: #{tpu_custom_call.1} parent=11 // pred_fallthru
          _
        // Predicated region
        $region33: #{tpu_custom_call.1} parent=11 // pred_check
          %p266 = pneg %p157
        $region34: #{tpu_custom_call.1} parent=11 // pred_check_branch
          %268 = sbr.rel (%p266) target = $region36
        $region35: #{tpu_custom_call.1} parent=11 // pred_region
          _
        $region36: #{tpu_custom_call.1} parent=11 // pred_fallthru
          _
        // Predicated region
        $region37: #{tpu_custom_call.1} parent=11 // pred_check
          %p269 = pneg %p178
        $region38: #{tpu_custom_call.1} parent=11 // pred_check_branch
          %271 = sbr.rel (%p269) target = $region40
        $region39: #{tpu_custom_call.1} parent=11 // pred_region
          _
        $region40: #{tpu_custom_call.1} parent=11 // pred_fallthru
          _
      $region12: #{tpu_custom_call.1} parent=5 // pred_fallthru
        _
      %p272 = scmp.lt.s32.totalorder %s19, 2
      // Predicated region
      $region41: #{tpu_custom_call.1} parent=5 // pred_check
        %p273 = pneg %p272
      $region42: #{tpu_custom_call.1} parent=5 // pred_check_branch
        %275 = sbr.rel (%p273) target = $region44
      $region43: #{tpu_custom_call.1} parent=5 // pred_region
        _
      $region44: #{tpu_custom_call.1} parent=5 // pred_fallthru
        _
      %p276 = scmp.le.s32.totalorder 1, %s19
      %p277 = scmp.lt.s32.totalorder %s19, 3
      %p278 = pnand %p276, %p277
      %p279 = pneg %p278
      // Predicated region
      $region45: #{tpu_custom_call.1} parent=5 // pred_check
        _
      $region46: #{tpu_custom_call.1} parent=5 // pred_check_branch
        %281 = sbr.rel (%p278) target = $region48
      $region47: #{tpu_custom_call.1} parent=5 // pred_region
        %s282 = ssub.s32 %s19, 1
        // Predicated region
        $region49: #{tpu_custom_call.1} parent=47 // pred_check
          %p283 = pneg %p52
        $region50: #{tpu_custom_call.1} parent=47 // pred_check_branch
          %285 = sbr.rel (%p283) target = $region52
        $region51: #{tpu_custom_call.1} parent=47 // pred_region
          %286 = dma.done [#allocation6], 896
        $region52: #{tpu_custom_call.1} parent=47 // pred_fallthru
          _
        // Predicated region
        $region53: #{tpu_custom_call.1} parent=47 // pred_check
          %p287 = pneg %p94
        $region54: #{tpu_custom_call.1} parent=47 // pred_check_branch
          %289 = sbr.rel (%p287) target = $region56
        $region55: #{tpu_custom_call.1} parent=47 // pred_region
          %290 = dma.done [#allocation9], 1024
        $region56: #{tpu_custom_call.1} parent=47 // pred_fallthru
          _
        // Predicated region
        $region57: #{tpu_custom_call.1} parent=47 // pred_check
          %p291 = pneg %p136
        $region58: #{tpu_custom_call.1} parent=47 // pred_check_branch
          %293 = sbr.rel (%p291) target = $region60
        $region59: #{tpu_custom_call.1} parent=47 // pred_region
          %294 = dma.done [#allocation9], 1024
        $region60: #{tpu_custom_call.1} parent=47 // pred_fallthru
          _
        %p295 = pneg %p52
        %p296 = pneg %p49
        %p297 = pneg %p73
        %p298 = pneg %p70
        %p299 = pneg %p94
        %p300 = pneg %p91
        %p301 = pneg %p115
        %p302 = pneg %p112
        %p303 = pneg %p136
        %p304 = pneg %p133
        %p305 = pneg %p157
        %p306 = pneg %p154
        %p307 = pneg %p178
        %p308 = pneg %p175
        %p309 = pneg %p206
        %p310 = pneg %p203
        %s311 = sand.u32 %s193, 1
        %s312 = scalar_lea.sflag [#allocation7], %s311
        %s313 = sand.u32 %s193, 1
        %s314 = smul.addr %s313, 256
        %s315 = scalar_lea.vmem [#allocation11], %s314
        %s316 = smul.u32 16, %s29
        %p318 = scmp.lt.s32.totalorder %s29, 0
        %s319 = ssub.s32 0, %s29
        %s320 = scalar_select %p318, %s319, %s29
        %s321 = sand.u32 %s320, 1
        %s322 = ssub.s32 0, %s321
        %s323 = scalar_select %p318, %s322, %s321
        %p324 = scmp.eq.s32.totalorder %s29, 0
        // Predicated region
        $region61: #{tpu_custom_call.1} parent=47 // pred_check
          %p325 = pneg %p324
        $region62: #{tpu_custom_call.1} parent=47 // pred_check_branch
          %327 = sbr.rel (%p325) target = $region64
        $region63: #{tpu_custom_call.1} parent=47 // pred_region
          %s328 = smul.u32 %s29, 16
          %s329 = smul.u32 %s328, 32
          %s330 = smul.u32 %s28, 704
          %s331 = sadd.s32 %s329, %s330
          %s332 = smul.addr %s331, 16
          %s333 = scalar_lea.hbm %s0, %s332
          %s334 = smul.u32 %s323, 704
          %s335 = scalar_lea.vmem [#allocation2], %s334
          %s336 = scalar_lea.sflag [#allocation3], %s323
          // Predicated region
          $region65: #{tpu_custom_call.1} parent=63 // pred_check
            _
          $region66: #{tpu_custom_call.1} parent=63 // pred_check_branch
            %338 = sbr.rel target = $region68
          $region67: #{tpu_custom_call.1} parent=63 // pred_region
            %339 = sst [smem:[#allocation14]] [#allocation13]
            %340 = sst [smem:[#allocation15]] [#allocation12]
          $region68: #{tpu_custom_call.1} parent=63 // pred_fallthru
            _
          %342 = shalt.err (0)
          %s344 = sshll.u32 %s335, 4
          %s345 = int_to_ptr.vmem [resolvable:$true] %s344
          %347 = dma.hbm_to_vmem [thread:$0]  %s333, 11264, %s345, %s336
        $region64: #{tpu_custom_call.1} parent=47 // pred_fallthru
          _
        %s348 = scalar_lea.sflag [#allocation3], %s323
        %s349 = smul.u32 22, 32
        %s350 = smul.u32 %s349, 1
        %s351 = sshll.u32 %s350, 4
        %352 = dma.done %s348, %s351
        %s353 = sadd.s32 %s29, 1
        %p354 = scmp.lt.s32.totalorder %s353, 1
        // Predicated region
        $region69: #{tpu_custom_call.1} parent=47 // pred_check
          %p355 = pneg %p354
        $region70: #{tpu_custom_call.1} parent=47 // pred_check_branch
          %357 = sbr.rel (%p355) target = $region72
        $region71: #{tpu_custom_call.1} parent=47 // pred_region
          %s358 = ssub.s32 1, %s323
          %s359 = smul.u32 %s353, 16
          %s360 = smul.u32 %s359, 32
          %s361 = smul.u32 %s28, 704
          %s362 = sadd.s32 %s360, %s361
          %s363 = smul.addr %s362, 16
          %s364 = scalar_lea.hbm %s0, %s363
          %s365 = smul.u32 %s358, 704
          %s366 = scalar_lea.vmem [#allocation2], %s365
          %s367 = scalar_lea.sflag [#allocation3], %s358
          // Predicated region
          $region73: #{tpu_custom_call.1} parent=71 // pred_check
            _
          $region74: #{tpu_custom_call.1} parent=71 // pred_check_branch
            %369 = sbr.rel target = $region76
          $region75: #{tpu_custom_call.1} parent=71 // pred_region
            %370 = sst [smem:[#allocation14]] [#allocation17]
            %371 = sst [smem:[#allocation15]] [#allocation16]
          $region76: #{tpu_custom_call.1} parent=71 // pred_fallthru
            _
          %373 = shalt.err (0)
          %s375 = sshll.u32 %s366, 4
          %s376 = int_to_ptr.vmem [resolvable:$true] %s375
          %378 = dma.hbm_to_vmem [thread:$0]  %s364, 11264, %s376, %s367
        $region72: #{tpu_custom_call.1} parent=47 // pred_fallthru
          _
        %v379 = vld [vmem:[#allocation5] sm:$0xff]
        %v380 = vld [vmem:[#allocation5 + $0x8] sm:$0xff]
        %v381 = vld [vmem:[#allocation5 + $0x10] sm:$0xff]
        %v382 = vld [vmem:[#allocation5 + $0x18] sm:$0xff]
        %v383 = vld [vmem:[#allocation5 + $0x20] sm:$0xff]
        %v384 = vld [vmem:[#allocation5 + $0x28] sm:$0xff]
        %v385 = vld [vmem:[#allocation5 + $0x30] sm:$0x1]
        %v386 = vld [vmem:[%s2] sm:$0x1]
        %v388 = vlaneseq
        %v389 = vshrl.u32 %v388, 7
        %v390 = vsub.s32 0, %v389
        %v391 = vrot.slane %v386, %v390
        %s393 = smul.u32 %s323, 704
        %s394 = scalar_lea.vmem [#allocation2], %s393
        %v395 = vld [vmem:[%s394 + $0x5] sm:$0xff]
        %v396 = vld [vmem:[%s394 + $0xd] sm:$0xff]
        %v397 = vld [vmem:[%s394 + $0x25] sm:$0xff]
        %v398 = vld [vmem:[%s394 + $0x2d] sm:$0xff]
        %v399 = vld [vmem:[%s394 + $0x45] sm:$0xff]
        %v400 = vld [vmem:[%s394 + $0x4d] sm:$0xff]
        %v401 = vld [vmem:[%s394 + $0x65] sm:$0xff]
        %v402 = vld [vmem:[%s394 + $0x6d] sm:$0xff]
        %v403 = vld [vmem:[%s394 + $0x85] sm:$0xff]
        %v404 = vld [vmem:[%s394 + $0x8d] sm:$0xff]
        %v405 = vld [vmem:[%s394 + $0xa5] sm:$0xff]
        %v406 = vld [vmem:[%s394 + $0xad] sm:$0xff]
        %v407 = vld [vmem:[%s394 + $0xc5] sm:$0xff]
        %v408 = vld [vmem:[%s394 + $0xcd] sm:$0xff]
        %v409 = vld [vmem:[%s394 + $0xe5] sm:$0xff]
        %v410 = vld [vmem:[%s394 + $0xed] sm:$0xff]
        %v411 = vld [vmem:[%s394 + $0x105] sm:$0xff]
        %v412 = vld [vmem:[%s394 + $0x10d] sm:$0xff]
        %v413 = vld [vmem:[%s394 + $0x125] sm:$0xff]
        %v414 = vld [vmem:[%s394 + $0x12d] sm:$0xff]
        %v415 = vld [vmem:[%s394 + $0x145] sm:$0xff]
        %v416 = vld [vmem:[%s394 + $0x14d] sm:$0xff]
        %v417 = vld [vmem:[%s394 + $0x165] sm:$0xff]
        %v418 = vld [vmem:[%s394 + $0x16d] sm:$0xff]
        %v419 = vld [vmem:[%s394 + $0x185] sm:$0xff]
        %v420 = vld [vmem:[%s394 + $0x18d] sm:$0xff]
        %v421 = vld [vmem:[%s394 + $0x1a5] sm:$0xff]
        %v422 = vld [vmem:[%s394 + $0x1ad] sm:$0xff]
        %v423 = vlaneseq
        %v424 = vshrl.u32 %v423, 7
        %v425 = vsub.s32 0, %v424
        %v426 = vrot.slane %v379, %v425
        %v427 = vmul.f32 %v395, %v426
        %v428 = vmul.f32 %v396, %v426
        %v429 = vmul.f32 %v397, %v426
        %v430 = vmul.f32 %v398, %v426
        %v431 = vmul.f32 %v399, %v426
        %v432 = vmul.f32 %v400, %v426
        %v433 = vmul.f32 %v401, %v426
        %v434 = vmul.f32 %v402, %v426
        %v435 = vmul.f32 %v403, %v426
        %v436 = vmul.f32 %v404, %v426
        %v437 = vmul.f32 %v405, %v426
        %v438 = vmul.f32 %v406, %v426
        %v439 = vmul.f32 %v407, %v426
        %v440 = vmul.f32 %v408, %v426
        %v441 = vmul.f32 %v409, %v426
        %v442 = vmul.f32 %v410, %v426
        %v443 = vadd.f32 %v391, %v427
        %v444 = vadd.f32 %v391, %v428
        %v445 = vadd.f32 %v391, %v429
        %v446 = vadd.f32 %v391, %v430
        %v447 = vadd.f32 %v391, %v431
        %v448 = vadd.f32 %v391, %v432
        %v449 = vadd.f32 %v391, %v433
        %v450 = vadd.f32 %v391, %v434
        %v451 = vadd.f32 %v391, %v435
        %v452 = vadd.f32 %v391, %v436
        %v453 = vadd.f32 %v391, %v437
        %v454 = vadd.f32 %v391, %v438
        %v455 = vadd.f32 %v391, %v439
        %v456 = vadd.f32 %v391, %v440
        %v457 = vadd.f32 %v391, %v441
        %v458 = vadd.f32 %v391, %v442
        %v459 = vlaneseq
        %v460 = vshrl.u32 %v459, 7
        %v461 = vsub.s32 7, %v460
        %v462 = vrot.slane %v379, %v461
        %v463 = vmul.f32 %v397, %v462
        %v464 = vmul.f32 %v398, %v462
        %v465 = vmul.f32 %v399, %v462
        %v466 = vmul.f32 %v400, %v462
        %v467 = vmul.f32 %v401, %v462
        %v468 = vmul.f32 %v402, %v462
        %v469 = vmul.f32 %v403, %v462
        %v470 = vmul.f32 %v404, %v462
        %v471 = vmul.f32 %v405, %v462
        %v472 = vmul.f32 %v406, %v462
        %v473 = vmul.f32 %v407, %v462
        %v474 = vmul.f32 %v408, %v462
        %v475 = vmul.f32 %v409, %v462
        %v476 = vmul.f32 %v410, %v462
        %v477 = vmul.f32 %v411, %v462
        %v478 = vmul.f32 %v412, %v462
        %v479 = vadd.f32 %v443, %v463
        %v480 = vadd.f32 %v444, %v464
        %v481 = vadd.f32 %v445, %v465
        %v482 = vadd.f32 %v446, %v466
        %v483 = vadd.f32 %v447, %v467
        %v484 = vadd.f32 %v448, %v468
        %v485 = vadd.f32 %v449, %v469
        %v486 = vadd.f32 %v450, %v470
        %v487 = vadd.f32 %v451, %v471
        %v488 = vadd.f32 %v452, %v472
        %v489 = vadd.f32 %v453, %v473
        %v490 = vadd.f32 %v454, %v474
        %v491 = vadd.f32 %v455, %v475
        %v492 = vadd.f32 %v456, %v476
        %v493 = vadd.f32 %v457, %v477
        %v494 = vadd.f32 %v458, %v478
        %v495 = vlaneseq
        %v496 = vshrl.u32 %v495, 7
        %v497 = vsub.s32 6, %v496
        %v498 = vrot.slane %v380, %v497
        %v499 = vmul.f32 %v399, %v498
        %v500 = vmul.f32 %v400, %v498
        %v501 = vmul.f32 %v401, %v498
        %v502 = vmul.f32 %v402, %v498
        %v503 = vmul.f32 %v403, %v498
        %v504 = vmul.f32 %v404, %v498
        %v505 = vmul.f32 %v405, %v498
        %v506 = vmul.f32 %v406, %v498
        %v507 = vmul.f32 %v407, %v498
        %v508 = vmul.f32 %v408, %v498
        %v509 = vmul.f32 %v409, %v498
        %v510 = vmul.f32 %v410, %v498
        %v511 = vmul.f32 %v411, %v498
        %v512 = vmul.f32 %v412, %v498
        %v513 = vmul.f32 %v413, %v498
        %v514 = vmul.f32 %v414, %v498
        %v515 = vadd.f32 %v479, %v499
        %v516 = vadd.f32 %v480, %v500
        %v517 = vadd.f32 %v481, %v501
        %v518 = vadd.f32 %v482, %v502
        %v519 = vadd.f32 %v483, %v503
        %v520 = vadd.f32 %v484, %v504
        %v521 = vadd.f32 %v485, %v505
        %v522 = vadd.f32 %v486, %v506
        %v523 = vadd.f32 %v487, %v507
        %v524 = vadd.f32 %v488, %v508
        %v525 = vadd.f32 %v489, %v509
        %v526 = vadd.f32 %v490, %v510
        %v527 = vadd.f32 %v491, %v511
        %v528 = vadd.f32 %v492, %v512
        %v529 = vadd.f32 %v493, %v513
        %v530 = vadd.f32 %v494, %v514
        %v531 = vlaneseq
        %v532 = vshrl.u32 %v531, 7
        %v533 = vsub.s32 5, %v532
        %v534 = vrot.slane %v381, %v533
        %v535 = vmul.f32 %v401, %v534
        %v536 = vmul.f32 %v402, %v534
        %v537 = vmul.f32 %v403, %v534
        %v538 = vmul.f32 %v404, %v534
        %v539 = vmul.f32 %v405, %v534
        %v540 = vmul.f32 %v406, %v534
        %v541 = vmul.f32 %v407, %v534
        %v542 = vmul.f32 %v408, %v534
        %v543 = vmul.f32 %v409, %v534
        %v544 = vmul.f32 %v410, %v534
        %v545 = vmul.f32 %v411, %v534
        %v546 = vmul.f32 %v412, %v534
        %v547 = vmul.f32 %v413, %v534
        %v548 = vmul.f32 %v414, %v534
        %v549 = vmul.f32 %v415, %v534
        %v550 = vmul.f32 %v416, %v534
        %v551 = vadd.f32 %v515, %v535
        %v552 = vadd.f32 %v516, %v536
        %v553 = vadd.f32 %v517, %v537
        %v554 = vadd.f32 %v518, %v538
        %v555 = vadd.f32 %v519, %v539
        %v556 = vadd.f32 %v520, %v540
        %v557 = vadd.f32 %v521, %v541
        %v558 = vadd.f32 %v522, %v542
        %v559 = vadd.f32 %v523, %v543
        %v560 = vadd.f32 %v524, %v544
        %v561 = vadd.f32 %v525, %v545
        %v562 = vadd.f32 %v526, %v546
        %v563 = vadd.f32 %v527, %v547
        %v564 = vadd.f32 %v528, %v548
        %v565 = vadd.f32 %v529, %v549
        %v566 = vadd.f32 %v530, %v550
        %v567 = vlaneseq
        %v568 = vshrl.u32 %v567, 7
        %v569 = vsub.s32 4, %v568
        %v570 = vrot.slane %v382, %v569
        %v571 = vmul.f32 %v403, %v570
        %v572 = vmul.f32 %v404, %v570
        %v573 = vmul.f32 %v405, %v570
        %v574 = vmul.f32 %v406, %v570
        %v575 = vmul.f32 %v407, %v570
        %v576 = vmul.f32 %v408, %v570
        %v577 = vmul.f32 %v409, %v570
        %v578 = vmul.f32 %v410, %v570
        %v579 = vmul.f32 %v411, %v570
        %v580 = vmul.f32 %v412, %v570
        %v581 = vmul.f32 %v413, %v570
        %v582 = vmul.f32 %v414, %v570
        %v583 = vmul.f32 %v415, %v570
        %v584 = vmul.f32 %v416, %v570
        %v585 = vmul.f32 %v417, %v570
        %v586 = vmul.f32 %v418, %v570
        %v587 = vadd.f32 %v551, %v571
        %v588 = vadd.f32 %v552, %v572
        %v589 = vadd.f32 %v553, %v573
        %v590 = vadd.f32 %v554, %v574
        %v591 = vadd.f32 %v555, %v575
        %v592 = vadd.f32 %v556, %v576
        %v593 = vadd.f32 %v557, %v577
        %v594 = vadd.f32 %v558, %v578
        %v595 = vadd.f32 %v559, %v579
        %v596 = vadd.f32 %v560, %v580
        %v597 = vadd.f32 %v561, %v581
        %v598 = vadd.f32 %v562, %v582
        %v599 = vadd.f32 %v563, %v583
        %v600 = vadd.f32 %v564, %v584
        %v601 = vadd.f32 %v565, %v585
        %v602 = vadd.f32 %v566, %v586
        %v603 = vlaneseq
        %v604 = vshrl.u32 %v603, 7
        %v605 = vsub.s32 3, %v604
        %v606 = vrot.slane %v383, %v605
        %v607 = vmul.f32 %v405, %v606
        %v608 = vmul.f32 %v406, %v606
        %v609 = vmul.f32 %v407, %v606
        %v610 = vmul.f32 %v408, %v606
        %v611 = vmul.f32 %v409, %v606
        %v612 = vmul.f32 %v410, %v606
        %v613 = vmul.f32 %v411, %v606
        %v614 = vmul.f32 %v412, %v606
        %v615 = vmul.f32 %v413, %v606
        %v616 = vmul.f32 %v414, %v606
        %v617 = vmul.f32 %v415, %v606
        %v618 = vmul.f32 %v416, %v606
        %v619 = vmul.f32 %v417, %v606
        %v620 = vmul.f32 %v418, %v606
        %v621 = vmul.f32 %v419, %v606
        %v622 = vmul.f32 %v420, %v606
        %v623 = vadd.f32 %v587, %v607
        %v624 = vadd.f32 %v588, %v608
        %v625 = vadd.f32 %v589, %v609
        %v626 = vadd.f32 %v590, %v610
        %v627 = vadd.f32 %v591, %v611
        %v628 = vadd.f32 %v592, %v612
        %v629 = vadd.f32 %v593, %v613
        %v630 = vadd.f32 %v594, %v614
        %v631 = vadd.f32 %v595, %v615
        %v632 = vadd.f32 %v596, %v616
        %v633 = vadd.f32 %v597, %v617
        %v634 = vadd.f32 %v598, %v618
        %v635 = vadd.f32 %v599, %v619
        %v636 = vadd.f32 %v600, %v620
        %v637 = vadd.f32 %v601, %v621
        %v638 = vadd.f32 %v602, %v622
        %v639 = vlaneseq
        %v640 = vshrl.u32 %v639, 7
        %v641 = vsub.s32 2, %v640
        %v642 = vrot.slane %v384, %v641
        %v643 = vmul.f32 %v407, %v642
        %v644 = vmul.f32 %v408, %v642
        %v645 = vmul.f32 %v409, %v642
        %v646 = vmul.f32 %v410, %v642
        %v647 = vmul.f32 %v411, %v642
        %v648 = vmul.f32 %v412, %v642
        %v649 = vmul.f32 %v413, %v642
        %v650 = vmul.f32 %v414, %v642
        %v651 = vmul.f32 %v415, %v642
        %v652 = vmul.f32 %v416, %v642
        %v653 = vmul.f32 %v417, %v642
        %v654 = vmul.f32 %v418, %v642
        %v655 = vmul.f32 %v419, %v642
        %v656 = vmul.f32 %v420, %v642
        %v657 = vmul.f32 %v421, %v642
        %v658 = vmul.f32 %v422, %v642
        %v659 = vadd.f32 %v623, %v643
        %v660 = vadd.f32 %v624, %v644
        %v661 = vadd.f32 %v625, %v645
        %v662 = vadd.f32 %v626, %v646
        %v663 = vadd.f32 %v627, %v647
        %v664 = vadd.f32 %v628, %v648
        %v665 = vadd.f32 %v629, %v649
        %v666 = vadd.f32 %v630, %v650
        %v667 = vadd.f32 %v631, %v651
        %v668 = vadd.f32 %v632, %v652
        %v669 = vadd.f32 %v633, %v653
        %v670 = vadd.f32 %v634, %v654
        %v671 = vadd.f32 %v635, %v655
        %v672 = vadd.f32 %v636, %v656
        %v673 = vadd.f32 %v637, %v657
        %v674 = vadd.f32 %v638, %v658
        %v675 = vld [vmem:[%s394 + $0x6] sm:$0xff]
        %v676 = vld [vmem:[%s394 + $0xe] sm:$0xff]
        %v677 = vld [vmem:[%s394 + $0x26] sm:$0xff]
        %v678 = vld [vmem:[%s394 + $0x2e] sm:$0xff]
        %v679 = vld [vmem:[%s394 + $0x46] sm:$0xff]
        %v680 = vld [vmem:[%s394 + $0x4e] sm:$0xff]
        %v681 = vld [vmem:[%s394 + $0x66] sm:$0xff]
        %v682 = vld [vmem:[%s394 + $0x6e] sm:$0xff]
        %v683 = vld [vmem:[%s394 + $0x86] sm:$0xff]
        %v684 = vld [vmem:[%s394 + $0x8e] sm:$0xff]
        %v685 = vld [vmem:[%s394 + $0xa6] sm:$0xff]
        %v686 = vld [vmem:[%s394 + $0xae] sm:$0xff]
        %v687 = vld [vmem:[%s394 + $0xc6] sm:$0xff]
        %v688 = vld [vmem:[%s394 + $0xce] sm:$0xff]
        %v689 = vld [vmem:[%s394 + $0xe6] sm:$0xff]
        %v690 = vld [vmem:[%s394 + $0xee] sm:$0xff]
        %v691 = vld [vmem:[%s394 + $0x106] sm:$0xff]
        %v692 = vld [vmem:[%s394 + $0x10e] sm:$0xff]
        %v693 = vld [vmem:[%s394 + $0x126] sm:$0xff]
        %v694 = vld [vmem:[%s394 + $0x12e] sm:$0xff]
        %v695 = vld [vmem:[%s394 + $0x146] sm:$0xff]
        %v696 = vld [vmem:[%s394 + $0x14e] sm:$0xff]
        %v697 = vld [vmem:[%s394 + $0x166] sm:$0xff]
        %v698 = vld [vmem:[%s394 + $0x16e] sm:$0xff]
        %v699 = vld [vmem:[%s394 + $0x186] sm:$0xff]
        %v700 = vld [vmem:[%s394 + $0x18e] sm:$0xff]
        %v701 = vld [vmem:[%s394 + $0x1a6] sm:$0xff]
        %v702 = vld [vmem:[%s394 + $0x1ae] sm:$0xff]
        %v703 = vlaneseq
        %v704 = vshrl.u32 %v703, 7
        %v705 = vsub.s32 1, %v704
        %v706 = vrot.slane %v379, %v705
        %v707 = vmul.f32 %v675, %v706
        %v708 = vmul.f32 %v676, %v706
        %v709 = vmul.f32 %v677, %v706
        %v710 = vmul.f32 %v678, %v706
        %v711 = vmul.f32 %v679, %v706
        %v712 = vmul.f32 %v680, %v706
        %v713 = vmul.f32 %v681, %v706
        %v714 = vmul.f32 %v682, %v706
        %v715 = vmul.f32 %v683, %v706
        %v716 = vmul.f32 %v684, %v706
        %v717 = vmul.f32 %v685, %v706
        %v718 = vmul.f32 %v686, %v706
        %v719 = vmul.f32 %v687, %v706
        %v720 = vmul.f32 %v688, %v706
        %v721 = vmul.f32 %v689, %v706
        %v722 = vmul.f32 %v690, %v706
        %v723 = vadd.f32 %v659, %v707
        %v724 = vadd.f32 %v660, %v708
        %v725 = vadd.f32 %v661, %v709
        %v726 = vadd.f32 %v662, %v710
        %v727 = vadd.f32 %v663, %v711
        %v728 = vadd.f32 %v664, %v712
        %v729 = vadd.f32 %v665, %v713
        %v730 = vadd.f32 %v666, %v714
        %v731 = vadd.f32 %v667, %v715
        %v732 = vadd.f32 %v668, %v716
        %v733 = vadd.f32 %v669, %v717
        %v734 = vadd.f32 %v670, %v718
        %v735 = vadd.f32 %v671, %v719
        %v736 = vadd.f32 %v672, %v720
        %v737 = vadd.f32 %v673, %v721
        %v738 = vadd.f32 %v674, %v722
        %v739 = vlaneseq
        %v740 = vshrl.u32 %v739, 7
        %v741 = vsub.s32 0, %v740
        %v742 = vrot.slane %v380, %v741
        %v743 = vmul.f32 %v677, %v742
        %v744 = vmul.f32 %v678, %v742
        %v745 = vmul.f32 %v679, %v742
        %v746 = vmul.f32 %v680, %v742
        %v747 = vmul.f32 %v681, %v742
        %v748 = vmul.f32 %v682, %v742
        %v749 = vmul.f32 %v683, %v742
        %v750 = vmul.f32 %v684, %v742
        %v751 = vmul.f32 %v685, %v742
        %v752 = vmul.f32 %v686, %v742
        %v753 = vmul.f32 %v687, %v742
        %v754 = vmul.f32 %v688, %v742
        %v755 = vmul.f32 %v689, %v742
        %v756 = vmul.f32 %v690, %v742
        %v757 = vmul.f32 %v691, %v742
        %v758 = vmul.f32 %v692, %v742
        %v759 = vadd.f32 %v723, %v743
        %v760 = vadd.f32 %v724, %v744
        %v761 = vadd.f32 %v725, %v745
        %v762 = vadd.f32 %v726, %v746
        %v763 = vadd.f32 %v727, %v747
        %v764 = vadd.f32 %v728, %v748
        %v765 = vadd.f32 %v729, %v749
        %v766 = vadd.f32 %v730, %v750
        %v767 = vadd.f32 %v731, %v751
        %v768 = vadd.f32 %v732, %v752
        %v769 = vadd.f32 %v733, %v753
        %v770 = vadd.f32 %v734, %v754
        %v771 = vadd.f32 %v735, %v755
        %v772 = vadd.f32 %v736, %v756
        %v773 = vadd.f32 %v737, %v757
        %v774 = vadd.f32 %v738, %v758
        %v775 = vlaneseq
        %v776 = vshrl.u32 %v775, 7
        %v777 = vsub.s32 7, %v776
        %v778 = vrot.slane %v380, %v777
        %v779 = vmul.f32 %v679, %v778
        %v780 = vmul.f32 %v680, %v778
        %v781 = vmul.f32 %v681, %v778
        %v782 = vmul.f32 %v682, %v778
        %v783 = vmul.f32 %v683, %v778
        %v784 = vmul.f32 %v684, %v778
        %v785 = vmul.f32 %v685, %v778
        %v786 = vmul.f32 %v686, %v778
        %v787 = vmul.f32 %v687, %v778
        %v788 = vmul.f32 %v688, %v778
        %v789 = vmul.f32 %v689, %v778
        %v790 = vmul.f32 %v690, %v778
        %v791 = vmul.f32 %v691, %v778
        %v792 = vmul.f32 %v692, %v778
        %v793 = vmul.f32 %v693, %v778
        %v794 = vmul.f32 %v694, %v778
        %v795 = vadd.f32 %v759, %v779
        %v796 = vadd.f32 %v760, %v780
        %v797 = vadd.f32 %v761, %v781
        %v798 = vadd.f32 %v762, %v782
        %v799 = vadd.f32 %v763, %v783
        %v800 = vadd.f32 %v764, %v784
        %v801 = vadd.f32 %v765, %v785
        %v802 = vadd.f32 %v766, %v786
        %v803 = vadd.f32 %v767, %v787
        %v804 = vadd.f32 %v768, %v788
        %v805 = vadd.f32 %v769, %v789
        %v806 = vadd.f32 %v770, %v790
        %v807 = vadd.f32 %v771, %v791
        %v808 = vadd.f32 %v772, %v792
        %v809 = vadd.f32 %v773, %v793
        %v810 = vadd.f32 %v774, %v794
        %v811 = vlaneseq
        %v812 = vshrl.u32 %v811, 7
        %v813 = vsub.s32 6, %v812
        %v814 = vrot.slane %v381, %v813
        %v815 = vmul.f32 %v681, %v814
        %v816 = vmul.f32 %v682, %v814
        %v817 = vmul.f32 %v683, %v814
        %v818 = vmul.f32 %v684, %v814
        %v819 = vmul.f32 %v685, %v814
        %v820 = vmul.f32 %v686, %v814
        %v821 = vmul.f32 %v687, %v814
        %v822 = vmul.f32 %v688, %v814
        %v823 = vmul.f32 %v689, %v814
        %v824 = vmul.f32 %v690, %v814
        %v825 = vmul.f32 %v691, %v814
        %v826 = vmul.f32 %v692, %v814
        %v827 = vmul.f32 %v693, %v814
        %v828 = vmul.f32 %v694, %v814
        %v829 = vmul.f32 %v695, %v814
        %v830 = vmul.f32 %v696, %v814
        %v831 = vadd.f32 %v795, %v815
        %v832 = vadd.f32 %v796, %v816
        %v833 = vadd.f32 %v797, %v817
        %v834 = vadd.f32 %v798, %v818
        %v835 = vadd.f32 %v799, %v819
        %v836 = vadd.f32 %v800, %v820
        %v837 = vadd.f32 %v801, %v821
        %v838 = vadd.f32 %v802, %v822
        %v839 = vadd.f32 %v803, %v823
        %v840 = vadd.f32 %v804, %v824
        %v841 = vadd.f32 %v805, %v825
        %v842 = vadd.f32 %v806, %v826
        %v843 = vadd.f32 %v807, %v827
        %v844 = vadd.f32 %v808, %v828
        %v845 = vadd.f32 %v809, %v829
        %v846 = vadd.f32 %v810, %v830
        %v847 = vlaneseq
        %v848 = vshrl.u32 %v847, 7
        %v849 = vsub.s32 5, %v848
        %v850 = vrot.slane %v382, %v849
        %v851 = vmul.f32 %v683, %v850
        %v852 = vmul.f32 %v684, %v850
        %v853 = vmul.f32 %v685, %v850
        %v854 = vmul.f32 %v686, %v850
        %v855 = vmul.f32 %v687, %v850
        %v856 = vmul.f32 %v688, %v850
        %v857 = vmul.f32 %v689, %v850
        %v858 = vmul.f32 %v690, %v850
        %v859 = vmul.f32 %v691, %v850
        %v860 = vmul.f32 %v692, %v850
        %v861 = vmul.f32 %v693, %v850
        %v862 = vmul.f32 %v694, %v850
        %v863 = vmul.f32 %v695, %v850
        %v864 = vmul.f32 %v696, %v850
        %v865 = vmul.f32 %v697, %v850
        %v866 = vmul.f32 %v698, %v850
        %v867 = vadd.f32 %v831, %v851
        %v868 = vadd.f32 %v832, %v852
        %v869 = vadd.f32 %v833, %v853
        %v870 = vadd.f32 %v834, %v854
        %v871 = vadd.f32 %v835, %v855
        %v872 = vadd.f32 %v836, %v856
        %v873 = vadd.f32 %v837, %v857
        %v874 = vadd.f32 %v838, %v858
        %v875 = vadd.f32 %v839, %v859
        %v876 = vadd.f32 %v840, %v860
        %v877 = vadd.f32 %v841, %v861
        %v878 = vadd.f32 %v842, %v862
        %v879 = vadd.f32 %v843, %v863
        %v880 = vadd.f32 %v844, %v864
        %v881 = vadd.f32 %v845, %v865
        %v882 = vadd.f32 %v846, %v866
        %v883 = vlaneseq
        %v884 = vshrl.u32 %v883, 7
        %v885 = vsub.s32 4, %v884
        %v886 = vrot.slane %v383, %v885
        %v887 = vmul.f32 %v685, %v886
        %v888 = vmul.f32 %v686, %v886
        %v889 = vmul.f32 %v687, %v886
        %v890 = vmul.f32 %v688, %v886
        %v891 = vmul.f32 %v689, %v886
        %v892 = vmul.f32 %v690, %v886
        %v893 = vmul.f32 %v691, %v886
        %v894 = vmul.f32 %v692, %v886
        %v895 = vmul.f32 %v693, %v886
        %v896 = vmul.f32 %v694, %v886
        %v897 = vmul.f32 %v695, %v886
        %v898 = vmul.f32 %v696, %v886
        %v899 = vmul.f32 %v697, %v886
        %v900 = vmul.f32 %v698, %v886
        %v901 = vmul.f32 %v699, %v886
        %v902 = vmul.f32 %v700, %v886
        %v903 = vadd.f32 %v867, %v887
        %v904 = vadd.f32 %v868, %v888
        %v905 = vadd.f32 %v869, %v889
        %v906 = vadd.f32 %v870, %v890
        %v907 = vadd.f32 %v871, %v891
        %v908 = vadd.f32 %v872, %v892
        %v909 = vadd.f32 %v873, %v893
        %v910 = vadd.f32 %v874, %v894
        %v911 = vadd.f32 %v875, %v895
        %v912 = vadd.f32 %v876, %v896
        %v913 = vadd.f32 %v877, %v897
        %v914 = vadd.f32 %v878, %v898
        %v915 = vadd.f32 %v879, %v899
        %v916 = vadd.f32 %v880, %v900
        %v917 = vadd.f32 %v881, %v901
        %v918 = vadd.f32 %v882, %v902
        %v919 = vlaneseq
        %v920 = vshrl.u32 %v919, 7
        %v921 = vsub.s32 3, %v920
        %v922 = vrot.slane %v384, %v921
        %v923 = vmul.f32 %v687, %v922
        %v924 = vmul.f32 %v688, %v922
        %v925 = vmul.f32 %v689, %v922
        %v926 = vmul.f32 %v690, %v922
        %v927 = vmul.f32 %v691, %v922
        %v928 = vmul.f32 %v692, %v922
        %v929 = vmul.f32 %v693, %v922
        %v930 = vmul.f32 %v694, %v922
        %v931 = vmul.f32 %v695, %v922
        %v932 = vmul.f32 %v696, %v922
        %v933 = vmul.f32 %v697, %v922
        %v934 = vmul.f32 %v698, %v922
        %v935 = vmul.f32 %v699, %v922
        %v936 = vmul.f32 %v700, %v922
        %v937 = vmul.f32 %v701, %v922
        %v938 = vmul.f32 %v702, %v922
        %v939 = vadd.f32 %v903, %v923
        %v940 = vadd.f32 %v904, %v924
        %v941 = vadd.f32 %v905, %v925
        %v942 = vadd.f32 %v906, %v926
        %v943 = vadd.f32 %v907, %v927
        %v944 = vadd.f32 %v908, %v928
        %v945 = vadd.f32 %v909, %v929
        %v946 = vadd.f32 %v910, %v930
        %v947 = vadd.f32 %v911, %v931
        %v948 = vadd.f32 %v912, %v932
        %v949 = vadd.f32 %v913, %v933
        %v950 = vadd.f32 %v914, %v934
        %v951 = vadd.f32 %v915, %v935
        %v952 = vadd.f32 %v916, %v936
        %v953 = vadd.f32 %v917, %v937
        %v954 = vadd.f32 %v918, %v938
        %v955 = vld [vmem:[%s394 + $0x7] sm:$0xff]
        %v956 = vld [vmem:[%s394 + $0xf] sm:$0xff]
        %v957 = vld [vmem:[%s394 + $0x27] sm:$0xff]
        %v958 = vld [vmem:[%s394 + $0x2f] sm:$0xff]
        %v959 = vld [vmem:[%s394 + $0x47] sm:$0xff]
        %v960 = vld [vmem:[%s394 + $0x4f] sm:$0xff]
        %v961 = vld [vmem:[%s394 + $0x67] sm:$0xff]
        %v962 = vld [vmem:[%s394 + $0x6f] sm:$0xff]
        %v963 = vld [vmem:[%s394 + $0x87] sm:$0xff]
        %v964 = vld [vmem:[%s394 + $0x8f] sm:$0xff]
        %v965 = vld [vmem:[%s394 + $0xa7] sm:$0xff]
        %v966 = vld [vmem:[%s394 + $0xaf] sm:$0xff]
        %v967 = vld [vmem:[%s394 + $0xc7] sm:$0xff]
        %v968 = vld [vmem:[%s394 + $0xcf] sm:$0xff]
        %v969 = vld [vmem:[%s394 + $0xe7] sm:$0xff]
        %v970 = vld [vmem:[%s394 + $0xef] sm:$0xff]
        %v971 = vld [vmem:[%s394 + $0x107] sm:$0xff]
        %v972 = vld [vmem:[%s394 + $0x10f] sm:$0xff]
        %v973 = vld [vmem:[%s394 + $0x127] sm:$0xff]
        %v974 = vld [vmem:[%s394 + $0x12f] sm:$0xff]
        %v975 = vld [vmem:[%s394 + $0x147] sm:$0xff]
        %v976 = vld [vmem:[%s394 + $0x14f] sm:$0xff]
        %v977 = vld [vmem:[%s394 + $0x167] sm:$0xff]
        %v978 = vld [vmem:[%s394 + $0x16f] sm:$0xff]
        %v979 = vld [vmem:[%s394 + $0x187] sm:$0xff]
        %v980 = vld [vmem:[%s394 + $0x18f] sm:$0xff]
        %v981 = vld [vmem:[%s394 + $0x1a7] sm:$0xff]
        %v982 = vld [vmem:[%s394 + $0x1af] sm:$0xff]
        %v983 = vlaneseq
        %v984 = vshrl.u32 %v983, 7
        %v985 = vsub.s32 2, %v984
        %v986 = vrot.slane %v379, %v985
        %v987 = vmul.f32 %v955, %v986
        %v988 = vmul.f32 %v956, %v986
        %v989 = vmul.f32 %v957, %v986
        %v990 = vmul.f32 %v958, %v986
        %v991 = vmul.f32 %v959, %v986
        %v992 = vmul.f32 %v960, %v986
        %v993 = vmul.f32 %v961, %v986
        %v994 = vmul.f32 %v962, %v986
        %v995 = vmul.f32 %v963, %v986
        %v996 = vmul.f32 %v964, %v986
        %v997 = vmul.f32 %v965, %v986
        %v998 = vmul.f32 %v966, %v986
        %v999 = vmul.f32 %v967, %v986
        %v1000 = vmul.f32 %v968, %v986
        %v1001 = vmul.f32 %v969, %v986
        %v1002 = vmul.f32 %v970, %v986
        %v1003 = vadd.f32 %v939, %v987
        %v1004 = vadd.f32 %v940, %v988
        %v1005 = vadd.f32 %v941, %v989
        %v1006 = vadd.f32 %v942, %v990
        %v1007 = vadd.f32 %v943, %v991
        %v1008 = vadd.f32 %v944, %v992
        %v1009 = vadd.f32 %v945, %v993
        %v1010 = vadd.f32 %v946, %v994
        %v1011 = vadd.f32 %v947, %v995
        %v1012 = vadd.f32 %v948, %v996
        %v1013 = vadd.f32 %v949, %v997
        %v1014 = vadd.f32 %v950, %v998
        %v1015 = vadd.f32 %v951, %v999
        %v1016 = vadd.f32 %v952, %v1000
        %v1017 = vadd.f32 %v953, %v1001
        %v1018 = vadd.f32 %v954, %v1002
        %v1019 = vlaneseq
        %v1020 = vshrl.u32 %v1019, 7
        %v1021 = vsub.s32 1, %v1020
        %v1022 = vrot.slane %v380, %v1021
        %v1023 = vmul.f32 %v957, %v1022
        %v1024 = vmul.f32 %v958, %v1022
        %v1025 = vmul.f32 %v959, %v1022
        %v1026 = vmul.f32 %v960, %v1022
        %v1027 = vmul.f32 %v961, %v1022
        %v1028 = vmul.f32 %v962, %v1022
        %v1029 = vmul.f32 %v963, %v1022
        %v1030 = vmul.f32 %v964, %v1022
        %v1031 = vmul.f32 %v965, %v1022
        %v1032 = vmul.f32 %v966, %v1022
        %v1033 = vmul.f32 %v967, %v1022
        %v1034 = vmul.f32 %v968, %v1022
        %v1035 = vmul.f32 %v969, %v1022
        %v1036 = vmul.f32 %v970, %v1022
        %v1037 = vmul.f32 %v971, %v1022
        %v1038 = vmul.f32 %v972, %v1022
        %v1039 = vadd.f32 %v1003, %v1023
        %v1040 = vadd.f32 %v1004, %v1024
        %v1041 = vadd.f32 %v1005, %v1025
        %v1042 = vadd.f32 %v1006, %v1026
        %v1043 = vadd.f32 %v1007, %v1027
        %v1044 = vadd.f32 %v1008, %v1028
        %v1045 = vadd.f32 %v1009, %v1029
        %v1046 = vadd.f32 %v1010, %v1030
        %v1047 = vadd.f32 %v1011, %v1031
        %v1048 = vadd.f32 %v1012, %v1032
        %v1049 = vadd.f32 %v1013, %v1033
        %v1050 = vadd.f32 %v1014, %v1034
        %v1051 = vadd.f32 %v1015, %v1035
        %v1052 = vadd.f32 %v1016, %v1036
        %v1053 = vadd.f32 %v1017, %v1037
        %v1054 = vadd.f32 %v1018, %v1038
        %v1055 = vlaneseq
        %v1056 = vshrl.u32 %v1055, 7
        %v1057 = vsub.s32 0, %v1056
        %v1058 = vrot.slane %v381, %v1057
        %v1059 = vmul.f32 %v959, %v1058
        %v1060 = vmul.f32 %v960, %v1058
        %v1061 = vmul.f32 %v961, %v1058
        %v1062 = vmul.f32 %v962, %v1058
        %v1063 = vmul.f32 %v963, %v1058
        %v1064 = vmul.f32 %v964, %v1058
        %v1065 = vmul.f32 %v965, %v1058
        %v1066 = vmul.f32 %v966, %v1058
        %v1067 = vmul.f32 %v967, %v1058
        %v1068 = vmul.f32 %v968, %v1058
        %v1069 = vmul.f32 %v969, %v1058
        %v1070 = vmul.f32 %v970, %v1058
        %v1071 = vmul.f32 %v971, %v1058
        %v1072 = vmul.f32 %v972, %v1058
        %v1073 = vmul.f32 %v973, %v1058
        %v1074 = vmul.f32 %v974, %v1058
        %v1075 = vadd.f32 %v1039, %v1059
        %v1076 = vadd.f32 %v1040, %v1060
        %v1077 = vadd.f32 %v1041, %v1061
        %v1078 = vadd.f32 %v1042, %v1062
        %v1079 = vadd.f32 %v1043, %v1063
        %v1080 = vadd.f32 %v1044, %v1064
        %v1081 = vadd.f32 %v1045, %v1065
        %v1082 = vadd.f32 %v1046, %v1066
        %v1083 = vadd.f32 %v1047, %v1067
        %v1084 = vadd.f32 %v1048, %v1068
        %v1085 = vadd.f32 %v1049, %v1069
        %v1086 = vadd.f32 %v1050, %v1070
        %v1087 = vadd.f32 %v1051, %v1071
        %v1088 = vadd.f32 %v1052, %v1072
        %v1089 = vadd.f32 %v1053, %v1073
        %v1090 = vadd.f32 %v1054, %v1074
        %v1091 = vlaneseq
        %v1092 = vshrl.u32 %v1091, 7
        %v1093 = vsub.s32 7, %v1092
        %v1094 = vrot.slane %v381, %v1093
        %v1095 = vmul.f32 %v961, %v1094
        %v1096 = vmul.f32 %v962, %v1094
        %v1097 = vmul.f32 %v963, %v1094
        %v1098 = vmul.f32 %v964, %v1094
        %v1099 = vmul.f32 %v965, %v1094
        %v1100 = vmul.f32 %v966, %v1094
        %v1101 = vmul.f32 %v967, %v1094
        %v1102 = vmul.f32 %v968, %v1094
        %v1103 = vmul.f32 %v969, %v1094
        %v1104 = vmul.f32 %v970, %v1094
        %v1105 = vmul.f32 %v971, %v1094
        %v1106 = vmul.f32 %v972, %v1094
        %v1107 = vmul.f32 %v973, %v1094
        %v1108 = vmul.f32 %v974, %v1094
        %v1109 = vmul.f32 %v975, %v1094
        %v1110 = vmul.f32 %v976, %v1094
        %v1111 = vadd.f32 %v1075, %v1095
        %v1112 = vadd.f32 %v1076, %v1096
        %v1113 = vadd.f32 %v1077, %v1097
        %v1114 = vadd.f32 %v1078, %v1098
        %v1115 = vadd.f32 %v1079, %v1099
        %v1116 = vadd.f32 %v1080, %v1100
        %v1117 = vadd.f32 %v1081, %v1101
        %v1118 = vadd.f32 %v1082, %v1102
        %v1119 = vadd.f32 %v1083, %v1103
        %v1120 = vadd.f32 %v1084, %v1104
        %v1121 = vadd.f32 %v1085, %v1105
        %v1122 = vadd.f32 %v1086, %v1106
        %v1123 = vadd.f32 %v1087, %v1107
        %v1124 = vadd.f32 %v1088, %v1108
        %v1125 = vadd.f32 %v1089, %v1109
        %v1126 = vadd.f32 %v1090, %v1110
        %v1127 = vlaneseq
        %v1128 = vshrl.u32 %v1127, 7
        %v1129 = vsub.s32 6, %v1128
        %v1130 = vrot.slane %v382, %v1129
        %v1131 = vmul.f32 %v963, %v1130
        %v1132 = vmul.f32 %v964, %v1130
        %v1133 = vmul.f32 %v965, %v1130
        %v1134 = vmul.f32 %v966, %v1130
        %v1135 = vmul.f32 %v967, %v1130
        %v1136 = vmul.f32 %v968, %v1130
        %v1137 = vmul.f32 %v969, %v1130
        %v1138 = vmul.f32 %v970, %v1130
        %v1139 = vmul.f32 %v971, %v1130
        %v1140 = vmul.f32 %v972, %v1130
        %v1141 = vmul.f32 %v973, %v1130
        %v1142 = vmul.f32 %v974, %v1130
        %v1143 = vmul.f32 %v975, %v1130
        %v1144 = vmul.f32 %v976, %v1130
        %v1145 = vmul.f32 %v977, %v1130
        %v1146 = vmul.f32 %v978, %v1130
        %v1147 = vadd.f32 %v1111, %v1131
        %v1148 = vadd.f32 %v1112, %v1132
        %v1149 = vadd.f32 %v1113, %v1133
        %v1150 = vadd.f32 %v1114, %v1134
        %v1151 = vadd.f32 %v1115, %v1135
        %v1152 = vadd.f32 %v1116, %v1136
        %v1153 = vadd.f32 %v1117, %v1137
        %v1154 = vadd.f32 %v1118, %v1138
        %v1155 = vadd.f32 %v1119, %v1139
        %v1156 = vadd.f32 %v1120, %v1140
        %v1157 = vadd.f32 %v1121, %v1141
        %v1158 = vadd.f32 %v1122, %v1142
        %v1159 = vadd.f32 %v1123, %v1143
        %v1160 = vadd.f32 %v1124, %v1144
        %v1161 = vadd.f32 %v1125, %v1145
        %v1162 = vadd.f32 %v1126, %v1146
        %v1163 = vlaneseq
        %v1164 = vshrl.u32 %v1163, 7
        %v1165 = vsub.s32 5, %v1164
        %v1166 = vrot.slane %v383, %v1165
        %v1167 = vmul.f32 %v965, %v1166
        %v1168 = vmul.f32 %v966, %v1166
        %v1169 = vmul.f32 %v967, %v1166
        %v1170 = vmul.f32 %v968, %v1166
        %v1171 = vmul.f32 %v969, %v1166
        %v1172 = vmul.f32 %v970, %v1166
        %v1173 = vmul.f32 %v971, %v1166
        %v1174 = vmul.f32 %v972, %v1166
        %v1175 = vmul.f32 %v973, %v1166
        %v1176 = vmul.f32 %v974, %v1166
        %v1177 = vmul.f32 %v975, %v1166
        %v1178 = vmul.f32 %v976, %v1166
        %v1179 = vmul.f32 %v977, %v1166
        %v1180 = vmul.f32 %v978, %v1166
        %v1181 = vmul.f32 %v979, %v1166
        %v1182 = vmul.f32 %v980, %v1166
        %v1183 = vadd.f32 %v1147, %v1167
        %v1184 = vadd.f32 %v1148, %v1168
        %v1185 = vadd.f32 %v1149, %v1169
        %v1186 = vadd.f32 %v1150, %v1170
        %v1187 = vadd.f32 %v1151, %v1171
        %v1188 = vadd.f32 %v1152, %v1172
        %v1189 = vadd.f32 %v1153, %v1173
        %v1190 = vadd.f32 %v1154, %v1174
        %v1191 = vadd.f32 %v1155, %v1175
        %v1192 = vadd.f32 %v1156, %v1176
        %v1193 = vadd.f32 %v1157, %v1177
        %v1194 = vadd.f32 %v1158, %v1178
        %v1195 = vadd.f32 %v1159, %v1179
        %v1196 = vadd.f32 %v1160, %v1180
        %v1197 = vadd.f32 %v1161, %v1181
        %v1198 = vadd.f32 %v1162, %v1182
        %v1199 = vlaneseq
        %v1200 = vshrl.u32 %v1199, 7
        %v1201 = vsub.s32 4, %v1200
        %v1202 = vrot.slane %v384, %v1201
        %v1203 = vmul.f32 %v967, %v1202
        %v1204 = vmul.f32 %v968, %v1202
        %v1205 = vmul.f32 %v969, %v1202
        %v1206 = vmul.f32 %v970, %v1202
        %v1207 = vmul.f32 %v971, %v1202
        %v1208 = vmul.f32 %v972, %v1202
        %v1209 = vmul.f32 %v973, %v1202
        %v1210 = vmul.f32 %v974, %v1202
        %v1211 = vmul.f32 %v975, %v1202
        %v1212 = vmul.f32 %v976, %v1202
        %v1213 = vmul.f32 %v977, %v1202
        %v1214 = vmul.f32 %v978, %v1202
        %v1215 = vmul.f32 %v979, %v1202
        %v1216 = vmul.f32 %v980, %v1202
        %v1217 = vmul.f32 %v981, %v1202
        %v1218 = vmul.f32 %v982, %v1202
        %v1219 = vadd.f32 %v1183, %v1203
        %v1220 = vadd.f32 %v1184, %v1204
        %v1221 = vadd.f32 %v1185, %v1205
        %v1222 = vadd.f32 %v1186, %v1206
        %v1223 = vadd.f32 %v1187, %v1207
        %v1224 = vadd.f32 %v1188, %v1208
        %v1225 = vadd.f32 %v1189, %v1209
        %v1226 = vadd.f32 %v1190, %v1210
        %v1227 = vadd.f32 %v1191, %v1211
        %v1228 = vadd.f32 %v1192, %v1212
        %v1229 = vadd.f32 %v1193, %v1213
        %v1230 = vadd.f32 %v1194, %v1214
        %v1231 = vadd.f32 %v1195, %v1215
        %v1232 = vadd.f32 %v1196, %v1216
        %v1233 = vadd.f32 %v1197, %v1217
        %v1234 = vadd.f32 %v1198, %v1218
        %v1235 = vld [vmem:[%s394 + $0x8] sm:$0xff]
        %v1236 = vld [vmem:[%s394 + $0x10] sm:$0xff]
        %v1237 = vld [vmem:[%s394 + $0x28] sm:$0xff]
        %v1238 = vld [vmem:[%s394 + $0x30] sm:$0xff]
        %v1239 = vld [vmem:[%s394 + $0x48] sm:$0xff]
        %v1240 = vld [vmem:[%s394 + $0x50] sm:$0xff]
        %v1241 = vld [vmem:[%s394 + $0x68] sm:$0xff]
        %v1242 = vld [vmem:[%s394 + $0x70] sm:$0xff]
        %v1243 = vld [vmem:[%s394 + $0x88] sm:$0xff]
        %v1244 = vld [vmem:[%s394 + $0x90] sm:$0xff]
        %v1245 = vld [vmem:[%s394 + $0xa8] sm:$0xff]
        %v1246 = vld [vmem:[%s394 + $0xb0] sm:$0xff]
        %v1247 = vld [vmem:[%s394 + $0xc8] sm:$0xff]
        %v1248 = vld [vmem:[%s394 + $0xd0] sm:$0xff]
        %v1249 = vld [vmem:[%s394 + $0xe8] sm:$0xff]
        %v1250 = vld [vmem:[%s394 + $0xf0] sm:$0xff]
        %v1251 = vld [vmem:[%s394 + $0x108] sm:$0xff]
        %v1252 = vld [vmem:[%s394 + $0x110] sm:$0xff]
        %v1253 = vld [vmem:[%s394 + $0x128] sm:$0xff]
        %v1254 = vld [vmem:[%s394 + $0x130] sm:$0xff]
        %v1255 = vld [vmem:[%s394 + $0x148] sm:$0xff]
        %v1256 = vld [vmem:[%s394 + $0x150] sm:$0xff]
        %v1257 = vld [vmem:[%s394 + $0x168] sm:$0xff]
        %v1258 = vld [vmem:[%s394 + $0x170] sm:$0xff]
        %v1259 = vld [vmem:[%s394 + $0x188] sm:$0xff]
        %v1260 = vld [vmem:[%s394 + $0x190] sm:$0xff]
        %v1261 = vld [vmem:[%s394 + $0x1a8] sm:$0xff]
        %v1262 = vld [vmem:[%s394 + $0x1b0] sm:$0xff]
        %v1263 = vlaneseq
        %v1264 = vshrl.u32 %v1263, 7
        %v1265 = vsub.s32 3, %v1264
        %v1266 = vrot.slane %v379, %v1265
        %v1267 = vmul.f32 %v1235, %v1266
        %v1268 = vmul.f32 %v1236, %v1266
        %v1269 = vmul.f32 %v1237, %v1266
        %v1270 = vmul.f32 %v1238, %v1266
        %v1271 = vmul.f32 %v1239, %v1266
        %v1272 = vmul.f32 %v1240, %v1266
        %v1273 = vmul.f32 %v1241, %v1266
        %v1274 = vmul.f32 %v1242, %v1266
        %v1275 = vmul.f32 %v1243, %v1266
        %v1276 = vmul.f32 %v1244, %v1266
        %v1277 = vmul.f32 %v1245, %v1266
        %v1278 = vmul.f32 %v1246, %v1266
        %v1279 = vmul.f32 %v1247, %v1266
        %v1280 = vmul.f32 %v1248, %v1266
        %v1281 = vmul.f32 %v1249, %v1266
        %v1282 = vmul.f32 %v1250, %v1266
        %v1283 = vadd.f32 %v1219, %v1267
        %v1284 = vadd.f32 %v1220, %v1268
        %v1285 = vadd.f32 %v1221, %v1269
        %v1286 = vadd.f32 %v1222, %v1270
        %v1287 = vadd.f32 %v1223, %v1271
        %v1288 = vadd.f32 %v1224, %v1272
        %v1289 = vadd.f32 %v1225, %v1273
        %v1290 = vadd.f32 %v1226, %v1274
        %v1291 = vadd.f32 %v1227, %v1275
        %v1292 = vadd.f32 %v1228, %v1276
        %v1293 = vadd.f32 %v1229, %v1277
        %v1294 = vadd.f32 %v1230, %v1278
        %v1295 = vadd.f32 %v1231, %v1279
        %v1296 = vadd.f32 %v1232, %v1280
        %v1297 = vadd.f32 %v1233, %v1281
        %v1298 = vadd.f32 %v1234, %v1282
        %v1299 = vlaneseq
        %v1300 = vshrl.u32 %v1299, 7
        %v1301 = vsub.s32 2, %v1300
        %v1302 = vrot.slane %v380, %v1301
        %v1303 = vmul.f32 %v1237, %v1302
        %v1304 = vmul.f32 %v1238, %v1302
        %v1305 = vmul.f32 %v1239, %v1302
        %v1306 = vmul.f32 %v1240, %v1302
        %v1307 = vmul.f32 %v1241, %v1302
        %v1308 = vmul.f32 %v1242, %v1302
        %v1309 = vmul.f32 %v1243, %v1302
        %v1310 = vmul.f32 %v1244, %v1302
        %v1311 = vmul.f32 %v1245, %v1302
        %v1312 = vmul.f32 %v1246, %v1302
        %v1313 = vmul.f32 %v1247, %v1302
        %v1314 = vmul.f32 %v1248, %v1302
        %v1315 = vmul.f32 %v1249, %v1302
        %v1316 = vmul.f32 %v1250, %v1302
        %v1317 = vmul.f32 %v1251, %v1302
        %v1318 = vmul.f32 %v1252, %v1302
        %v1319 = vadd.f32 %v1283, %v1303
        %v1320 = vadd.f32 %v1284, %v1304
        %v1321 = vadd.f32 %v1285, %v1305
        %v1322 = vadd.f32 %v1286, %v1306
        %v1323 = vadd.f32 %v1287, %v1307
        %v1324 = vadd.f32 %v1288, %v1308
        %v1325 = vadd.f32 %v1289, %v1309
        %v1326 = vadd.f32 %v1290, %v1310
        %v1327 = vadd.f32 %v1291, %v1311
        %v1328 = vadd.f32 %v1292, %v1312
        %v1329 = vadd.f32 %v1293, %v1313
        %v1330 = vadd.f32 %v1294, %v1314
        %v1331 = vadd.f32 %v1295, %v1315
        %v1332 = vadd.f32 %v1296, %v1316
        %v1333 = vadd.f32 %v1297, %v1317
        %v1334 = vadd.f32 %v1298, %v1318
        %v1335 = vlaneseq
        %v1336 = vshrl.u32 %v1335, 7
        %v1337 = vsub.s32 1, %v1336
        %v1338 = vrot.slane %v381, %v1337
        %v1339 = vmul.f32 %v1239, %v1338
        %v1340 = vmul.f32 %v1240, %v1338
        %v1341 = vmul.f32 %v1241, %v1338
        %v1342 = vmul.f32 %v1242, %v1338
        %v1343 = vmul.f32 %v1243, %v1338
        %v1344 = vmul.f32 %v1244, %v1338
        %v1345 = vmul.f32 %v1245, %v1338
        %v1346 = vmul.f32 %v1246, %v1338
        %v1347 = vmul.f32 %v1247, %v1338
        %v1348 = vmul.f32 %v1248, %v1338
        %v1349 = vmul.f32 %v1249, %v1338
        %v1350 = vmul.f32 %v1250, %v1338
        %v1351 = vmul.f32 %v1251, %v1338
        %v1352 = vmul.f32 %v1252, %v1338
        %v1353 = vmul.f32 %v1253, %v1338
        %v1354 = vmul.f32 %v1254, %v1338
        %v1355 = vadd.f32 %v1319, %v1339
        %v1356 = vadd.f32 %v1320, %v1340
        %v1357 = vadd.f32 %v1321, %v1341
        %v1358 = vadd.f32 %v1322, %v1342
        %v1359 = vadd.f32 %v1323, %v1343
        %v1360 = vadd.f32 %v1324, %v1344
        %v1361 = vadd.f32 %v1325, %v1345
        %v1362 = vadd.f32 %v1326, %v1346
        %v1363 = vadd.f32 %v1327, %v1347
        %v1364 = vadd.f32 %v1328, %v1348
        %v1365 = vadd.f32 %v1329, %v1349
        %v1366 = vadd.f32 %v1330, %v1350
        %v1367 = vadd.f32 %v1331, %v1351
        %v1368 = vadd.f32 %v1332, %v1352
        %v1369 = vadd.f32 %v1333, %v1353
        %v1370 = vadd.f32 %v1334, %v1354
        %v1371 = vlaneseq
        %v1372 = vshrl.u32 %v1371, 7
        %v1373 = vsub.s32 0, %v1372
        %v1374 = vrot.slane %v382, %v1373
        %v1375 = vmul.f32 %v1241, %v1374
        %v1376 = vmul.f32 %v1242, %v1374
        %v1377 = vmul.f32 %v1243, %v1374
        %v1378 = vmul.f32 %v1244, %v1374
        %v1379 = vmul.f32 %v1245, %v1374
        %v1380 = vmul.f32 %v1246, %v1374
        %v1381 = vmul.f32 %v1247, %v1374
        %v1382 = vmul.f32 %v1248, %v1374
        %v1383 = vmul.f32 %v1249, %v1374
        %v1384 = vmul.f32 %v1250, %v1374
        %v1385 = vmul.f32 %v1251, %v1374
        %v1386 = vmul.f32 %v1252, %v1374
        %v1387 = vmul.f32 %v1253, %v1374
        %v1388 = vmul.f32 %v1254, %v1374
        %v1389 = vmul.f32 %v1255, %v1374
        %v1390 = vmul.f32 %v1256, %v1374
        %v1391 = vadd.f32 %v1355, %v1375
        %v1392 = vadd.f32 %v1356, %v1376
        %v1393 = vadd.f32 %v1357, %v1377
        %v1394 = vadd.f32 %v1358, %v1378
        %v1395 = vadd.f32 %v1359, %v1379
        %v1396 = vadd.f32 %v1360, %v1380
        %v1397 = vadd.f32 %v1361, %v1381
        %v1398 = vadd.f32 %v1362, %v1382
        %v1399 = vadd.f32 %v1363, %v1383
        %v1400 = vadd.f32 %v1364, %v1384
        %v1401 = vadd.f32 %v1365, %v1385
        %v1402 = vadd.f32 %v1366, %v1386
        %v1403 = vadd.f32 %v1367, %v1387
        %v1404 = vadd.f32 %v1368, %v1388
        %v1405 = vadd.f32 %v1369, %v1389
        %v1406 = vadd.f32 %v1370, %v1390
        %v1407 = vlaneseq
        %v1408 = vshrl.u32 %v1407, 7
        %v1409 = vsub.s32 7, %v1408
        %v1410 = vrot.slane %v382, %v1409
        %v1411 = vmul.f32 %v1243, %v1410
        %v1412 = vmul.f32 %v1244, %v1410
        %v1413 = vmul.f32 %v1245, %v1410
        %v1414 = vmul.f32 %v1246, %v1410
        %v1415 = vmul.f32 %v1247, %v1410
        %v1416 = vmul.f32 %v1248, %v1410
        %v1417 = vmul.f32 %v1249, %v1410
        %v1418 = vmul.f32 %v1250, %v1410
        %v1419 = vmul.f32 %v1251, %v1410
        %v1420 = vmul.f32 %v1252, %v1410
        %v1421 = vmul.f32 %v1253, %v1410
        %v1422 = vmul.f32 %v1254, %v1410
        %v1423 = vmul.f32 %v1255, %v1410
        %v1424 = vmul.f32 %v1256, %v1410
        %v1425 = vmul.f32 %v1257, %v1410
        %v1426 = vmul.f32 %v1258, %v1410
        %v1427 = vadd.f32 %v1391, %v1411
        %v1428 = vadd.f32 %v1392, %v1412
        %v1429 = vadd.f32 %v1393, %v1413
        %v1430 = vadd.f32 %v1394, %v1414
        %v1431 = vadd.f32 %v1395, %v1415
        %v1432 = vadd.f32 %v1396, %v1416
        %v1433 = vadd.f32 %v1397, %v1417
        %v1434 = vadd.f32 %v1398, %v1418
        %v1435 = vadd.f32 %v1399, %v1419
        %v1436 = vadd.f32 %v1400, %v1420
        %v1437 = vadd.f32 %v1401, %v1421
        %v1438 = vadd.f32 %v1402, %v1422
        %v1439 = vadd.f32 %v1403, %v1423
        %v1440 = vadd.f32 %v1404, %v1424
        %v1441 = vadd.f32 %v1405, %v1425
        %v1442 = vadd.f32 %v1406, %v1426
        %v1443 = vlaneseq
        %v1444 = vshrl.u32 %v1443, 7
        %v1445 = vsub.s32 6, %v1444
        %v1446 = vrot.slane %v383, %v1445
        %v1447 = vmul.f32 %v1245, %v1446
        %v1448 = vmul.f32 %v1246, %v1446
        %v1449 = vmul.f32 %v1247, %v1446
        %v1450 = vmul.f32 %v1248, %v1446
        %v1451 = vmul.f32 %v1249, %v1446
        %v1452 = vmul.f32 %v1250, %v1446
        %v1453 = vmul.f32 %v1251, %v1446
        %v1454 = vmul.f32 %v1252, %v1446
        %v1455 = vmul.f32 %v1253, %v1446
        %v1456 = vmul.f32 %v1254, %v1446
        %v1457 = vmul.f32 %v1255, %v1446
        %v1458 = vmul.f32 %v1256, %v1446
        %v1459 = vmul.f32 %v1257, %v1446
        %v1460 = vmul.f32 %v1258, %v1446
        %v1461 = vmul.f32 %v1259, %v1446
        %v1462 = vmul.f32 %v1260, %v1446
        %v1463 = vadd.f32 %v1427, %v1447
        %v1464 = vadd.f32 %v1428, %v1448
        %v1465 = vadd.f32 %v1429, %v1449
        %v1466 = vadd.f32 %v1430, %v1450
        %v1467 = vadd.f32 %v1431, %v1451
        %v1468 = vadd.f32 %v1432, %v1452
        %v1469 = vadd.f32 %v1433, %v1453
        %v1470 = vadd.f32 %v1434, %v1454
        %v1471 = vadd.f32 %v1435, %v1455
        %v1472 = vadd.f32 %v1436, %v1456
        %v1473 = vadd.f32 %v1437, %v1457
        %v1474 = vadd.f32 %v1438, %v1458
        %v1475 = vadd.f32 %v1439, %v1459
        %v1476 = vadd.f32 %v1440, %v1460
        %v1477 = vadd.f32 %v1441, %v1461
        %v1478 = vadd.f32 %v1442, %v1462
        %v1479 = vlaneseq
        %v1480 = vshrl.u32 %v1479, 7
        %v1481 = vsub.s32 5, %v1480
        %v1482 = vrot.slane %v384, %v1481
        %v1483 = vmul.f32 %v1247, %v1482
        %v1484 = vmul.f32 %v1248, %v1482
        %v1485 = vmul.f32 %v1249, %v1482
        %v1486 = vmul.f32 %v1250, %v1482
        %v1487 = vmul.f32 %v1251, %v1482
        %v1488 = vmul.f32 %v1252, %v1482
        %v1489 = vmul.f32 %v1253, %v1482
        %v1490 = vmul.f32 %v1254, %v1482
        %v1491 = vmul.f32 %v1255, %v1482
        %v1492 = vmul.f32 %v1256, %v1482
        %v1493 = vmul.f32 %v1257, %v1482
        %v1494 = vmul.f32 %v1258, %v1482
        %v1495 = vmul.f32 %v1259, %v1482
        %v1496 = vmul.f32 %v1260, %v1482
        %v1497 = vmul.f32 %v1261, %v1482
        %v1498 = vmul.f32 %v1262, %v1482
        %v1499 = vadd.f32 %v1463, %v1483
        %v1500 = vadd.f32 %v1464, %v1484
        %v1501 = vadd.f32 %v1465, %v1485
        %v1502 = vadd.f32 %v1466, %v1486
        %v1503 = vadd.f32 %v1467, %v1487
        %v1504 = vadd.f32 %v1468, %v1488
        %v1505 = vadd.f32 %v1469, %v1489
        %v1506 = vadd.f32 %v1470, %v1490
        %v1507 = vadd.f32 %v1471, %v1491
        %v1508 = vadd.f32 %v1472, %v1492
        %v1509 = vadd.f32 %v1473, %v1493
        %v1510 = vadd.f32 %v1474, %v1494
        %v1511 = vadd.f32 %v1475, %v1495
        %v1512 = vadd.f32 %v1476, %v1496
        %v1513 = vadd.f32 %v1477, %v1497
        %v1514 = vadd.f32 %v1478, %v1498
        %v1515 = vld [vmem:[%s394 + $0x9] sm:$0xff]
        %v1516 = vld [vmem:[%s394 + $0x11] sm:$0xff]
        %v1517 = vld [vmem:[%s394 + $0x29] sm:$0xff]
        %v1518 = vld [vmem:[%s394 + $0x31] sm:$0xff]
        %v1519 = vld [vmem:[%s394 + $0x49] sm:$0xff]
        %v1520 = vld [vmem:[%s394 + $0x51] sm:$0xff]
        %v1521 = vld [vmem:[%s394 + $0x69] sm:$0xff]
        %v1522 = vld [vmem:[%s394 + $0x71] sm:$0xff]
        %v1523 = vld [vmem:[%s394 + $0x89] sm:$0xff]
        %v1524 = vld [vmem:[%s394 + $0x91] sm:$0xff]
        %v1525 = vld [vmem:[%s394 + $0xa9] sm:$0xff]
        %v1526 = vld [vmem:[%s394 + $0xb1] sm:$0xff]
        %v1527 = vld [vmem:[%s394 + $0xc9] sm:$0xff]
        %v1528 = vld [vmem:[%s394 + $0xd1] sm:$0xff]
        %v1529 = vld [vmem:[%s394 + $0xe9] sm:$0xff]
        %v1530 = vld [vmem:[%s394 + $0xf1] sm:$0xff]
        %v1531 = vld [vmem:[%s394 + $0x109] sm:$0xff]
        %v1532 = vld [vmem:[%s394 + $0x111] sm:$0xff]
        %v1533 = vld [vmem:[%s394 + $0x129] sm:$0xff]
        %v1534 = vld [vmem:[%s394 + $0x131] sm:$0xff]
        %v1535 = vld [vmem:[%s394 + $0x149] sm:$0xff]
        %v1536 = vld [vmem:[%s394 + $0x151] sm:$0xff]
        %v1537 = vld [vmem:[%s394 + $0x169] sm:$0xff]
        %v1538 = vld [vmem:[%s394 + $0x171] sm:$0xff]
        %v1539 = vld [vmem:[%s394 + $0x189] sm:$0xff]
        %v1540 = vld [vmem:[%s394 + $0x191] sm:$0xff]
        %v1541 = vld [vmem:[%s394 + $0x1a9] sm:$0xff]
        %v1542 = vld [vmem:[%s394 + $0x1b1] sm:$0xff]
        %v1543 = vlaneseq
        %v1544 = vshrl.u32 %v1543, 7
        %v1545 = vsub.s32 4, %v1544
        %v1546 = vrot.slane %v379, %v1545
        %v1547 = vmul.f32 %v1515, %v1546
        %v1548 = vmul.f32 %v1516, %v1546
        %v1549 = vmul.f32 %v1517, %v1546
        %v1550 = vmul.f32 %v1518, %v1546
        %v1551 = vmul.f32 %v1519, %v1546
        %v1552 = vmul.f32 %v1520, %v1546
        %v1553 = vmul.f32 %v1521, %v1546
        %v1554 = vmul.f32 %v1522, %v1546
        %v1555 = vmul.f32 %v1523, %v1546
        %v1556 = vmul.f32 %v1524, %v1546
        %v1557 = vmul.f32 %v1525, %v1546
        %v1558 = vmul.f32 %v1526, %v1546
        %v1559 = vmul.f32 %v1527, %v1546
        %v1560 = vmul.f32 %v1528, %v1546
        %v1561 = vmul.f32 %v1529, %v1546
        %v1562 = vmul.f32 %v1530, %v1546
        %v1563 = vadd.f32 %v1499, %v1547
        %v1564 = vadd.f32 %v1500, %v1548
        %v1565 = vadd.f32 %v1501, %v1549
        %v1566 = vadd.f32 %v1502, %v1550
        %v1567 = vadd.f32 %v1503, %v1551
        %v1568 = vadd.f32 %v1504, %v1552
        %v1569 = vadd.f32 %v1505, %v1553
        %v1570 = vadd.f32 %v1506, %v1554
        %v1571 = vadd.f32 %v1507, %v1555
        %v1572 = vadd.f32 %v1508, %v1556
        %v1573 = vadd.f32 %v1509, %v1557
        %v1574 = vadd.f32 %v1510, %v1558
        %v1575 = vadd.f32 %v1511, %v1559
        %v1576 = vadd.f32 %v1512, %v1560
        %v1577 = vadd.f32 %v1513, %v1561
        %v1578 = vadd.f32 %v1514, %v1562
        %v1579 = vlaneseq
        %v1580 = vshrl.u32 %v1579, 7
        %v1581 = vsub.s32 3, %v1580
        %v1582 = vrot.slane %v380, %v1581
        %v1583 = vmul.f32 %v1517, %v1582
        %v1584 = vmul.f32 %v1518, %v1582
        %v1585 = vmul.f32 %v1519, %v1582
        %v1586 = vmul.f32 %v1520, %v1582
        %v1587 = vmul.f32 %v1521, %v1582
        %v1588 = vmul.f32 %v1522, %v1582
        %v1589 = vmul.f32 %v1523, %v1582
        %v1590 = vmul.f32 %v1524, %v1582
        %v1591 = vmul.f32 %v1525, %v1582
        %v1592 = vmul.f32 %v1526, %v1582
        %v1593 = vmul.f32 %v1527, %v1582
        %v1594 = vmul.f32 %v1528, %v1582
        %v1595 = vmul.f32 %v1529, %v1582
        %v1596 = vmul.f32 %v1530, %v1582
        %v1597 = vmul.f32 %v1531, %v1582
        %v1598 = vmul.f32 %v1532, %v1582
        %v1599 = vadd.f32 %v1563, %v1583
        %v1600 = vadd.f32 %v1564, %v1584
        %v1601 = vadd.f32 %v1565, %v1585
        %v1602 = vadd.f32 %v1566, %v1586
        %v1603 = vadd.f32 %v1567, %v1587
        %v1604 = vadd.f32 %v1568, %v1588
        %v1605 = vadd.f32 %v1569, %v1589
        %v1606 = vadd.f32 %v1570, %v1590
        %v1607 = vadd.f32 %v1571, %v1591
        %v1608 = vadd.f32 %v1572, %v1592
        %v1609 = vadd.f32 %v1573, %v1593
        %v1610 = vadd.f32 %v1574, %v1594
        %v1611 = vadd.f32 %v1575, %v1595
        %v1612 = vadd.f32 %v1576, %v1596
        %v1613 = vadd.f32 %v1577, %v1597
        %v1614 = vadd.f32 %v1578, %v1598
        %v1615 = vlaneseq
        %v1616 = vshrl.u32 %v1615, 7
        %v1617 = vsub.s32 2, %v1616
        %v1618 = vrot.slane %v381, %v1617
        %v1619 = vmul.f32 %v1519, %v1618
        %v1620 = vmul.f32 %v1520, %v1618
        %v1621 = vmul.f32 %v1521, %v1618
        %v1622 = vmul.f32 %v1522, %v1618
        %v1623 = vmul.f32 %v1523, %v1618
        %v1624 = vmul.f32 %v1524, %v1618
        %v1625 = vmul.f32 %v1525, %v1618
        %v1626 = vmul.f32 %v1526, %v1618
        %v1627 = vmul.f32 %v1527, %v1618
        %v1628 = vmul.f32 %v1528, %v1618
        %v1629 = vmul.f32 %v1529, %v1618
        %v1630 = vmul.f32 %v1530, %v1618
        %v1631 = vmul.f32 %v1531, %v1618
        %v1632 = vmul.f32 %v1532, %v1618
        %v1633 = vmul.f32 %v1533, %v1618
        %v1634 = vmul.f32 %v1534, %v1618
        %v1635 = vadd.f32 %v1599, %v1619
        %v1636 = vadd.f32 %v1600, %v1620
        %v1637 = vadd.f32 %v1601, %v1621
        %v1638 = vadd.f32 %v1602, %v1622
        %v1639 = vadd.f32 %v1603, %v1623
        %v1640 = vadd.f32 %v1604, %v1624
        %v1641 = vadd.f32 %v1605, %v1625
        %v1642 = vadd.f32 %v1606, %v1626
        %v1643 = vadd.f32 %v1607, %v1627
        %v1644 = vadd.f32 %v1608, %v1628
        %v1645 = vadd.f32 %v1609, %v1629
        %v1646 = vadd.f32 %v1610, %v1630
        %v1647 = vadd.f32 %v1611, %v1631
        %v1648 = vadd.f32 %v1612, %v1632
        %v1649 = vadd.f32 %v1613, %v1633
        %v1650 = vadd.f32 %v1614, %v1634
        %v1651 = vlaneseq
        %v1652 = vshrl.u32 %v1651, 7
        %v1653 = vsub.s32 1, %v1652
        %v1654 = vrot.slane %v382, %v1653
        %v1655 = vmul.f32 %v1521, %v1654
        %v1656 = vmul.f32 %v1522, %v1654
        %v1657 = vmul.f32 %v1523, %v1654
        %v1658 = vmul.f32 %v1524, %v1654
        %v1659 = vmul.f32 %v1525, %v1654
        %v1660 = vmul.f32 %v1526, %v1654
        %v1661 = vmul.f32 %v1527, %v1654
        %v1662 = vmul.f32 %v1528, %v1654
        %v1663 = vmul.f32 %v1529, %v1654
        %v1664 = vmul.f32 %v1530, %v1654
        %v1665 = vmul.f32 %v1531, %v1654
        %v1666 = vmul.f32 %v1532, %v1654
        %v1667 = vmul.f32 %v1533, %v1654
        %v1668 = vmul.f32 %v1534, %v1654
        %v1669 = vmul.f32 %v1535, %v1654
        %v1670 = vmul.f32 %v1536, %v1654
        %v1671 = vadd.f32 %v1635, %v1655
        %v1672 = vadd.f32 %v1636, %v1656
        %v1673 = vadd.f32 %v1637, %v1657
        %v1674 = vadd.f32 %v1638, %v1658
        %v1675 = vadd.f32 %v1639, %v1659
        %v1676 = vadd.f32 %v1640, %v1660
        %v1677 = vadd.f32 %v1641, %v1661
        %v1678 = vadd.f32 %v1642, %v1662
        %v1679 = vadd.f32 %v1643, %v1663
        %v1680 = vadd.f32 %v1644, %v1664
        %v1681 = vadd.f32 %v1645, %v1665
        %v1682 = vadd.f32 %v1646, %v1666
        %v1683 = vadd.f32 %v1647, %v1667
        %v1684 = vadd.f32 %v1648, %v1668
        %v1685 = vadd.f32 %v1649, %v1669
        %v1686 = vadd.f32 %v1650, %v1670
        %v1687 = vlaneseq
        %v1688 = vshrl.u32 %v1687, 7
        %v1689 = vsub.s32 0, %v1688
        %v1690 = vrot.slane %v383, %v1689
        %v1691 = vmul.f32 %v1523, %v1690
        %v1692 = vmul.f32 %v1524, %v1690
        %v1693 = vmul.f32 %v1525, %v1690
        %v1694 = vmul.f32 %v1526, %v1690
        %v1695 = vmul.f32 %v1527, %v1690
        %v1696 = vmul.f32 %v1528, %v1690
        %v1697 = vmul.f32 %v1529, %v1690
        %v1698 = vmul.f32 %v1530, %v1690
        %v1699 = vmul.f32 %v1531, %v1690
        %v1700 = vmul.f32 %v1532, %v1690
        %v1701 = vmul.f32 %v1533, %v1690
        %v1702 = vmul.f32 %v1534, %v1690
        %v1703 = vmul.f32 %v1535, %v1690
        %v1704 = vmul.f32 %v1536, %v1690
        %v1705 = vmul.f32 %v1537, %v1690
        %v1706 = vmul.f32 %v1538, %v1690
        %v1707 = vadd.f32 %v1671, %v1691
        %v1708 = vadd.f32 %v1672, %v1692
        %v1709 = vadd.f32 %v1673, %v1693
        %v1710 = vadd.f32 %v1674, %v1694
        %v1711 = vadd.f32 %v1675, %v1695
        %v1712 = vadd.f32 %v1676, %v1696
        %v1713 = vadd.f32 %v1677, %v1697
        %v1714 = vadd.f32 %v1678, %v1698
        %v1715 = vadd.f32 %v1679, %v1699
        %v1716 = vadd.f32 %v1680, %v1700
        %v1717 = vadd.f32 %v1681, %v1701
        %v1718 = vadd.f32 %v1682, %v1702
        %v1719 = vadd.f32 %v1683, %v1703
        %v1720 = vadd.f32 %v1684, %v1704
        %v1721 = vadd.f32 %v1685, %v1705
        %v1722 = vadd.f32 %v1686, %v1706
        %v1723 = vlaneseq
        %v1724 = vshrl.u32 %v1723, 7
        %v1725 = vsub.s32 7, %v1724
        %v1726 = vrot.slane %v383, %v1725
        %v1727 = vmul.f32 %v1525, %v1726
        %v1728 = vmul.f32 %v1526, %v1726
        %v1729 = vmul.f32 %v1527, %v1726
        %v1730 = vmul.f32 %v1528, %v1726
        %v1731 = vmul.f32 %v1529, %v1726
        %v1732 = vmul.f32 %v1530, %v1726
        %v1733 = vmul.f32 %v1531, %v1726
        %v1734 = vmul.f32 %v1532, %v1726
        %v1735 = vmul.f32 %v1533, %v1726
        %v1736 = vmul.f32 %v1534, %v1726
        %v1737 = vmul.f32 %v1535, %v1726
        %v1738 = vmul.f32 %v1536, %v1726
        %v1739 = vmul.f32 %v1537, %v1726
        %v1740 = vmul.f32 %v1538, %v1726
        %v1741 = vmul.f32 %v1539, %v1726
        %v1742 = vmul.f32 %v1540, %v1726
        %v1743 = vadd.f32 %v1707, %v1727
        %v1744 = vadd.f32 %v1708, %v1728
        %v1745 = vadd.f32 %v1709, %v1729
        %v1746 = vadd.f32 %v1710, %v1730
        %v1747 = vadd.f32 %v1711, %v1731
        %v1748 = vadd.f32 %v1712, %v1732
        %v1749 = vadd.f32 %v1713, %v1733
        %v1750 = vadd.f32 %v1714, %v1734
        %v1751 = vadd.f32 %v1715, %v1735
        %v1752 = vadd.f32 %v1716, %v1736
        %v1753 = vadd.f32 %v1717, %v1737
        %v1754 = vadd.f32 %v1718, %v1738
        %v1755 = vadd.f32 %v1719, %v1739
        %v1756 = vadd.f32 %v1720, %v1740
        %v1757 = vadd.f32 %v1721, %v1741
        %v1758 = vadd.f32 %v1722, %v1742
        %v1759 = vlaneseq
        %v1760 = vshrl.u32 %v1759, 7
        %v1761 = vsub.s32 6, %v1760
        %v1762 = vrot.slane %v384, %v1761
        %v1763 = vmul.f32 %v1527, %v1762
        %v1764 = vmul.f32 %v1528, %v1762
        %v1765 = vmul.f32 %v1529, %v1762
        %v1766 = vmul.f32 %v1530, %v1762
        %v1767 = vmul.f32 %v1531, %v1762
        %v1768 = vmul.f32 %v1532, %v1762
        %v1769 = vmul.f32 %v1533, %v1762
        %v1770 = vmul.f32 %v1534, %v1762
        %v1771 = vmul.f32 %v1535, %v1762
        %v1772 = vmul.f32 %v1536, %v1762
        %v1773 = vmul.f32 %v1537, %v1762
        %v1774 = vmul.f32 %v1538, %v1762
        %v1775 = vmul.f32 %v1539, %v1762
        %v1776 = vmul.f32 %v1540, %v1762
        %v1777 = vmul.f32 %v1541, %v1762
        %v1778 = vmul.f32 %v1542, %v1762
        %v1779 = vadd.f32 %v1743, %v1763
        %v1780 = vadd.f32 %v1744, %v1764
        %v1781 = vadd.f32 %v1745, %v1765
        %v1782 = vadd.f32 %v1746, %v1766
        %v1783 = vadd.f32 %v1747, %v1767
        %v1784 = vadd.f32 %v1748, %v1768
        %v1785 = vadd.f32 %v1749, %v1769
        %v1786 = vadd.f32 %v1750, %v1770
        %v1787 = vadd.f32 %v1751, %v1771
        %v1788 = vadd.f32 %v1752, %v1772
        %v1789 = vadd.f32 %v1753, %v1773
        %v1790 = vadd.f32 %v1754, %v1774
        %v1791 = vadd.f32 %v1755, %v1775
        %v1792 = vadd.f32 %v1756, %v1776
        %v1793 = vadd.f32 %v1757, %v1777
        %v1794 = vadd.f32 %v1758, %v1778
        %v1795 = vld [vmem:[%s394 + $0xa] sm:$0xff]
        %v1796 = vld [vmem:[%s394 + $0x12] sm:$0xff]
        %v1797 = vld [vmem:[%s394 + $0x2a] sm:$0xff]
        %v1798 = vld [vmem:[%s394 + $0x32] sm:$0xff]
        %v1799 = vld [vmem:[%s394 + $0x4a] sm:$0xff]
        %v1800 = vld [vmem:[%s394 + $0x52] sm:$0xff]
        %v1801 = vld [vmem:[%s394 + $0x6a] sm:$0xff]
        %v1802 = vld [vmem:[%s394 + $0x72] sm:$0xff]
        %v1803 = vld [vmem:[%s394 + $0x8a] sm:$0xff]
        %v1804 = vld [vmem:[%s394 + $0x92] sm:$0xff]
        %v1805 = vld [vmem:[%s394 + $0xaa] sm:$0xff]
        %v1806 = vld [vmem:[%s394 + $0xb2] sm:$0xff]
        %v1807 = vld [vmem:[%s394 + $0xca] sm:$0xff]
        %v1808 = vld [vmem:[%s394 + $0xd2] sm:$0xff]
        %v1809 = vld [vmem:[%s394 + $0xea] sm:$0xff]
        %v1810 = vld [vmem:[%s394 + $0xf2] sm:$0xff]
        %v1811 = vld [vmem:[%s394 + $0x10a] sm:$0xff]
        %v1812 = vld [vmem:[%s394 + $0x112] sm:$0xff]
        %v1813 = vld [vmem:[%s394 + $0x12a] sm:$0xff]
        %v1814 = vld [vmem:[%s394 + $0x132] sm:$0xff]
        %v1815 = vld [vmem:[%s394 + $0x14a] sm:$0xff]
        %v1816 = vld [vmem:[%s394 + $0x152] sm:$0xff]
        %v1817 = vld [vmem:[%s394 + $0x16a] sm:$0xff]
        %v1818 = vld [vmem:[%s394 + $0x172] sm:$0xff]
        %v1819 = vld [vmem:[%s394 + $0x18a] sm:$0xff]
        %v1820 = vld [vmem:[%s394 + $0x192] sm:$0xff]
        %v1821 = vld [vmem:[%s394 + $0x1aa] sm:$0xff]
        %v1822 = vld [vmem:[%s394 + $0x1b2] sm:$0xff]
        %v1823 = vlaneseq
        %v1824 = vshrl.u32 %v1823, 7
        %v1825 = vsub.s32 5, %v1824
        %v1826 = vrot.slane %v379, %v1825
        %v1827 = vmul.f32 %v1795, %v1826
        %v1828 = vmul.f32 %v1796, %v1826
        %v1829 = vmul.f32 %v1797, %v1826
        %v1830 = vmul.f32 %v1798, %v1826
        %v1831 = vmul.f32 %v1799, %v1826
        %v1832 = vmul.f32 %v1800, %v1826
        %v1833 = vmul.f32 %v1801, %v1826
        %v1834 = vmul.f32 %v1802, %v1826
        %v1835 = vmul.f32 %v1803, %v1826
        %v1836 = vmul.f32 %v1804, %v1826
        %v1837 = vmul.f32 %v1805, %v1826
        %v1838 = vmul.f32 %v1806, %v1826
        %v1839 = vmul.f32 %v1807, %v1826
        %v1840 = vmul.f32 %v1808, %v1826
        %v1841 = vmul.f32 %v1809, %v1826
        %v1842 = vmul.f32 %v1810, %v1826
        %v1843 = vadd.f32 %v1779, %v1827
        %v1844 = vadd.f32 %v1780, %v1828
        %v1845 = vadd.f32 %v1781, %v1829
        %v1846 = vadd.f32 %v1782, %v1830
        %v1847 = vadd.f32 %v1783, %v1831
        %v1848 = vadd.f32 %v1784, %v1832
        %v1849 = vadd.f32 %v1785, %v1833
        %v1850 = vadd.f32 %v1786, %v1834
        %v1851 = vadd.f32 %v1787, %v1835
        %v1852 = vadd.f32 %v1788, %v1836
        %v1853 = vadd.f32 %v1789, %v1837
        %v1854 = vadd.f32 %v1790, %v1838
        %v1855 = vadd.f32 %v1791, %v1839
        %v1856 = vadd.f32 %v1792, %v1840
        %v1857 = vadd.f32 %v1793, %v1841
        %v1858 = vadd.f32 %v1794, %v1842
        %v1859 = vlaneseq
        %v1860 = vshrl.u32 %v1859, 7
        %v1861 = vsub.s32 4, %v1860
        %v1862 = vrot.slane %v380, %v1861
        %v1863 = vmul.f32 %v1797, %v1862
        %v1864 = vmul.f32 %v1798, %v1862
        %v1865 = vmul.f32 %v1799, %v1862
        %v1866 = vmul.f32 %v1800, %v1862
        %v1867 = vmul.f32 %v1801, %v1862
        %v1868 = vmul.f32 %v1802, %v1862
        %v1869 = vmul.f32 %v1803, %v1862
        %v1870 = vmul.f32 %v1804, %v1862
        %v1871 = vmul.f32 %v1805, %v1862
        %v1872 = vmul.f32 %v1806, %v1862
        %v1873 = vmul.f32 %v1807, %v1862
        %v1874 = vmul.f32 %v1808, %v1862
        %v1875 = vmul.f32 %v1809, %v1862
        %v1876 = vmul.f32 %v1810, %v1862
        %v1877 = vmul.f32 %v1811, %v1862
        %v1878 = vmul.f32 %v1812, %v1862
        %v1879 = vadd.f32 %v1843, %v1863
        %v1880 = vadd.f32 %v1844, %v1864
        %v1881 = vadd.f32 %v1845, %v1865
        %v1882 = vadd.f32 %v1846, %v1866
        %v1883 = vadd.f32 %v1847, %v1867
        %v1884 = vadd.f32 %v1848, %v1868
        %v1885 = vadd.f32 %v1849, %v1869
        %v1886 = vadd.f32 %v1850, %v1870
        %v1887 = vadd.f32 %v1851, %v1871
        %v1888 = vadd.f32 %v1852, %v1872
        %v1889 = vadd.f32 %v1853, %v1873
        %v1890 = vadd.f32 %v1854, %v1874
        %v1891 = vadd.f32 %v1855, %v1875
        %v1892 = vadd.f32 %v1856, %v1876
        %v1893 = vadd.f32 %v1857, %v1877
        %v1894 = vadd.f32 %v1858, %v1878
        %v1895 = vlaneseq
        %v1896 = vshrl.u32 %v1895, 7
        %v1897 = vsub.s32 3, %v1896
        %v1898 = vrot.slane %v381, %v1897
        %v1899 = vmul.f32 %v1799, %v1898
        %v1900 = vmul.f32 %v1800, %v1898
        %v1901 = vmul.f32 %v1801, %v1898
        %v1902 = vmul.f32 %v1802, %v1898
        %v1903 = vmul.f32 %v1803, %v1898
        %v1904 = vmul.f32 %v1804, %v1898
        %v1905 = vmul.f32 %v1805, %v1898
        %v1906 = vmul.f32 %v1806, %v1898
        %v1907 = vmul.f32 %v1807, %v1898
        %v1908 = vmul.f32 %v1808, %v1898
        %v1909 = vmul.f32 %v1809, %v1898
        %v1910 = vmul.f32 %v1810, %v1898
        %v1911 = vmul.f32 %v1811, %v1898
        %v1912 = vmul.f32 %v1812, %v1898
        %v1913 = vmul.f32 %v1813, %v1898
        %v1914 = vmul.f32 %v1814, %v1898
        %v1915 = vadd.f32 %v1879, %v1899
        %v1916 = vadd.f32 %v1880, %v1900
        %v1917 = vadd.f32 %v1881, %v1901
        %v1918 = vadd.f32 %v1882, %v1902
        %v1919 = vadd.f32 %v1883, %v1903
        %v1920 = vadd.f32 %v1884, %v1904
        %v1921 = vadd.f32 %v1885, %v1905
        %v1922 = vadd.f32 %v1886, %v1906
        %v1923 = vadd.f32 %v1887, %v1907
        %v1924 = vadd.f32 %v1888, %v1908
        %v1925 = vadd.f32 %v1889, %v1909
        %v1926 = vadd.f32 %v1890, %v1910
        %v1927 = vadd.f32 %v1891, %v1911
        %v1928 = vadd.f32 %v1892, %v1912
        %v1929 = vadd.f32 %v1893, %v1913
        %v1930 = vadd.f32 %v1894, %v1914
        %v1931 = vlaneseq
        %v1932 = vshrl.u32 %v1931, 7
        %v1933 = vsub.s32 2, %v1932
        %v1934 = vrot.slane %v382, %v1933
        %v1935 = vmul.f32 %v1801, %v1934
        %v1936 = vmul.f32 %v1802, %v1934
        %v1937 = vmul.f32 %v1803, %v1934
        %v1938 = vmul.f32 %v1804, %v1934
        %v1939 = vmul.f32 %v1805, %v1934
        %v1940 = vmul.f32 %v1806, %v1934
        %v1941 = vmul.f32 %v1807, %v1934
        %v1942 = vmul.f32 %v1808, %v1934
        %v1943 = vmul.f32 %v1809, %v1934
        %v1944 = vmul.f32 %v1810, %v1934
        %v1945 = vmul.f32 %v1811, %v1934
        %v1946 = vmul.f32 %v1812, %v1934
        %v1947 = vmul.f32 %v1813, %v1934
        %v1948 = vmul.f32 %v1814, %v1934
        %v1949 = vmul.f32 %v1815, %v1934
        %v1950 = vmul.f32 %v1816, %v1934
        %v1951 = vadd.f32 %v1915, %v1935
        %v1952 = vadd.f32 %v1916, %v1936
        %v1953 = vadd.f32 %v1917, %v1937
        %v1954 = vadd.f32 %v1918, %v1938
        %v1955 = vadd.f32 %v1919, %v1939
        %v1956 = vadd.f32 %v1920, %v1940
        %v1957 = vadd.f32 %v1921, %v1941
        %v1958 = vadd.f32 %v1922, %v1942
        %v1959 = vadd.f32 %v1923, %v1943
        %v1960 = vadd.f32 %v1924, %v1944
        %v1961 = vadd.f32 %v1925, %v1945
        %v1962 = vadd.f32 %v1926, %v1946
        %v1963 = vadd.f32 %v1927, %v1947
        %v1964 = vadd.f32 %v1928, %v1948
        %v1965 = vadd.f32 %v1929, %v1949
        %v1966 = vadd.f32 %v1930, %v1950
        %v1967 = vlaneseq
        %v1968 = vshrl.u32 %v1967, 7
        %v1969 = vsub.s32 1, %v1968
        %v1970 = vrot.slane %v383, %v1969
        %v1971 = vmul.f32 %v1803, %v1970
        %v1972 = vmul.f32 %v1804, %v1970
        %v1973 = vmul.f32 %v1805, %v1970
        %v1974 = vmul.f32 %v1806, %v1970
        %v1975 = vmul.f32 %v1807, %v1970
        %v1976 = vmul.f32 %v1808, %v1970
        %v1977 = vmul.f32 %v1809, %v1970
        %v1978 = vmul.f32 %v1810, %v1970
        %v1979 = vmul.f32 %v1811, %v1970
        %v1980 = vmul.f32 %v1812, %v1970
        %v1981 = vmul.f32 %v1813, %v1970
        %v1982 = vmul.f32 %v1814, %v1970
        %v1983 = vmul.f32 %v1815, %v1970
        %v1984 = vmul.f32 %v1816, %v1970
        %v1985 = vmul.f32 %v1817, %v1970
        %v1986 = vmul.f32 %v1818, %v1970
        %v1987 = vadd.f32 %v1951, %v1971
        %v1988 = vadd.f32 %v1952, %v1972
        %v1989 = vadd.f32 %v1953, %v1973
        %v1990 = vadd.f32 %v1954, %v1974
        %v1991 = vadd.f32 %v1955, %v1975
        %v1992 = vadd.f32 %v1956, %v1976
        %v1993 = vadd.f32 %v1957, %v1977
        %v1994 = vadd.f32 %v1958, %v1978
        %v1995 = vadd.f32 %v1959, %v1979
        %v1996 = vadd.f32 %v1960, %v1980
        %v1997 = vadd.f32 %v1961, %v1981
        %v1998 = vadd.f32 %v1962, %v1982
        %v1999 = vadd.f32 %v1963, %v1983
        %v2000 = vadd.f32 %v1964, %v1984
        %v2001 = vadd.f32 %v1965, %v1985
        %v2002 = vadd.f32 %v1966, %v1986
        %v2003 = vlaneseq
        %v2004 = vshrl.u32 %v2003, 7
        %v2005 = vsub.s32 0, %v2004
        %v2006 = vrot.slane %v384, %v2005
        %v2007 = vmul.f32 %v1805, %v2006
        %v2008 = vmul.f32 %v1806, %v2006
        %v2009 = vmul.f32 %v1807, %v2006
        %v2010 = vmul.f32 %v1808, %v2006
        %v2011 = vmul.f32 %v1809, %v2006
        %v2012 = vmul.f32 %v1810, %v2006
        %v2013 = vmul.f32 %v1811, %v2006
        %v2014 = vmul.f32 %v1812, %v2006
        %v2015 = vmul.f32 %v1813, %v2006
        %v2016 = vmul.f32 %v1814, %v2006
        %v2017 = vmul.f32 %v1815, %v2006
        %v2018 = vmul.f32 %v1816, %v2006
        %v2019 = vmul.f32 %v1817, %v2006
        %v2020 = vmul.f32 %v1818, %v2006
        %v2021 = vmul.f32 %v1819, %v2006
        %v2022 = vmul.f32 %v1820, %v2006
        %v2023 = vadd.f32 %v1987, %v2007
        %v2024 = vadd.f32 %v1988, %v2008
        %v2025 = vadd.f32 %v1989, %v2009
        %v2026 = vadd.f32 %v1990, %v2010
        %v2027 = vadd.f32 %v1991, %v2011
        %v2028 = vadd.f32 %v1992, %v2012
        %v2029 = vadd.f32 %v1993, %v2013
        %v2030 = vadd.f32 %v1994, %v2014
        %v2031 = vadd.f32 %v1995, %v2015
        %v2032 = vadd.f32 %v1996, %v2016
        %v2033 = vadd.f32 %v1997, %v2017
        %v2034 = vadd.f32 %v1998, %v2018
        %v2035 = vadd.f32 %v1999, %v2019
        %v2036 = vadd.f32 %v2000, %v2020
        %v2037 = vadd.f32 %v2001, %v2021
        %v2038 = vadd.f32 %v2002, %v2022
        %v2039 = vlaneseq
        %v2040 = vshrl.u32 %v2039, 7
        %v2041 = vsub.s32 7, %v2040
        %v2042 = vrot.slane %v384, %v2041
        %v2043 = vmul.f32 %v1807, %v2042
        %v2044 = vmul.f32 %v1808, %v2042
        %v2045 = vmul.f32 %v1809, %v2042
        %v2046 = vmul.f32 %v1810, %v2042
        %v2047 = vmul.f32 %v1811, %v2042
        %v2048 = vmul.f32 %v1812, %v2042
        %v2049 = vmul.f32 %v1813, %v2042
        %v2050 = vmul.f32 %v1814, %v2042
        %v2051 = vmul.f32 %v1815, %v2042
        %v2052 = vmul.f32 %v1816, %v2042
        %v2053 = vmul.f32 %v1817, %v2042
        %v2054 = vmul.f32 %v1818, %v2042
        %v2055 = vmul.f32 %v1819, %v2042
        %v2056 = vmul.f32 %v1820, %v2042
        %v2057 = vmul.f32 %v1821, %v2042
        %v2058 = vmul.f32 %v1822, %v2042
        %v2059 = vadd.f32 %v2023, %v2043
        %v2060 = vadd.f32 %v2024, %v2044
        %v2061 = vadd.f32 %v2025, %v2045
        %v2062 = vadd.f32 %v2026, %v2046
        %v2063 = vadd.f32 %v2027, %v2047
        %v2064 = vadd.f32 %v2028, %v2048
        %v2065 = vadd.f32 %v2029, %v2049
        %v2066 = vadd.f32 %v2030, %v2050
        %v2067 = vadd.f32 %v2031, %v2051
        %v2068 = vadd.f32 %v2032, %v2052
        %v2069 = vadd.f32 %v2033, %v2053
        %v2070 = vadd.f32 %v2034, %v2054
        %v2071 = vadd.f32 %v2035, %v2055
        %v2072 = vadd.f32 %v2036, %v2056
        %v2073 = vadd.f32 %v2037, %v2057
        %v2074 = vadd.f32 %v2038, %v2058
        %v2075 = vld [vmem:[%s394 + $0xb] sm:$0xff]
        %v2076 = vld [vmem:[%s394 + $0x13] sm:$0xff]
        %v2077 = vld [vmem:[%s394 + $0x2b] sm:$0xff]
        %v2078 = vld [vmem:[%s394 + $0x33] sm:$0xff]
        %v2079 = vld [vmem:[%s394 + $0x4b] sm:$0xff]
        %v2080 = vld [vmem:[%s394 + $0x53] sm:$0xff]
        %v2081 = vld [vmem:[%s394 + $0x6b] sm:$0xff]
        %v2082 = vld [vmem:[%s394 + $0x73] sm:$0xff]
        %v2083 = vld [vmem:[%s394 + $0x8b] sm:$0xff]
        %v2084 = vld [vmem:[%s394 + $0x93] sm:$0xff]
        %v2085 = vld [vmem:[%s394 + $0xab] sm:$0xff]
        %v2086 = vld [vmem:[%s394 + $0xb3] sm:$0xff]
        %v2087 = vld [vmem:[%s394 + $0xcb] sm:$0xff]
        %v2088 = vld [vmem:[%s394 + $0xd3] sm:$0xff]
        %v2089 = vld [vmem:[%s394 + $0xeb] sm:$0xff]
        %v2090 = vld [vmem:[%s394 + $0xf3] sm:$0xff]
        %v2091 = vld [vmem:[%s394 + $0x10b] sm:$0xff]
        %v2092 = vld [vmem:[%s394 + $0x113] sm:$0xff]
        %v2093 = vld [vmem:[%s394 + $0x12b] sm:$0xff]
        %v2094 = vld [vmem:[%s394 + $0x133] sm:$0xff]
        %v2095 = vld [vmem:[%s394 + $0x14b] sm:$0xff]
        %v2096 = vld [vmem:[%s394 + $0x153] sm:$0xff]
        %v2097 = vld [vmem:[%s394 + $0x16b] sm:$0xff]
        %v2098 = vld [vmem:[%s394 + $0x173] sm:$0xff]
        %v2099 = vld [vmem:[%s394 + $0x18b] sm:$0xff]
        %v2100 = vld [vmem:[%s394 + $0x193] sm:$0xff]
        %v2101 = vld [vmem:[%s394 + $0x1ab] sm:$0xff]
        %v2102 = vld [vmem:[%s394 + $0x1b3] sm:$0xff]
        %v2103 = vlaneseq
        %v2104 = vshrl.u32 %v2103, 7
        %v2105 = vsub.s32 6, %v2104
        %v2106 = vrot.slane %v379, %v2105
        %v2107 = vmul.f32 %v2075, %v2106
        %v2108 = vmul.f32 %v2076, %v2106
        %v2109 = vmul.f32 %v2077, %v2106
        %v2110 = vmul.f32 %v2078, %v2106
        %v2111 = vmul.f32 %v2079, %v2106
        %v2112 = vmul.f32 %v2080, %v2106
        %v2113 = vmul.f32 %v2081, %v2106
        %v2114 = vmul.f32 %v2082, %v2106
        %v2115 = vmul.f32 %v2083, %v2106
        %v2116 = vmul.f32 %v2084, %v2106
        %v2117 = vmul.f32 %v2085, %v2106
        %v2118 = vmul.f32 %v2086, %v2106
        %v2119 = vmul.f32 %v2087, %v2106
        %v2120 = vmul.f32 %v2088, %v2106
        %v2121 = vmul.f32 %v2089, %v2106
        %v2122 = vmul.f32 %v2090, %v2106
        %v2123 = vadd.f32 %v2059, %v2107
        %v2124 = vadd.f32 %v2060, %v2108
        %v2125 = vadd.f32 %v2061, %v2109
        %v2126 = vadd.f32 %v2062, %v2110
        %v2127 = vadd.f32 %v2063, %v2111
        %v2128 = vadd.f32 %v2064, %v2112
        %v2129 = vadd.f32 %v2065, %v2113
        %v2130 = vadd.f32 %v2066, %v2114
        %v2131 = vadd.f32 %v2067, %v2115
        %v2132 = vadd.f32 %v2068, %v2116
        %v2133 = vadd.f32 %v2069, %v2117
        %v2134 = vadd.f32 %v2070, %v2118
        %v2135 = vadd.f32 %v2071, %v2119
        %v2136 = vadd.f32 %v2072, %v2120
        %v2137 = vadd.f32 %v2073, %v2121
        %v2138 = vadd.f32 %v2074, %v2122
        %v2139 = vlaneseq
        %v2140 = vshrl.u32 %v2139, 7
        %v2141 = vsub.s32 5, %v2140
        %v2142 = vrot.slane %v380, %v2141
        %v2143 = vmul.f32 %v2077, %v2142
        %v2144 = vmul.f32 %v2078, %v2142
        %v2145 = vmul.f32 %v2079, %v2142
        %v2146 = vmul.f32 %v2080, %v2142
        %v2147 = vmul.f32 %v2081, %v2142
        %v2148 = vmul.f32 %v2082, %v2142
        %v2149 = vmul.f32 %v2083, %v2142
        %v2150 = vmul.f32 %v2084, %v2142
        %v2151 = vmul.f32 %v2085, %v2142
        %v2152 = vmul.f32 %v2086, %v2142
        %v2153 = vmul.f32 %v2087, %v2142
        %v2154 = vmul.f32 %v2088, %v2142
        %v2155 = vmul.f32 %v2089, %v2142
        %v2156 = vmul.f32 %v2090, %v2142
        %v2157 = vmul.f32 %v2091, %v2142
        %v2158 = vmul.f32 %v2092, %v2142
        %v2159 = vadd.f32 %v2123, %v2143
        %v2160 = vadd.f32 %v2124, %v2144
        %v2161 = vadd.f32 %v2125, %v2145
        %v2162 = vadd.f32 %v2126, %v2146
        %v2163 = vadd.f32 %v2127, %v2147
        %v2164 = vadd.f32 %v2128, %v2148
        %v2165 = vadd.f32 %v2129, %v2149
        %v2166 = vadd.f32 %v2130, %v2150
        %v2167 = vadd.f32 %v2131, %v2151
        %v2168 = vadd.f32 %v2132, %v2152
        %v2169 = vadd.f32 %v2133, %v2153
        %v2170 = vadd.f32 %v2134, %v2154
        %v2171 = vadd.f32 %v2135, %v2155
        %v2172 = vadd.f32 %v2136, %v2156
        %v2173 = vadd.f32 %v2137, %v2157
        %v2174 = vadd.f32 %v2138, %v2158
        %v2175 = vlaneseq
        %v2176 = vshrl.u32 %v2175, 7
        %v2177 = vsub.s32 4, %v2176
        %v2178 = vrot.slane %v381, %v2177
        %v2179 = vmul.f32 %v2079, %v2178
        %v2180 = vmul.f32 %v2080, %v2178
        %v2181 = vmul.f32 %v2081, %v2178
        %v2182 = vmul.f32 %v2082, %v2178
        %v2183 = vmul.f32 %v2083, %v2178
        %v2184 = vmul.f32 %v2084, %v2178
        %v2185 = vmul.f32 %v2085, %v2178
        %v2186 = vmul.f32 %v2086, %v2178
        %v2187 = vmul.f32 %v2087, %v2178
        %v2188 = vmul.f32 %v2088, %v2178
        %v2189 = vmul.f32 %v2089, %v2178
        %v2190 = vmul.f32 %v2090, %v2178
        %v2191 = vmul.f32 %v2091, %v2178
        %v2192 = vmul.f32 %v2092, %v2178
        %v2193 = vmul.f32 %v2093, %v2178
        %v2194 = vmul.f32 %v2094, %v2178
        %v2195 = vadd.f32 %v2159, %v2179
        %v2196 = vadd.f32 %v2160, %v2180
        %v2197 = vadd.f32 %v2161, %v2181
        %v2198 = vadd.f32 %v2162, %v2182
        %v2199 = vadd.f32 %v2163, %v2183
        %v2200 = vadd.f32 %v2164, %v2184
        %v2201 = vadd.f32 %v2165, %v2185
        %v2202 = vadd.f32 %v2166, %v2186
        %v2203 = vadd.f32 %v2167, %v2187
        %v2204 = vadd.f32 %v2168, %v2188
        %v2205 = vadd.f32 %v2169, %v2189
        %v2206 = vadd.f32 %v2170, %v2190
        %v2207 = vadd.f32 %v2171, %v2191
        %v2208 = vadd.f32 %v2172, %v2192
        %v2209 = vadd.f32 %v2173, %v2193
        %v2210 = vadd.f32 %v2174, %v2194
        %v2211 = vlaneseq
        %v2212 = vshrl.u32 %v2211, 7
        %v2213 = vsub.s32 3, %v2212
        %v2214 = vrot.slane %v382, %v2213
        %v2215 = vmul.f32 %v2081, %v2214
        %v2216 = vmul.f32 %v2082, %v2214
        %v2217 = vmul.f32 %v2083, %v2214
        %v2218 = vmul.f32 %v2084, %v2214
        %v2219 = vmul.f32 %v2085, %v2214
        %v2220 = vmul.f32 %v2086, %v2214
        %v2221 = vmul.f32 %v2087, %v2214
        %v2222 = vmul.f32 %v2088, %v2214
        %v2223 = vmul.f32 %v2089, %v2214
        %v2224 = vmul.f32 %v2090, %v2214
        %v2225 = vmul.f32 %v2091, %v2214
        %v2226 = vmul.f32 %v2092, %v2214
        %v2227 = vmul.f32 %v2093, %v2214
        %v2228 = vmul.f32 %v2094, %v2214
        %v2229 = vmul.f32 %v2095, %v2214
        %v2230 = vmul.f32 %v2096, %v2214
        %v2231 = vadd.f32 %v2195, %v2215
        %v2232 = vadd.f32 %v2196, %v2216
        %v2233 = vadd.f32 %v2197, %v2217
        %v2234 = vadd.f32 %v2198, %v2218
        %v2235 = vadd.f32 %v2199, %v2219
        %v2236 = vadd.f32 %v2200, %v2220
        %v2237 = vadd.f32 %v2201, %v2221
        %v2238 = vadd.f32 %v2202, %v2222
        %v2239 = vadd.f32 %v2203, %v2223
        %v2240 = vadd.f32 %v2204, %v2224
        %v2241 = vadd.f32 %v2205, %v2225
        %v2242 = vadd.f32 %v2206, %v2226
        %v2243 = vadd.f32 %v2207, %v2227
        %v2244 = vadd.f32 %v2208, %v2228
        %v2245 = vadd.f32 %v2209, %v2229
        %v2246 = vadd.f32 %v2210, %v2230
        %v2247 = vlaneseq
        %v2248 = vshrl.u32 %v2247, 7
        %v2249 = vsub.s32 2, %v2248
        %v2250 = vrot.slane %v383, %v2249
        %v2251 = vmul.f32 %v2083, %v2250
        %v2252 = vmul.f32 %v2084, %v2250
        %v2253 = vmul.f32 %v2085, %v2250
        %v2254 = vmul.f32 %v2086, %v2250
        %v2255 = vmul.f32 %v2087, %v2250
        %v2256 = vmul.f32 %v2088, %v2250
        %v2257 = vmul.f32 %v2089, %v2250
        %v2258 = vmul.f32 %v2090, %v2250
        %v2259 = vmul.f32 %v2091, %v2250
        %v2260 = vmul.f32 %v2092, %v2250
        %v2261 = vmul.f32 %v2093, %v2250
        %v2262 = vmul.f32 %v2094, %v2250
        %v2263 = vmul.f32 %v2095, %v2250
        %v2264 = vmul.f32 %v2096, %v2250
        %v2265 = vmul.f32 %v2097, %v2250
        %v2266 = vmul.f32 %v2098, %v2250
        %v2267 = vadd.f32 %v2231, %v2251
        %v2268 = vadd.f32 %v2232, %v2252
        %v2269 = vadd.f32 %v2233, %v2253
        %v2270 = vadd.f32 %v2234, %v2254
        %v2271 = vadd.f32 %v2235, %v2255
        %v2272 = vadd.f32 %v2236, %v2256
        %v2273 = vadd.f32 %v2237, %v2257
        %v2274 = vadd.f32 %v2238, %v2258
        %v2275 = vadd.f32 %v2239, %v2259
        %v2276 = vadd.f32 %v2240, %v2260
        %v2277 = vadd.f32 %v2241, %v2261
        %v2278 = vadd.f32 %v2242, %v2262
        %v2279 = vadd.f32 %v2243, %v2263
        %v2280 = vadd.f32 %v2244, %v2264
        %v2281 = vadd.f32 %v2245, %v2265
        %v2282 = vadd.f32 %v2246, %v2266
        %v2283 = vlaneseq
        %v2284 = vshrl.u32 %v2283, 7
        %v2285 = vsub.s32 1, %v2284
        %v2286 = vrot.slane %v384, %v2285
        %v2287 = vmul.f32 %v2085, %v2286
        %v2288 = vmul.f32 %v2086, %v2286
        %v2289 = vmul.f32 %v2087, %v2286
        %v2290 = vmul.f32 %v2088, %v2286
        %v2291 = vmul.f32 %v2089, %v2286
        %v2292 = vmul.f32 %v2090, %v2286
        %v2293 = vmul.f32 %v2091, %v2286
        %v2294 = vmul.f32 %v2092, %v2286
        %v2295 = vmul.f32 %v2093, %v2286
        %v2296 = vmul.f32 %v2094, %v2286
        %v2297 = vmul.f32 %v2095, %v2286
        %v2298 = vmul.f32 %v2096, %v2286
        %v2299 = vmul.f32 %v2097, %v2286
        %v2300 = vmul.f32 %v2098, %v2286
        %v2301 = vmul.f32 %v2099, %v2286
        %v2302 = vmul.f32 %v2100, %v2286
        %v2303 = vadd.f32 %v2267, %v2287
        %v2304 = vadd.f32 %v2268, %v2288
        %v2305 = vadd.f32 %v2269, %v2289
        %v2306 = vadd.f32 %v2270, %v2290
        %v2307 = vadd.f32 %v2271, %v2291
        %v2308 = vadd.f32 %v2272, %v2292
        %v2309 = vadd.f32 %v2273, %v2293
        %v2310 = vadd.f32 %v2274, %v2294
        %v2311 = vadd.f32 %v2275, %v2295
        %v2312 = vadd.f32 %v2276, %v2296
        %v2313 = vadd.f32 %v2277, %v2297
        %v2314 = vadd.f32 %v2278, %v2298
        %v2315 = vadd.f32 %v2279, %v2299
        %v2316 = vadd.f32 %v2280, %v2300
        %v2317 = vadd.f32 %v2281, %v2301
        %v2318 = vadd.f32 %v2282, %v2302
        %v2319 = vlaneseq
        %v2320 = vshrl.u32 %v2319, 7
        %v2321 = vsub.s32 0, %v2320
        %v2322 = vrot.slane %v385, %v2321
        %v2323 = vmul.f32 %v2087, %v2322
        %v2324 = vmul.f32 %v2088, %v2322
        %v2325 = vmul.f32 %v2089, %v2322
        %v2326 = vmul.f32 %v2090, %v2322
        %v2327 = vmul.f32 %v2091, %v2322
        %v2328 = vmul.f32 %v2092, %v2322
        %v2329 = vmul.f32 %v2093, %v2322
        %v2330 = vmul.f32 %v2094, %v2322
        %v2331 = vmul.f32 %v2095, %v2322
        %v2332 = vmul.f32 %v2096, %v2322
        %v2333 = vmul.f32 %v2097, %v2322
        %v2334 = vmul.f32 %v2098, %v2322
        %v2335 = vmul.f32 %v2099, %v2322
        %v2336 = vmul.f32 %v2100, %v2322
        %v2337 = vmul.f32 %v2101, %v2322
        %v2338 = vmul.f32 %v2102, %v2322
        %v2339 = vadd.f32 %v2303, %v2323
        %v2340 = vadd.f32 %v2304, %v2324
        %v2341 = vadd.f32 %v2305, %v2325
        %v2342 = vadd.f32 %v2306, %v2326
        %v2343 = vadd.f32 %v2307, %v2327
        %v2344 = vadd.f32 %v2308, %v2328
        %v2345 = vadd.f32 %v2309, %v2329
        %v2346 = vadd.f32 %v2310, %v2330
        %v2347 = vadd.f32 %v2311, %v2331
        %v2348 = vadd.f32 %v2312, %v2332
        %v2349 = vadd.f32 %v2313, %v2333
        %v2350 = vadd.f32 %v2314, %v2334
        %v2351 = vadd.f32 %v2315, %v2335
        %v2352 = vadd.f32 %v2316, %v2336
        %v2353 = vadd.f32 %v2317, %v2337
        %v2354 = vadd.f32 %v2318, %v2338
        %v2355 = vpack.c.bf16 %v2340, %v2339
        %v2356 = vpack.c.bf16 %v2342, %v2341
        %v2357 = vpack.c.bf16 %v2344, %v2343
        %v2358 = vpack.c.bf16 %v2346, %v2345
        %v2359 = vpack.c.bf16 %v2348, %v2347
        %v2360 = vpack.c.bf16 %v2350, %v2349
        %v2361 = vpack.c.bf16 %v2352, %v2351
        %v2362 = vpack.c.bf16 %v2354, %v2353
        %2363 = vst [vmem:[#allocation4] sm:$0xff] %v2355
        %2364 = vst [vmem:[#allocation4 + $0x8] sm:$0xff] %v2356
        %2365 = vst [vmem:[#allocation4 + $0x10] sm:$0xff] %v2357
        %2366 = vst [vmem:[#allocation4 + $0x18] sm:$0xff] %v2358
        %2367 = vst [vmem:[#allocation4 + $0x20] sm:$0xff] %v2359
        %2368 = vst [vmem:[#allocation4 + $0x28] sm:$0xff] %v2360
        %2369 = vst [vmem:[#allocation4 + $0x30] sm:$0xff] %v2361
        %2370 = vst [vmem:[#allocation4 + $0x38] sm:$0xff] %v2362
        %s2371 = sadd.s32 256, %s393
        %s2372 = scalar_lea.vmem [#allocation2], %s2371
        %v2373 = vld [vmem:[%s2372 + $0x5] sm:$0xff]
        %v2374 = vld [vmem:[%s2372 + $0xd] sm:$0xff]
        %v2375 = vld [vmem:[%s2372 + $0x25] sm:$0xff]
        %v2376 = vld [vmem:[%s2372 + $0x2d] sm:$0xff]
        %v2377 = vld [vmem:[%s2372 + $0x45] sm:$0xff]
        %v2378 = vld [vmem:[%s2372 + $0x4d] sm:$0xff]
        %v2379 = vld [vmem:[%s2372 + $0x65] sm:$0xff]
        %v2380 = vld [vmem:[%s2372 + $0x6d] sm:$0xff]
        %v2381 = vld [vmem:[%s2372 + $0x85] sm:$0xff]
        %v2382 = vld [vmem:[%s2372 + $0x8d] sm:$0xff]
        %v2383 = vld [vmem:[%s2372 + $0xa5] sm:$0xff]
        %v2384 = vld [vmem:[%s2372 + $0xad] sm:$0xff]
        %v2385 = vld [vmem:[%s2372 + $0xc5] sm:$0xff]
        %v2386 = vld [vmem:[%s2372 + $0xcd] sm:$0xff]
        %v2387 = vld [vmem:[%s2372 + $0xe5] sm:$0xff]
        %v2388 = vld [vmem:[%s2372 + $0xed] sm:$0xff]
        %v2389 = vld [vmem:[%s2372 + $0x105] sm:$0xff]
        %v2390 = vld [vmem:[%s2372 + $0x10d] sm:$0xff]
        %v2391 = vld [vmem:[%s2372 + $0x125] sm:$0xff]
        %v2392 = vld [vmem:[%s2372 + $0x12d] sm:$0xff]
        %v2393 = vld [vmem:[%s2372 + $0x145] sm:$0xff]
        %v2394 = vld [vmem:[%s2372 + $0x14d] sm:$0xff]
        %v2395 = vld [vmem:[%s2372 + $0x165] sm:$0xff]
        %v2396 = vld [vmem:[%s2372 + $0x16d] sm:$0xff]
        %v2397 = vld [vmem:[%s2372 + $0x185] sm:$0xff]
        %v2398 = vld [vmem:[%s2372 + $0x18d] sm:$0xff]
        %v2399 = vld [vmem:[%s2372 + $0x1a5] sm:$0xff]
        %v2400 = vld [vmem:[%s2372 + $0x1ad] sm:$0xff]
        %v2401 = vmul.f32 %v2373, %v426
        %v2402 = vmul.f32 %v2374, %v426
        %v2403 = vmul.f32 %v2375, %v426
        %v2404 = vmul.f32 %v2376, %v426
        %v2405 = vmul.f32 %v2377, %v426
        %v2406 = vmul.f32 %v2378, %v426
        %v2407 = vmul.f32 %v2379, %v426
        %v2408 = vmul.f32 %v2380, %v426
        %v2409 = vmul.f32 %v2381, %v426
        %v2410 = vmul.f32 %v2382, %v426
        %v2411 = vmul.f32 %v2383, %v426
        %v2412 = vmul.f32 %v2384, %v426
        %v2413 = vmul.f32 %v2385, %v426
        %v2414 = vmul.f32 %v2386, %v426
        %v2415 = vmul.f32 %v2387, %v426
        %v2416 = vmul.f32 %v2388, %v426
        %v2417 = vadd.f32 %v391, %v2401
        %v2418 = vadd.f32 %v391, %v2402
        %v2419 = vadd.f32 %v391, %v2403
        %v2420 = vadd.f32 %v391, %v2404
        %v2421 = vadd.f32 %v391, %v2405
        %v2422 = vadd.f32 %v391, %v2406
        %v2423 = vadd.f32 %v391, %v2407
        %v2424 = vadd.f32 %v391, %v2408
        %v2425 = vadd.f32 %v391, %v2409
        %v2426 = vadd.f32 %v391, %v2410
        %v2427 = vadd.f32 %v391, %v2411
        %v2428 = vadd.f32 %v391, %v2412
        %v2429 = vadd.f32 %v391, %v2413
        %v2430 = vadd.f32 %v391, %v2414
        %v2431 = vadd.f32 %v391, %v2415
        %v2432 = vadd.f32 %v391, %v2416
        %v2433 = vmul.f32 %v2375, %v462
        %v2434 = vmul.f32 %v2376, %v462
        %v2435 = vmul.f32 %v2377, %v462
        %v2436 = vmul.f32 %v2378, %v462
        %v2437 = vmul.f32 %v2379, %v462
        %v2438 = vmul.f32 %v2380, %v462
        %v2439 = vmul.f32 %v2381, %v462
        %v2440 = vmul.f32 %v2382, %v462
        %v2441 = vmul.f32 %v2383, %v462
        %v2442 = vmul.f32 %v2384, %v462
        %v2443 = vmul.f32 %v2385, %v462
        %v2444 = vmul.f32 %v2386, %v462
        %v2445 = vmul.f32 %v2387, %v462
        %v2446 = vmul.f32 %v2388, %v462
        %v2447 = vmul.f32 %v2389, %v462
        %v2448 = vmul.f32 %v2390, %v462
        %v2449 = vadd.f32 %v2417, %v2433
        %v2450 = vadd.f32 %v2418, %v2434
        %v2451 = vadd.f32 %v2419, %v2435
        %v2452 = vadd.f32 %v2420, %v2436
        %v2453 = vadd.f32 %v2421, %v2437
        %v2454 = vadd.f32 %v2422, %v2438
        %v2455 = vadd.f32 %v2423, %v2439
        %v2456 = vadd.f32 %v2424, %v2440
        %v2457 = vadd.f32 %v2425, %v2441
        %v2458 = vadd.f32 %v2426, %v2442
        %v2459 = vadd.f32 %v2427, %v2443
        %v2460 = vadd.f32 %v2428, %v2444
        %v2461 = vadd.f32 %v2429, %v2445
        %v2462 = vadd.f32 %v2430, %v2446
        %v2463 = vadd.f32 %v2431, %v2447
        %v2464 = vadd.f32 %v2432, %v2448
        %v2465 = vmul.f32 %v2377, %v498
        %v2466 = vmul.f32 %v2378, %v498
        %v2467 = vmul.f32 %v2379, %v498
        %v2468 = vmul.f32 %v2380, %v498
        %v2469 = vmul.f32 %v2381, %v498
        %v2470 = vmul.f32 %v2382, %v498
        %v2471 = vmul.f32 %v2383, %v498
        %v2472 = vmul.f32 %v2384, %v498
        %v2473 = vmul.f32 %v2385, %v498
        %v2474 = vmul.f32 %v2386, %v498
        %v2475 = vmul.f32 %v2387, %v498
        %v2476 = vmul.f32 %v2388, %v498
        %v2477 = vmul.f32 %v2389, %v498
        %v2478 = vmul.f32 %v2390, %v498
        %v2479 = vmul.f32 %v2391, %v498
        %v2480 = vmul.f32 %v2392, %v498
        %v2481 = vadd.f32 %v2449, %v2465
        %v2482 = vadd.f32 %v2450, %v2466
        %v2483 = vadd.f32 %v2451, %v2467
        %v2484 = vadd.f32 %v2452, %v2468
        %v2485 = vadd.f32 %v2453, %v2469
        %v2486 = vadd.f32 %v2454, %v2470
        %v2487 = vadd.f32 %v2455, %v2471
        %v2488 = vadd.f32 %v2456, %v2472
        %v2489 = vadd.f32 %v2457, %v2473
        %v2490 = vadd.f32 %v2458, %v2474
        %v2491 = vadd.f32 %v2459, %v2475
        %v2492 = vadd.f32 %v2460, %v2476
        %v2493 = vadd.f32 %v2461, %v2477
        %v2494 = vadd.f32 %v2462, %v2478
        %v2495 = vadd.f32 %v2463, %v2479
        %v2496 = vadd.f32 %v2464, %v2480
        %v2497 = vmul.f32 %v2379, %v534
        %v2498 = vmul.f32 %v2380, %v534
        %v2499 = vmul.f32 %v2381, %v534
        %v2500 = vmul.f32 %v2382, %v534
        %v2501 = vmul.f32 %v2383, %v534
        %v2502 = vmul.f32 %v2384, %v534
        %v2503 = vmul.f32 %v2385, %v534
        %v2504 = vmul.f32 %v2386, %v534
        %v2505 = vmul.f32 %v2387, %v534
        %v2506 = vmul.f32 %v2388, %v534
        %v2507 = vmul.f32 %v2389, %v534
        %v2508 = vmul.f32 %v2390, %v534
        %v2509 = vmul.f32 %v2391, %v534
        %v2510 = vmul.f32 %v2392, %v534
        %v2511 = vmul.f32 %v2393, %v534
        %v2512 = vmul.f32 %v2394, %v534
        %v2513 = vadd.f32 %v2481, %v2497
        %v2514 = vadd.f32 %v2482, %v2498
        %v2515 = vadd.f32 %v2483, %v2499
        %v2516 = vadd.f32 %v2484, %v2500
        %v2517 = vadd.f32 %v2485, %v2501
        %v2518 = vadd.f32 %v2486, %v2502
        %v2519 = vadd.f32 %v2487, %v2503
        %v2520 = vadd.f32 %v2488, %v2504
        %v2521 = vadd.f32 %v2489, %v2505
        %v2522 = vadd.f32 %v2490, %v2506
        %v2523 = vadd.f32 %v2491, %v2507
        %v2524 = vadd.f32 %v2492, %v2508
        %v2525 = vadd.f32 %v2493, %v2509
        %v2526 = vadd.f32 %v2494, %v2510
        %v2527 = vadd.f32 %v2495, %v2511
        %v2528 = vadd.f32 %v2496, %v2512
        %v2529 = vmul.f32 %v2381, %v570
        %v2530 = vmul.f32 %v2382, %v570
        %v2531 = vmul.f32 %v2383, %v570
        %v2532 = vmul.f32 %v2384, %v570
        %v2533 = vmul.f32 %v2385, %v570
        %v2534 = vmul.f32 %v2386, %v570
        %v2535 = vmul.f32 %v2387, %v570
        %v2536 = vmul.f32 %v2388, %v570
        %v2537 = vmul.f32 %v2389, %v570
        %v2538 = vmul.f32 %v2390, %v570
        %v2539 = vmul.f32 %v2391, %v570
        %v2540 = vmul.f32 %v2392, %v570
        %v2541 = vmul.f32 %v2393, %v570
        %v2542 = vmul.f32 %v2394, %v570
        %v2543 = vmul.f32 %v2395, %v570
        %v2544 = vmul.f32 %v2396, %v570
        %v2545 = vadd.f32 %v2513, %v2529
        %v2546 = vadd.f32 %v2514, %v2530
        %v2547 = vadd.f32 %v2515, %v2531
        %v2548 = vadd.f32 %v2516, %v2532
        %v2549 = vadd.f32 %v2517, %v2533
        %v2550 = vadd.f32 %v2518, %v2534
        %v2551 = vadd.f32 %v2519, %v2535
        %v2552 = vadd.f32 %v2520, %v2536
        %v2553 = vadd.f32 %v2521, %v2537
        %v2554 = vadd.f32 %v2522, %v2538
        %v2555 = vadd.f32 %v2523, %v2539
        %v2556 = vadd.f32 %v2524, %v2540
        %v2557 = vadd.f32 %v2525, %v2541
        %v2558 = vadd.f32 %v2526, %v2542
        %v2559 = vadd.f32 %v2527, %v2543
        %v2560 = vadd.f32 %v2528, %v2544
        %v2561 = vmul.f32 %v2383, %v606
        %v2562 = vmul.f32 %v2384, %v606
        %v2563 = vmul.f32 %v2385, %v606
        %v2564 = vmul.f32 %v2386, %v606
        %v2565 = vmul.f32 %v2387, %v606
        %v2566 = vmul.f32 %v2388, %v606
        %v2567 = vmul.f32 %v2389, %v606
        %v2568 = vmul.f32 %v2390, %v606
        %v2569 = vmul.f32 %v2391, %v606
        %v2570 = vmul.f32 %v2392, %v606
        %v2571 = vmul.f32 %v2393, %v606
        %v2572 = vmul.f32 %v2394, %v606
        %v2573 = vmul.f32 %v2395, %v606
        %v2574 = vmul.f32 %v2396, %v606
        %v2575 = vmul.f32 %v2397, %v606
        %v2576 = vmul.f32 %v2398, %v606
        %v2577 = vadd.f32 %v2545, %v2561
        %v2578 = vadd.f32 %v2546, %v2562
        %v2579 = vadd.f32 %v2547, %v2563
        %v2580 = vadd.f32 %v2548, %v2564
        %v2581 = vadd.f32 %v2549, %v2565
        %v2582 = vadd.f32 %v2550, %v2566
        %v2583 = vadd.f32 %v2551, %v2567
        %v2584 = vadd.f32 %v2552, %v2568
        %v2585 = vadd.f32 %v2553, %v2569
        %v2586 = vadd.f32 %v2554, %v2570
        %v2587 = vadd.f32 %v2555, %v2571
        %v2588 = vadd.f32 %v2556, %v2572
        %v2589 = vadd.f32 %v2557, %v2573
        %v2590 = vadd.f32 %v2558, %v2574
        %v2591 = vadd.f32 %v2559, %v2575
        %v2592 = vadd.f32 %v2560, %v2576
        %v2593 = vmul.f32 %v2385, %v642
        %v2594 = vmul.f32 %v2386, %v642
        %v2595 = vmul.f32 %v2387, %v642
        %v2596 = vmul.f32 %v2388, %v642
        %v2597 = vmul.f32 %v2389, %v642
        %v2598 = vmul.f32 %v2390, %v642
        %v2599 = vmul.f32 %v2391, %v642
        %v2600 = vmul.f32 %v2392, %v642
        %v2601 = vmul.f32 %v2393, %v642
        %v2602 = vmul.f32 %v2394, %v642
        %v2603 = vmul.f32 %v2395, %v642
        %v2604 = vmul.f32 %v2396, %v642
        %v2605 = vmul.f32 %v2397, %v642
        %v2606 = vmul.f32 %v2398, %v642
        %v2607 = vmul.f32 %v2399, %v642
        %v2608 = vmul.f32 %v2400, %v642
        %v2609 = vadd.f32 %v2577, %v2593
        %v2610 = vadd.f32 %v2578, %v2594
        %v2611 = vadd.f32 %v2579, %v2595
        %v2612 = vadd.f32 %v2580, %v2596
        %v2613 = vadd.f32 %v2581, %v2597
        %v2614 = vadd.f32 %v2582, %v2598
        %v2615 = vadd.f32 %v2583, %v2599
        %v2616 = vadd.f32 %v2584, %v2600
        %v2617 = vadd.f32 %v2585, %v2601
        %v2618 = vadd.f32 %v2586, %v2602
        %v2619 = vadd.f32 %v2587, %v2603
        %v2620 = vadd.f32 %v2588, %v2604
        %v2621 = vadd.f32 %v2589, %v2605
        %v2622 = vadd.f32 %v2590, %v2606
        %v2623 = vadd.f32 %v2591, %v2607
        %v2624 = vadd.f32 %v2592, %v2608
        %v2625 = vld [vmem:[%s2372 + $0x6] sm:$0xff]
        %v2626 = vld [vmem:[%s2372 + $0xe] sm:$0xff]
        %v2627 = vld [vmem:[%s2372 + $0x26] sm:$0xff]
        %v2628 = vld [vmem:[%s2372 + $0x2e] sm:$0xff]
        %v2629 = vld [vmem:[%s2372 + $0x46] sm:$0xff]
        %v2630 = vld [vmem:[%s2372 + $0x4e] sm:$0xff]
        %v2631 = vld [vmem:[%s2372 + $0x66] sm:$0xff]
        %v2632 = vld [vmem:[%s2372 + $0x6e] sm:$0xff]
        %v2633 = vld [vmem:[%s2372 + $0x86] sm:$0xff]
        %v2634 = vld [vmem:[%s2372 + $0x8e] sm:$0xff]
        %v2635 = vld [vmem:[%s2372 + $0xa6] sm:$0xff]
        %v2636 = vld [vmem:[%s2372 + $0xae] sm:$0xff]
        %v2637 = vld [vmem:[%s2372 + $0xc6] sm:$0xff]
        %v2638 = vld [vmem:[%s2372 + $0xce] sm:$0xff]
        %v2639 = vld [vmem:[%s2372 + $0xe6] sm:$0xff]
        %v2640 = vld [vmem:[%s2372 + $0xee] sm:$0xff]
        %v2641 = vld [vmem:[%s2372 + $0x106] sm:$0xff]
        %v2642 = vld [vmem:[%s2372 + $0x10e] sm:$0xff]
        %v2643 = vld [vmem:[%s2372 + $0x126] sm:$0xff]
        %v2644 = vld [vmem:[%s2372 + $0x12e] sm:$0xff]
        %v2645 = vld [vmem:[%s2372 + $0x146] sm:$0xff]
        %v2646 = vld [vmem:[%s2372 + $0x14e] sm:$0xff]
        %v2647 = vld [vmem:[%s2372 + $0x166] sm:$0xff]
        %v2648 = vld [vmem:[%s2372 + $0x16e] sm:$0xff]
        %v2649 = vld [vmem:[%s2372 + $0x186] sm:$0xff]
        %v2650 = vld [vmem:[%s2372 + $0x18e] sm:$0xff]
        %v2651 = vld [vmem:[%s2372 + $0x1a6] sm:$0xff]
        %v2652 = vld [vmem:[%s2372 + $0x1ae] sm:$0xff]
        %v2653 = vmul.f32 %v2625, %v706
        %v2654 = vmul.f32 %v2626, %v706
        %v2655 = vmul.f32 %v2627, %v706
        %v2656 = vmul.f32 %v2628, %v706
        %v2657 = vmul.f32 %v2629, %v706
        %v2658 = vmul.f32 %v2630, %v706
        %v2659 = vmul.f32 %v2631, %v706
        %v2660 = vmul.f32 %v2632, %v706
        %v2661 = vmul.f32 %v2633, %v706
        %v2662 = vmul.f32 %v2634, %v706
        %v2663 = vmul.f32 %v2635, %v706
        %v2664 = vmul.f32 %v2636, %v706
        %v2665 = vmul.f32 %v2637, %v706
        %v2666 = vmul.f32 %v2638, %v706
        %v2667 = vmul.f32 %v2639, %v706
        %v2668 = vmul.f32 %v2640, %v706
        %v2669 = vadd.f32 %v2609, %v2653
        %v2670 = vadd.f32 %v2610, %v2654
        %v2671 = vadd.f32 %v2611, %v2655
        %v2672 = vadd.f32 %v2612, %v2656
        %v2673 = vadd.f32 %v2613, %v2657
        %v2674 = vadd.f32 %v2614, %v2658
        %v2675 = vadd.f32 %v2615, %v2659
        %v2676 = vadd.f32 %v2616, %v2660
        %v2677 = vadd.f32 %v2617, %v2661
        %v2678 = vadd.f32 %v2618, %v2662
        %v2679 = vadd.f32 %v2619, %v2663
        %v2680 = vadd.f32 %v2620, %v2664
        %v2681 = vadd.f32 %v2621, %v2665
        %v2682 = vadd.f32 %v2622, %v2666
        %v2683 = vadd.f32 %v2623, %v2667
        %v2684 = vadd.f32 %v2624, %v2668
        %v2685 = vmul.f32 %v2627, %v742
        %v2686 = vmul.f32 %v2628, %v742
        %v2687 = vmul.f32 %v2629, %v742
        %v2688 = vmul.f32 %v2630, %v742
        %v2689 = vmul.f32 %v2631, %v742
        %v2690 = vmul.f32 %v2632, %v742
        %v2691 = vmul.f32 %v2633, %v742
        %v2692 = vmul.f32 %v2634, %v742
        %v2693 = vmul.f32 %v2635, %v742
        %v2694 = vmul.f32 %v2636, %v742
        %v2695 = vmul.f32 %v2637, %v742
        %v2696 = vmul.f32 %v2638, %v742
        %v2697 = vmul.f32 %v2639, %v742
        %v2698 = vmul.f32 %v2640, %v742
        %v2699 = vmul.f32 %v2641, %v742
        %v2700 = vmul.f32 %v2642, %v742
        %v2701 = vadd.f32 %v2669, %v2685
        %v2702 = vadd.f32 %v2670, %v2686
        %v2703 = vadd.f32 %v2671, %v2687
        %v2704 = vadd.f32 %v2672, %v2688
        %v2705 = vadd.f32 %v2673, %v2689
        %v2706 = vadd.f32 %v2674, %v2690
        %v2707 = vadd.f32 %v2675, %v2691
        %v2708 = vadd.f32 %v2676, %v2692
        %v2709 = vadd.f32 %v2677, %v2693
        %v2710 = vadd.f32 %v2678, %v2694
        %v2711 = vadd.f32 %v2679, %v2695
        %v2712 = vadd.f32 %v2680, %v2696
        %v2713 = vadd.f32 %v2681, %v2697
        %v2714 = vadd.f32 %v2682, %v2698
        %v2715 = vadd.f32 %v2683, %v2699
        %v2716 = vadd.f32 %v2684, %v2700
        %v2717 = vmul.f32 %v2629, %v778
        %v2718 = vmul.f32 %v2630, %v778
        %v2719 = vmul.f32 %v2631, %v778
        %v2720 = vmul.f32 %v2632, %v778
        %v2721 = vmul.f32 %v2633, %v778
        %v2722 = vmul.f32 %v2634, %v778
        %v2723 = vmul.f32 %v2635, %v778
        %v2724 = vmul.f32 %v2636, %v778
        %v2725 = vmul.f32 %v2637, %v778
        %v2726 = vmul.f32 %v2638, %v778
        %v2727 = vmul.f32 %v2639, %v778
        %v2728 = vmul.f32 %v2640, %v778
        %v2729 = vmul.f32 %v2641, %v778
        %v2730 = vmul.f32 %v2642, %v778
        %v2731 = vmul.f32 %v2643, %v778
        %v2732 = vmul.f32 %v2644, %v778
        %v2733 = vadd.f32 %v2701, %v2717
        %v2734 = vadd.f32 %v2702, %v2718
        %v2735 = vadd.f32 %v2703, %v2719
        %v2736 = vadd.f32 %v2704, %v2720
        %v2737 = vadd.f32 %v2705, %v2721
        %v2738 = vadd.f32 %v2706, %v2722
        %v2739 = vadd.f32 %v2707, %v2723
        %v2740 = vadd.f32 %v2708, %v2724
        %v2741 = vadd.f32 %v2709, %v2725
        %v2742 = vadd.f32 %v2710, %v2726
        %v2743 = vadd.f32 %v2711, %v2727
        %v2744 = vadd.f32 %v2712, %v2728
        %v2745 = vadd.f32 %v2713, %v2729
        %v2746 = vadd.f32 %v2714, %v2730
        %v2747 = vadd.f32 %v2715, %v2731
        %v2748 = vadd.f32 %v2716, %v2732
        %v2749 = vmul.f32 %v2631, %v814
        %v2750 = vmul.f32 %v2632, %v814
        %v2751 = vmul.f32 %v2633, %v814
        %v2752 = vmul.f32 %v2634, %v814
        %v2753 = vmul.f32 %v2635, %v814
        %v2754 = vmul.f32 %v2636, %v814
        %v2755 = vmul.f32 %v2637, %v814
        %v2756 = vmul.f32 %v2638, %v814
        %v2757 = vmul.f32 %v2639, %v814
        %v2758 = vmul.f32 %v2640, %v814
        %v2759 = vmul.f32 %v2641, %v814
        %v2760 = vmul.f32 %v2642, %v814
        %v2761 = vmul.f32 %v2643, %v814
        %v2762 = vmul.f32 %v2644, %v814
        %v2763 = vmul.f32 %v2645, %v814
        %v2764 = vmul.f32 %v2646, %v814
        %v2765 = vadd.f32 %v2733, %v2749
        %v2766 = vadd.f32 %v2734, %v2750
        %v2767 = vadd.f32 %v2735, %v2751
        %v2768 = vadd.f32 %v2736, %v2752
        %v2769 = vadd.f32 %v2737, %v2753
        %v2770 = vadd.f32 %v2738, %v2754
        %v2771 = vadd.f32 %v2739, %v2755
        %v2772 = vadd.f32 %v2740, %v2756
        %v2773 = vadd.f32 %v2741, %v2757
        %v2774 = vadd.f32 %v2742, %v2758
        %v2775 = vadd.f32 %v2743, %v2759
        %v2776 = vadd.f32 %v2744, %v2760
        %v2777 = vadd.f32 %v2745, %v2761
        %v2778 = vadd.f32 %v2746, %v2762
        %v2779 = vadd.f32 %v2747, %v2763
        %v2780 = vadd.f32 %v2748, %v2764
        %v2781 = vmul.f32 %v2633, %v850
        %v2782 = vmul.f32 %v2634, %v850
        %v2783 = vmul.f32 %v2635, %v850
        %v2784 = vmul.f32 %v2636, %v850
        %v2785 = vmul.f32 %v2637, %v850
        %v2786 = vmul.f32 %v2638, %v850
        %v2787 = vmul.f32 %v2639, %v850
        %v2788 = vmul.f32 %v2640, %v850
        %v2789 = vmul.f32 %v2641, %v850
        %v2790 = vmul.f32 %v2642, %v850
        %v2791 = vmul.f32 %v2643, %v850
        %v2792 = vmul.f32 %v2644, %v850
        %v2793 = vmul.f32 %v2645, %v850
        %v2794 = vmul.f32 %v2646, %v850
        %v2795 = vmul.f32 %v2647, %v850
        %v2796 = vmul.f32 %v2648, %v850
        %v2797 = vadd.f32 %v2765, %v2781
        %v2798 = vadd.f32 %v2766, %v2782
        %v2799 = vadd.f32 %v2767, %v2783
        %v2800 = vadd.f32 %v2768, %v2784
        %v2801 = vadd.f32 %v2769, %v2785
        %v2802 = vadd.f32 %v2770, %v2786
        %v2803 = vadd.f32 %v2771, %v2787
        %v2804 = vadd.f32 %v2772, %v2788
        %v2805 = vadd.f32 %v2773, %v2789
        %v2806 = vadd.f32 %v2774, %v2790
        %v2807 = vadd.f32 %v2775, %v2791
        %v2808 = vadd.f32 %v2776, %v2792
        %v2809 = vadd.f32 %v2777, %v2793
        %v2810 = vadd.f32 %v2778, %v2794
        %v2811 = vadd.f32 %v2779, %v2795
        %v2812 = vadd.f32 %v2780, %v2796
        %v2813 = vmul.f32 %v2635, %v886
        %v2814 = vmul.f32 %v2636, %v886
        %v2815 = vmul.f32 %v2637, %v886
        %v2816 = vmul.f32 %v2638, %v886
        %v2817 = vmul.f32 %v2639, %v886
        %v2818 = vmul.f32 %v2640, %v886
        %v2819 = vmul.f32 %v2641, %v886
        %v2820 = vmul.f32 %v2642, %v886
        %v2821 = vmul.f32 %v2643, %v886
        %v2822 = vmul.f32 %v2644, %v886
        %v2823 = vmul.f32 %v2645, %v886
        %v2824 = vmul.f32 %v2646, %v886
        %v2825 = vmul.f32 %v2647, %v886
        %v2826 = vmul.f32 %v2648, %v886
        %v2827 = vmul.f32 %v2649, %v886
        %v2828 = vmul.f32 %v2650, %v886
        %v2829 = vadd.f32 %v2797, %v2813
        %v2830 = vadd.f32 %v2798, %v2814
        %v2831 = vadd.f32 %v2799, %v2815
        %v2832 = vadd.f32 %v2800, %v2816
        %v2833 = vadd.f32 %v2801, %v2817
        %v2834 = vadd.f32 %v2802, %v2818
        %v2835 = vadd.f32 %v2803, %v2819
        %v2836 = vadd.f32 %v2804, %v2820
        %v2837 = vadd.f32 %v2805, %v2821
        %v2838 = vadd.f32 %v2806, %v2822
        %v2839 = vadd.f32 %v2807, %v2823
        %v2840 = vadd.f32 %v2808, %v2824
        %v2841 = vadd.f32 %v2809, %v2825
        %v2842 = vadd.f32 %v2810, %v2826
        %v2843 = vadd.f32 %v2811, %v2827
        %v2844 = vadd.f32 %v2812, %v2828
        %v2845 = vmul.f32 %v2637, %v922
        %v2846 = vmul.f32 %v2638, %v922
        %v2847 = vmul.f32 %v2639, %v922
        %v2848 = vmul.f32 %v2640, %v922
        %v2849 = vmul.f32 %v2641, %v922
        %v2850 = vmul.f32 %v2642, %v922
        %v2851 = vmul.f32 %v2643, %v922
        %v2852 = vmul.f32 %v2644, %v922
        %v2853 = vmul.f32 %v2645, %v922
        %v2854 = vmul.f32 %v2646, %v922
        %v2855 = vmul.f32 %v2647, %v922
        %v2856 = vmul.f32 %v2648, %v922
        %v2857 = vmul.f32 %v2649, %v922
        %v2858 = vmul.f32 %v2650, %v922
        %v2859 = vmul.f32 %v2651, %v922
        %v2860 = vmul.f32 %v2652, %v922
        %v2861 = vadd.f32 %v2829, %v2845
        %v2862 = vadd.f32 %v2830, %v2846
        %v2863 = vadd.f32 %v2831, %v2847
        %v2864 = vadd.f32 %v2832, %v2848
        %v2865 = vadd.f32 %v2833, %v2849
        %v2866 = vadd.f32 %v2834, %v2850
        %v2867 = vadd.f32 %v2835, %v2851
        %v2868 = vadd.f32 %v2836, %v2852
        %v2869 = vadd.f32 %v2837, %v2853
        %v2870 = vadd.f32 %v2838, %v2854
        %v2871 = vadd.f32 %v2839, %v2855
        %v2872 = vadd.f32 %v2840, %v2856
        %v2873 = vadd.f32 %v2841, %v2857
        %v2874 = vadd.f32 %v2842, %v2858
        %v2875 = vadd.f32 %v2843, %v2859
        %v2876 = vadd.f32 %v2844, %v2860
        %v2877 = vld [vmem:[%s2372 + $0x7] sm:$0xff]
        %v2878 = vld [vmem:[%s2372 + $0xf] sm:$0xff]
        %v2879 = vld [vmem:[%s2372 + $0x27] sm:$0xff]
        %v2880 = vld [vmem:[%s2372 + $0x2f] sm:$0xff]
        %v2881 = vld [vmem:[%s2372 + $0x47] sm:$0xff]
        %v2882 = vld [vmem:[%s2372 + $0x4f] sm:$0xff]
        %v2883 = vld [vmem:[%s2372 + $0x67] sm:$0xff]
        %v2884 = vld [vmem:[%s2372 + $0x6f] sm:$0xff]
        %v2885 = vld [vmem:[%s2372 + $0x87] sm:$0xff]
        %v2886 = vld [vmem:[%s2372 + $0x8f] sm:$0xff]
        %v2887 = vld [vmem:[%s2372 + $0xa7] sm:$0xff]
        %v2888 = vld [vmem:[%s2372 + $0xaf] sm:$0xff]
        %v2889 = vld [vmem:[%s2372 + $0xc7] sm:$0xff]
        %v2890 = vld [vmem:[%s2372 + $0xcf] sm:$0xff]
        %v2891 = vld [vmem:[%s2372 + $0xe7] sm:$0xff]
        %v2892 = vld [vmem:[%s2372 + $0xef] sm:$0xff]
        %v2893 = vld [vmem:[%s2372 + $0x107] sm:$0xff]
        %v2894 = vld [vmem:[%s2372 + $0x10f] sm:$0xff]
        %v2895 = vld [vmem:[%s2372 + $0x127] sm:$0xff]
        %v2896 = vld [vmem:[%s2372 + $0x12f] sm:$0xff]
        %v2897 = vld [vmem:[%s2372 + $0x147] sm:$0xff]
        %v2898 = vld [vmem:[%s2372 + $0x14f] sm:$0xff]
        %v2899 = vld [vmem:[%s2372 + $0x167] sm:$0xff]
        %v2900 = vld [vmem:[%s2372 + $0x16f] sm:$0xff]
        %v2901 = vld [vmem:[%s2372 + $0x187] sm:$0xff]
        %v2902 = vld [vmem:[%s2372 + $0x18f] sm:$0xff]
        %v2903 = vld [vmem:[%s2372 + $0x1a7] sm:$0xff]
        %v2904 = vld [vmem:[%s2372 + $0x1af] sm:$0xff]
        %v2905 = vmul.f32 %v2877, %v986
        %v2906 = vmul.f32 %v2878, %v986
        %v2907 = vmul.f32 %v2879, %v986
        %v2908 = vmul.f32 %v2880, %v986
        %v2909 = vmul.f32 %v2881, %v986
        %v2910 = vmul.f32 %v2882, %v986
        %v2911 = vmul.f32 %v2883, %v986
        %v2912 = vmul.f32 %v2884, %v986
        %v2913 = vmul.f32 %v2885, %v986
        %v2914 = vmul.f32 %v2886, %v986
        %v2915 = vmul.f32 %v2887, %v986
        %v2916 = vmul.f32 %v2888, %v986
        %v2917 = vmul.f32 %v2889, %v986
        %v2918 = vmul.f32 %v2890, %v986
        %v2919 = vmul.f32 %v2891, %v986
        %v2920 = vmul.f32 %v2892, %v986
        %v2921 = vadd.f32 %v2861, %v2905
        %v2922 = vadd.f32 %v2862, %v2906
        %v2923 = vadd.f32 %v2863, %v2907
        %v2924 = vadd.f32 %v2864, %v2908
        %v2925 = vadd.f32 %v2865, %v2909
        %v2926 = vadd.f32 %v2866, %v2910
        %v2927 = vadd.f32 %v2867, %v2911
        %v2928 = vadd.f32 %v2868, %v2912
        %v2929 = vadd.f32 %v2869, %v2913
        %v2930 = vadd.f32 %v2870, %v2914
        %v2931 = vadd.f32 %v2871, %v2915
        %v2932 = vadd.f32 %v2872, %v2916
        %v2933 = vadd.f32 %v2873, %v2917
        %v2934 = vadd.f32 %v2874, %v2918
        %v2935 = vadd.f32 %v2875, %v2919
        %v2936 = vadd.f32 %v2876, %v2920
        %v2937 = vmul.f32 %v2879, %v1022
        %v2938 = vmul.f32 %v2880, %v1022
        %v2939 = vmul.f32 %v2881, %v1022
        %v2940 = vmul.f32 %v2882, %v1022
        %v2941 = vmul.f32 %v2883, %v1022
        %v2942 = vmul.f32 %v2884, %v1022
        %v2943 = vmul.f32 %v2885, %v1022
        %v2944 = vmul.f32 %v2886, %v1022
        %v2945 = vmul.f32 %v2887, %v1022
        %v2946 = vmul.f32 %v2888, %v1022
        %v2947 = vmul.f32 %v2889, %v1022
        %v2948 = vmul.f32 %v2890, %v1022
        %v2949 = vmul.f32 %v2891, %v1022
        %v2950 = vmul.f32 %v2892, %v1022
        %v2951 = vmul.f32 %v2893, %v1022
        %v2952 = vmul.f32 %v2894, %v1022
        %v2953 = vadd.f32 %v2921, %v2937
        %v2954 = vadd.f32 %v2922, %v2938
        %v2955 = vadd.f32 %v2923, %v2939
        %v2956 = vadd.f32 %v2924, %v2940
        %v2957 = vadd.f32 %v2925, %v2941
        %v2958 = vadd.f32 %v2926, %v2942
        %v2959 = vadd.f32 %v2927, %v2943
        %v2960 = vadd.f32 %v2928, %v2944
        %v2961 = vadd.f32 %v2929, %v2945
        %v2962 = vadd.f32 %v2930, %v2946
        %v2963 = vadd.f32 %v2931, %v2947
        %v2964 = vadd.f32 %v2932, %v2948
        %v2965 = vadd.f32 %v2933, %v2949
        %v2966 = vadd.f32 %v2934, %v2950
        %v2967 = vadd.f32 %v2935, %v2951
        %v2968 = vadd.f32 %v2936, %v2952
        %v2969 = vmul.f32 %v2881, %v1058
        %v2970 = vmul.f32 %v2882, %v1058
        %v2971 = vmul.f32 %v2883, %v1058
        %v2972 = vmul.f32 %v2884, %v1058
        %v2973 = vmul.f32 %v2885, %v1058
        %v2974 = vmul.f32 %v2886, %v1058
        %v2975 = vmul.f32 %v2887, %v1058
        %v2976 = vmul.f32 %v2888, %v1058
        %v2977 = vmul.f32 %v2889, %v1058
        %v2978 = vmul.f32 %v2890, %v1058
        %v2979 = vmul.f32 %v2891, %v1058
        %v2980 = vmul.f32 %v2892, %v1058
        %v2981 = vmul.f32 %v2893, %v1058
        %v2982 = vmul.f32 %v2894, %v1058
        %v2983 = vmul.f32 %v2895, %v1058
        %v2984 = vmul.f32 %v2896, %v1058
        %v2985 = vadd.f32 %v2953, %v2969
        %v2986 = vadd.f32 %v2954, %v2970
        %v2987 = vadd.f32 %v2955, %v2971
        %v2988 = vadd.f32 %v2956, %v2972
        %v2989 = vadd.f32 %v2957, %v2973
        %v2990 = vadd.f32 %v2958, %v2974
        %v2991 = vadd.f32 %v2959, %v2975
        %v2992 = vadd.f32 %v2960, %v2976
        %v2993 = vadd.f32 %v2961, %v2977
        %v2994 = vadd.f32 %v2962, %v2978
        %v2995 = vadd.f32 %v2963, %v2979
        %v2996 = vadd.f32 %v2964, %v2980
        %v2997 = vadd.f32 %v2965, %v2981
        %v2998 = vadd.f32 %v2966, %v2982
        %v2999 = vadd.f32 %v2967, %v2983
        %v3000 = vadd.f32 %v2968, %v2984
        %v3001 = vmul.f32 %v2883, %v1094
        %v3002 = vmul.f32 %v2884, %v1094
        %v3003 = vmul.f32 %v2885, %v1094
        %v3004 = vmul.f32 %v2886, %v1094
        %v3005 = vmul.f32 %v2887, %v1094
        %v3006 = vmul.f32 %v2888, %v1094
        %v3007 = vmul.f32 %v2889, %v1094
        %v3008 = vmul.f32 %v2890, %v1094
        %v3009 = vmul.f32 %v2891, %v1094
        %v3010 = vmul.f32 %v2892, %v1094
        %v3011 = vmul.f32 %v2893, %v1094
        %v3012 = vmul.f32 %v2894, %v1094
        %v3013 = vmul.f32 %v2895, %v1094
        %v3014 = vmul.f32 %v2896, %v1094
        %v3015 = vmul.f32 %v2897, %v1094
        %v3016 = vmul.f32 %v2898, %v1094
        %v3017 = vadd.f32 %v2985, %v3001
        %v3018 = vadd.f32 %v2986, %v3002
        %v3019 = vadd.f32 %v2987, %v3003
        %v3020 = vadd.f32 %v2988, %v3004
        %v3021 = vadd.f32 %v2989, %v3005
        %v3022 = vadd.f32 %v2990, %v3006
        %v3023 = vadd.f32 %v2991, %v3007
        %v3024 = vadd.f32 %v2992, %v3008
        %v3025 = vadd.f32 %v2993, %v3009
        %v3026 = vadd.f32 %v2994, %v3010
        %v3027 = vadd.f32 %v2995, %v3011
        %v3028 = vadd.f32 %v2996, %v3012
        %v3029 = vadd.f32 %v2997, %v3013
        %v3030 = vadd.f32 %v2998, %v3014
        %v3031 = vadd.f32 %v2999, %v3015
        %v3032 = vadd.f32 %v3000, %v3016
        %v3033 = vmul.f32 %v2885, %v1130
        %v3034 = vmul.f32 %v2886, %v1130
        %v3035 = vmul.f32 %v2887, %v1130
        %v3036 = vmul.f32 %v2888, %v1130
        %v3037 = vmul.f32 %v2889, %v1130
        %v3038 = vmul.f32 %v2890, %v1130
        %v3039 = vmul.f32 %v2891, %v1130
        %v3040 = vmul.f32 %v2892, %v1130
        %v3041 = vmul.f32 %v2893, %v1130
        %v3042 = vmul.f32 %v2894, %v1130
        %v3043 = vmul.f32 %v2895, %v1130
        %v3044 = vmul.f32 %v2896, %v1130
        %v3045 = vmul.f32 %v2897, %v1130
        %v3046 = vmul.f32 %v2898, %v1130
        %v3047 = vmul.f32 %v2899, %v1130
        %v3048 = vmul.f32 %v2900, %v1130
        %v3049 = vadd.f32 %v3017, %v3033
        %v3050 = vadd.f32 %v3018, %v3034
        %v3051 = vadd.f32 %v3019, %v3035
        %v3052 = vadd.f32 %v3020, %v3036
        %v3053 = vadd.f32 %v3021, %v3037
        %v3054 = vadd.f32 %v3022, %v3038
        %v3055 = vadd.f32 %v3023, %v3039
        %v3056 = vadd.f32 %v3024, %v3040
        %v3057 = vadd.f32 %v3025, %v3041
        %v3058 = vadd.f32 %v3026, %v3042
        %v3059 = vadd.f32 %v3027, %v3043
        %v3060 = vadd.f32 %v3028, %v3044
        %v3061 = vadd.f32 %v3029, %v3045
        %v3062 = vadd.f32 %v3030, %v3046
        %v3063 = vadd.f32 %v3031, %v3047
        %v3064 = vadd.f32 %v3032, %v3048
        %v3065 = vmul.f32 %v2887, %v1166
        %v3066 = vmul.f32 %v2888, %v1166
        %v3067 = vmul.f32 %v2889, %v1166
        %v3068 = vmul.f32 %v2890, %v1166
        %v3069 = vmul.f32 %v2891, %v1166
        %v3070 = vmul.f32 %v2892, %v1166
        %v3071 = vmul.f32 %v2893, %v1166
        %v3072 = vmul.f32 %v2894, %v1166
        %v3073 = vmul.f32 %v2895, %v1166
        %v3074 = vmul.f32 %v2896, %v1166
        %v3075 = vmul.f32 %v2897, %v1166
        %v3076 = vmul.f32 %v2898, %v1166
        %v3077 = vmul.f32 %v2899, %v1166
        %v3078 = vmul.f32 %v2900, %v1166
        %v3079 = vmul.f32 %v2901, %v1166
        %v3080 = vmul.f32 %v2902, %v1166
        %v3081 = vadd.f32 %v3049, %v3065
        %v3082 = vadd.f32 %v3050, %v3066
        %v3083 = vadd.f32 %v3051, %v3067
        %v3084 = vadd.f32 %v3052, %v3068
        %v3085 = vadd.f32 %v3053, %v3069
        %v3086 = vadd.f32 %v3054, %v3070
        %v3087 = vadd.f32 %v3055, %v3071
        %v3088 = vadd.f32 %v3056, %v3072
        %v3089 = vadd.f32 %v3057, %v3073
        %v3090 = vadd.f32 %v3058, %v3074
        %v3091 = vadd.f32 %v3059, %v3075
        %v3092 = vadd.f32 %v3060, %v3076
        %v3093 = vadd.f32 %v3061, %v3077
        %v3094 = vadd.f32 %v3062, %v3078
        %v3095 = vadd.f32 %v3063, %v3079
        %v3096 = vadd.f32 %v3064, %v3080
        %v3097 = vmul.f32 %v2889, %v1202
        %v3098 = vmul.f32 %v2890, %v1202
        %v3099 = vmul.f32 %v2891, %v1202
        %v3100 = vmul.f32 %v2892, %v1202
        %v3101 = vmul.f32 %v2893, %v1202
        %v3102 = vmul.f32 %v2894, %v1202
        %v3103 = vmul.f32 %v2895, %v1202
        %v3104 = vmul.f32 %v2896, %v1202
        %v3105 = vmul.f32 %v2897, %v1202
        %v3106 = vmul.f32 %v2898, %v1202
        %v3107 = vmul.f32 %v2899, %v1202
        %v3108 = vmul.f32 %v2900, %v1202
        %v3109 = vmul.f32 %v2901, %v1202
        %v3110 = vmul.f32 %v2902, %v1202
        %v3111 = vmul.f32 %v2903, %v1202
        %v3112 = vmul.f32 %v2904, %v1202
        %v3113 = vadd.f32 %v3081, %v3097
        %v3114 = vadd.f32 %v3082, %v3098
        %v3115 = vadd.f32 %v3083, %v3099
        %v3116 = vadd.f32 %v3084, %v3100
        %v3117 = vadd.f32 %v3085, %v3101
        %v3118 = vadd.f32 %v3086, %v3102
        %v3119 = vadd.f32 %v3087, %v3103
        %v3120 = vadd.f32 %v3088, %v3104
        %v3121 = vadd.f32 %v3089, %v3105
        %v3122 = vadd.f32 %v3090, %v3106
        %v3123 = vadd.f32 %v3091, %v3107
        %v3124 = vadd.f32 %v3092, %v3108
        %v3125 = vadd.f32 %v3093, %v3109
        %v3126 = vadd.f32 %v3094, %v3110
        %v3127 = vadd.f32 %v3095, %v3111
        %v3128 = vadd.f32 %v3096, %v3112
        %v3129 = vld [vmem:[%s2372 + $0x8] sm:$0xff]
        %v3130 = vld [vmem:[%s2372 + $0x10] sm:$0xff]
        %v3131 = vld [vmem:[%s2372 + $0x28] sm:$0xff]
        %v3132 = vld [vmem:[%s2372 + $0x30] sm:$0xff]
        %v3133 = vld [vmem:[%s2372 + $0x48] sm:$0xff]
        %v3134 = vld [vmem:[%s2372 + $0x50] sm:$0xff]
        %v3135 = vld [vmem:[%s2372 + $0x68] sm:$0xff]
        %v3136 = vld [vmem:[%s2372 + $0x70] sm:$0xff]
        %v3137 = vld [vmem:[%s2372 + $0x88] sm:$0xff]
        %v3138 = vld [vmem:[%s2372 + $0x90] sm:$0xff]
        %v3139 = vld [vmem:[%s2372 + $0xa8] sm:$0xff]
        %v3140 = vld [vmem:[%s2372 + $0xb0] sm:$0xff]
        %v3141 = vld [vmem:[%s2372 + $0xc8] sm:$0xff]
        %v3142 = vld [vmem:[%s2372 + $0xd0] sm:$0xff]
        %v3143 = vld [vmem:[%s2372 + $0xe8] sm:$0xff]
        %v3144 = vld [vmem:[%s2372 + $0xf0] sm:$0xff]
        %v3145 = vld [vmem:[%s2372 + $0x108] sm:$0xff]
        %v3146 = vld [vmem:[%s2372 + $0x110] sm:$0xff]
        %v3147 = vld [vmem:[%s2372 + $0x128] sm:$0xff]
        %v3148 = vld [vmem:[%s2372 + $0x130] sm:$0xff]
        %v3149 = vld [vmem:[%s2372 + $0x148] sm:$0xff]
        %v3150 = vld [vmem:[%s2372 + $0x150] sm:$0xff]
        %v3151 = vld [vmem:[%s2372 + $0x168] sm:$0xff]
        %v3152 = vld [vmem:[%s2372 + $0x170] sm:$0xff]
        %v3153 = vld [vmem:[%s2372 + $0x188] sm:$0xff]
        %v3154 = vld [vmem:[%s2372 + $0x190] sm:$0xff]
        %v3155 = vld [vmem:[%s2372 + $0x1a8] sm:$0xff]
        %v3156 = vld [vmem:[%s2372 + $0x1b0] sm:$0xff]
        %v3157 = vmul.f32 %v3129, %v1266
        %v3158 = vmul.f32 %v3130, %v1266
        %v3159 = vmul.f32 %v3131, %v1266
        %v3160 = vmul.f32 %v3132, %v1266
        %v3161 = vmul.f32 %v3133, %v1266
        %v3162 = vmul.f32 %v3134, %v1266
        %v3163 = vmul.f32 %v3135, %v1266
        %v3164 = vmul.f32 %v3136, %v1266
        %v3165 = vmul.f32 %v3137, %v1266
        %v3166 = vmul.f32 %v3138, %v1266
        %v3167 = vmul.f32 %v3139, %v1266
        %v3168 = vmul.f32 %v3140, %v1266
        %v3169 = vmul.f32 %v3141, %v1266
        %v3170 = vmul.f32 %v3142, %v1266
        %v3171 = vmul.f32 %v3143, %v1266
        %v3172 = vmul.f32 %v3144, %v1266
        %v3173 = vadd.f32 %v3113, %v3157
        %v3174 = vadd.f32 %v3114, %v3158
        %v3175 = vadd.f32 %v3115, %v3159
        %v3176 = vadd.f32 %v3116, %v3160
        %v3177 = vadd.f32 %v3117, %v3161
        %v3178 = vadd.f32 %v3118, %v3162
        %v3179 = vadd.f32 %v3119, %v3163
        %v3180 = vadd.f32 %v3120, %v3164
        %v3181 = vadd.f32 %v3121, %v3165
        %v3182 = vadd.f32 %v3122, %v3166
        %v3183 = vadd.f32 %v3123, %v3167
        %v3184 = vadd.f32 %v3124, %v3168
        %v3185 = vadd.f32 %v3125, %v3169
        %v3186 = vadd.f32 %v3126, %v3170
        %v3187 = vadd.f32 %v3127, %v3171
        %v3188 = vadd.f32 %v3128, %v3172
        %v3189 = vmul.f32 %v3131, %v1302
        %v3190 = vmul.f32 %v3132, %v1302
        %v3191 = vmul.f32 %v3133, %v1302
        %v3192 = vmul.f32 %v3134, %v1302
        %v3193 = vmul.f32 %v3135, %v1302
        %v3194 = vmul.f32 %v3136, %v1302
        %v3195 = vmul.f32 %v3137, %v1302
        %v3196 = vmul.f32 %v3138, %v1302
        %v3197 = vmul.f32 %v3139, %v1302
        %v3198 = vmul.f32 %v3140, %v1302
        %v3199 = vmul.f32 %v3141, %v1302
        %v3200 = vmul.f32 %v3142, %v1302
        %v3201 = vmul.f32 %v3143, %v1302
        %v3202 = vmul.f32 %v3144, %v1302
        %v3203 = vmul.f32 %v3145, %v1302
        %v3204 = vmul.f32 %v3146, %v1302
        %v3205 = vadd.f32 %v3173, %v3189
        %v3206 = vadd.f32 %v3174, %v3190
        %v3207 = vadd.f32 %v3175, %v3191
        %v3208 = vadd.f32 %v3176, %v3192
        %v3209 = vadd.f32 %v3177, %v3193
        %v3210 = vadd.f32 %v3178, %v3194
        %v3211 = vadd.f32 %v3179, %v3195
        %v3212 = vadd.f32 %v3180, %v3196
        %v3213 = vadd.f32 %v3181, %v3197
        %v3214 = vadd.f32 %v3182, %v3198
        %v3215 = vadd.f32 %v3183, %v3199
        %v3216 = vadd.f32 %v3184, %v3200
        %v3217 = vadd.f32 %v3185, %v3201
        %v3218 = vadd.f32 %v3186, %v3202
        %v3219 = vadd.f32 %v3187, %v3203
        %v3220 = vadd.f32 %v3188, %v3204
        %v3221 = vmul.f32 %v3133, %v1338
        %v3222 = vmul.f32 %v3134, %v1338
        %v3223 = vmul.f32 %v3135, %v1338
        %v3224 = vmul.f32 %v3136, %v1338
        %v3225 = vmul.f32 %v3137, %v1338
        %v3226 = vmul.f32 %v3138, %v1338
        %v3227 = vmul.f32 %v3139, %v1338
        %v3228 = vmul.f32 %v3140, %v1338
        %v3229 = vmul.f32 %v3141, %v1338
        %v3230 = vmul.f32 %v3142, %v1338
        %v3231 = vmul.f32 %v3143, %v1338
        %v3232 = vmul.f32 %v3144, %v1338
        %v3233 = vmul.f32 %v3145, %v1338
        %v3234 = vmul.f32 %v3146, %v1338
        %v3235 = vmul.f32 %v3147, %v1338
        %v3236 = vmul.f32 %v3148, %v1338
        %v3237 = vadd.f32 %v3205, %v3221
        %v3238 = vadd.f32 %v3206, %v3222
        %v3239 = vadd.f32 %v3207, %v3223
        %v3240 = vadd.f32 %v3208, %v3224
        %v3241 = vadd.f32 %v3209, %v3225
        %v3242 = vadd.f32 %v3210, %v3226
        %v3243 = vadd.f32 %v3211, %v3227
        %v3244 = vadd.f32 %v3212, %v3228
        %v3245 = vadd.f32 %v3213, %v3229
        %v3246 = vadd.f32 %v3214, %v3230
        %v3247 = vadd.f32 %v3215, %v3231
        %v3248 = vadd.f32 %v3216, %v3232
        %v3249 = vadd.f32 %v3217, %v3233
        %v3250 = vadd.f32 %v3218, %v3234
        %v3251 = vadd.f32 %v3219, %v3235
        %v3252 = vadd.f32 %v3220, %v3236
        %v3253 = vmul.f32 %v3135, %v1374
        %v3254 = vmul.f32 %v3136, %v1374
        %v3255 = vmul.f32 %v3137, %v1374
        %v3256 = vmul.f32 %v3138, %v1374
        %v3257 = vmul.f32 %v3139, %v1374
        %v3258 = vmul.f32 %v3140, %v1374
        %v3259 = vmul.f32 %v3141, %v1374
        %v3260 = vmul.f32 %v3142, %v1374
        %v3261 = vmul.f32 %v3143, %v1374
        %v3262 = vmul.f32 %v3144, %v1374
        %v3263 = vmul.f32 %v3145, %v1374
        %v3264 = vmul.f32 %v3146, %v1374
        %v3265 = vmul.f32 %v3147, %v1374
        %v3266 = vmul.f32 %v3148, %v1374
        %v3267 = vmul.f32 %v3149, %v1374
        %v3268 = vmul.f32 %v3150, %v1374
        %v3269 = vadd.f32 %v3237, %v3253
        %v3270 = vadd.f32 %v3238, %v3254
        %v3271 = vadd.f32 %v3239, %v3255
        %v3272 = vadd.f32 %v3240, %v3256
        %v3273 = vadd.f32 %v3241, %v3257
        %v3274 = vadd.f32 %v3242, %v3258
        %v3275 = vadd.f32 %v3243, %v3259
        %v3276 = vadd.f32 %v3244, %v3260
        %v3277 = vadd.f32 %v3245, %v3261
        %v3278 = vadd.f32 %v3246, %v3262
        %v3279 = vadd.f32 %v3247, %v3263
        %v3280 = vadd.f32 %v3248, %v3264
        %v3281 = vadd.f32 %v3249, %v3265
        %v3282 = vadd.f32 %v3250, %v3266
        %v3283 = vadd.f32 %v3251, %v3267
        %v3284 = vadd.f32 %v3252, %v3268
        %v3285 = vmul.f32 %v3137, %v1410
        %v3286 = vmul.f32 %v3138, %v1410
        %v3287 = vmul.f32 %v3139, %v1410
        %v3288 = vmul.f32 %v3140, %v1410
        %v3289 = vmul.f32 %v3141, %v1410
        %v3290 = vmul.f32 %v3142, %v1410
        %v3291 = vmul.f32 %v3143, %v1410
        %v3292 = vmul.f32 %v3144, %v1410
        %v3293 = vmul.f32 %v3145, %v1410
        %v3294 = vmul.f32 %v3146, %v1410
        %v3295 = vmul.f32 %v3147, %v1410
        %v3296 = vmul.f32 %v3148, %v1410
        %v3297 = vmul.f32 %v3149, %v1410
        %v3298 = vmul.f32 %v3150, %v1410
        %v3299 = vmul.f32 %v3151, %v1410
        %v3300 = vmul.f32 %v3152, %v1410
        %v3301 = vadd.f32 %v3269, %v3285
        %v3302 = vadd.f32 %v3270, %v3286
        %v3303 = vadd.f32 %v3271, %v3287
        %v3304 = vadd.f32 %v3272, %v3288
        %v3305 = vadd.f32 %v3273, %v3289
        %v3306 = vadd.f32 %v3274, %v3290
        %v3307 = vadd.f32 %v3275, %v3291
        %v3308 = vadd.f32 %v3276, %v3292
        %v3309 = vadd.f32 %v3277, %v3293
        %v3310 = vadd.f32 %v3278, %v3294
        %v3311 = vadd.f32 %v3279, %v3295
        %v3312 = vadd.f32 %v3280, %v3296
        %v3313 = vadd.f32 %v3281, %v3297
        %v3314 = vadd.f32 %v3282, %v3298
        %v3315 = vadd.f32 %v3283, %v3299
        %v3316 = vadd.f32 %v3284, %v3300
        %v3317 = vmul.f32 %v3139, %v1446
        %v3318 = vmul.f32 %v3140, %v1446
        %v3319 = vmul.f32 %v3141, %v1446
        %v3320 = vmul.f32 %v3142, %v1446
        %v3321 = vmul.f32 %v3143, %v1446
        %v3322 = vmul.f32 %v3144, %v1446
        %v3323 = vmul.f32 %v3145, %v1446
        %v3324 = vmul.f32 %v3146, %v1446
        %v3325 = vmul.f32 %v3147, %v1446
        %v3326 = vmul.f32 %v3148, %v1446
        %v3327 = vmul.f32 %v3149, %v1446
        %v3328 = vmul.f32 %v3150, %v1446
        %v3329 = vmul.f32 %v3151, %v1446
        %v3330 = vmul.f32 %v3152, %v1446
        %v3331 = vmul.f32 %v3153, %v1446
        %v3332 = vmul.f32 %v3154, %v1446
        %v3333 = vadd.f32 %v3301, %v3317
        %v3334 = vadd.f32 %v3302, %v3318
        %v3335 = vadd.f32 %v3303, %v3319
        %v3336 = vadd.f32 %v3304, %v3320
        %v3337 = vadd.f32 %v3305, %v3321
        %v3338 = vadd.f32 %v3306, %v3322
        %v3339 = vadd.f32 %v3307, %v3323
        %v3340 = vadd.f32 %v3308, %v3324
        %v3341 = vadd.f32 %v3309, %v3325
        %v3342 = vadd.f32 %v3310, %v3326
        %v3343 = vadd.f32 %v3311, %v3327
        %v3344 = vadd.f32 %v3312, %v3328
        %v3345 = vadd.f32 %v3313, %v3329
        %v3346 = vadd.f32 %v3314, %v3330
        %v3347 = vadd.f32 %v3315, %v3331
        %v3348 = vadd.f32 %v3316, %v3332
        %v3349 = vmul.f32 %v3141, %v1482
        %v3350 = vmul.f32 %v3142, %v1482
        %v3351 = vmul.f32 %v3143, %v1482
        %v3352 = vmul.f32 %v3144, %v1482
        %v3353 = vmul.f32 %v3145, %v1482
        %v3354 = vmul.f32 %v3146, %v1482
        %v3355 = vmul.f32 %v3147, %v1482
        %v3356 = vmul.f32 %v3148, %v1482
        %v3357 = vmul.f32 %v3149, %v1482
        %v3358 = vmul.f32 %v3150, %v1482
        %v3359 = vmul.f32 %v3151, %v1482
        %v3360 = vmul.f32 %v3152, %v1482
        %v3361 = vmul.f32 %v3153, %v1482
        %v3362 = vmul.f32 %v3154, %v1482
        %v3363 = vmul.f32 %v3155, %v1482
        %v3364 = vmul.f32 %v3156, %v1482
        %v3365 = vadd.f32 %v3333, %v3349
        %v3366 = vadd.f32 %v3334, %v3350
        %v3367 = vadd.f32 %v3335, %v3351
        %v3368 = vadd.f32 %v3336, %v3352
        %v3369 = vadd.f32 %v3337, %v3353
        %v3370 = vadd.f32 %v3338, %v3354
        %v3371 = vadd.f32 %v3339, %v3355
        %v3372 = vadd.f32 %v3340, %v3356
        %v3373 = vadd.f32 %v3341, %v3357
        %v3374 = vadd.f32 %v3342, %v3358
        %v3375 = vadd.f32 %v3343, %v3359
        %v3376 = vadd.f32 %v3344, %v3360
        %v3377 = vadd.f32 %v3345, %v3361
        %v3378 = vadd.f32 %v3346, %v3362
        %v3379 = vadd.f32 %v3347, %v3363
        %v3380 = vadd.f32 %v3348, %v3364
        %v3381 = vld [vmem:[%s2372 + $0x9] sm:$0xff]
        %v3382 = vld [vmem:[%s2372 + $0x11] sm:$0xff]
        %v3383 = vld [vmem:[%s2372 + $0x29] sm:$0xff]
        %v3384 = vld [vmem:[%s2372 + $0x31] sm:$0xff]
        %v3385 = vld [vmem:[%s2372 + $0x49] sm:$0xff]
        %v3386 = vld [vmem:[%s2372 + $0x51] sm:$0xff]
        %v3387 = vld [vmem:[%s2372 + $0x69] sm:$0xff]
        %v3388 = vld [vmem:[%s2372 + $0x71] sm:$0xff]
        %v3389 = vld [vmem:[%s2372 + $0x89] sm:$0xff]
        %v3390 = vld [vmem:[%s2372 + $0x91] sm:$0xff]
        %v3391 = vld [vmem:[%s2372 + $0xa9] sm:$0xff]
        %v3392 = vld [vmem:[%s2372 + $0xb1] sm:$0xff]
        %v3393 = vld [vmem:[%s2372 + $0xc9] sm:$0xff]
        %v3394 = vld [vmem:[%s2372 + $0xd1] sm:$0xff]
        %v3395 = vld [vmem:[%s2372 + $0xe9] sm:$0xff]
        %v3396 = vld [vmem:[%s2372 + $0xf1] sm:$0xff]
        %v3397 = vld [vmem:[%s2372 + $0x109] sm:$0xff]
        %v3398 = vld [vmem:[%s2372 + $0x111] sm:$0xff]
        %v3399 = vld [vmem:[%s2372 + $0x129] sm:$0xff]
        %v3400 = vld [vmem:[%s2372 + $0x131] sm:$0xff]
        %v3401 = vld [vmem:[%s2372 + $0x149] sm:$0xff]
        %v3402 = vld [vmem:[%s2372 + $0x151] sm:$0xff]
        %v3403 = vld [vmem:[%s2372 + $0x169] sm:$0xff]
        %v3404 = vld [vmem:[%s2372 + $0x171] sm:$0xff]
        %v3405 = vld [vmem:[%s2372 + $0x189] sm:$0xff]
        %v3406 = vld [vmem:[%s2372 + $0x191] sm:$0xff]
        %v3407 = vld [vmem:[%s2372 + $0x1a9] sm:$0xff]
        %v3408 = vld [vmem:[%s2372 + $0x1b1] sm:$0xff]
        %v3409 = vmul.f32 %v3381, %v1546
        %v3410 = vmul.f32 %v3382, %v1546
        %v3411 = vmul.f32 %v3383, %v1546
        %v3412 = vmul.f32 %v3384, %v1546
        %v3413 = vmul.f32 %v3385, %v1546
        %v3414 = vmul.f32 %v3386, %v1546
        %v3415 = vmul.f32 %v3387, %v1546
        %v3416 = vmul.f32 %v3388, %v1546
        %v3417 = vmul.f32 %v3389, %v1546
        %v3418 = vmul.f32 %v3390, %v1546
        %v3419 = vmul.f32 %v3391, %v1546
        %v3420 = vmul.f32 %v3392, %v1546
        %v3421 = vmul.f32 %v3393, %v1546
        %v3422 = vmul.f32 %v3394, %v1546
        %v3423 = vmul.f32 %v3395, %v1546
        %v3424 = vmul.f32 %v3396, %v1546
        %v3425 = vadd.f32 %v3365, %v3409
        %v3426 = vadd.f32 %v3366, %v3410
        %v3427 = vadd.f32 %v3367, %v3411
        %v3428 = vadd.f32 %v3368, %v3412
        %v3429 = vadd.f32 %v3369, %v3413
        %v3430 = vadd.f32 %v3370, %v3414
        %v3431 = vadd.f32 %v3371, %v3415
        %v3432 = vadd.f32 %v3372, %v3416
        %v3433 = vadd.f32 %v3373, %v3417
        %v3434 = vadd.f32 %v3374, %v3418
        %v3435 = vadd.f32 %v3375, %v3419
        %v3436 = vadd.f32 %v3376, %v3420
        %v3437 = vadd.f32 %v3377, %v3421
        %v3438 = vadd.f32 %v3378, %v3422
        %v3439 = vadd.f32 %v3379, %v3423
        %v3440 = vadd.f32 %v3380, %v3424
        %v3441 = vmul.f32 %v3383, %v1582
        %v3442 = vmul.f32 %v3384, %v1582
        %v3443 = vmul.f32 %v3385, %v1582
        %v3444 = vmul.f32 %v3386, %v1582
        %v3445 = vmul.f32 %v3387, %v1582
        %v3446 = vmul.f32 %v3388, %v1582
        %v3447 = vmul.f32 %v3389, %v1582
        %v3448 = vmul.f32 %v3390, %v1582
        %v3449 = vmul.f32 %v3391, %v1582
        %v3450 = vmul.f32 %v3392, %v1582
        %v3451 = vmul.f32 %v3393, %v1582
        %v3452 = vmul.f32 %v3394, %v1582
        %v3453 = vmul.f32 %v3395, %v1582
        %v3454 = vmul.f32 %v3396, %v1582
        %v3455 = vmul.f32 %v3397, %v1582
        %v3456 = vmul.f32 %v3398, %v1582
        %v3457 = vadd.f32 %v3425, %v3441
        %v3458 = vadd.f32 %v3426, %v3442
        %v3459 = vadd.f32 %v3427, %v3443
        %v3460 = vadd.f32 %v3428, %v3444
        %v3461 = vadd.f32 %v3429, %v3445
        %v3462 = vadd.f32 %v3430, %v3446
        %v3463 = vadd.f32 %v3431, %v3447
        %v3464 = vadd.f32 %v3432, %v3448
        %v3465 = vadd.f32 %v3433, %v3449
        %v3466 = vadd.f32 %v3434, %v3450
        %v3467 = vadd.f32 %v3435, %v3451
        %v3468 = vadd.f32 %v3436, %v3452
        %v3469 = vadd.f32 %v3437, %v3453
        %v3470 = vadd.f32 %v3438, %v3454
        %v3471 = vadd.f32 %v3439, %v3455
        %v3472 = vadd.f32 %v3440, %v3456
        %v3473 = vmul.f32 %v3385, %v1618
        %v3474 = vmul.f32 %v3386, %v1618
        %v3475 = vmul.f32 %v3387, %v1618
        %v3476 = vmul.f32 %v3388, %v1618
        %v3477 = vmul.f32 %v3389, %v1618
        %v3478 = vmul.f32 %v3390, %v1618
        %v3479 = vmul.f32 %v3391, %v1618
        %v3480 = vmul.f32 %v3392, %v1618
        %v3481 = vmul.f32 %v3393, %v1618
        %v3482 = vmul.f32 %v3394, %v1618
        %v3483 = vmul.f32 %v3395, %v1618
        %v3484 = vmul.f32 %v3396, %v1618
        %v3485 = vmul.f32 %v3397, %v1618
        %v3486 = vmul.f32 %v3398, %v1618
        %v3487 = vmul.f32 %v3399, %v1618
        %v3488 = vmul.f32 %v3400, %v1618
        %v3489 = vadd.f32 %v3457, %v3473
        %v3490 = vadd.f32 %v3458, %v3474
        %v3491 = vadd.f32 %v3459, %v3475
        %v3492 = vadd.f32 %v3460, %v3476
        %v3493 = vadd.f32 %v3461, %v3477
        %v3494 = vadd.f32 %v3462, %v3478
        %v3495 = vadd.f32 %v3463, %v3479
        %v3496 = vadd.f32 %v3464, %v3480
        %v3497 = vadd.f32 %v3465, %v3481
        %v3498 = vadd.f32 %v3466, %v3482
        %v3499 = vadd.f32 %v3467, %v3483
        %v3500 = vadd.f32 %v3468, %v3484
        %v3501 = vadd.f32 %v3469, %v3485
        %v3502 = vadd.f32 %v3470, %v3486
        %v3503 = vadd.f32 %v3471, %v3487
        %v3504 = vadd.f32 %v3472, %v3488
        %v3505 = vmul.f32 %v3387, %v1654
        %v3506 = vmul.f32 %v3388, %v1654
        %v3507 = vmul.f32 %v3389, %v1654
        %v3508 = vmul.f32 %v3390, %v1654
        %v3509 = vmul.f32 %v3391, %v1654
        %v3510 = vmul.f32 %v3392, %v1654
        %v3511 = vmul.f32 %v3393, %v1654
        %v3512 = vmul.f32 %v3394, %v1654
        %v3513 = vmul.f32 %v3395, %v1654
        %v3514 = vmul.f32 %v3396, %v1654
        %v3515 = vmul.f32 %v3397, %v1654
        %v3516 = vmul.f32 %v3398, %v1654
        %v3517 = vmul.f32 %v3399, %v1654
        %v3518 = vmul.f32 %v3400, %v1654
        %v3519 = vmul.f32 %v3401, %v1654
        %v3520 = vmul.f32 %v3402, %v1654
        %v3521 = vadd.f32 %v3489, %v3505
        %v3522 = vadd.f32 %v3490, %v3506
        %v3523 = vadd.f32 %v3491, %v3507
        %v3524 = vadd.f32 %v3492, %v3508
        %v3525 = vadd.f32 %v3493, %v3509
        %v3526 = vadd.f32 %v3494, %v3510
        %v3527 = vadd.f32 %v3495, %v3511
        %v3528 = vadd.f32 %v3496, %v3512
        %v3529 = vadd.f32 %v3497, %v3513
        %v3530 = vadd.f32 %v3498, %v3514
        %v3531 = vadd.f32 %v3499, %v3515
        %v3532 = vadd.f32 %v3500, %v3516
        %v3533 = vadd.f32 %v3501, %v3517
        %v3534 = vadd.f32 %v3502, %v3518
        %v3535 = vadd.f32 %v3503, %v3519
        %v3536 = vadd.f32 %v3504, %v3520
        %v3537 = vmul.f32 %v3389, %v1690
        %v3538 = vmul.f32 %v3390, %v1690
        %v3539 = vmul.f32 %v3391, %v1690
        %v3540 = vmul.f32 %v3392, %v1690
        %v3541 = vmul.f32 %v3393, %v1690
        %v3542 = vmul.f32 %v3394, %v1690
        %v3543 = vmul.f32 %v3395, %v1690
        %v3544 = vmul.f32 %v3396, %v1690
        %v3545 = vmul.f32 %v3397, %v1690
        %v3546 = vmul.f32 %v3398, %v1690
        %v3547 = vmul.f32 %v3399, %v1690
        %v3548 = vmul.f32 %v3400, %v1690
        %v3549 = vmul.f32 %v3401, %v1690
        %v3550 = vmul.f32 %v3402, %v1690
        %v3551 = vmul.f32 %v3403, %v1690
        %v3552 = vmul.f32 %v3404, %v1690
        %v3553 = vadd.f32 %v3521, %v3537
        %v3554 = vadd.f32 %v3522, %v3538
        %v3555 = vadd.f32 %v3523, %v3539
        %v3556 = vadd.f32 %v3524, %v3540
        %v3557 = vadd.f32 %v3525, %v3541
        %v3558 = vadd.f32 %v3526, %v3542
        %v3559 = vadd.f32 %v3527, %v3543
        %v3560 = vadd.f32 %v3528, %v3544
        %v3561 = vadd.f32 %v3529, %v3545
        %v3562 = vadd.f32 %v3530, %v3546
        %v3563 = vadd.f32 %v3531, %v3547
        %v3564 = vadd.f32 %v3532, %v3548
        %v3565 = vadd.f32 %v3533, %v3549
        %v3566 = vadd.f32 %v3534, %v3550
        %v3567 = vadd.f32 %v3535, %v3551
        %v3568 = vadd.f32 %v3536, %v3552
        %v3569 = vmul.f32 %v3391, %v1726
        %v3570 = vmul.f32 %v3392, %v1726
        %v3571 = vmul.f32 %v3393, %v1726
        %v3572 = vmul.f32 %v3394, %v1726
        %v3573 = vmul.f32 %v3395, %v1726
        %v3574 = vmul.f32 %v3396, %v1726
        %v3575 = vmul.f32 %v3397, %v1726
        %v3576 = vmul.f32 %v3398, %v1726
        %v3577 = vmul.f32 %v3399, %v1726
        %v3578 = vmul.f32 %v3400, %v1726
        %v3579 = vmul.f32 %v3401, %v1726
        %v3580 = vmul.f32 %v3402, %v1726
        %v3581 = vmul.f32 %v3403, %v1726
        %v3582 = vmul.f32 %v3404, %v1726
        %v3583 = vmul.f32 %v3405, %v1726
        %v3584 = vmul.f32 %v3406, %v1726
        %v3585 = vadd.f32 %v3553, %v3569
        %v3586 = vadd.f32 %v3554, %v3570
        %v3587 = vadd.f32 %v3555, %v3571
        %v3588 = vadd.f32 %v3556, %v3572
        %v3589 = vadd.f32 %v3557, %v3573
        %v3590 = vadd.f32 %v3558, %v3574
        %v3591 = vadd.f32 %v3559, %v3575
        %v3592 = vadd.f32 %v3560, %v3576
        %v3593 = vadd.f32 %v3561, %v3577
        %v3594 = vadd.f32 %v3562, %v3578
        %v3595 = vadd.f32 %v3563, %v3579
        %v3596 = vadd.f32 %v3564, %v3580
        %v3597 = vadd.f32 %v3565, %v3581
        %v3598 = vadd.f32 %v3566, %v3582
        %v3599 = vadd.f32 %v3567, %v3583
        %v3600 = vadd.f32 %v3568, %v3584
        %v3601 = vmul.f32 %v3393, %v1762
        %v3602 = vmul.f32 %v3394, %v1762
        %v3603 = vmul.f32 %v3395, %v1762
        %v3604 = vmul.f32 %v3396, %v1762
        %v3605 = vmul.f32 %v3397, %v1762
        %v3606 = vmul.f32 %v3398, %v1762
        %v3607 = vmul.f32 %v3399, %v1762
        %v3608 = vmul.f32 %v3400, %v1762
        %v3609 = vmul.f32 %v3401, %v1762
        %v3610 = vmul.f32 %v3402, %v1762
        %v3611 = vmul.f32 %v3403, %v1762
        %v3612 = vmul.f32 %v3404, %v1762
        %v3613 = vmul.f32 %v3405, %v1762
        %v3614 = vmul.f32 %v3406, %v1762
        %v3615 = vmul.f32 %v3407, %v1762
        %v3616 = vmul.f32 %v3408, %v1762
        %v3617 = vadd.f32 %v3585, %v3601
        %v3618 = vadd.f32 %v3586, %v3602
        %v3619 = vadd.f32 %v3587, %v3603
        %v3620 = vadd.f32 %v3588, %v3604
        %v3621 = vadd.f32 %v3589, %v3605
        %v3622 = vadd.f32 %v3590, %v3606
        %v3623 = vadd.f32 %v3591, %v3607
        %v3624 = vadd.f32 %v3592, %v3608
        %v3625 = vadd.f32 %v3593, %v3609
        %v3626 = vadd.f32 %v3594, %v3610
        %v3627 = vadd.f32 %v3595, %v3611
        %v3628 = vadd.f32 %v3596, %v3612
        %v3629 = vadd.f32 %v3597, %v3613
        %v3630 = vadd.f32 %v3598, %v3614
        %v3631 = vadd.f32 %v3599, %v3615
        %v3632 = vadd.f32 %v3600, %v3616
        %v3633 = vld [vmem:[%s2372 + $0xa] sm:$0xff]
        %v3634 = vld [vmem:[%s2372 + $0x12] sm:$0xff]
        %v3635 = vld [vmem:[%s2372 + $0x2a] sm:$0xff]
        %v3636 = vld [vmem:[%s2372 + $0x32] sm:$0xff]
        %v3637 = vld [vmem:[%s2372 + $0x4a] sm:$0xff]
        %v3638 = vld [vmem:[%s2372 + $0x52] sm:$0xff]
        %v3639 = vld [vmem:[%s2372 + $0x6a] sm:$0xff]
        %v3640 = vld [vmem:[%s2372 + $0x72] sm:$0xff]
        %v3641 = vld [vmem:[%s2372 + $0x8a] sm:$0xff]
        %v3642 = vld [vmem:[%s2372 + $0x92] sm:$0xff]
        %v3643 = vld [vmem:[%s2372 + $0xaa] sm:$0xff]
        %v3644 = vld [vmem:[%s2372 + $0xb2] sm:$0xff]
        %v3645 = vld [vmem:[%s2372 + $0xca] sm:$0xff]
        %v3646 = vld [vmem:[%s2372 + $0xd2] sm:$0xff]
        %v3647 = vld [vmem:[%s2372 + $0xea] sm:$0xff]
        %v3648 = vld [vmem:[%s2372 + $0xf2] sm:$0xff]
        %v3649 = vld [vmem:[%s2372 + $0x10a] sm:$0xff]
        %v3650 = vld [vmem:[%s2372 + $0x112] sm:$0xff]
        %v3651 = vld [vmem:[%s2372 + $0x12a] sm:$0xff]
        %v3652 = vld [vmem:[%s2372 + $0x132] sm:$0xff]
        %v3653 = vld [vmem:[%s2372 + $0x14a] sm:$0xff]
        %v3654 = vld [vmem:[%s2372 + $0x152] sm:$0xff]
        %v3655 = vld [vmem:[%s2372 + $0x16a] sm:$0xff]
        %v3656 = vld [vmem:[%s2372 + $0x172] sm:$0xff]
        %v3657 = vld [vmem:[%s2372 + $0x18a] sm:$0xff]
        %v3658 = vld [vmem:[%s2372 + $0x192] sm:$0xff]
        %v3659 = vld [vmem:[%s2372 + $0x1aa] sm:$0xff]
        %v3660 = vld [vmem:[%s2372 + $0x1b2] sm:$0xff]
        %v3661 = vmul.f32 %v3633, %v1826
        %v3662 = vmul.f32 %v3634, %v1826
        %v3663 = vmul.f32 %v3635, %v1826
        %v3664 = vmul.f32 %v3636, %v1826
        %v3665 = vmul.f32 %v3637, %v1826
        %v3666 = vmul.f32 %v3638, %v1826
        %v3667 = vmul.f32 %v3639, %v1826
        %v3668 = vmul.f32 %v3640, %v1826
        %v3669 = vmul.f32 %v3641, %v1826
        %v3670 = vmul.f32 %v3642, %v1826
        %v3671 = vmul.f32 %v3643, %v1826
        %v3672 = vmul.f32 %v3644, %v1826
        %v3673 = vmul.f32 %v3645, %v1826
        %v3674 = vmul.f32 %v3646, %v1826
        %v3675 = vmul.f32 %v3647, %v1826
        %v3676 = vmul.f32 %v3648, %v1826
        %v3677 = vadd.f32 %v3617, %v3661
        %v3678 = vadd.f32 %v3618, %v3662
        %v3679 = vadd.f32 %v3619, %v3663
        %v3680 = vadd.f32 %v3620, %v3664
        %v3681 = vadd.f32 %v3621, %v3665
        %v3682 = vadd.f32 %v3622, %v3666
        %v3683 = vadd.f32 %v3623, %v3667
        %v3684 = vadd.f32 %v3624, %v3668
        %v3685 = vadd.f32 %v3625, %v3669
        %v3686 = vadd.f32 %v3626, %v3670
        %v3687 = vadd.f32 %v3627, %v3671
        %v3688 = vadd.f32 %v3628, %v3672
        %v3689 = vadd.f32 %v3629, %v3673
        %v3690 = vadd.f32 %v3630, %v3674
        %v3691 = vadd.f32 %v3631, %v3675
        %v3692 = vadd.f32 %v3632, %v3676
        %v3693 = vmul.f32 %v3635, %v1862
        %v3694 = vmul.f32 %v3636, %v1862
        %v3695 = vmul.f32 %v3637, %v1862
        %v3696 = vmul.f32 %v3638, %v1862
        %v3697 = vmul.f32 %v3639, %v1862
        %v3698 = vmul.f32 %v3640, %v1862
        %v3699 = vmul.f32 %v3641, %v1862
        %v3700 = vmul.f32 %v3642, %v1862
        %v3701 = vmul.f32 %v3643, %v1862
        %v3702 = vmul.f32 %v3644, %v1862
        %v3703 = vmul.f32 %v3645, %v1862
        %v3704 = vmul.f32 %v3646, %v1862
        %v3705 = vmul.f32 %v3647, %v1862
        %v3706 = vmul.f32 %v3648, %v1862
        %v3707 = vmul.f32 %v3649, %v1862
        %v3708 = vmul.f32 %v3650, %v1862
        %v3709 = vadd.f32 %v3677, %v3693
        %v3710 = vadd.f32 %v3678, %v3694
        %v3711 = vadd.f32 %v3679, %v3695
        %v3712 = vadd.f32 %v3680, %v3696
        %v3713 = vadd.f32 %v3681, %v3697
        %v3714 = vadd.f32 %v3682, %v3698
        %v3715 = vadd.f32 %v3683, %v3699
        %v3716 = vadd.f32 %v3684, %v3700
        %v3717 = vadd.f32 %v3685, %v3701
        %v3718 = vadd.f32 %v3686, %v3702
        %v3719 = vadd.f32 %v3687, %v3703
        %v3720 = vadd.f32 %v3688, %v3704
        %v3721 = vadd.f32 %v3689, %v3705
        %v3722 = vadd.f32 %v3690, %v3706
        %v3723 = vadd.f32 %v3691, %v3707
        %v3724 = vadd.f32 %v3692, %v3708
        %v3725 = vmul.f32 %v3637, %v1898
        %v3726 = vmul.f32 %v3638, %v1898
        %v3727 = vmul.f32 %v3639, %v1898
        %v3728 = vmul.f32 %v3640, %v1898
        %v3729 = vmul.f32 %v3641, %v1898
        %v3730 = vmul.f32 %v3642, %v1898
        %v3731 = vmul.f32 %v3643, %v1898
        %v3732 = vmul.f32 %v3644, %v1898
        %v3733 = vmul.f32 %v3645, %v1898
        %v3734 = vmul.f32 %v3646, %v1898
        %v3735 = vmul.f32 %v3647, %v1898
        %v3736 = vmul.f32 %v3648, %v1898
        %v3737 = vmul.f32 %v3649, %v1898
        %v3738 = vmul.f32 %v3650, %v1898
        %v3739 = vmul.f32 %v3651, %v1898
        %v3740 = vmul.f32 %v3652, %v1898
        %v3741 = vadd.f32 %v3709, %v3725
        %v3742 = vadd.f32 %v3710, %v3726
        %v3743 = vadd.f32 %v3711, %v3727
        %v3744 = vadd.f32 %v3712, %v3728
        %v3745 = vadd.f32 %v3713, %v3729
        %v3746 = vadd.f32 %v3714, %v3730
        %v3747 = vadd.f32 %v3715, %v3731
        %v3748 = vadd.f32 %v3716, %v3732
        %v3749 = vadd.f32 %v3717, %v3733
        %v3750 = vadd.f32 %v3718, %v3734
        %v3751 = vadd.f32 %v3719, %v3735
        %v3752 = vadd.f32 %v3720, %v3736
        %v3753 = vadd.f32 %v3721, %v3737
        %v3754 = vadd.f32 %v3722, %v3738
        %v3755 = vadd.f32 %v3723, %v3739
        %v3756 = vadd.f32 %v3724, %v3740
        %v3757 = vmul.f32 %v3639, %v1934
        %v3758 = vmul.f32 %v3640, %v1934
        %v3759 = vmul.f32 %v3641, %v1934
        %v3760 = vmul.f32 %v3642, %v1934
        %v3761 = vmul.f32 %v3643, %v1934
        %v3762 = vmul.f32 %v3644, %v1934
        %v3763 = vmul.f32 %v3645, %v1934
        %v3764 = vmul.f32 %v3646, %v1934
        %v3765 = vmul.f32 %v3647, %v1934
        %v3766 = vmul.f32 %v3648, %v1934
        %v3767 = vmul.f32 %v3649, %v1934
        %v3768 = vmul.f32 %v3650, %v1934
        %v3769 = vmul.f32 %v3651, %v1934
        %v3770 = vmul.f32 %v3652, %v1934
        %v3771 = vmul.f32 %v3653, %v1934
        %v3772 = vmul.f32 %v3654, %v1934
        %v3773 = vadd.f32 %v3741, %v3757
        %v3774 = vadd.f32 %v3742, %v3758
        %v3775 = vadd.f32 %v3743, %v3759
        %v3776 = vadd.f32 %v3744, %v3760
        %v3777 = vadd.f32 %v3745, %v3761
        %v3778 = vadd.f32 %v3746, %v3762
        %v3779 = vadd.f32 %v3747, %v3763
        %v3780 = vadd.f32 %v3748, %v3764
        %v3781 = vadd.f32 %v3749, %v3765
        %v3782 = vadd.f32 %v3750, %v3766
        %v3783 = vadd.f32 %v3751, %v3767
        %v3784 = vadd.f32 %v3752, %v3768
        %v3785 = vadd.f32 %v3753, %v3769
        %v3786 = vadd.f32 %v3754, %v3770
        %v3787 = vadd.f32 %v3755, %v3771
        %v3788 = vadd.f32 %v3756, %v3772
        %v3789 = vmul.f32 %v3641, %v1970
        %v3790 = vmul.f32 %v3642, %v1970
        %v3791 = vmul.f32 %v3643, %v1970
        %v3792 = vmul.f32 %v3644, %v1970
        %v3793 = vmul.f32 %v3645, %v1970
        %v3794 = vmul.f32 %v3646, %v1970
        %v3795 = vmul.f32 %v3647, %v1970
        %v3796 = vmul.f32 %v3648, %v1970
        %v3797 = vmul.f32 %v3649, %v1970
        %v3798 = vmul.f32 %v3650, %v1970
        %v3799 = vmul.f32 %v3651, %v1970
        %v3800 = vmul.f32 %v3652, %v1970
        %v3801 = vmul.f32 %v3653, %v1970
        %v3802 = vmul.f32 %v3654, %v1970
        %v3803 = vmul.f32 %v3655, %v1970
        %v3804 = vmul.f32 %v3656, %v1970
        %v3805 = vadd.f32 %v3773, %v3789
        %v3806 = vadd.f32 %v3774, %v3790
        %v3807 = vadd.f32 %v3775, %v3791
        %v3808 = vadd.f32 %v3776, %v3792
        %v3809 = vadd.f32 %v3777, %v3793
        %v3810 = vadd.f32 %v3778, %v3794
        %v3811 = vadd.f32 %v3779, %v3795
        %v3812 = vadd.f32 %v3780, %v3796
        %v3813 = vadd.f32 %v3781, %v3797
        %v3814 = vadd.f32 %v3782, %v3798
        %v3815 = vadd.f32 %v3783, %v3799
        %v3816 = vadd.f32 %v3784, %v3800
        %v3817 = vadd.f32 %v3785, %v3801
        %v3818 = vadd.f32 %v3786, %v3802
        %v3819 = vadd.f32 %v3787, %v3803
        %v3820 = vadd.f32 %v3788, %v3804
        %v3821 = vmul.f32 %v3643, %v2006
        %v3822 = vmul.f32 %v3644, %v2006
        %v3823 = vmul.f32 %v3645, %v2006
        %v3824 = vmul.f32 %v3646, %v2006
        %v3825 = vmul.f32 %v3647, %v2006
        %v3826 = vmul.f32 %v3648, %v2006
        %v3827 = vmul.f32 %v3649, %v2006
        %v3828 = vmul.f32 %v3650, %v2006
        %v3829 = vmul.f32 %v3651, %v2006
        %v3830 = vmul.f32 %v3652, %v2006
        %v3831 = vmul.f32 %v3653, %v2006
        %v3832 = vmul.f32 %v3654, %v2006
        %v3833 = vmul.f32 %v3655, %v2006
        %v3834 = vmul.f32 %v3656, %v2006
        %v3835 = vmul.f32 %v3657, %v2006
        %v3836 = vmul.f32 %v3658, %v2006
        %v3837 = vadd.f32 %v3805, %v3821
        %v3838 = vadd.f32 %v3806, %v3822
        %v3839 = vadd.f32 %v3807, %v3823
        %v3840 = vadd.f32 %v3808, %v3824
        %v3841 = vadd.f32 %v3809, %v3825
        %v3842 = vadd.f32 %v3810, %v3826
        %v3843 = vadd.f32 %v3811, %v3827
        %v3844 = vadd.f32 %v3812, %v3828
        %v3845 = vadd.f32 %v3813, %v3829
        %v3846 = vadd.f32 %v3814, %v3830
        %v3847 = vadd.f32 %v3815, %v3831
        %v3848 = vadd.f32 %v3816, %v3832
        %v3849 = vadd.f32 %v3817, %v3833
        %v3850 = vadd.f32 %v3818, %v3834
        %v3851 = vadd.f32 %v3819, %v3835
        %v3852 = vadd.f32 %v3820, %v3836
        %v3853 = vmul.f32 %v3645, %v2042
        %v3854 = vmul.f32 %v3646, %v2042
        %v3855 = vmul.f32 %v3647, %v2042
        %v3856 = vmul.f32 %v3648, %v2042
        %v3857 = vmul.f32 %v3649, %v2042
        %v3858 = vmul.f32 %v3650, %v2042
        %v3859 = vmul.f32 %v3651, %v2042
        %v3860 = vmul.f32 %v3652, %v2042
        %v3861 = vmul.f32 %v3653, %v2042
        %v3862 = vmul.f32 %v3654, %v2042
        %v3863 = vmul.f32 %v3655, %v2042
        %v3864 = vmul.f32 %v3656, %v2042
        %v3865 = vmul.f32 %v3657, %v2042
        %v3866 = vmul.f32 %v3658, %v2042
        %v3867 = vmul.f32 %v3659, %v2042
        %v3868 = vmul.f32 %v3660, %v2042
        %v3869 = vadd.f32 %v3837, %v3853
        %v3870 = vadd.f32 %v3838, %v3854
        %v3871 = vadd.f32 %v3839, %v3855
        %v3872 = vadd.f32 %v3840, %v3856
        %v3873 = vadd.f32 %v3841, %v3857
        %v3874 = vadd.f32 %v3842, %v3858
        %v3875 = vadd.f32 %v3843, %v3859
        %v3876 = vadd.f32 %v3844, %v3860
        %v3877 = vadd.f32 %v3845, %v3861
        %v3878 = vadd.f32 %v3846, %v3862
        %v3879 = vadd.f32 %v3847, %v3863
        %v3880 = vadd.f32 %v3848, %v3864
        %v3881 = vadd.f32 %v3849, %v3865
        %v3882 = vadd.f32 %v3850, %v3866
        %v3883 = vadd.f32 %v3851, %v3867
        %v3884 = vadd.f32 %v3852, %v3868
        %v3885 = vld [vmem:[%s2372 + $0xb] sm:$0xff]
        %v3886 = vld [vmem:[%s2372 + $0x13] sm:$0xff]
        %v3887 = vld [vmem:[%s2372 + $0x2b] sm:$0xff]
        %v3888 = vld [vmem:[%s2372 + $0x33] sm:$0xff]
        %v3889 = vld [vmem:[%s2372 + $0x4b] sm:$0xff]
        %v3890 = vld [vmem:[%s2372 + $0x53] sm:$0xff]
        %v3891 = vld [vmem:[%s2372 + $0x6b] sm:$0xff]
        %v3892 = vld [vmem:[%s2372 + $0x73] sm:$0xff]
        %v3893 = vld [vmem:[%s2372 + $0x8b] sm:$0xff]
        %v3894 = vld [vmem:[%s2372 + $0x93] sm:$0xff]
        %v3895 = vld [vmem:[%s2372 + $0xab] sm:$0xff]
        %v3896 = vld [vmem:[%s2372 + $0xb3] sm:$0xff]
        %v3897 = vld [vmem:[%s2372 + $0xcb] sm:$0xff]
        %v3898 = vld [vmem:[%s2372 + $0xd3] sm:$0xff]
        %v3899 = vld [vmem:[%s2372 + $0xeb] sm:$0xff]
        %v3900 = vld [vmem:[%s2372 + $0xf3] sm:$0xff]
        %v3901 = vld [vmem:[%s2372 + $0x10b] sm:$0xff]
        %v3902 = vld [vmem:[%s2372 + $0x113] sm:$0xff]
        %v3903 = vld [vmem:[%s2372 + $0x12b] sm:$0xff]
        %v3904 = vld [vmem:[%s2372 + $0x133] sm:$0xff]
        %v3905 = vld [vmem:[%s2372 + $0x14b] sm:$0xff]
        %v3906 = vld [vmem:[%s2372 + $0x153] sm:$0xff]
        %v3907 = vld [vmem:[%s2372 + $0x16b] sm:$0xff]
        %v3908 = vld [vmem:[%s2372 + $0x173] sm:$0xff]
        %v3909 = vld [vmem:[%s2372 + $0x18b] sm:$0xff]
        %v3910 = vld [vmem:[%s2372 + $0x193] sm:$0xff]
        %v3911 = vld [vmem:[%s2372 + $0x1ab] sm:$0xff]
        %v3912 = vld [vmem:[%s2372 + $0x1b3] sm:$0xff]
        %v3913 = vmul.f32 %v3885, %v2106
        %v3914 = vmul.f32 %v3886, %v2106
        %v3915 = vmul.f32 %v3887, %v2106
        %v3916 = vmul.f32 %v3888, %v2106
        %v3917 = vmul.f32 %v3889, %v2106
        %v3918 = vmul.f32 %v3890, %v2106
        %v3919 = vmul.f32 %v3891, %v2106
        %v3920 = vmul.f32 %v3892, %v2106
        %v3921 = vmul.f32 %v3893, %v2106
        %v3922 = vmul.f32 %v3894, %v2106
        %v3923 = vmul.f32 %v3895, %v2106
        %v3924 = vmul.f32 %v3896, %v2106
        %v3925 = vmul.f32 %v3897, %v2106
        %v3926 = vmul.f32 %v3898, %v2106
        %v3927 = vmul.f32 %v3899, %v2106
        %v3928 = vmul.f32 %v3900, %v2106
        %v3929 = vadd.f32 %v3869, %v3913
        %v3930 = vadd.f32 %v3870, %v3914
        %v3931 = vadd.f32 %v3871, %v3915
        %v3932 = vadd.f32 %v3872, %v3916
        %v3933 = vadd.f32 %v3873, %v3917
        %v3934 = vadd.f32 %v3874, %v3918
        %v3935 = vadd.f32 %v3875, %v3919
        %v3936 = vadd.f32 %v3876, %v3920
        %v3937 = vadd.f32 %v3877, %v3921
        %v3938 = vadd.f32 %v3878, %v3922
        %v3939 = vadd.f32 %v3879, %v3923
        %v3940 = vadd.f32 %v3880, %v3924
        %v3941 = vadd.f32 %v3881, %v3925
        %v3942 = vadd.f32 %v3882, %v3926
        %v3943 = vadd.f32 %v3883, %v3927
        %v3944 = vadd.f32 %v3884, %v3928
        %v3945 = vmul.f32 %v3887, %v2142
        %v3946 = vmul.f32 %v3888, %v2142
        %v3947 = vmul.f32 %v3889, %v2142
        %v3948 = vmul.f32 %v3890, %v2142
        %v3949 = vmul.f32 %v3891, %v2142
        %v3950 = vmul.f32 %v3892, %v2142
        %v3951 = vmul.f32 %v3893, %v2142
        %v3952 = vmul.f32 %v3894, %v2142
        %v3953 = vmul.f32 %v3895, %v2142
        %v3954 = vmul.f32 %v3896, %v2142
        %v3955 = vmul.f32 %v3897, %v2142
        %v3956 = vmul.f32 %v3898, %v2142
        %v3957 = vmul.f32 %v3899, %v2142
        %v3958 = vmul.f32 %v3900, %v2142
        %v3959 = vmul.f32 %v3901, %v2142
        %v3960 = vmul.f32 %v3902, %v2142
        %v3961 = vadd.f32 %v3929, %v3945
        %v3962 = vadd.f32 %v3930, %v3946
        %v3963 = vadd.f32 %v3931, %v3947
        %v3964 = vadd.f32 %v3932, %v3948
        %v3965 = vadd.f32 %v3933, %v3949
        %v3966 = vadd.f32 %v3934, %v3950
        %v3967 = vadd.f32 %v3935, %v3951
        %v3968 = vadd.f32 %v3936, %v3952
        %v3969 = vadd.f32 %v3937, %v3953
        %v3970 = vadd.f32 %v3938, %v3954
        %v3971 = vadd.f32 %v3939, %v3955
        %v3972 = vadd.f32 %v3940, %v3956
        %v3973 = vadd.f32 %v3941, %v3957
        %v3974 = vadd.f32 %v3942, %v3958
        %v3975 = vadd.f32 %v3943, %v3959
        %v3976 = vadd.f32 %v3944, %v3960
        %v3977 = vmul.f32 %v3889, %v2178
        %v3978 = vmul.f32 %v3890, %v2178
        %v3979 = vmul.f32 %v3891, %v2178
        %v3980 = vmul.f32 %v3892, %v2178
        %v3981 = vmul.f32 %v3893, %v2178
        %v3982 = vmul.f32 %v3894, %v2178
        %v3983 = vmul.f32 %v3895, %v2178
        %v3984 = vmul.f32 %v3896, %v2178
        %v3985 = vmul.f32 %v3897, %v2178
        %v3986 = vmul.f32 %v3898, %v2178
        %v3987 = vmul.f32 %v3899, %v2178
        %v3988 = vmul.f32 %v3900, %v2178
        %v3989 = vmul.f32 %v3901, %v2178
        %v3990 = vmul.f32 %v3902, %v2178
        %v3991 = vmul.f32 %v3903, %v2178
        %v3992 = vmul.f32 %v3904, %v2178
        %v3993 = vadd.f32 %v3961, %v3977
        %v3994 = vadd.f32 %v3962, %v3978
        %v3995 = vadd.f32 %v3963, %v3979
        %v3996 = vadd.f32 %v3964, %v3980
        %v3997 = vadd.f32 %v3965, %v3981
        %v3998 = vadd.f32 %v3966, %v3982
        %v3999 = vadd.f32 %v3967, %v3983
        %v4000 = vadd.f32 %v3968, %v3984
        %v4001 = vadd.f32 %v3969, %v3985
        %v4002 = vadd.f32 %v3970, %v3986
        %v4003 = vadd.f32 %v3971, %v3987
        %v4004 = vadd.f32 %v3972, %v3988
        %v4005 = vadd.f32 %v3973, %v3989
        %v4006 = vadd.f32 %v3974, %v3990
        %v4007 = vadd.f32 %v3975, %v3991
        %v4008 = vadd.f32 %v3976, %v3992
        %v4009 = vmul.f32 %v3891, %v2214
        %v4010 = vmul.f32 %v3892, %v2214
        %v4011 = vmul.f32 %v3893, %v2214
        %v4012 = vmul.f32 %v3894, %v2214
        %v4013 = vmul.f32 %v3895, %v2214
        %v4014 = vmul.f32 %v3896, %v2214
        %v4015 = vmul.f32 %v3897, %v2214
        %v4016 = vmul.f32 %v3898, %v2214
        %v4017 = vmul.f32 %v3899, %v2214
        %v4018 = vmul.f32 %v3900, %v2214
        %v4019 = vmul.f32 %v3901, %v2214
        %v4020 = vmul.f32 %v3902, %v2214
        %v4021 = vmul.f32 %v3903, %v2214
        %v4022 = vmul.f32 %v3904, %v2214
        %v4023 = vmul.f32 %v3905, %v2214
        %v4024 = vmul.f32 %v3906, %v2214
        %v4025 = vadd.f32 %v3993, %v4009
        %v4026 = vadd.f32 %v3994, %v4010
        %v4027 = vadd.f32 %v3995, %v4011
        %v4028 = vadd.f32 %v3996, %v4012
        %v4029 = vadd.f32 %v3997, %v4013
        %v4030 = vadd.f32 %v3998, %v4014
        %v4031 = vadd.f32 %v3999, %v4015
        %v4032 = vadd.f32 %v4000, %v4016
        %v4033 = vadd.f32 %v4001, %v4017
        %v4034 = vadd.f32 %v4002, %v4018
        %v4035 = vadd.f32 %v4003, %v4019
        %v4036 = vadd.f32 %v4004, %v4020
        %v4037 = vadd.f32 %v4005, %v4021
        %v4038 = vadd.f32 %v4006, %v4022
        %v4039 = vadd.f32 %v4007, %v4023
        %v4040 = vadd.f32 %v4008, %v4024
        %v4041 = vmul.f32 %v3893, %v2250
        %v4042 = vmul.f32 %v3894, %v2250
        %v4043 = vmul.f32 %v3895, %v2250
        %v4044 = vmul.f32 %v3896, %v2250
        %v4045 = vmul.f32 %v3897, %v2250
        %v4046 = vmul.f32 %v3898, %v2250
        %v4047 = vmul.f32 %v3899, %v2250
        %v4048 = vmul.f32 %v3900, %v2250
        %v4049 = vmul.f32 %v3901, %v2250
        %v4050 = vmul.f32 %v3902, %v2250
        %v4051 = vmul.f32 %v3903, %v2250
        %v4052 = vmul.f32 %v3904, %v2250
        %v4053 = vmul.f32 %v3905, %v2250
        %v4054 = vmul.f32 %v3906, %v2250
        %v4055 = vmul.f32 %v3907, %v2250
        %v4056 = vmul.f32 %v3908, %v2250
        %v4057 = vadd.f32 %v4025, %v4041
        %v4058 = vadd.f32 %v4026, %v4042
        %v4059 = vadd.f32 %v4027, %v4043
        %v4060 = vadd.f32 %v4028, %v4044
        %v4061 = vadd.f32 %v4029, %v4045
        %v4062 = vadd.f32 %v4030, %v4046
        %v4063 = vadd.f32 %v4031, %v4047
        %v4064 = vadd.f32 %v4032, %v4048
        %v4065 = vadd.f32 %v4033, %v4049
        %v4066 = vadd.f32 %v4034, %v4050
        %v4067 = vadd.f32 %v4035, %v4051
        %v4068 = vadd.f32 %v4036, %v4052
        %v4069 = vadd.f32 %v4037, %v4053
        %v4070 = vadd.f32 %v4038, %v4054
        %v4071 = vadd.f32 %v4039, %v4055
        %v4072 = vadd.f32 %v4040, %v4056
        %v4073 = vmul.f32 %v3895, %v2286
        %v4074 = vmul.f32 %v3896, %v2286
        %v4075 = vmul.f32 %v3897, %v2286
        %v4076 = vmul.f32 %v3898, %v2286
        %v4077 = vmul.f32 %v3899, %v2286
        %v4078 = vmul.f32 %v3900, %v2286
        %v4079 = vmul.f32 %v3901, %v2286
        %v4080 = vmul.f32 %v3902, %v2286
        %v4081 = vmul.f32 %v3903, %v2286
        %v4082 = vmul.f32 %v3904, %v2286
        %v4083 = vmul.f32 %v3905, %v2286
        %v4084 = vmul.f32 %v3906, %v2286
        %v4085 = vmul.f32 %v3907, %v2286
        %v4086 = vmul.f32 %v3908, %v2286
        %v4087 = vmul.f32 %v3909, %v2286
        %v4088 = vmul.f32 %v3910, %v2286
        %v4089 = vadd.f32 %v4057, %v4073
        %v4090 = vadd.f32 %v4058, %v4074
        %v4091 = vadd.f32 %v4059, %v4075
        %v4092 = vadd.f32 %v4060, %v4076
        %v4093 = vadd.f32 %v4061, %v4077
        %v4094 = vadd.f32 %v4062, %v4078
        %v4095 = vadd.f32 %v4063, %v4079
        %v4096 = vadd.f32 %v4064, %v4080
        %v4097 = vadd.f32 %v4065, %v4081
        %v4098 = vadd.f32 %v4066, %v4082
        %v4099 = vadd.f32 %v4067, %v4083
        %v4100 = vadd.f32 %v4068, %v4084
        %v4101 = vadd.f32 %v4069, %v4085
        %v4102 = vadd.f32 %v4070, %v4086
        %v4103 = vadd.f32 %v4071, %v4087
        %v4104 = vadd.f32 %v4072, %v4088
        %v4105 = vmul.f32 %v3897, %v2322
        %v4106 = vmul.f32 %v3898, %v2322
        %v4107 = vmul.f32 %v3899, %v2322
        %v4108 = vmul.f32 %v3900, %v2322
        %v4109 = vmul.f32 %v3901, %v2322
        %v4110 = vmul.f32 %v3902, %v2322
        %v4111 = vmul.f32 %v3903, %v2322
        %v4112 = vmul.f32 %v3904, %v2322
        %v4113 = vmul.f32 %v3905, %v2322
        %v4114 = vmul.f32 %v3906, %v2322
        %v4115 = vmul.f32 %v3907, %v2322
        %v4116 = vmul.f32 %v3908, %v2322
        %v4117 = vmul.f32 %v3909, %v2322
        %v4118 = vmul.f32 %v3910, %v2322
        %v4119 = vmul.f32 %v3911, %v2322
        %v4120 = vmul.f32 %v3912, %v2322
        %v4121 = vadd.f32 %v4089, %v4105
        %v4122 = vadd.f32 %v4090, %v4106
        %v4123 = vadd.f32 %v4091, %v4107
        %v4124 = vadd.f32 %v4092, %v4108
        %v4125 = vadd.f32 %v4093, %v4109
        %v4126 = vadd.f32 %v4094, %v4110
        %v4127 = vadd.f32 %v4095, %v4111
        %v4128 = vadd.f32 %v4096, %v4112
        %v4129 = vadd.f32 %v4097, %v4113
        %v4130 = vadd.f32 %v4098, %v4114
        %v4131 = vadd.f32 %v4099, %v4115
        %v4132 = vadd.f32 %v4100, %v4116
        %v4133 = vadd.f32 %v4101, %v4117
        %v4134 = vadd.f32 %v4102, %v4118
        %v4135 = vadd.f32 %v4103, %v4119
        %v4136 = vadd.f32 %v4104, %v4120
        %v4137 = vpack.c.bf16 %v4122, %v4121
        %v4138 = vpack.c.bf16 %v4124, %v4123
        %v4139 = vpack.c.bf16 %v4126, %v4125
        %v4140 = vpack.c.bf16 %v4128, %v4127
        %v4141 = vpack.c.bf16 %v4130, %v4129
        %v4142 = vpack.c.bf16 %v4132, %v4131
        %v4143 = vpack.c.bf16 %v4134, %v4133
        %v4144 = vpack.c.bf16 %v4136, %v4135
        %4145 = vst [vmem:[#allocation4 + $0x40] sm:$0xff] %v4137
        %4146 = vst [vmem:[#allocation4 + $0x48] sm:$0xff] %v4138
        %4147 = vst [vmem:[#allocation4 + $0x50] sm:$0xff] %v4139
        %4148 = vst [vmem:[#allocation4 + $0x58] sm:$0xff] %v4140
        %4149 = vst [vmem:[#allocation4 + $0x60] sm:$0xff] %v4141
        %4150 = vst [vmem:[#allocation4 + $0x68] sm:$0xff] %v4142
        %4151 = vst [vmem:[#allocation4 + $0x70] sm:$0xff] %v4143
        %4152 = vst [vmem:[#allocation4 + $0x78] sm:$0xff] %v4144
        %v4153 = vld [vmem:[#allocation4] sm:$0xff]
        %v4154 = vld [vmem:[#allocation4 + $0x8] sm:$0xff]
        %v4155 = vld [vmem:[#allocation4 + $0x10] sm:$0xff]
        %v4156 = vld [vmem:[#allocation4 + $0x18] sm:$0xff]
        %v4157 = vld [vmem:[#allocation4 + $0x20] sm:$0xff]
        %v4158 = vld [vmem:[#allocation4 + $0x28] sm:$0xff]
        %v4159 = vld [vmem:[#allocation4 + $0x30] sm:$0xff]
        %v4160 = vld [vmem:[#allocation4 + $0x38] sm:$0xff]
        %v4161 = vld [vmem:[#allocation4 + $0x40] sm:$0xff]
        %v4162 = vld [vmem:[#allocation4 + $0x48] sm:$0xff]
        %v4163 = vld [vmem:[#allocation4 + $0x50] sm:$0xff]
        %v4164 = vld [vmem:[#allocation4 + $0x58] sm:$0xff]
        %v4165 = vld [vmem:[#allocation4 + $0x60] sm:$0xff]
        %v4166 = vld [vmem:[#allocation4 + $0x68] sm:$0xff]
        %v4167 = vld [vmem:[#allocation4 + $0x70] sm:$0xff]
        %v4168 = vld [vmem:[#allocation4 + $0x78] sm:$0xff]
        %v4169 = vld [vmem:[#allocation8] sm:$0xf]
        %v4170 = vld [vmem:[#allocation8 + $0x4] sm:$0xf]
        %v4171 = vld [vmem:[#allocation8 + $0x8] sm:$0xf]
        %v4172 = vld [vmem:[#allocation8 + $0xc] sm:$0xf]
        %v4173 = vld [vmem:[#allocation8 + $0x10] sm:$0xf]
        %v4174 = vld [vmem:[#allocation8 + $0x14] sm:$0xf]
        %v4175 = vld [vmem:[#allocation8 + $0x18] sm:$0xf]
        %v4176 = vld [vmem:[#allocation8 + $0x1c] sm:$0xf]
        %v4177 = vld [vmem:[#allocation8 + $0x20] sm:$0xf]
        %v4178 = vld [vmem:[#allocation8 + $0x24] sm:$0xf]
        %v4179 = vld [vmem:[#allocation8 + $0x28] sm:$0xf]
        %v4180 = vld [vmem:[#allocation8 + $0x2c] sm:$0xf]
        %v4181 = vld [vmem:[#allocation8 + $0x30] sm:$0xf]
        %v4182 = vld [vmem:[#allocation8 + $0x34] sm:$0xf]
        %v4183 = vld [vmem:[#allocation8 + $0x38] sm:$0xf]
        %v4184 = vld [vmem:[#allocation8 + $0x3c] sm:$0xf]
        %v4185 = vld [vmem:[%s4] sm:$0x1]
        %v4187 = vlaneseq
        %v4188 = vshrl.u32 %v4187, 7
        %v4189 = vsub.s32 0, %v4188
        %v4190 = vrot.slane %v4185, %v4189
        %v4208 = vunpack.c.l.b16 %v4169
        %v4209 = vunpack.c.l.b16 %v4170
        %v4210 = vunpack.c.l.b16 %v4171
        %v4211 = vunpack.c.l.b16 %v4172
        %v4212 = vunpack.c.l.b16 %v4173
        %v4213 = vunpack.c.l.b16 %v4174
        %v4214 = vunpack.c.l.b16 %v4175
        %v4215 = vunpack.c.l.b16 %v4176
        %v4216 = vunpack.c.l.b16 %v4177
        %v4217 = vunpack.c.l.b16 %v4178
        %v4218 = vunpack.c.l.b16 %v4179
        %v4219 = vunpack.c.l.b16 %v4180
        %v4220 = vunpack.c.l.b16 %v4181
        %v4221 = vunpack.c.l.b16 %v4182
        %v4222 = vunpack.c.l.b16 %v4183
        %v4223 = vunpack.c.l.b16 %v4184
        %v4224 = vpack.c.b16 %v4209, %v4208
        %v4225 = vpack.c.b16 %v4211, %v4210
        %v4226 = vpack.c.b16 %v4213, %v4212
        %v4227 = vpack.c.b16 %v4215, %v4214
        %v4228 = vpack.c.b16 %v4217, %v4216
        %v4229 = vpack.c.b16 %v4219, %v4218
        %v4230 = vpack.c.b16 %v4221, %v4220
        %v4231 = vpack.c.b16 %v4223, %v4222
        %4240 = vmatprep.subr.bf16.mxu0 0
        %4241 = vmatpush1.bf16.msra.mxu0 %v4224
        %4242 = vmatprep.subr.bf16.mxu0 0
        %4243 = vmatpush1.bf16.msra.mxu0 %v4225
        %4244 = vmatprep.subr.bf16.mxu0 0
        %4245 = vmatpush1.bf16.msra.mxu0 %v4226
        %4246 = vmatprep.subr.bf16.mxu0 0
        %4247 = vmatpush1.bf16.msra.mxu0 %v4227
        %4248 = vmatprep.subr.bf16.mxu0 0
        %4249 = vmatpush1.bf16.msra.mxu0 %v4228
        %4250 = vmatprep.subr.bf16.mxu0 0
        %4251 = vmatpush1.bf16.msra.mxu0 %v4229
        %4252 = vmatprep.subr.bf16.mxu0 0
        %4253 = vmatpush1.bf16.msra.mxu0 %v4230
        %4254 = vmatprep.subr.bf16.mxu0 0
        %4255 = vmatpush1.bf16.msra.mxu0 %v4231
        %4256 = vmatprep.subr.bf16.mxu0 0
        %4257 = vmatpush1.bf16.msra.mxu0 0
        %4258 = vmatprep.subr.bf16.mxu0 0
        %4259 = vmatpush1.bf16.msra.mxu0 0
        %4260 = vmatprep.subr.bf16.mxu0 0
        %4261 = vmatpush1.bf16.msra.mxu0 0
        %4262 = vmatprep.subr.bf16.mxu0 0
        %4263 = vmatpush1.bf16.msra.mxu0 0
        %4264 = vmatprep.subr.bf16.mxu0 0
        %4265 = vmatpush1.bf16.msra.mxu0 0
        %4266 = vmatprep.subr.bf16.mxu0 0
        %4267 = vmatpush1.bf16.msra.mxu0 0
        %4268 = vmatprep.subr.bf16.mxu0 0
        %4269 = vmatpush1.bf16.msra.mxu0 0
        %4270 = vmatprep.subr.bf16.mxu0 0
        %4271 = vmatpush1.bf16.msra.mxu0 0
        %4272 = vmatprep.mubr.bf16.mxu0 0
        %4273 = vmatmul.mubr.bf16.gmra.mrb[0].mxu0 %v4153
        %v4274 = vpop.f32.mrb[0].mxu0
        %v4275 = vadd.f32 %v4190, %v4274
        %v4276 = vpop.f32.mrb[0].mxu0
        %v4277 = vpop.f32.mrb[0].mxu0
        %v4278 = vadd.f32 %v4190, %v4277
        %v4279 = vpop.f32.mrb[0].mxu0
        %4280 = vmatprep.mubr.bf16.mxu0 0
        %4281 = vmatmul.mubr.bf16.gmra.mrb[0].mxu0 %v4154
        %v4282 = vpop.f32.mrb[0].mxu0
        %v4283 = vadd.f32 %v4190, %v4282
        %v4284 = vpop.f32.mrb[0].mxu0
        %v4285 = vpop.f32.mrb[0].mxu0
        %v4286 = vadd.f32 %v4190, %v4285
        %v4287 = vpop.f32.mrb[0].mxu0
        %4288 = vmatprep.mubr.bf16.mxu0 0
        %4289 = vmatmul.mubr.bf16.gmra.mrb[0].mxu0 %v4155
        %v4290 = vpop.f32.mrb[0].mxu0
        %v4291 = vadd.f32 %v4190, %v4290
        %v4292 = vpop.f32.mrb[0].mxu0
        %v4293 = vpop.f32.mrb[0].mxu0
        %v4294 = vadd.f32 %v4190, %v4293
        %v4295 = vpop.f32.mrb[0].mxu0
        %4296 = vmatprep.mubr.bf16.mxu0 0
        %4297 = vmatmul.mubr.bf16.gmra.mrb[0].mxu0 %v4156
        %v4298 = vpop.f32.mrb[0].mxu0
        %v4299 = vadd.f32 %v4190, %v4298
        %v4300 = vpop.f32.mrb[0].mxu0
        %v4301 = vpop.f32.mrb[0].mxu0
        %v4302 = vadd.f32 %v4190, %v4301
        %v4303 = vpop.f32.mrb[0].mxu0
        %4304 = vmatprep.mubr.bf16.mxu0 0
        %4305 = vmatmul.mubr.bf16.gmra.mrb[0].mxu0 %v4157
        %v4306 = vpop.f32.mrb[0].mxu0
        %v4307 = vadd.f32 %v4190, %v4306
        %v4308 = vpop.f32.mrb[0].mxu0
        %v4309 = vpop.f32.mrb[0].mxu0
        %v4310 = vadd.f32 %v4190, %v4309
        %v4311 = vpop.f32.mrb[0].mxu0
        %4312 = vmatprep.mubr.bf16.mxu0 0
        %4313 = vmatmul.mubr.bf16.gmra.mrb[0].mxu0 %v4158
        %v4314 = vpop.f32.mrb[0].mxu0
        %v4315 = vadd.f32 %v4190, %v4314
        %v4316 = vpop.f32.mrb[0].mxu0
        %v4317 = vpop.f32.mrb[0].mxu0
        %v4318 = vadd.f32 %v4190, %v4317
        %v4319 = vpop.f32.mrb[0].mxu0
        %4320 = vmatprep.mubr.bf16.mxu0 0
        %4321 = vmatmul.mubr.bf16.gmra.mrb[0].mxu0 %v4159
        %v4322 = vpop.f32.mrb[0].mxu0
        %v4323 = vadd.f32 %v4190, %v4322
        %v4324 = vpop.f32.mrb[0].mxu0
        %v4325 = vpop.f32.mrb[0].mxu0
        %v4326 = vadd.f32 %v4190, %v4325
        %v4327 = vpop.f32.mrb[0].mxu0
        %4328 = vmatprep.mubr.bf16.mxu0 0
        %4329 = vmatmul.mubr.bf16.gmra.mrb[0].mxu0 %v4160
        %v4330 = vpop.f32.mrb[0].mxu0
        %v4331 = vadd.f32 %v4190, %v4330
        %v4332 = vpop.f32.mrb[0].mxu0
        %v4333 = vpop.f32.mrb[0].mxu0
        %v4334 = vadd.f32 %v4190, %v4333
        %v4335 = vpop.f32.mrb[0].mxu0
        %4336 = vmatprep.mubr.bf16.mxu0 0
        %4337 = vmatmul.mubr.bf16.gmra.mrb[0].mxu0 %v4161
        %v4338 = vpop.f32.mrb[0].mxu0
        %v4339 = vadd.f32 %v4190, %v4338
        %v4340 = vpop.f32.mrb[0].mxu0
        %v4341 = vpop.f32.mrb[0].mxu0
        %v4342 = vadd.f32 %v4190, %v4341
        %v4343 = vpop.f32.mrb[0].mxu0
        %4344 = vmatprep.mubr.bf16.mxu0 0
        %4345 = vmatmul.mubr.bf16.gmra.mrb[0].mxu0 %v4162
        %v4346 = vpop.f32.mrb[0].mxu0
        %v4347 = vadd.f32 %v4190, %v4346
        %v4348 = vpop.f32.mrb[0].mxu0
        %v4349 = vpop.f32.mrb[0].mxu0
        %v4350 = vadd.f32 %v4190, %v4349
        %v4351 = vpop.f32.mrb[0].mxu0
        %4352 = vmatprep.mubr.bf16.mxu0 0
        %4353 = vmatmul.mubr.bf16.gmra.mrb[0].mxu0 %v4163
        %v4354 = vpop.f32.mrb[0].mxu0
        %v4355 = vadd.f32 %v4190, %v4354
        %v4356 = vpop.f32.mrb[0].mxu0
        %v4357 = vpop.f32.mrb[0].mxu0
        %v4358 = vadd.f32 %v4190, %v4357
        %v4359 = vpop.f32.mrb[0].mxu0
        %4360 = vmatprep.mubr.bf16.mxu0 0
        %4361 = vmatmul.mubr.bf16.gmra.mrb[0].mxu0 %v4164
        %v4362 = vpop.f32.mrb[0].mxu0
        %v4363 = vadd.f32 %v4190, %v4362
        %v4364 = vpop.f32.mrb[0].mxu0
        %v4365 = vpop.f32.mrb[0].mxu0
        %v4366 = vadd.f32 %v4190, %v4365
        %v4367 = vpop.f32.mrb[0].mxu0
        %4368 = vmatprep.mubr.bf16.mxu0 0
        %4369 = vmatmul.mubr.bf16.gmra.mrb[0].mxu0 %v4165
        %v4370 = vpop.f32.mrb[0].mxu0
        %v4371 = vadd.f32 %v4190, %v4370
        %v4372 = vpop.f32.mrb[0].mxu0
        %v4373 = vpop.f32.mrb[0].mxu0
        %v4374 = vadd.f32 %v4190, %v4373
        %v4375 = vpop.f32.mrb[0].mxu0
        %4376 = vmatprep.mubr.bf16.mxu0 0
        %4377 = vmatmul.mubr.bf16.gmra.mrb[0].mxu0 %v4166
        %v4378 = vpop.f32.mrb[0].mxu0
        %v4379 = vadd.f32 %v4190, %v4378
        %v4380 = vpop.f32.mrb[0].mxu0
        %v4381 = vpop.f32.mrb[0].mxu0
        %v4382 = vadd.f32 %v4190, %v4381
        %v4383 = vpop.f32.mrb[0].mxu0
        %4384 = vmatprep.mubr.bf16.mxu0 0
        %4385 = vmatmul.mubr.bf16.gmra.mrb[0].mxu0 %v4167
        %v4386 = vpop.f32.mrb[0].mxu0
        %v4387 = vadd.f32 %v4190, %v4386
        %v4388 = vpop.f32.mrb[0].mxu0
        %v4389 = vpop.f32.mrb[0].mxu0
        %v4390 = vadd.f32 %v4190, %v4389
        %v4391 = vpop.f32.mrb[0].mxu0
        %4392 = vmatprep.mubr.bf16.mxu0 0
        %4393 = vmatmul.mubr.bf16.gmra.mrb[0].mxu0 %v4168
        %v4394 = vpop.f32.mrb[0].mxu0
        %v4395 = vadd.f32 %v4190, %v4394
        %v4396 = vpop.f32.mrb[0].mxu0
        %v4397 = vpop.f32.mrb[0].mxu0
        %v4398 = vadd.f32 %v4190, %v4397
        %v4399 = vpop.f32.mrb[0].mxu0
        %4400 = vdwg.mxu0
        %v4401 = vmul.f32 %v4275, 0.5
        %v4402 = vmul.f32 %v4278, 0.5
        %v4403 = vmul.f32 %v4283, 0.5
        %v4404 = vmul.f32 %v4286, 0.5
        %v4405 = vmul.f32 %v4291, 0.5
        %v4406 = vmul.f32 %v4294, 0.5
        %v4407 = vmul.f32 %v4299, 0.5
        %v4408 = vmul.f32 %v4302, 0.5
        %v4409 = vmul.f32 %v4307, 0.5
        %v4410 = vmul.f32 %v4310, 0.5
        %v4411 = vmul.f32 %v4315, 0.5
        %v4412 = vmul.f32 %v4318, 0.5
        %v4413 = vmul.f32 %v4323, 0.5
        %v4414 = vmul.f32 %v4326, 0.5
        %v4415 = vmul.f32 %v4331, 0.5
        %v4416 = vmul.f32 %v4334, 0.5
        %v4417 = vmul.f32 %v4339, 0.5
        %v4418 = vmul.f32 %v4342, 0.5
        %v4419 = vmul.f32 %v4347, 0.5
        %v4420 = vmul.f32 %v4350, 0.5
        %v4421 = vmul.f32 %v4355, 0.5
        %v4422 = vmul.f32 %v4358, 0.5
        %v4423 = vmul.f32 %v4363, 0.5
        %v4424 = vmul.f32 %v4366, 0.5
        %v4425 = vmul.f32 %v4371, 0.5
        %v4426 = vmul.f32 %v4374, 0.5
        %v4427 = vmul.f32 %v4379, 0.5
        %v4428 = vmul.f32 %v4382, 0.5
        %v4429 = vmul.f32 %v4387, 0.5
        %v4430 = vmul.f32 %v4390, 0.5
        %v4431 = vmul.f32 %v4395, 0.5
        %v4432 = vmul.f32 %v4398, 0.5
        %v4433 = vrcp.pop 1.4142135
        %v4434 = vmul.f32 %v4275, %v4433
        %v4435 = vmul.f32 %v4278, %v4433
        %v4436 = vmul.f32 %v4283, %v4433
        %v4437 = vmul.f32 %v4286, %v4433
        %v4438 = vmul.f32 %v4291, %v4433
        %v4439 = vmul.f32 %v4294, %v4433
        %v4440 = vmul.f32 %v4299, %v4433
        %v4441 = vmul.f32 %v4302, %v4433
        %v4442 = vmul.f32 %v4307, %v4433
        %v4443 = vmul.f32 %v4310, %v4433
        %v4444 = vmul.f32 %v4315, %v4433
        %v4445 = vmul.f32 %v4318, %v4433
        %v4446 = vmul.f32 %v4323, %v4433
        %v4447 = vmul.f32 %v4326, %v4433
        %v4448 = vmul.f32 %v4331, %v4433
        %v4449 = vmul.f32 %v4334, %v4433
        %v4450 = vmul.f32 %v4339, %v4433
        %v4451 = vmul.f32 %v4342, %v4433
        %v4452 = vmul.f32 %v4347, %v4433
        %v4453 = vmul.f32 %v4350, %v4433
        %v4454 = vmul.f32 %v4355, %v4433
        %v4455 = vmul.f32 %v4358, %v4433
        %v4456 = vmul.f32 %v4363, %v4433
        %v4457 = vmul.f32 %v4366, %v4433
        %v4458 = vmul.f32 %v4371, %v4433
        %v4459 = vmul.f32 %v4374, %v4433
        %v4460 = vmul.f32 %v4379, %v4433
        %v4461 = vmul.f32 %v4382, %v4433
        %v4462 = vmul.f32 %v4387, %v4433
        %v4463 = vmul.f32 %v4390, %v4433
        %v4464 = vmul.f32 %v4395, %v4433
        %v4465 = vmul.f32 %v4398, %v4433
        %v4466 = vand.u32 2147483647, %v4434
        %v4467 = vand.u32 2147483647, %v4435
        %v4468 = vand.u32 2147483647, %v4436
        %v4469 = vand.u32 2147483647, %v4437
        %v4470 = vand.u32 2147483647, %v4438
        %v4471 = vand.u32 2147483647, %v4439
        %v4472 = vand.u32 2147483647, %v4440
        %v4473 = vand.u32 2147483647, %v4441
        %v4474 = vand.u32 2147483647, %v4442
        %v4475 = vand.u32 2147483647, %v4443
        %v4476 = vand.u32 2147483647, %v4444
        %v4477 = vand.u32 2147483647, %v4445
        %v4478 = vand.u32 2147483647, %v4446
        %v4479 = vand.u32 2147483647, %v4447
        %v4480 = vand.u32 2147483647, %v4448
        %v4481 = vand.u32 2147483647, %v4449
        %v4482 = vand.u32 2147483647, %v4450
        %v4483 = vand.u32 2147483647, %v4451
        %v4484 = vand.u32 2147483647, %v4452
        %v4485 = vand.u32 2147483647, %v4453
        %v4486 = vand.u32 2147483647, %v4454
        %v4487 = vand.u32 2147483647, %v4455
        %v4488 = vand.u32 2147483647, %v4456
        %v4489 = vand.u32 2147483647, %v4457
        %v4490 = vand.u32 2147483647, %v4458
        %v4491 = vand.u32 2147483647, %v4459
        %v4492 = vand.u32 2147483647, %v4460
        %v4493 = vand.u32 2147483647, %v4461
        %v4494 = vand.u32 2147483647, %v4462
        %v4495 = vand.u32 2147483647, %v4463
        %v4496 = vand.u32 2147483647, %v4464
        %v4497 = vand.u32 2147483647, %v4465
        %v4498 = vmul.f32 %v4466, 0.3275911
        %v4499 = vmul.f32 %v4467, 0.3275911
        %v4500 = vmul.f32 %v4468, 0.3275911
        %v4501 = vmul.f32 %v4469, 0.3275911
        %v4502 = vmul.f32 %v4470, 0.3275911
        %v4503 = vmul.f32 %v4471, 0.3275911
        %v4504 = vmul.f32 %v4472, 0.3275911
        %v4505 = vmul.f32 %v4473, 0.3275911
        %v4506 = vmul.f32 %v4474, 0.3275911
        %v4507 = vmul.f32 %v4475, 0.3275911
        %v4508 = vmul.f32 %v4476, 0.3275911
        %v4509 = vmul.f32 %v4477, 0.3275911
        %v4510 = vmul.f32 %v4478, 0.3275911
        %v4511 = vmul.f32 %v4479, 0.3275911
        %v4512 = vmul.f32 %v4480, 0.3275911
        %v4513 = vmul.f32 %v4481, 0.3275911
        %v4514 = vmul.f32 %v4482, 0.3275911
        %v4515 = vmul.f32 %v4483, 0.3275911
        %v4516 = vmul.f32 %v4484, 0.3275911
        %v4517 = vmul.f32 %v4485, 0.3275911
        %v4518 = vmul.f32 %v4486, 0.3275911
        %v4519 = vmul.f32 %v4487, 0.3275911
        %v4520 = vmul.f32 %v4488, 0.3275911
        %v4521 = vmul.f32 %v4489, 0.3275911
        %v4522 = vmul.f32 %v4490, 0.3275911
        %v4523 = vmul.f32 %v4491, 0.3275911
        %v4524 = vmul.f32 %v4492, 0.3275911
        %v4525 = vmul.f32 %v4493, 0.3275911
        %v4526 = vmul.f32 %v4494, 0.3275911
        %v4527 = vmul.f32 %v4495, 0.3275911
        %v4528 = vmul.f32 %v4496, 0.3275911
        %v4529 = vmul.f32 %v4497, 0.3275911
        %v4530 = vadd.f32 %v4498, 1.0
        %v4531 = vadd.f32 %v4499, 1.0
        %v4532 = vadd.f32 %v4500, 1.0
        %v4533 = vadd.f32 %v4501, 1.0
        %v4534 = vadd.f32 %v4502, 1.0
        %v4535 = vadd.f32 %v4503, 1.0
        %v4536 = vadd.f32 %v4504, 1.0
        %v4537 = vadd.f32 %v4505, 1.0
        %v4538 = vadd.f32 %v4506, 1.0
        %v4539 = vadd.f32 %v4507, 1.0
        %v4540 = vadd.f32 %v4508, 1.0
        %v4541 = vadd.f32 %v4509, 1.0
        %v4542 = vadd.f32 %v4510, 1.0
        %v4543 = vadd.f32 %v4511, 1.0
        %v4544 = vadd.f32 %v4512, 1.0
        %v4545 = vadd.f32 %v4513, 1.0
        %v4546 = vadd.f32 %v4514, 1.0
        %v4547 = vadd.f32 %v4515, 1.0
        %v4548 = vadd.f32 %v4516, 1.0
        %v4549 = vadd.f32 %v4517, 1.0
        %v4550 = vadd.f32 %v4518, 1.0
        %v4551 = vadd.f32 %v4519, 1.0
        %v4552 = vadd.f32 %v4520, 1.0
        %v4553 = vadd.f32 %v4521, 1.0
        %v4554 = vadd.f32 %v4522, 1.0
        %v4555 = vadd.f32 %v4523, 1.0
        %v4556 = vadd.f32 %v4524, 1.0
        %v4557 = vadd.f32 %v4525, 1.0
        %v4558 = vadd.f32 %v4526, 1.0
        %v4559 = vadd.f32 %v4527, 1.0
        %v4560 = vadd.f32 %v4528, 1.0
        %v4561 = vadd.f32 %v4529, 1.0
        %v4562 = vrcp.pop %v4530
        %v4563 = vrcp.pop %v4531
        %v4564 = vrcp.pop %v4532
        %v4565 = vrcp.pop %v4533
        %v4566 = vrcp.pop %v4534
        %v4567 = vrcp.pop %v4535
        %v4568 = vrcp.pop %v4536
        %v4569 = vrcp.pop %v4537
        %v4570 = vrcp.pop %v4538
        %v4571 = vrcp.pop %v4539
        %v4572 = vrcp.pop %v4540
        %v4573 = vrcp.pop %v4541
        %v4574 = vrcp.pop %v4542
        %v4575 = vrcp.pop %v4543
        %v4576 = vrcp.pop %v4544
        %v4577 = vrcp.pop %v4545
        %v4578 = vrcp.pop %v4546
        %v4579 = vrcp.pop %v4547
        %v4580 = vrcp.pop %v4548
        %v4581 = vrcp.pop %v4549
        %v4582 = vrcp.pop %v4550
        %v4583 = vrcp.pop %v4551
        %v4584 = vrcp.pop %v4552
        %v4585 = vrcp.pop %v4553
        %v4586 = vrcp.pop %v4554
        %v4587 = vrcp.pop %v4555
        %v4588 = vrcp.pop %v4556
        %v4589 = vrcp.pop %v4557
        %v4590 = vrcp.pop %v4558
        %v4591 = vrcp.pop %v4559
        %v4592 = vrcp.pop %v4560
        %v4593 = vrcp.pop %v4561
        %v4594 = vmul.f32 %v4562, 1.0614054
        %v4595 = vmul.f32 %v4563, 1.0614054
        %v4596 = vmul.f32 %v4564, 1.0614054
        %v4597 = vmul.f32 %v4565, 1.0614054
        %v4598 = vmul.f32 %v4566, 1.0614054
        %v4599 = vmul.f32 %v4567, 1.0614054
        %v4600 = vmul.f32 %v4568, 1.0614054
        %v4601 = vmul.f32 %v4569, 1.0614054
        %v4602 = vmul.f32 %v4570, 1.0614054
        %v4603 = vmul.f32 %v4571, 1.0614054
        %v4604 = vmul.f32 %v4572, 1.0614054
        %v4605 = vmul.f32 %v4573, 1.0614054
        %v4606 = vmul.f32 %v4574, 1.0614054
        %v4607 = vmul.f32 %v4575, 1.0614054
        %v4608 = vmul.f32 %v4576, 1.0614054
        %v4609 = vmul.f32 %v4577, 1.0614054
        %v4610 = vmul.f32 %v4578, 1.0614054
        %v4611 = vmul.f32 %v4579, 1.0614054
        %v4612 = vmul.f32 %v4580, 1.0614054
        %v4613 = vmul.f32 %v4581, 1.0614054
        %v4614 = vmul.f32 %v4582, 1.0614054
        %v4615 = vmul.f32 %v4583, 1.0614054
        %v4616 = vmul.f32 %v4584, 1.0614054
        %v4617 = vmul.f32 %v4585, 1.0614054
        %v4618 = vmul.f32 %v4586, 1.0614054
        %v4619 = vmul.f32 %v4587, 1.0614054
        %v4620 = vmul.f32 %v4588, 1.0614054
        %v4621 = vmul.f32 %v4589, 1.0614054
        %v4622 = vmul.f32 %v4590, 1.0614054
        %v4623 = vmul.f32 %v4591, 1.0614054
        %v4624 = vmul.f32 %v4592, 1.0614054
        %v4625 = vmul.f32 %v4593, 1.0614054
        %v4626 = vadd.f32 %v4594, -1.4531521
        %v4627 = vadd.f32 %v4595, -1.4531521
        %v4628 = vadd.f32 %v4596, -1.4531521
        %v4629 = vadd.f32 %v4597, -1.4531521
        %v4630 = vadd.f32 %v4598, -1.4531521
        %v4631 = vadd.f32 %v4599, -1.4531521
        %v4632 = vadd.f32 %v4600, -1.4531521
        %v4633 = vadd.f32 %v4601, -1.4531521
        %v4634 = vadd.f32 %v4602, -1.4531521
        %v4635 = vadd.f32 %v4603, -1.4531521
        %v4636 = vadd.f32 %v4604, -1.4531521
        %v4637 = vadd.f32 %v4605, -1.4531521
        %v4638 = vadd.f32 %v4606, -1.4531521
        %v4639 = vadd.f32 %v4607, -1.4531521
        %v4640 = vadd.f32 %v4608, -1.4531521
        %v4641 = vadd.f32 %v4609, -1.4531521
        %v4642 = vadd.f32 %v4610, -1.4531521
        %v4643 = vadd.f32 %v4611, -1.4531521
        %v4644 = vadd.f32 %v4612, -1.4531521
        %v4645 = vadd.f32 %v4613, -1.4531521
        %v4646 = vadd.f32 %v4614, -1.4531521
        %v4647 = vadd.f32 %v4615, -1.4531521
        %v4648 = vadd.f32 %v4616, -1.4531521
        %v4649 = vadd.f32 %v4617, -1.4531521
        %v4650 = vadd.f32 %v4618, -1.4531521
        %v4651 = vadd.f32 %v4619, -1.4531521
        %v4652 = vadd.f32 %v4620, -1.4531521
        %v4653 = vadd.f32 %v4621, -1.4531521
        %v4654 = vadd.f32 %v4622, -1.4531521
        %v4655 = vadd.f32 %v4623, -1.4531521
        %v4656 = vadd.f32 %v4624, -1.4531521
        %v4657 = vadd.f32 %v4625, -1.4531521
        %v4658 = vmul.f32 %v4626, %v4562
        %v4659 = vmul.f32 %v4627, %v4563
        %v4660 = vmul.f32 %v4628, %v4564
        %v4661 = vmul.f32 %v4629, %v4565
        %v4662 = vmul.f32 %v4630, %v4566
        %v4663 = vmul.f32 %v4631, %v4567
        %v4664 = vmul.f32 %v4632, %v4568
        %v4665 = vmul.f32 %v4633, %v4569
        %v4666 = vmul.f32 %v4634, %v4570
        %v4667 = vmul.f32 %v4635, %v4571
        %v4668 = vmul.f32 %v4636, %v4572
        %v4669 = vmul.f32 %v4637, %v4573
        %v4670 = vmul.f32 %v4638, %v4574
        %v4671 = vmul.f32 %v4639, %v4575
        %v4672 = vmul.f32 %v4640, %v4576
        %v4673 = vmul.f32 %v4641, %v4577
        %v4674 = vmul.f32 %v4642, %v4578
        %v4675 = vmul.f32 %v4643, %v4579
        %v4676 = vmul.f32 %v4644, %v4580
        %v4677 = vmul.f32 %v4645, %v4581
        %v4678 = vmul.f32 %v4646, %v4582
        %v4679 = vmul.f32 %v4647, %v4583
        %v4680 = vmul.f32 %v4648, %v4584
        %v4681 = vmul.f32 %v4649, %v4585
        %v4682 = vmul.f32 %v4650, %v4586
        %v4683 = vmul.f32 %v4651, %v4587
        %v4684 = vmul.f32 %v4652, %v4588
        %v4685 = vmul.f32 %v4653, %v4589
        %v4686 = vmul.f32 %v4654, %v4590
        %v4687 = vmul.f32 %v4655, %v4591
        %v4688 = vmul.f32 %v4656, %v4592
        %v4689 = vmul.f32 %v4657, %v4593
        %v4690 = vadd.f32 %v4658, 1.4214138
        %v4691 = vadd.f32 %v4659, 1.4214138
        %v4692 = vadd.f32 %v4660, 1.4214138
        %v4693 = vadd.f32 %v4661, 1.4214138
        %v4694 = vadd.f32 %v4662, 1.4214138
        %v4695 = vadd.f32 %v4663, 1.4214138
        %v4696 = vadd.f32 %v4664, 1.4214138
        %v4697 = vadd.f32 %v4665, 1.4214138
        %v4698 = vadd.f32 %v4666, 1.4214138
        %v4699 = vadd.f32 %v4667, 1.4214138
        %v4700 = vadd.f32 %v4668, 1.4214138
        %v4701 = vadd.f32 %v4669, 1.4214138
        %v4702 = vadd.f32 %v4670, 1.4214138
        %v4703 = vadd.f32 %v4671, 1.4214138
        %v4704 = vadd.f32 %v4672, 1.4214138
        %v4705 = vadd.f32 %v4673, 1.4214138
        %v4706 = vadd.f32 %v4674, 1.4214138
        %v4707 = vadd.f32 %v4675, 1.4214138
        %v4708 = vadd.f32 %v4676, 1.4214138
        %v4709 = vadd.f32 %v4677, 1.4214138
        %v4710 = vadd.f32 %v4678, 1.4214138
        %v4711 = vadd.f32 %v4679, 1.4214138
        %v4712 = vadd.f32 %v4680, 1.4214138
        %v4713 = vadd.f32 %v4681, 1.4214138
        %v4714 = vadd.f32 %v4682, 1.4214138
        %v4715 = vadd.f32 %v4683, 1.4214138
        %v4716 = vadd.f32 %v4684, 1.4214138
        %v4717 = vadd.f32 %v4685, 1.4214138
        %v4718 = vadd.f32 %v4686, 1.4214138
        %v4719 = vadd.f32 %v4687, 1.4214138
        %v4720 = vadd.f32 %v4688, 1.4214138
        %v4721 = vadd.f32 %v4689, 1.4214138
        %v4722 = vmul.f32 %v4690, %v4562
        %v4723 = vmul.f32 %v4691, %v4563
        %v4724 = vmul.f32 %v4692, %v4564
        %v4725 = vmul.f32 %v4693, %v4565
        %v4726 = vmul.f32 %v4694, %v4566
        %v4727 = vmul.f32 %v4695, %v4567
        %v4728 = vmul.f32 %v4696, %v4568
        %v4729 = vmul.f32 %v4697, %v4569
        %v4730 = vmul.f32 %v4698, %v4570
        %v4731 = vmul.f32 %v4699, %v4571
        %v4732 = vmul.f32 %v4700, %v4572
        %v4733 = vmul.f32 %v4701, %v4573
        %v4734 = vmul.f32 %v4702, %v4574
        %v4735 = vmul.f32 %v4703, %v4575
        %v4736 = vmul.f32 %v4704, %v4576
        %v4737 = vmul.f32 %v4705, %v4577
        %v4738 = vmul.f32 %v4706, %v4578
        %v4739 = vmul.f32 %v4707, %v4579
        %v4740 = vmul.f32 %v4708, %v4580
        %v4741 = vmul.f32 %v4709, %v4581
        %v4742 = vmul.f32 %v4710, %v4582
        %v4743 = vmul.f32 %v4711, %v4583
        %v4744 = vmul.f32 %v4712, %v4584
        %v4745 = vmul.f32 %v4713, %v4585
        %v4746 = vmul.f32 %v4714, %v4586
        %v4747 = vmul.f32 %v4715, %v4587
        %v4748 = vmul.f32 %v4716, %v4588
        %v4749 = vmul.f32 %v4717, %v4589
        %v4750 = vmul.f32 %v4718, %v4590
        %v4751 = vmul.f32 %v4719, %v4591
        %v4752 = vmul.f32 %v4720, %v4592
        %v4753 = vmul.f32 %v4721, %v4593
        %v4754 = vadd.f32 %v4722, -0.28449672
        %v4755 = vadd.f32 %v4723, -0.28449672
        %v4756 = vadd.f32 %v4724, -0.28449672
        %v4757 = vadd.f32 %v4725, -0.28449672
        %v4758 = vadd.f32 %v4726, -0.28449672
        %v4759 = vadd.f32 %v4727, -0.28449672
        %v4760 = vadd.f32 %v4728, -0.28449672
        %v4761 = vadd.f32 %v4729, -0.28449672
        %v4762 = vadd.f32 %v4730, -0.28449672
        %v4763 = vadd.f32 %v4731, -0.28449672
        %v4764 = vadd.f32 %v4732, -0.28449672
        %v4765 = vadd.f32 %v4733, -0.28449672
        %v4766 = vadd.f32 %v4734, -0.28449672
        %v4767 = vadd.f32 %v4735, -0.28449672
        %v4768 = vadd.f32 %v4736, -0.28449672
        %v4769 = vadd.f32 %v4737, -0.28449672
        %v4770 = vadd.f32 %v4738, -0.28449672
        %v4771 = vadd.f32 %v4739, -0.28449672
        %v4772 = vadd.f32 %v4740, -0.28449672
        %v4773 = vadd.f32 %v4741, -0.28449672
        %v4774 = vadd.f32 %v4742, -0.28449672
        %v4775 = vadd.f32 %v4743, -0.28449672
        %v4776 = vadd.f32 %v4744, -0.28449672
        %v4777 = vadd.f32 %v4745, -0.28449672
        %v4778 = vadd.f32 %v4746, -0.28449672
        %v4779 = vadd.f32 %v4747, -0.28449672
        %v4780 = vadd.f32 %v4748, -0.28449672
        %v4781 = vadd.f32 %v4749, -0.28449672
        %v4782 = vadd.f32 %v4750, -0.28449672
        %v4783 = vadd.f32 %v4751, -0.28449672
        %v4784 = vadd.f32 %v4752, -0.28449672
        %v4785 = vadd.f32 %v4753, -0.28449672
        %v4786 = vmul.f32 %v4754, %v4562
        %v4787 = vmul.f32 %v4755, %v4563
        %v4788 = vmul.f32 %v4756, %v4564
        %v4789 = vmul.f32 %v4757, %v4565
        %v4790 = vmul.f32 %v4758, %v4566
        %v4791 = vmul.f32 %v4759, %v4567
        %v4792 = vmul.f32 %v4760, %v4568
        %v4793 = vmul.f32 %v4761, %v4569
        %v4794 = vmul.f32 %v4762, %v4570
        %v4795 = vmul.f32 %v4763, %v4571
        %v4796 = vmul.f32 %v4764, %v4572
        %v4797 = vmul.f32 %v4765, %v4573
        %v4798 = vmul.f32 %v4766, %v4574
        %v4799 = vmul.f32 %v4767, %v4575
        %v4800 = vmul.f32 %v4768, %v4576
        %v4801 = vmul.f32 %v4769, %v4577
        %v4802 = vmul.f32 %v4770, %v4578
        %v4803 = vmul.f32 %v4771, %v4579
        %v4804 = vmul.f32 %v4772, %v4580
        %v4805 = vmul.f32 %v4773, %v4581
        %v4806 = vmul.f32 %v4774, %v4582
        %v4807 = vmul.f32 %v4775, %v4583
        %v4808 = vmul.f32 %v4776, %v4584
        %v4809 = vmul.f32 %v4777, %v4585
        %v4810 = vmul.f32 %v4778, %v4586
        %v4811 = vmul.f32 %v4779, %v4587
        %v4812 = vmul.f32 %v4780, %v4588
        %v4813 = vmul.f32 %v4781, %v4589
        %v4814 = vmul.f32 %v4782, %v4590
        %v4815 = vmul.f32 %v4783, %v4591
        %v4816 = vmul.f32 %v4784, %v4592
        %v4817 = vmul.f32 %v4785, %v4593
        %v4818 = vadd.f32 %v4786, 0.2548296
        %v4819 = vadd.f32 %v4787, 0.2548296
        %v4820 = vadd.f32 %v4788, 0.2548296
        %v4821 = vadd.f32 %v4789, 0.2548296
        %v4822 = vadd.f32 %v4790, 0.2548296
        %v4823 = vadd.f32 %v4791, 0.2548296
        %v4824 = vadd.f32 %v4792, 0.2548296
        %v4825 = vadd.f32 %v4793, 0.2548296
        %v4826 = vadd.f32 %v4794, 0.2548296
        %v4827 = vadd.f32 %v4795, 0.2548296
        %v4828 = vadd.f32 %v4796, 0.2548296
        %v4829 = vadd.f32 %v4797, 0.2548296
        %v4830 = vadd.f32 %v4798, 0.2548296
        %v4831 = vadd.f32 %v4799, 0.2548296
        %v4832 = vadd.f32 %v4800, 0.2548296
        %v4833 = vadd.f32 %v4801, 0.2548296
        %v4834 = vadd.f32 %v4802, 0.2548296
        %v4835 = vadd.f32 %v4803, 0.2548296
        %v4836 = vadd.f32 %v4804, 0.2548296
        %v4837 = vadd.f32 %v4805, 0.2548296
        %v4838 = vadd.f32 %v4806, 0.2548296
        %v4839 = vadd.f32 %v4807, 0.2548296
        %v4840 = vadd.f32 %v4808, 0.2548296
        %v4841 = vadd.f32 %v4809, 0.2548296
        %v4842 = vadd.f32 %v4810, 0.2548296
        %v4843 = vadd.f32 %v4811, 0.2548296
        %v4844 = vadd.f32 %v4812, 0.2548296
        %v4845 = vadd.f32 %v4813, 0.2548296
        %v4846 = vadd.f32 %v4814, 0.2548296
        %v4847 = vadd.f32 %v4815, 0.2548296
        %v4848 = vadd.f32 %v4816, 0.2548296
        %v4849 = vadd.f32 %v4817, 0.2548296
        %v4850 = vmul.f32 %v4818, %v4562
        %v4851 = vmul.f32 %v4819, %v4563
        %v4852 = vmul.f32 %v4820, %v4564
        %v4853 = vmul.f32 %v4821, %v4565
        %v4854 = vmul.f32 %v4822, %v4566
        %v4855 = vmul.f32 %v4823, %v4567
        %v4856 = vmul.f32 %v4824, %v4568
        %v4857 = vmul.f32 %v4825, %v4569
        %v4858 = vmul.f32 %v4826, %v4570
        %v4859 = vmul.f32 %v4827, %v4571
        %v4860 = vmul.f32 %v4828, %v4572
        %v4861 = vmul.f32 %v4829, %v4573
        %v4862 = vmul.f32 %v4830, %v4574
        %v4863 = vmul.f32 %v4831, %v4575
        %v4864 = vmul.f32 %v4832, %v4576
        %v4865 = vmul.f32 %v4833, %v4577
        %v4866 = vmul.f32 %v4834, %v4578
        %v4867 = vmul.f32 %v4835, %v4579
        %v4868 = vmul.f32 %v4836, %v4580
        %v4869 = vmul.f32 %v4837, %v4581
        %v4870 = vmul.f32 %v4838, %v4582
        %v4871 = vmul.f32 %v4839, %v4583
        %v4872 = vmul.f32 %v4840, %v4584
        %v4873 = vmul.f32 %v4841, %v4585
        %v4874 = vmul.f32 %v4842, %v4586
        %v4875 = vmul.f32 %v4843, %v4587
        %v4876 = vmul.f32 %v4844, %v4588
        %v4877 = vmul.f32 %v4845, %v4589
        %v4878 = vmul.f32 %v4846, %v4590
        %v4879 = vmul.f32 %v4847, %v4591
        %v4880 = vmul.f32 %v4848, %v4592
        %v4881 = vmul.f32 %v4849, %v4593
        %v4882 = vsub.f32 0.0, %v4466
        %v4883 = vsub.f32 0.0, %v4467
        %v4884 = vsub.f32 0.0, %v4468
        %v4885 = vsub.f32 0.0, %v4469
        %v4886 = vsub.f32 0.0, %v4470
        %v4887 = vsub.f32 0.0, %v4471
        %v4888 = vsub.f32 0.0, %v4472
        %v4889 = vsub.f32 0.0, %v4473
        %v4890 = vsub.f32 0.0, %v4474
        %v4891 = vsub.f32 0.0, %v4475
        %v4892 = vsub.f32 0.0, %v4476
        %v4893 = vsub.f32 0.0, %v4477
        %v4894 = vsub.f32 0.0, %v4478
        %v4895 = vsub.f32 0.0, %v4479
        %v4896 = vsub.f32 0.0, %v4480
        %v4897 = vsub.f32 0.0, %v4481
        %v4898 = vsub.f32 0.0, %v4482
        %v4899 = vsub.f32 0.0, %v4483
        %v4900 = vsub.f32 0.0, %v4484
        %v4901 = vsub.f32 0.0, %v4485
        %v4902 = vsub.f32 0.0, %v4486
        %v4903 = vsub.f32 0.0, %v4487
        %v4904 = vsub.f32 0.0, %v4488
        %v4905 = vsub.f32 0.0, %v4489
        %v4906 = vsub.f32 0.0, %v4490
        %v4907 = vsub.f32 0.0, %v4491
        %v4908 = vsub.f32 0.0, %v4492
        %v4909 = vsub.f32 0.0, %v4493
        %v4910 = vsub.f32 0.0, %v4494
        %v4911 = vsub.f32 0.0, %v4495
        %v4912 = vsub.f32 0.0, %v4496
        %v4913 = vsub.f32 0.0, %v4497
        %v4914 = vmul.f32 %v4882, %v4466
        %v4915 = vmul.f32 %v4883, %v4467
        %v4916 = vmul.f32 %v4884, %v4468
        %v4917 = vmul.f32 %v4885, %v4469
        %v4918 = vmul.f32 %v4886, %v4470
        %v4919 = vmul.f32 %v4887, %v4471
        %v4920 = vmul.f32 %v4888, %v4472
        %v4921 = vmul.f32 %v4889, %v4473
        %v4922 = vmul.f32 %v4890, %v4474
        %v4923 = vmul.f32 %v4891, %v4475
        %v4924 = vmul.f32 %v4892, %v4476
        %v4925 = vmul.f32 %v4893, %v4477
        %v4926 = vmul.f32 %v4894, %v4478
        %v4927 = vmul.f32 %v4895, %v4479
        %v4928 = vmul.f32 %v4896, %v4480
        %v4929 = vmul.f32 %v4897, %v4481
        %v4930 = vmul.f32 %v4898, %v4482
        %v4931 = vmul.f32 %v4899, %v4483
        %v4932 = vmul.f32 %v4900, %v4484
        %v4933 = vmul.f32 %v4901, %v4485
        %v4934 = vmul.f32 %v4902, %v4486
        %v4935 = vmul.f32 %v4903, %v4487
        %v4936 = vmul.f32 %v4904, %v4488
        %v4937 = vmul.f32 %v4905, %v4489
        %v4938 = vmul.f32 %v4906, %v4490
        %v4939 = vmul.f32 %v4907, %v4491
        %v4940 = vmul.f32 %v4908, %v4492
        %v4941 = vmul.f32 %v4909, %v4493
        %v4942 = vmul.f32 %v4910, %v4494
        %v4943 = vmul.f32 %v4911, %v4495
        %v4944 = vmul.f32 %v4912, %v4496
        %v4945 = vmul.f32 %v4913, %v4497
        %v4946 = vmul.f32 %v4914, 1.442695
        %v4947 = vpow.pop %v4946
        %v4948 = vmul.f32 %v4915, 1.442695
        %v4949 = vpow.pop %v4948
        %v4950 = vmul.f32 %v4916, 1.442695
        %v4951 = vpow.pop %v4950
        %v4952 = vmul.f32 %v4917, 1.442695
        %v4953 = vpow.pop %v4952
        %v4954 = vmul.f32 %v4918, 1.442695
        %v4955 = vpow.pop %v4954
        %v4956 = vmul.f32 %v4919, 1.442695
        %v4957 = vpow.pop %v4956
        %v4958 = vmul.f32 %v4920, 1.442695
        %v4959 = vpow.pop %v4958
        %v4960 = vmul.f32 %v4921, 1.442695
        %v4961 = vpow.pop %v4960
        %v4962 = vmul.f32 %v4922, 1.442695
        %v4963 = vpow.pop %v4962
        %v4964 = vmul.f32 %v4923, 1.442695
        %v4965 = vpow.pop %v4964
        %v4966 = vmul.f32 %v4924, 1.442695
        %v4967 = vpow.pop %v4966
        %v4968 = vmul.f32 %v4925, 1.442695
        %v4969 = vpow.pop %v4968
        %v4970 = vmul.f32 %v4926, 1.442695
        %v4971 = vpow.pop %v4970
        %v4972 = vmul.f32 %v4927, 1.442695
        %v4973 = vpow.pop %v4972
        %v4974 = vmul.f32 %v4928, 1.442695
        %v4975 = vpow.pop %v4974
        %v4976 = vmul.f32 %v4929, 1.442695
        %v4977 = vpow.pop %v4976
        %v4978 = vmul.f32 %v4930, 1.442695
        %v4979 = vpow.pop %v4978
        %v4980 = vmul.f32 %v4931, 1.442695
        %v4981 = vpow.pop %v4980
        %v4982 = vmul.f32 %v4932, 1.442695
        %v4983 = vpow.pop %v4982
        %v4984 = vmul.f32 %v4933, 1.442695
        %v4985 = vpow.pop %v4984
        %v4986 = vmul.f32 %v4934, 1.442695
        %v4987 = vpow.pop %v4986
        %v4988 = vmul.f32 %v4935, 1.442695
        %v4989 = vpow.pop %v4988
        %v4990 = vmul.f32 %v4936, 1.442695
        %v4991 = vpow.pop %v4990
        %v4992 = vmul.f32 %v4937, 1.442695
        %v4993 = vpow.pop %v4992
        %v4994 = vmul.f32 %v4938, 1.442695
        %v4995 = vpow.pop %v4994
        %v4996 = vmul.f32 %v4939, 1.442695
        %v4997 = vpow.pop %v4996
        %v4998 = vmul.f32 %v4940, 1.442695
        %v4999 = vpow.pop %v4998
        %v5000 = vmul.f32 %v4941, 1.442695
        %v5001 = vpow.pop %v5000
        %v5002 = vmul.f32 %v4942, 1.442695
        %v5003 = vpow.pop %v5002
        %v5004 = vmul.f32 %v4943, 1.442695
        %v5005 = vpow.pop %v5004
        %v5006 = vmul.f32 %v4944, 1.442695
        %v5007 = vpow.pop %v5006
        %v5008 = vmul.f32 %v4945, 1.442695
        %v5009 = vpow.pop %v5008
        %v5010 = vmul.f32 %v4850, %v4947
        %v5011 = vmul.f32 %v4851, %v4949
        %v5012 = vmul.f32 %v4852, %v4951
        %v5013 = vmul.f32 %v4853, %v4953
        %v5014 = vmul.f32 %v4854, %v4955
        %v5015 = vmul.f32 %v4855, %v4957
        %v5016 = vmul.f32 %v4856, %v4959
        %v5017 = vmul.f32 %v4857, %v4961
        %v5018 = vmul.f32 %v4858, %v4963
        %v5019 = vmul.f32 %v4859, %v4965
        %v5020 = vmul.f32 %v4860, %v4967
        %v5021 = vmul.f32 %v4861, %v4969
        %v5022 = vmul.f32 %v4862, %v4971
        %v5023 = vmul.f32 %v4863, %v4973
        %v5024 = vmul.f32 %v4864, %v4975
        %v5025 = vmul.f32 %v4865, %v4977
        %v5026 = vmul.f32 %v4866, %v4979
        %v5027 = vmul.f32 %v4867, %v4981
        %v5028 = vmul.f32 %v4868, %v4983
        %v5029 = vmul.f32 %v4869, %v4985
        %v5030 = vmul.f32 %v4870, %v4987
        %v5031 = vmul.f32 %v4871, %v4989
        %v5032 = vmul.f32 %v4872, %v4991
        %v5033 = vmul.f32 %v4873, %v4993
        %v5034 = vmul.f32 %v4874, %v4995
        %v5035 = vmul.f32 %v4875, %v4997
        %v5036 = vmul.f32 %v4876, %v4999
        %v5037 = vmul.f32 %v4877, %v5001
        %v5038 = vmul.f32 %v4878, %v5003
        %v5039 = vmul.f32 %v4879, %v5005
        %v5040 = vmul.f32 %v4880, %v5007
        %v5041 = vmul.f32 %v4881, %v5009
        %v5042 = vsub.f32 1.0, %v5010
        %v5043 = vsub.f32 1.0, %v5011
        %v5044 = vsub.f32 1.0, %v5012
        %v5045 = vsub.f32 1.0, %v5013
        %v5046 = vsub.f32 1.0, %v5014
        %v5047 = vsub.f32 1.0, %v5015
        %v5048 = vsub.f32 1.0, %v5016
        %v5049 = vsub.f32 1.0, %v5017
        %v5050 = vsub.f32 1.0, %v5018
        %v5051 = vsub.f32 1.0, %v5019
        %v5052 = vsub.f32 1.0, %v5020
        %v5053 = vsub.f32 1.0, %v5021
        %v5054 = vsub.f32 1.0, %v5022
        %v5055 = vsub.f32 1.0, %v5023
        %v5056 = vsub.f32 1.0, %v5024
        %v5057 = vsub.f32 1.0, %v5025
        %v5058 = vsub.f32 1.0, %v5026
        %v5059 = vsub.f32 1.0, %v5027
        %v5060 = vsub.f32 1.0, %v5028
        %v5061 = vsub.f32 1.0, %v5029
        %v5062 = vsub.f32 1.0, %v5030
        %v5063 = vsub.f32 1.0, %v5031
        %v5064 = vsub.f32 1.0, %v5032
        %v5065 = vsub.f32 1.0, %v5033
        %v5066 = vsub.f32 1.0, %v5034
        %v5067 = vsub.f32 1.0, %v5035
        %v5068 = vsub.f32 1.0, %v5036
        %v5069 = vsub.f32 1.0, %v5037
        %v5070 = vsub.f32 1.0, %v5038
        %v5071 = vsub.f32 1.0, %v5039
        %v5072 = vsub.f32 1.0, %v5040
        %v5073 = vsub.f32 1.0, %v5041
        %vm5074 = vcmp.ge.f32.partialorder %v4434, 0.0
        %vm5075 = vcmp.ge.f32.partialorder %v4435, 0.0
        %vm5076 = vcmp.ge.f32.partialorder %v4436, 0.0
        %vm5077 = vcmp.ge.f32.partialorder %v4437, 0.0
        %vm5078 = vcmp.ge.f32.partialorder %v4438, 0.0
        %vm5079 = vcmp.ge.f32.partialorder %v4439, 0.0
        %vm5080 = vcmp.ge.f32.partialorder %v4440, 0.0
        %vm5081 = vcmp.ge.f32.partialorder %v4441, 0.0
        %vm5082 = vcmp.ge.f32.partialorder %v4442, 0.0
        %vm5083 = vcmp.ge.f32.partialorder %v4443, 0.0
        %vm5084 = vcmp.ge.f32.partialorder %v4444, 0.0
        %vm5085 = vcmp.ge.f32.partialorder %v4445, 0.0
        %vm5086 = vcmp.ge.f32.partialorder %v4446, 0.0
        %vm5087 = vcmp.ge.f32.partialorder %v4447, 0.0
        %vm5088 = vcmp.ge.f32.partialorder %v4448, 0.0
        %vm5089 = vcmp.ge.f32.partialorder %v4449, 0.0
        %vm5090 = vcmp.ge.f32.partialorder %v4450, 0.0
        %vm5091 = vcmp.ge.f32.partialorder %v4451, 0.0
        %vm5092 = vcmp.ge.f32.partialorder %v4452, 0.0
        %vm5093 = vcmp.ge.f32.partialorder %v4453, 0.0
        %vm5094 = vcmp.ge.f32.partialorder %v4454, 0.0
        %vm5095 = vcmp.ge.f32.partialorder %v4455, 0.0
        %vm5096 = vcmp.ge.f32.partialorder %v4456, 0.0
        %vm5097 = vcmp.ge.f32.partialorder %v4457, 0.0
        %vm5098 = vcmp.ge.f32.partialorder %v4458, 0.0
        %vm5099 = vcmp.ge.f32.partialorder %v4459, 0.0
        %vm5100 = vcmp.ge.f32.partialorder %v4460, 0.0
        %vm5101 = vcmp.ge.f32.partialorder %v4461, 0.0
        %vm5102 = vcmp.ge.f32.partialorder %v4462, 0.0
        %vm5103 = vcmp.ge.f32.partialorder %v4463, 0.0
        %vm5104 = vcmp.ge.f32.partialorder %v4464, 0.0
        %vm5105 = vcmp.ge.f32.partialorder %v4465, 0.0
        %v5106 = vsub.f32 0.0, %v5042
        %v5107 = vsub.f32 0.0, %v5043
        %v5108 = vsub.f32 0.0, %v5044
        %v5109 = vsub.f32 0.0, %v5045
        %v5110 = vsub.f32 0.0, %v5046
        %v5111 = vsub.f32 0.0, %v5047
        %v5112 = vsub.f32 0.0, %v5048
        %v5113 = vsub.f32 0.0, %v5049
        %v5114 = vsub.f32 0.0, %v5050
        %v5115 = vsub.f32 0.0, %v5051
        %v5116 = vsub.f32 0.0, %v5052
        %v5117 = vsub.f32 0.0, %v5053
        %v5118 = vsub.f32 0.0, %v5054
        %v5119 = vsub.f32 0.0, %v5055
        %v5120 = vsub.f32 0.0, %v5056
        %v5121 = vsub.f32 0.0, %v5057
        %v5122 = vsub.f32 0.0, %v5058
        %v5123 = vsub.f32 0.0, %v5059
        %v5124 = vsub.f32 0.0, %v5060
        %v5125 = vsub.f32 0.0, %v5061
        %v5126 = vsub.f32 0.0, %v5062
        %v5127 = vsub.f32 0.0, %v5063
        %v5128 = vsub.f32 0.0, %v5064
        %v5129 = vsub.f32 0.0, %v5065
        %v5130 = vsub.f32 0.0, %v5066
        %v5131 = vsub.f32 0.0, %v5067
        %v5132 = vsub.f32 0.0, %v5068
        %v5133 = vsub.f32 0.0, %v5069
        %v5134 = vsub.f32 0.0, %v5070
        %v5135 = vsub.f32 0.0, %v5071
        %v5136 = vsub.f32 0.0, %v5072
        %v5137 = vsub.f32 0.0, %v5073
        %v5138 = vsel %vm5074, %v5042, %v5106
        %v5139 = vsel %vm5075, %v5043, %v5107
        %v5140 = vsel %vm5076, %v5044, %v5108
        %v5141 = vsel %vm5077, %v5045, %v5109
        %v5142 = vsel %vm5078, %v5046, %v5110
        %v5143 = vsel %vm5079, %v5047, %v5111
        %v5144 = vsel %vm5080, %v5048, %v5112
        %v5145 = vsel %vm5081, %v5049, %v5113
        %v5146 = vsel %vm5082, %v5050, %v5114
        %v5147 = vsel %vm5083, %v5051, %v5115
        %v5148 = vsel %vm5084, %v5052, %v5116
        %v5149 = vsel %vm5085, %v5053, %v5117
        %v5150 = vsel %vm5086, %v5054, %v5118
        %v5151 = vsel %vm5087, %v5055, %v5119
        %v5152 = vsel %vm5088, %v5056, %v5120
        %v5153 = vsel %vm5089, %v5057, %v5121
        %v5154 = vsel %vm5090, %v5058, %v5122
        %v5155 = vsel %vm5091, %v5059, %v5123
        %v5156 = vsel %vm5092, %v5060, %v5124
        %v5157 = vsel %vm5093, %v5061, %v5125
        %v5158 = vsel %vm5094, %v5062, %v5126
        %v5159 = vsel %vm5095, %v5063, %v5127
        %v5160 = vsel %vm5096, %v5064, %v5128
        %v5161 = vsel %vm5097, %v5065, %v5129
        %v5162 = vsel %vm5098, %v5066, %v5130
        %v5163 = vsel %vm5099, %v5067, %v5131
        %v5164 = vsel %vm5100, %v5068, %v5132
        %v5165 = vsel %vm5101, %v5069, %v5133
        %v5166 = vsel %vm5102, %v5070, %v5134
        %v5167 = vsel %vm5103, %v5071, %v5135
        %v5168 = vsel %vm5104, %v5072, %v5136
        %v5169 = vsel %vm5105, %v5073, %v5137
        %v5170 = vadd.f32 %v5138, 1.0
        %v5171 = vadd.f32 %v5139, 1.0
        %v5172 = vadd.f32 %v5140, 1.0
        %v5173 = vadd.f32 %v5141, 1.0
        %v5174 = vadd.f32 %v5142, 1.0
        %v5175 = vadd.f32 %v5143, 1.0
        %v5176 = vadd.f32 %v5144, 1.0
        %v5177 = vadd.f32 %v5145, 1.0
        %v5178 = vadd.f32 %v5146, 1.0
        %v5179 = vadd.f32 %v5147, 1.0
        %v5180 = vadd.f32 %v5148, 1.0
        %v5181 = vadd.f32 %v5149, 1.0
        %v5182 = vadd.f32 %v5150, 1.0
        %v5183 = vadd.f32 %v5151, 1.0
        %v5184 = vadd.f32 %v5152, 1.0
        %v5185 = vadd.f32 %v5153, 1.0
        %v5186 = vadd.f32 %v5154, 1.0
        %v5187 = vadd.f32 %v5155, 1.0
        %v5188 = vadd.f32 %v5156, 1.0
        %v5189 = vadd.f32 %v5157, 1.0
        %v5190 = vadd.f32 %v5158, 1.0
        %v5191 = vadd.f32 %v5159, 1.0
        %v5192 = vadd.f32 %v5160, 1.0
        %v5193 = vadd.f32 %v5161, 1.0
        %v5194 = vadd.f32 %v5162, 1.0
        %v5195 = vadd.f32 %v5163, 1.0
        %v5196 = vadd.f32 %v5164, 1.0
        %v5197 = vadd.f32 %v5165, 1.0
        %v5198 = vadd.f32 %v5166, 1.0
        %v5199 = vadd.f32 %v5167, 1.0
        %v5200 = vadd.f32 %v5168, 1.0
        %v5201 = vadd.f32 %v5169, 1.0
        %v5202 = vmul.f32 %v4401, %v5170
        %v5203 = vmul.f32 %v4402, %v5171
        %v5204 = vmul.f32 %v4403, %v5172
        %v5205 = vmul.f32 %v4404, %v5173
        %v5206 = vmul.f32 %v4405, %v5174
        %v5207 = vmul.f32 %v4406, %v5175
        %v5208 = vmul.f32 %v4407, %v5176
        %v5209 = vmul.f32 %v4408, %v5177
        %v5210 = vmul.f32 %v4409, %v5178
        %v5211 = vmul.f32 %v4410, %v5179
        %v5212 = vmul.f32 %v4411, %v5180
        %v5213 = vmul.f32 %v4412, %v5181
        %v5214 = vmul.f32 %v4413, %v5182
        %v5215 = vmul.f32 %v4414, %v5183
        %v5216 = vmul.f32 %v4415, %v5184
        %v5217 = vmul.f32 %v4416, %v5185
        %v5218 = vmul.f32 %v4417, %v5186
        %v5219 = vmul.f32 %v4418, %v5187
        %v5220 = vmul.f32 %v4419, %v5188
        %v5221 = vmul.f32 %v4420, %v5189
        %v5222 = vmul.f32 %v4421, %v5190
        %v5223 = vmul.f32 %v4422, %v5191
        %v5224 = vmul.f32 %v4423, %v5192
        %v5225 = vmul.f32 %v4424, %v5193
        %v5226 = vmul.f32 %v4425, %v5194
        %v5227 = vmul.f32 %v4426, %v5195
        %v5228 = vmul.f32 %v4427, %v5196
        %v5229 = vmul.f32 %v4428, %v5197
        %v5230 = vmul.f32 %v4429, %v5198
        %v5231 = vmul.f32 %v4430, %v5199
        %v5232 = vmul.f32 %v4431, %v5200
        %v5233 = vmul.f32 %v4432, %v5201
        %v5234 = vpack.c.bf16 %v5203, %v5202
        %v5235 = vpack.c.bf16 %v5205, %v5204
        %v5236 = vpack.c.bf16 %v5207, %v5206
        %v5237 = vpack.c.bf16 %v5209, %v5208
        %v5238 = vpack.c.bf16 %v5211, %v5210
        %v5239 = vpack.c.bf16 %v5213, %v5212
        %v5240 = vpack.c.bf16 %v5215, %v5214
        %v5241 = vpack.c.bf16 %v5217, %v5216
        %v5242 = vpack.c.bf16 %v5219, %v5218
        %v5243 = vpack.c.bf16 %v5221, %v5220
        %v5244 = vpack.c.bf16 %v5223, %v5222
        %v5245 = vpack.c.bf16 %v5225, %v5224
        %v5246 = vpack.c.bf16 %v5227, %v5226
        %v5247 = vpack.c.bf16 %v5229, %v5228
        %v5248 = vpack.c.bf16 %v5231, %v5230
        %v5249 = vpack.c.bf16 %v5233, %v5232
        %v5250 = vld [vmem:[#allocation10] sm:$0xf]
        %v5251 = vld [vmem:[#allocation10 + $0x4] sm:$0xf]
        %v5252 = vld [vmem:[#allocation10 + $0x8] sm:$0xf]
        %v5253 = vld [vmem:[#allocation10 + $0xc] sm:$0xf]
        %v5254 = vld [vmem:[#allocation10 + $0x10] sm:$0xf]
        %v5255 = vld [vmem:[#allocation10 + $0x14] sm:$0xf]
        %v5256 = vld [vmem:[#allocation10 + $0x18] sm:$0xf]
        %v5257 = vld [vmem:[#allocation10 + $0x1c] sm:$0xf]
        %v5258 = vld [vmem:[#allocation10 + $0x20] sm:$0xf]
        %v5259 = vld [vmem:[#allocation10 + $0x24] sm:$0xf]
        %v5260 = vld [vmem:[#allocation10 + $0x28] sm:$0xf]
        %v5261 = vld [vmem:[#allocation10 + $0x2c] sm:$0xf]
        %v5262 = vld [vmem:[#allocation10 + $0x30] sm:$0xf]
        %v5263 = vld [vmem:[#allocation10 + $0x34] sm:$0xf]
        %v5264 = vld [vmem:[#allocation10 + $0x38] sm:$0xf]
        %v5265 = vld [vmem:[#allocation10 + $0x3c] sm:$0xf]
        %v5266 = vld [vmem:[%s6] sm:$0x1]
        %v5268 = vlaneseq
        %v5269 = vshrl.u32 %v5268, 7
        %v5270 = vsub.s32 0, %v5269
        %v5271 = vrot.slane %v5266, %v5270
        %v5289 = vunpack.c.l.b16 %v5250
        %v5290 = vunpack.c.l.b16 %v5251
        %v5291 = vunpack.c.l.b16 %v5252
        %v5292 = vunpack.c.l.b16 %v5253
        %v5293 = vunpack.c.l.b16 %v5254
        %v5294 = vunpack.c.l.b16 %v5255
        %v5295 = vunpack.c.l.b16 %v5256
        %v5296 = vunpack.c.l.b16 %v5257
        %v5297 = vunpack.c.l.b16 %v5258
        %v5298 = vunpack.c.l.b16 %v5259
        %v5299 = vunpack.c.l.b16 %v5260
        %v5300 = vunpack.c.l.b16 %v5261
        %v5301 = vunpack.c.l.b16 %v5262
        %v5302 = vunpack.c.l.b16 %v5263
        %v5303 = vunpack.c.l.b16 %v5264
        %v5304 = vunpack.c.l.b16 %v5265
        %v5305 = vpack.c.b16 %v5290, %v5289
        %v5306 = vpack.c.b16 %v5292, %v5291
        %v5307 = vpack.c.b16 %v5294, %v5293
        %v5308 = vpack.c.b16 %v5296, %v5295
        %v5309 = vpack.c.b16 %v5298, %v5297
        %v5310 = vpack.c.b16 %v5300, %v5299
        %v5311 = vpack.c.b16 %v5302, %v5301
        %v5312 = vpack.c.b16 %v5304, %v5303
        %5321 = vmatprep.subr.bf16.mxu0 0
        %5322 = vmatpush1.bf16.msra.mxu0 %v5305
        %5323 = vmatprep.subr.bf16.mxu0 0
        %5324 = vmatpush1.bf16.msra.mxu0 %v5306
        %5325 = vmatprep.subr.bf16.mxu0 0
        %5326 = vmatpush1.bf16.msra.mxu0 %v5307
        %5327 = vmatprep.subr.bf16.mxu0 0
        %5328 = vmatpush1.bf16.msra.mxu0 %v5308
        %5329 = vmatprep.subr.bf16.mxu0 0
        %5330 = vmatpush1.bf16.msra.mxu0 %v5309
        %5331 = vmatprep.subr.bf16.mxu0 0
        %5332 = vmatpush1.bf16.msra.mxu0 %v5310
        %5333 = vmatprep.subr.bf16.mxu0 0
        %5334 = vmatpush1.bf16.msra.mxu0 %v5311
        %5335 = vmatprep.subr.bf16.mxu0 0
        %5336 = vmatpush1.bf16.msra.mxu0 %v5312
        %5337 = vmatprep.subr.bf16.mxu0 0
        %5338 = vmatpush1.bf16.msra.mxu0 0
        %5339 = vmatprep.subr.bf16.mxu0 0
        %5340 = vmatpush1.bf16.msra.mxu0 0
        %5341 = vmatprep.subr.bf16.mxu0 0
        %5342 = vmatpush1.bf16.msra.mxu0 0
        %5343 = vmatprep.subr.bf16.mxu0 0
        %5344 = vmatpush1.bf16.msra.mxu0 0
        %5345 = vmatprep.subr.bf16.mxu0 0
        %5346 = vmatpush1.bf16.msra.mxu0 0
        %5347 = vmatprep.subr.bf16.mxu0 0
        %5348 = vmatpush1.bf16.msra.mxu0 0
        %5349 = vmatprep.subr.bf16.mxu0 0
        %5350 = vmatpush1.bf16.msra.mxu0 0
        %5351 = vmatprep.subr.bf16.mxu0 0
        %5352 = vmatpush1.bf16.msra.mxu0 0
        %5353 = vmatprep.mubr.bf16.mxu0 0
        %5354 = vmatmul.mubr.bf16.gmra.mrb[0].mxu0 %v5234
        %v5355 = vpop.f32.mrb[0].mxu0
        %v5356 = vadd.f32 %v5271, %v5355
        %v5357 = vpop.f32.mrb[0].mxu0
        %v5358 = vpop.f32.mrb[0].mxu0
        %v5359 = vadd.f32 %v5271, %v5358
        %v5360 = vpop.f32.mrb[0].mxu0
        %5361 = vmatprep.mubr.bf16.mxu0 0
        %5362 = vmatmul.mubr.bf16.gmra.mrb[0].mxu0 %v5235
        %v5363 = vpop.f32.mrb[0].mxu0
        %v5364 = vadd.f32 %v5271, %v5363
        %v5365 = vpop.f32.mrb[0].mxu0
        %v5366 = vpop.f32.mrb[0].mxu0
        %v5367 = vadd.f32 %v5271, %v5366
        %v5368 = vpop.f32.mrb[0].mxu0
        %5369 = vmatprep.mubr.bf16.mxu0 0
        %5370 = vmatmul.mubr.bf16.gmra.mrb[0].mxu0 %v5236
        %v5371 = vpop.f32.mrb[0].mxu0
        %v5372 = vadd.f32 %v5271, %v5371
        %v5373 = vpop.f32.mrb[0].mxu0
        %v5374 = vpop.f32.mrb[0].mxu0
        %v5375 = vadd.f32 %v5271, %v5374
        %v5376 = vpop.f32.mrb[0].mxu0
        %5377 = vmatprep.mubr.bf16.mxu0 0
        %5378 = vmatmul.mubr.bf16.gmra.mrb[0].mxu0 %v5237
        %v5379 = vpop.f32.mrb[0].mxu0
        %v5380 = vadd.f32 %v5271, %v5379
        %v5381 = vpop.f32.mrb[0].mxu0
        %v5382 = vpop.f32.mrb[0].mxu0
        %v5383 = vadd.f32 %v5271, %v5382
        %v5384 = vpop.f32.mrb[0].mxu0
        %5385 = vmatprep.mubr.bf16.mxu0 0
        %5386 = vmatmul.mubr.bf16.gmra.mrb[0].mxu0 %v5238
        %v5387 = vpop.f32.mrb[0].mxu0
        %v5388 = vadd.f32 %v5271, %v5387
        %v5389 = vpop.f32.mrb[0].mxu0
        %v5390 = vpop.f32.mrb[0].mxu0
        %v5391 = vadd.f32 %v5271, %v5390
        %v5392 = vpop.f32.mrb[0].mxu0
        %5393 = vmatprep.mubr.bf16.mxu0 0
        %5394 = vmatmul.mubr.bf16.gmra.mrb[0].mxu0 %v5239
        %v5395 = vpop.f32.mrb[0].mxu0
        %v5396 = vadd.f32 %v5271, %v5395
        %v5397 = vpop.f32.mrb[0].mxu0
        %v5398 = vpop.f32.mrb[0].mxu0
        %v5399 = vadd.f32 %v5271, %v5398
        %v5400 = vpop.f32.mrb[0].mxu0
        %5401 = vmatprep.mubr.bf16.mxu0 0
        %5402 = vmatmul.mubr.bf16.gmra.mrb[0].mxu0 %v5240
        %v5403 = vpop.f32.mrb[0].mxu0
        %v5404 = vadd.f32 %v5271, %v5403
        %v5405 = vpop.f32.mrb[0].mxu0
        %v5406 = vpop.f32.mrb[0].mxu0
        %v5407 = vadd.f32 %v5271, %v5406
        %v5408 = vpop.f32.mrb[0].mxu0
        %5409 = vmatprep.mubr.bf16.mxu0 0
        %5410 = vmatmul.mubr.bf16.gmra.mrb[0].mxu0 %v5241
        %v5411 = vpop.f32.mrb[0].mxu0
        %v5412 = vadd.f32 %v5271, %v5411
        %v5413 = vpop.f32.mrb[0].mxu0
        %v5414 = vpop.f32.mrb[0].mxu0
        %v5415 = vadd.f32 %v5271, %v5414
        %v5416 = vpop.f32.mrb[0].mxu0
        %5417 = vmatprep.mubr.bf16.mxu0 0
        %5418 = vmatmul.mubr.bf16.gmra.mrb[0].mxu0 %v5242
        %v5419 = vpop.f32.mrb[0].mxu0
        %v5420 = vadd.f32 %v5271, %v5419
        %v5421 = vpop.f32.mrb[0].mxu0
        %v5422 = vpop.f32.mrb[0].mxu0
        %v5423 = vadd.f32 %v5271, %v5422
        %v5424 = vpop.f32.mrb[0].mxu0
        %5425 = vmatprep.mubr.bf16.mxu0 0
        %5426 = vmatmul.mubr.bf16.gmra.mrb[0].mxu0 %v5243
        %v5427 = vpop.f32.mrb[0].mxu0
        %v5428 = vadd.f32 %v5271, %v5427
        %v5429 = vpop.f32.mrb[0].mxu0
        %v5430 = vpop.f32.mrb[0].mxu0
        %v5431 = vadd.f32 %v5271, %v5430
        %v5432 = vpop.f32.mrb[0].mxu0
        %5433 = vmatprep.mubr.bf16.mxu0 0
        %5434 = vmatmul.mubr.bf16.gmra.mrb[0].mxu0 %v5244
        %v5435 = vpop.f32.mrb[0].mxu0
        %v5436 = vadd.f32 %v5271, %v5435
        %v5437 = vpop.f32.mrb[0].mxu0
        %v5438 = vpop.f32.mrb[0].mxu0
        %v5439 = vadd.f32 %v5271, %v5438
        %v5440 = vpop.f32.mrb[0].mxu0
        %5441 = vmatprep.mubr.bf16.mxu0 0
        %5442 = vmatmul.mubr.bf16.gmra.mrb[0].mxu0 %v5245
        %v5443 = vpop.f32.mrb[0].mxu0
        %v5444 = vadd.f32 %v5271, %v5443
        %v5445 = vpop.f32.mrb[0].mxu0
        %v5446 = vpop.f32.mrb[0].mxu0
        %v5447 = vadd.f32 %v5271, %v5446
        %v5448 = vpop.f32.mrb[0].mxu0
        %5449 = vmatprep.mubr.bf16.mxu0 0
        %5450 = vmatmul.mubr.bf16.gmra.mrb[0].mxu0 %v5246
        %v5451 = vpop.f32.mrb[0].mxu0
        %v5452 = vadd.f32 %v5271, %v5451
        %v5453 = vpop.f32.mrb[0].mxu0
        %v5454 = vpop.f32.mrb[0].mxu0
        %v5455 = vadd.f32 %v5271, %v5454
        %v5456 = vpop.f32.mrb[0].mxu0
        %5457 = vmatprep.mubr.bf16.mxu0 0
        %5458 = vmatmul.mubr.bf16.gmra.mrb[0].mxu0 %v5247
        %v5459 = vpop.f32.mrb[0].mxu0
        %v5460 = vadd.f32 %v5271, %v5459
        %v5461 = vpop.f32.mrb[0].mxu0
        %v5462 = vpop.f32.mrb[0].mxu0
        %v5463 = vadd.f32 %v5271, %v5462
        %v5464 = vpop.f32.mrb[0].mxu0
        %5465 = vmatprep.mubr.bf16.mxu0 0
        %5466 = vmatmul.mubr.bf16.gmra.mrb[0].mxu0 %v5248
        %v5467 = vpop.f32.mrb[0].mxu0
        %v5468 = vadd.f32 %v5271, %v5467
        %v5469 = vpop.f32.mrb[0].mxu0
        %v5470 = vpop.f32.mrb[0].mxu0
        %v5471 = vadd.f32 %v5271, %v5470
        %v5472 = vpop.f32.mrb[0].mxu0
        %5473 = vmatprep.mubr.bf16.mxu0 0
        %5474 = vmatmul.mubr.bf16.gmra.mrb[0].mxu0 %v5249
        %v5475 = vpop.f32.mrb[0].mxu0
        %v5476 = vadd.f32 %v5271, %v5475
        %v5477 = vpop.f32.mrb[0].mxu0
        %v5478 = vpop.f32.mrb[0].mxu0
        %v5479 = vadd.f32 %v5271, %v5478
        %v5480 = vpop.f32.mrb[0].mxu0
        %5481 = vdwg.mxu0
        %v5482 = vld [vmem:[%s7] sm:$0x1]
        %v5484 = vlaneseq
        %v5485 = vshrl.u32 %v5484, 7
        %v5486 = vsub.s32 0, %v5485
        %v5487 = vrot.slane %v5482, %v5486
        %v5489 = vmul.f32 %v5356, %v5487
        %v5490 = vmul.f32 %v5359, %v5487
        %v5491 = vmul.f32 %v5364, %v5487
        %v5492 = vmul.f32 %v5367, %v5487
        %v5493 = vmul.f32 %v5372, %v5487
        %v5494 = vmul.f32 %v5375, %v5487
        %v5495 = vmul.f32 %v5380, %v5487
        %v5496 = vmul.f32 %v5383, %v5487
        %v5497 = vmul.f32 %v5388, %v5487
        %v5498 = vmul.f32 %v5391, %v5487
        %v5499 = vmul.f32 %v5396, %v5487
        %v5500 = vmul.f32 %v5399, %v5487
        %v5501 = vmul.f32 %v5404, %v5487
        %v5502 = vmul.f32 %v5407, %v5487
        %v5503 = vmul.f32 %v5412, %v5487
        %v5504 = vmul.f32 %v5415, %v5487
        %v5505 = vmul.f32 %v5420, %v5487
        %v5506 = vmul.f32 %v5423, %v5487
        %v5507 = vmul.f32 %v5428, %v5487
        %v5508 = vmul.f32 %v5431, %v5487
        %v5509 = vmul.f32 %v5436, %v5487
        %v5510 = vmul.f32 %v5439, %v5487
        %v5511 = vmul.f32 %v5444, %v5487
        %v5512 = vmul.f32 %v5447, %v5487
        %v5513 = vmul.f32 %v5452, %v5487
        %v5514 = vmul.f32 %v5455, %v5487
        %v5515 = vmul.f32 %v5460, %v5487
        %v5516 = vmul.f32 %v5463, %v5487
        %v5517 = vmul.f32 %v5468, %v5487
        %v5518 = vmul.f32 %v5471, %v5487
        %v5519 = vmul.f32 %v5476, %v5487
        %v5520 = vmul.f32 %v5479, %v5487
        %s5521 = sadd.s32 96, %s393
        %s5522 = scalar_lea.vmem [#allocation2], %s5521
        %v5523 = vld [vmem:[%s5522 + $0x8] sm:$0xff]
        %v5524 = vld [vmem:[%s5522 + $0x10] sm:$0xff]
        %v5525 = vld [vmem:[%s5522 + $0x28] sm:$0xff]
        %v5526 = vld [vmem:[%s5522 + $0x30] sm:$0xff]
        %v5527 = vld [vmem:[%s5522 + $0x48] sm:$0xff]
        %v5528 = vld [vmem:[%s5522 + $0x50] sm:$0xff]
        %v5529 = vld [vmem:[%s5522 + $0x68] sm:$0xff]
        %v5530 = vld [vmem:[%s5522 + $0x70] sm:$0xff]
        %v5531 = vld [vmem:[%s5522 + $0x88] sm:$0xff]
        %v5532 = vld [vmem:[%s5522 + $0x90] sm:$0xff]
        %v5533 = vld [vmem:[%s5522 + $0xa8] sm:$0xff]
        %v5534 = vld [vmem:[%s5522 + $0xb0] sm:$0xff]
        %v5535 = vld [vmem:[%s5522 + $0xc8] sm:$0xff]
        %v5536 = vld [vmem:[%s5522 + $0xd0] sm:$0xff]
        %v5537 = vld [vmem:[%s5522 + $0xe8] sm:$0xff]
        %v5538 = vld [vmem:[%s5522 + $0xf0] sm:$0xff]
        %v5539 = vld [vmem:[%s5522 + $0x108] sm:$0xff]
        %v5540 = vld [vmem:[%s5522 + $0x110] sm:$0xff]
        %v5541 = vld [vmem:[%s5522 + $0x128] sm:$0xff]
        %v5542 = vld [vmem:[%s5522 + $0x130] sm:$0xff]
        %v5543 = vld [vmem:[%s5522 + $0x148] sm:$0xff]
        %v5544 = vld [vmem:[%s5522 + $0x150] sm:$0xff]
        %v5545 = vld [vmem:[%s5522 + $0x168] sm:$0xff]
        %v5546 = vld [vmem:[%s5522 + $0x170] sm:$0xff]
        %v5547 = vld [vmem:[%s5522 + $0x188] sm:$0xff]
        %v5548 = vld [vmem:[%s5522 + $0x190] sm:$0xff]
        %v5549 = vld [vmem:[%s5522 + $0x1a8] sm:$0xff]
        %v5550 = vld [vmem:[%s5522 + $0x1b0] sm:$0xff]
        %v5551 = vld [vmem:[%s5522 + $0x1c8] sm:$0xff]
        %v5552 = vld [vmem:[%s5522 + $0x1d0] sm:$0xff]
        %v5553 = vld [vmem:[%s5522 + $0x1e8] sm:$0xff]
        %v5554 = vld [vmem:[%s5522 + $0x1f0] sm:$0xff]
        %v5555 = vadd.f32 %v5523, %v5489
        %v5556 = vadd.f32 %v5524, %v5490
        %v5557 = vadd.f32 %v5525, %v5491
        %v5558 = vadd.f32 %v5526, %v5492
        %v5559 = vadd.f32 %v5527, %v5493
        %v5560 = vadd.f32 %v5528, %v5494
        %v5561 = vadd.f32 %v5529, %v5495
        %v5562 = vadd.f32 %v5530, %v5496
        %v5563 = vadd.f32 %v5531, %v5497
        %v5564 = vadd.f32 %v5532, %v5498
        %v5565 = vadd.f32 %v5533, %v5499
        %v5566 = vadd.f32 %v5534, %v5500
        %v5567 = vadd.f32 %v5535, %v5501
        %v5568 = vadd.f32 %v5536, %v5502
        %v5569 = vadd.f32 %v5537, %v5503
        %v5570 = vadd.f32 %v5538, %v5504
        %v5571 = vadd.f32 %v5539, %v5505
        %v5572 = vadd.f32 %v5540, %v5506
        %v5573 = vadd.f32 %v5541, %v5507
        %v5574 = vadd.f32 %v5542, %v5508
        %v5575 = vadd.f32 %v5543, %v5509
        %v5576 = vadd.f32 %v5544, %v5510
        %v5577 = vadd.f32 %v5545, %v5511
        %v5578 = vadd.f32 %v5546, %v5512
        %v5579 = vadd.f32 %v5547, %v5513
        %v5580 = vadd.f32 %v5548, %v5514
        %v5581 = vadd.f32 %v5549, %v5515
        %v5582 = vadd.f32 %v5550, %v5516
        %v5583 = vadd.f32 %v5551, %v5517
        %v5584 = vadd.f32 %v5552, %v5518
        %v5585 = vadd.f32 %v5553, %v5519
        %v5586 = vadd.f32 %v5554, %v5520
        %5587 = vst [vmem:[%s315] sm:$0xff] %v5555
        %5588 = vst [vmem:[%s315 + $0x8] sm:$0xff] %v5556
        %5589 = vst [vmem:[%s315 + $0x10] sm:$0xff] %v5557
        %5590 = vst [vmem:[%s315 + $0x18] sm:$0xff] %v5558
        %5591 = vst [vmem:[%s315 + $0x20] sm:$0xff] %v5559
        %5592 = vst [vmem:[%s315 + $0x28] sm:$0xff] %v5560
        %5593 = vst [vmem:[%s315 + $0x30] sm:$0xff] %v5561
        %5594 = vst [vmem:[%s315 + $0x38] sm:$0xff] %v5562
        %5595 = vst [vmem:[%s315 + $0x40] sm:$0xff] %v5563
        %5596 = vst [vmem:[%s315 + $0x48] sm:$0xff] %v5564
        %5597 = vst [vmem:[%s315 + $0x50] sm:$0xff] %v5565
        %5598 = vst [vmem:[%s315 + $0x58] sm:$0xff] %v5566
        %5599 = vst [vmem:[%s315 + $0x60] sm:$0xff] %v5567
        %5600 = vst [vmem:[%s315 + $0x68] sm:$0xff] %v5568
        %5601 = vst [vmem:[%s315 + $0x70] sm:$0xff] %v5569
        %5602 = vst [vmem:[%s315 + $0x78] sm:$0xff] %v5570
        %5603 = vst [vmem:[%s315 + $0x80] sm:$0xff] %v5571
        %5604 = vst [vmem:[%s315 + $0x88] sm:$0xff] %v5572
        %5605 = vst [vmem:[%s315 + $0x90] sm:$0xff] %v5573
        %5606 = vst [vmem:[%s315 + $0x98] sm:$0xff] %v5574
        %5607 = vst [vmem:[%s315 + $0xa0] sm:$0xff] %v5575
        %5608 = vst [vmem:[%s315 + $0xa8] sm:$0xff] %v5576
        %5609 = vst [vmem:[%s315 + $0xb0] sm:$0xff] %v5577
        %5610 = vst [vmem:[%s315 + $0xb8] sm:$0xff] %v5578
        %5611 = vst [vmem:[%s315 + $0xc0] sm:$0xff] %v5579
        %5612 = vst [vmem:[%s315 + $0xc8] sm:$0xff] %v5580
        %5613 = vst [vmem:[%s315 + $0xd0] sm:$0xff] %v5581
        %5614 = vst [vmem:[%s315 + $0xd8] sm:$0xff] %v5582
        %5615 = vst [vmem:[%s315 + $0xe0] sm:$0xff] %v5583
        %5616 = vst [vmem:[%s315 + $0xe8] sm:$0xff] %v5584
        %5617 = vst [vmem:[%s315 + $0xf0] sm:$0xff] %v5585
        %5618 = vst [vmem:[%s315 + $0xf8] sm:$0xff] %v5586
        %s5619 = sand.u32 %s193, 1
        %s5620 = scalar_lea.sflag [#allocation7], %s5619
        %s5621 = sand.u32 %s193, 1
        %s5622 = smul.addr %s5621, 256
        %s5623 = scalar_lea.vmem [#allocation11], %s5622
        // Predicated region
        $region77: #{tpu_custom_call.1} parent=47 // pred_check
          %p5624 = pneg %p203
        $region78: #{tpu_custom_call.1} parent=47 // pred_check_branch
          %5626 = sbr.rel (%p5624) target = $region80
        $region79: #{tpu_custom_call.1} parent=47 // pred_region
          %s5627 = smul.u32 16, %s29
          %s5629 = ssub.s32 4096, 4096
          %5630 = vsyncadd %s5620, %s5629
          %s5631 = smul.addr %s5627, 2
          %s5632 = smul.addr %s28, 32
          %s5633 = sadd.s32 %s5631, %s5632
          %s5634 = smul.addr %s5633, 128
          %s5635 = scalar_lea.hbm %s8, %s5634
          %s5636 = sshll.u32 %s5623, 4
          %s5637 = int_to_ptr.vmem [resolvable:$true] %s5636
          %5642 = dma.vmem_to_hbm [thread:$0]  %s5637, 4096, %s5635, %s5620, 128, 128, 8
        $region80: #{tpu_custom_call.1} parent=47 // pred_fallthru
          _
      $region48: #{tpu_custom_call.1} parent=5 // pred_fallthru
        _
      %p5643 = scmp.le.s32.totalorder 2, %s19
      // Predicated region
      $region81: #{tpu_custom_call.1} parent=5 // pred_check
        %p5644 = pneg %p5643
      $region82: #{tpu_custom_call.1} parent=5 // pred_check_branch
        %5646 = sbr.rel (%p5644) target = $region84
      $region83: #{tpu_custom_call.1} parent=5 // pred_region
        %s5647 = ssub.s32 %s19, 2
        // Predicated region
        $region85: #{tpu_custom_call.1} parent=83 // pred_check
          %p5648 = pneg %p209
        $region86: #{tpu_custom_call.1} parent=83 // pred_check_branch
          %5650 = sbr.rel (%p5648) target = $region88
        $region87: #{tpu_custom_call.1} parent=83 // pred_region
          %s5651 = sand.u32 %s194, 1
          %s5652 = scalar_lea.sflag [#allocation7], %s5651
          %s5653 = sand.u32 %s194, 1
          %s5654 = smul.addr %s5653, 256
          %s5655 = scalar_lea.vmem [#allocation11], %s5654
          %5656 = dma.done %s5652, 4096
        $region88: #{tpu_custom_call.1} parent=83 // pred_fallthru
          _
      $region84: #{tpu_custom_call.1} parent=5 // pred_fallthru
        _
    $region6: #{tpu_custom_call.1} parent=1 // loop_footer
      %s23 = sadd.s32 1, %s19
    $region7: #{tpu_custom_call.1} parent=1 // loop_footer_branch
      %18 = sbr.rel target = $region3
    $region8: #{tpu_custom_call.1} parent=1 // loop_exit
      _
    %5657 = vsyncpa [#allocation6], 1
    %s5658 = scalar_lea.sflag [#allocation6], 1
    %5659 = vsyncpa %s5658, 1
    %5660 = vsyncpa [#allocation9], 1
    %5661 = vsyncpa [#allocation7], 1
    %s5662 = scalar_lea.sflag [#allocation7], 1
    %5663 = vsyncpa %s5662, 1
  %5664 = vsyncmov [#allocation3]
  %s5665 = vpop.sfrf %5664
  %p5666 = scmp.eq.s32.totalorder %s5665, 0
  %p5667 = pneg %p5666
  %5669 = shalt.err (%p5667)
  %s5670 = scalar_lea.sflag [#allocation3], 1
  %5671 = vsyncmov %s5670
  %s5672 = vpop.sfrf %5671
  %p5673 = scmp.eq.s32.totalorder %s5672, 0
  %p5674 = pneg %p5673
  %5676 = shalt.err (%p5674)

</llo_original>
